<compile_context>
chip_gen: v6e
topology: v6e:2x2x1
jax: 0.10.0
libtpu: 0.0.40
codegen_flags: <defaults>
</compile_context>

<pallas_src>
import math
from math import ceil
from functools import partial

import numpy as np
import jax
import jax.numpy as jnp
from jax import lax
from jax.experimental import pallas as pl
from jax.experimental.pallas import tpu as pltpu

LN_EPS = 1e-5
F32 = jnp.float32
BF16 = jnp.bfloat16
NEG = -1e30


def _num_tensorcores():
    try:
        kind = jax.devices()[0].device_kind.lower()
    except Exception:
        return 1
    return 2 if ('v7' in kind or '7x' in kind) else 1


_N_TC = _num_tensorcores()
_CPARAMS = pltpu.CompilerParams(dimension_semantics=("parallel",))


# ---------------------------------------------------------------------------
# In-kernel math helpers (trace-time functions on loaded values)
# ---------------------------------------------------------------------------
def _ln(x, g, b, eps=LN_EPS):
    mu = jnp.mean(x, axis=-1, keepdims=True)
    var = jnp.mean((x - mu) ** 2, axis=-1, keepdims=True)
    return (x - mu) * lax.rsqrt(var + eps) * g + b


def _erf(x):
    # Abramowitz & Stegun 7.1.26 (|err| <= 1.5e-7); only mul/add/exp/abs/where,
    # all of which have guaranteed Mosaic lowerings.
    a1, a2, a3 = 0.254829592, -0.284496736, 1.421413741
    a4, a5, p = -1.453152027, 1.061405429, 0.3275911
    sgn = jnp.where(x >= 0.0, 1.0, -1.0)
    ax = jnp.abs(x)
    t = 1.0 / (1.0 + p * ax)
    poly = ((((a5 * t + a4) * t + a3) * t + a2) * t + a1) * t
    return sgn * (1.0 - poly * jnp.exp(-ax * ax))


def _gelu(x):
    # torch.nn.GELU default (exact-erf form)
    return 0.5 * x * (1.0 + _erf(x * (1.0 / math.sqrt(2.0))))


def _dot(x_f32, w_bf16, b=None):
    """2-D matmul with bf16 MXU operands and f32 accumulation."""
    out = jnp.dot(x_f32.astype(BF16), w_bf16, preferred_element_type=F32)
    return out if b is None else out + b


def _mlp(x, w1, b1, w2, b2):
    return _dot(_gelu(_dot(x, w1, b1)), w2, b2)


def _mha2(q2, kv2, mask, kv_per_batch, w, b, n_heads, scale):
    """Multi-head attention over independent batches packed row-wise into 2-D slabs.

    q2 : [Nq, D] f32, kv2: [Nk, D] f32
    mask: [Nq, Nk] f32 additive mask (0 where query/key share a batch, -1e30 else).
    w  : [D, 4D] bf16 packed Wq|Wk|Wv|Wo ;  b: [1, 4D] f32 packed bq|bk|bv|bo.
    Returns [Nq, D] f32.  Masked keys get weight exp(-1e30) == 0, so this is
    exactly per-batch softmax attention without any per-batch loop or reshape.
    """
    d = q2.shape[-1]
    e = d // n_heads
    wo, bo = w[:, 3 * d:], b[:, 3 * d:]

    if kv_per_batch == 1:
        # softmax over a single key == 1 -> context is that key's value row,
        # replicated onto its batch's query rows by the 0/1 block mask.
        v = _dot(kv2, w[:, 2 * d:3 * d], b[:, 2 * d:3 * d])           # [Nk, D]
        sel = jnp.where(mask >= -0.5, 1.0, 0.0).astype(BF16)           # [Nq, Nk]
        ctx = jnp.dot(sel, v.astype(BF16), preferred_element_type=F32)
        return _dot(ctx, wo, bo)

    if q2 is kv2:                       # self-attention: fused QKV projection (N = 3D)
        qkv = _dot(q2, w[:, :3 * d], b[:, :3 * d])
        q, k, v = qkv[:, :d], qkv[:, d:2 * d], qkv[:, 2 * d:]
    else:                               # cross attention: fused KV projection (N = 2D)
        q = _dot(q2, w[:, :d], b[:, :d])
        kv = _dot(kv2, w[:, d:3 * d], b[:, d:3 * d])
        k, v = kv[:, :d], kv[:, d:]

    qh, kh, vh = q.astype(BF16), k.astype(BF16), v.astype(BF16)
    ctx = []
    for h in range(n_heads):            # static unroll; heads live in lane slices
        sl = slice(h * e, (h + 1) * e)
        s = lax.dot_general(qh[:, sl], kh[:, sl], (((1,), (1,)), ((), ())),
                            preferred_element_type=F32) * scale + mask
        m = jnp.max(s, axis=-1, keepdims=True)
        p = jnp.exp(s - m)
        # approx reciprocal uses the EUP slot; deviation ~1e-3 rel (fine for inference)
        p = p * pl.reciprocal(jnp.sum(p, axis=-1, keepdims=True), approx=True)
        ctx.append(jnp.dot(p.astype(BF16), vh[:, sl], preferred_element_type=F32))
    ctx2 = jnp.concatenate(ctx, axis=-1)        # head concat -> single K=D Wo matmul
    return _dot(ctx2, wo, bo)


# ---------------------------------------------------------------------------
# Fused Pallas kernels
# ---------------------------------------------------------------------------
def _tsa_kernel(x_ref, rt_ref, tmask_ref, smask_ref, rmask_ref,
                wt_ref, bt_ref, g1_ref, c1_ref, w11_ref, d11_ref, w12_ref, d12_ref,
                g2_ref, c2_ref, ws_ref, bs_ref, wr_ref, br_ref,
                g3_ref, c3_ref, w21_ref, d21_ref, w22_ref, d22_ref,
                g4_ref, c4_ref, o_ref, *, seg, ts_d, factor, n_heads, scale):
    """Full TwoStageAttentionLayer on a [b*ts_d*seg, d_model] slab (one call)."""
    x2 = x_ref[...].astype(F32)
    rt2 = rt_ref[...].astype(F32)
    # --- time stage: self attention across segments of the same (b, channel) series
    a = _mha2(x2, x2, tmask_ref[...], seg, wt_ref[...], bt_ref[...], n_heads, scale)
    y = _ln(x2 + a, g1_ref[...], c1_ref[...])
    y = _ln(y + _mlp(y, w11_ref[...], d11_ref[...], w12_ref[...], d12_ref[...]),
            g2_ref[...], c2_ref[...])
    # --- dimension stage: router sender / receiver attention across channels
    buf = _mha2(rt2, y, smask_ref[...], ts_d, ws_ref[...], bs_ref[...], n_heads, scale)
    rcv = _mha2(y, buf, rmask_ref[...], factor, wr_ref[...], br_ref[...], n_heads, scale)
    z = _ln(y + rcv, g3_ref[...], c3_ref[...])
    z = _ln(z + _mlp(z, w21_ref[...], d21_ref[...], w22_ref[...], d22_ref[...]),
            g4_ref[...], c4_ref[...])
    o_ref[...] = z.astype(o_ref.dtype)


def _cross_pred_kernel(x_ref, cr_ref, mask_ref, wa_ref, ba_ref, g1_ref, c1_ref,
                       w1_ref, d1_ref, w2_ref, d2_ref, g2_ref, c2_ref,
                       wp_ref, dp_ref, o_ref, p_ref, *, lk, n_heads, scale):
    """Decoder layer tail: cross attention + residual + LN + MLP + LN + pred linear."""
    x2 = x_ref[...].astype(F32)
    cr2 = cr_ref[...].astype(F32)
    a = _mha2(x2, cr2, mask_ref[...], lk, wa_ref[...], ba_ref[...], n_heads, scale)
    y = _ln(x2 + a, g1_ref[...], c1_ref[...])
    dec = _ln(y + _mlp(y, w1_ref[...], d1_ref[...], w2_ref[...], d2_ref[...]),
              g2_ref[...], c2_ref[...])
    o_ref[...] = dec.astype(o_ref.dtype)
    # TODO(synk): pred's last dim (seg_len=12) < 128 lanes -> a few masked partial
    # stores; the output is tiny so padding to a lane-dense slab would cost more.
    p_ref[...] = _dot(dec, wp_ref[...], dp_ref[...]).astype(p_ref.dtype)


def _embed_kernel(x_ref, pos_ref, w_ref, g_ref, c_ref, o_ref, *, batch):
    """Patch value-embedding + (sinusoidal PE + enc pos embedding) + pre-LayerNorm."""
    y = jnp.dot(x_ref[...].astype(BF16), w_ref[...], preferred_element_type=F32)
    pos = pos_ref[...].astype(F32)                       # [C*in_seg, D]
    y = y + jnp.concatenate([pos] * batch, axis=0)       # broadcast over B in-kernel
    o_ref[...] = _ln(y, g_ref[...], c_ref[...]).astype(o_ref.dtype)


def _merge_kernel(x_ref, g_ref, c_ref, w_ref, d_ref, o_ref):
    """SegMerging: out = LayerNorm(x) @ W + b on a dense 2-D slab."""
    y = _ln(x_ref[...].astype(F32), g_ref[...], c_ref[...])
    o_ref[...] = _dot(y, w_ref[...], d_ref[...]).astype(o_ref.dtype)


# ---------------------------------------------------------------------------
# pallas_call plumbing
# ---------------------------------------------------------------------------
def _row_spec(shape, nb):
    """Row-split a 2-D slab into nb independent blocks along the leading axis."""
    blk = (shape[0] // nb,) + tuple(shape[1:])
    nd = len(shape)
    return pl.BlockSpec(blk, lambda i: (i,) + (0,) * (nd - 1))


def _rep_spec(shape):
    """Whole array, same block for every grid step (weights / biases / masks)."""
    nd = len(shape)
    return pl.BlockSpec(tuple(shape), lambda i: (0,) * nd)


def _num_row_blocks(batches, *row_counts):
    """2-way split of the independent batch axis: only on multi-TensorCore chips,
    only when the batch axis splits evenly and every split slab keeps (8,*)-aligned
    sublane counts (nb=1 on v5e / v6e -- a split there is just a wasted grid step)."""
    if _N_TC < 2 or batches % 2 != 0:
        return 1
    for n in row_counts:
        if (n // 2) % 8 != 0:
            return 1
    return 2


def _cost(args, out_shapes, flops, transcendentals=0):
    ba = sum(int(a.size) * int(a.dtype.itemsize) for a in args)
    ba += sum(int(math.prod(s.shape)) * int(jnp.dtype(s.dtype).itemsize) for s in out_shapes)
    return pl.CostEstimate(flops=int(flops), transcendentals=int(transcendentals),
                           bytes_accessed=int(ba))


def _np_block_mask(nbatch, lq, lk):
    """Additive block-diagonal mask for nbatch independent (lq x lk) attentions."""
    qb = np.arange(nbatch * lq) // lq
    kb = np.arange(nbatch * lk) // lk
    return jnp.asarray(np.where(qb[:, None] == kb[None, :], 0.0, NEG).astype(np.float32))


def _np_tsa_masks(b, ts_d, seg, factor):
    """Masks for one TSA layer: activation rows ordered (b, ts_d, seg), router rows
    ordered (b, seg, factor).  The dim-stage mask encodes the '(b ts_d) seg ->
    (b seg) ts_d' regrouping, so no transpose is needed anywhere."""
    rows = np.arange(b * ts_d * seg)
    t_batch = rows // seg                                      # time-stage batch  (b, ts_d)
    d_batch = (rows // (ts_d * seg)) * seg + (rows % seg)      # dim-stage batch   (b, seg)
    r_batch = np.arange(b * seg * factor) // factor            # router batch      (b, seg)
    tmask = np.where(t_batch[:, None] == t_batch[None, :], 0.0, NEG).astype(np.float32)
    smask = np.where(r_batch[:, None] == d_batch[None, :], 0.0, NEG).astype(np.float32)
    return jnp.asarray(tmask), jnp.asarray(smask), jnp.asarray(smask.T.copy())


# ---------------------------------------------------------------------------
# Crossformer sub-modules (forward semantics mirror the PyTorch code)
# ---------------------------------------------------------------------------
def tsa_layer(p, x4, n_heads):
    """TwoStageAttentionLayer: ONE fused pallas_call, no inter-kernel transposes."""
    b, ts_d, seg, d = x4.shape
    factor = p['router'].shape[1]
    f = p['mlp1']['l1']['w'].shape[1]
    e = d // n_heads
    n = b * ts_d * seg
    pr = b * seg * factor
    nb = _num_row_blocks(b, n, pr)
    tmask, smask, rmask = _np_tsa_masks(b // nb, ts_d, seg, factor)

    x2 = x4.reshape(n, d)
    router2 = jnp.broadcast_to(p['router'][None], (b,) + p['router'].shape).reshape(pr, d)
    args = (x2, router2, tmask, smask, rmask,
            p['time_attn']['w'].astype(BF16), p['time_attn']['b'],
            p['norm1']['g'].reshape(1, d), p['norm1']['b'].reshape(1, d),
            p['mlp1']['l1']['w'].astype(BF16), p['mlp1']['l1']['b'].reshape(1, f),
            p['mlp1']['l2']['w'].astype(BF16), p['mlp1']['l2']['b'].reshape(1, d),
            p['norm2']['g'].reshape(1, d), p['norm2']['b'].reshape(1, d),
            p['dim_sender']['w'].astype(BF16), p['dim_sender']['b'],
            p['dim_receiver']['w'].astype(BF16), p['dim_receiver']['b'],
            p['norm3']['g'].reshape(1, d), p['norm3']['b'].reshape(1, d),
            p['mlp2']['l1']['w'].astype(BF16), p['mlp2']['l1']['b'].reshape(1, f),
            p['mlp2']['l2']['w'].astype(BF16), p['mlp2']['l2']['b'].reshape(1, d),
            p['norm4']['g'].reshape(1, d), p['norm4']['b'].reshape(1, d))
    in_specs = [_row_spec(x2.shape, nb), _row_spec(router2.shape, nb)] + \
               [_rep_spec(a.shape) for a in args[2:]]
    out_shape = jax.ShapeDtypeStruct((n, d), jnp.float32)
    flops = 2 * n * d * (8 * d + 4 * f) + 4 * d * (n * n + 2 * n * pr)
    transc = n * (n + 2 * pr + 2 * f)
    out2 = pl.pallas_call(
        partial(_tsa_kernel, seg=seg, ts_d=ts_d, factor=factor,
                n_heads=n_heads, scale=1.0 / math.sqrt(e)),
        grid=(nb,), in_specs=in_specs,
        out_specs=_row_spec((n, d), nb), out_shape=out_shape,
        compiler_params=_CPARAMS,
        cost_estimate=_cost(args, [out_shape], flops, transc),
    )(*args)
    return out2.reshape(b, ts_d, seg, d)


def cross_pred_block(p, x4, cross4, n_heads, seg_len):
    """Decoder cross attention + LN + MLP + LN + prediction linear (one pallas_call)."""
    b, ts_d, lq, d = x4.shape
    lk = cross4.shape[2]
    f = p['mlp1']['l1']['w'].shape[1]
    e = d // n_heads
    bt = b * ts_d
    nb = _num_row_blocks(bt, bt * lq, bt * lk)
    mask = _np_block_mask(bt // nb, lq, lk)

    x2 = x4.reshape(bt * lq, d)
    cross2 = cross4.reshape(bt * lk, d)
    args = (x2, cross2, mask,
            p['cross_attn']['w'].astype(BF16), p['cross_attn']['b'],
            p['norm1']['g'].reshape(1, d), p['norm1']['b'].reshape(1, d),
            p['mlp1']['l1']['w'].astype(BF16), p['mlp1']['l1']['b'].reshape(1, f),
            p['mlp1']['l2']['w'].astype(BF16), p['mlp1']['l2']['b'].reshape(1, d),
            p['norm2']['g'].reshape(1, d), p['norm2']['b'].reshape(1, d),
            p['pred']['w'].astype(BF16), p['pred']['b'].reshape(1, seg_len))
    in_specs = [_row_spec(x2.shape, nb), _row_spec(cross2.shape, nb)] + \
               [_rep_spec(a.shape) for a in args[2:]]
    out_shapes = (jax.ShapeDtypeStruct((bt * lq, d), jnp.float32),
                  jax.ShapeDtypeStruct((bt * lq, seg_len), jnp.float32))
    out_specs = (_row_spec((bt * lq, d), nb), _row_spec((bt * lq, seg_len), nb))
    flops = 2 * bt * lq * d * (4 * d + 2 * f + seg_len) + 4 * d * bt * bt * lq * lk
    transc = bt * lq * (bt * lk + f)
    dec2, pred2 = pl.pallas_call(
        partial(_cross_pred_kernel, lk=lk, n_heads=n_heads, scale=1.0 / math.sqrt(e)),
        grid=(nb,), in_specs=in_specs, out_specs=out_specs, out_shape=out_shapes,
        compiler_params=_CPARAMS,
        cost_estimate=_cost(args, list(out_shapes), flops, transc),
    )(*args)
    return dec2.reshape(b, ts_d, lq, d), pred2.reshape(b, ts_d * lq, seg_len)


def sinusoidal_pe(n, d):
    pos = np.arange(n, dtype=np.float32)[:, None]
    div = np.exp(np.arange(0, d, 2, dtype=np.float32) * (-math.log(10000.0) / d))
    pe = np.zeros((n, d), np.float32)
    pe[:, 0::2] = np.sin(pos * div)
    pe[:, 1::2] = np.cos(pos * div)
    return jnp.asarray(pe)


def patch_embed_prenorm(params, cfg, x_enc):
    """Non-overlapping patch embedding + positional adds + pre-LayerNorm (one call)."""
    B, _, C = x_enc.shape
    x = jnp.transpose(x_enc, (0, 2, 1))                        # [B, C, seq_len]
    pad = cfg['pad_in_len'] - cfg['seq_len']
    if pad > 0:                                                # ReplicationPad1d((0, pad))
        x = jnp.concatenate([x, jnp.repeat(x[:, :, -1:], pad, axis=-1)], axis=-1)
    seg_len, d_model, in_seg = cfg['seg_len'], cfg['d_model'], cfg['in_seg_num']
    x2 = x.reshape(B * C * in_seg, seg_len)                    # unfold(size=step=seg_len)
    pos = (sinusoidal_pe(in_seg, d_model)[None] + params['enc_pos'][0]) \
        .reshape(C * in_seg, d_model)                          # broadcast over B in-kernel
    args = (x2, pos, params['patch']['w_val'].astype(BF16),
            params['pre_norm']['g'].reshape(1, d_model),
            params['pre_norm']['b'].reshape(1, d_model))
    out_shape = jax.ShapeDtypeStruct((B * C * in_seg, d_model), jnp.float32)
    flops = 2 * B * C * in_seg * seg_len * d_model
    out2 = pl.pallas_call(partial(_embed_kernel, batch=B), out_shape=out_shape,
                          cost_estimate=_cost(args, [out_shape], flops))(*args)
    return out2.reshape(B, C, in_seg, d_model)


def seg_merging(p, x, win_size):
    b, ts_d, seg_num, d_model = x.shape
    pad_num = seg_num % win_size
    if pad_num != 0:
        pad_num = win_size - pad_num
        x = jnp.concatenate([x, x[:, :, -pad_num:, :]], axis=2)
    segs = [x[:, :, i::win_size, :] for i in range(win_size)]
    x = jnp.concatenate(segs, axis=-1)                          # [b, ts_d, seg2, w*d]
    seg2 = x.shape[2]
    rows = b * ts_d * seg2
    x2 = x.reshape(rows, win_size * d_model)
    args = (x2, p['norm']['g'].reshape(1, -1), p['norm']['b'].reshape(1, -1),
            p['lin']['w'].astype(BF16), p['lin']['b'].reshape(1, -1))
    out_shape = jax.ShapeDtypeStruct((rows, d_model), jnp.float32)
    flops = 2 * rows * win_size * d_model * d_model
    out2 = pl.pallas_call(_merge_kernel, out_shape=out_shape,
                          cost_estimate=_cost(args, [out_shape], flops))(*args)
    return out2.reshape(b, ts_d, seg2, d_model)


def encoder_forward(blocks, x, n_heads, win_size):
    outs = [x]
    for blk in blocks:
        if blk['merge'] is not None:
            x = seg_merging(blk['merge'], x, win_size)
        for lp in blk['layers']:
            x = tsa_layer(lp, x, n_heads)
        outs.append(x)
    return outs


def decoder_forward(layers, x, cross_list, n_heads, seg_len):
    final = None
    b, ts_d = x.shape[0], x.shape[1]
    for i, lp in enumerate(layers):
        x = tsa_layer(lp['self_attn'], x, n_heads)
        x, pred = cross_pred_block(lp, x, cross_list[i], n_heads, seg_len)
        final = pred if final is None else final + pred
    seg_num = final.shape[1] // ts_d
    # 'b (out_d seg_num) seg_len -> b (seg_num seg_len) out_d'
    final = final.reshape(b, ts_d, seg_num, seg_len)
    return final.transpose(0, 2, 3, 1).reshape(b, seg_num * seg_len, ts_d)


def crossformer_forward(params, cfg, x_enc):
    # task_name == 'long_term_forecast'
    B = x_enc.shape[0]
    x = patch_embed_prenorm(params, cfg, x_enc)                 # [B, C, in_seg, D]
    enc_out = encoder_forward(params['enc_blocks'], x, cfg['n_heads'], cfg['win_size'])
    dec_in = jnp.broadcast_to(params['dec_pos'], (B,) + params['dec_pos'].shape[1:])
    dec_out = decoder_forward(params['dec_layers'], dec_in, enc_out,
                              cfg['n_heads'], cfg['seg_len'])
    return dec_out[:, -cfg['pred_len']:, :]


# ---------------------------------------------------------------------------
# Deterministic parameter initialization (synthetic, not a checkpoint)
# ---------------------------------------------------------------------------
class KeyGen:
    def __init__(self, key):
        self.key = key

    def __call__(self):
        self.key, sub = jax.random.split(self.key)
        return sub


def init_linear(kg, d_in, d_out, scale=0.02):
    return {'w': jax.random.normal(kg(), (d_in, d_out), jnp.float32) * scale,
            'b': jnp.zeros((d_out,), jnp.float32)}


def init_ln(d):
    return {'g': jnp.ones((d,), jnp.float32), 'b': jnp.zeros((d,), jnp.float32)}


def init_attention(kg, d_model, scale=0.02):
    # packed weights Wq|Wk|Wv|Wo and biases bq|bk|bv|bo
    return {'w': jax.random.normal(kg(), (d_model, 4 * d_model), jnp.float32) * scale,
            'b': jnp.zeros((1, 4 * d_model), jnp.float32)}


def init_mlp(kg, d_in, d_hidden):
    return {'l1': init_linear(kg, d_in, d_hidden), 'l2': init_linear(kg, d_hidden, d_in)}


def init_tsa(kg, seg_num, factor, d_model, d_ff):
    return {'time_attn': init_attention(kg, d_model),
            'dim_sender': init_attention(kg, d_model),
            'dim_receiver': init_attention(kg, d_model),
            'router': jax.random.normal(kg(), (seg_num, factor, d_model), jnp.float32) * 0.02,
            'norm1': init_ln(d_model), 'norm2': init_ln(d_model),
            'norm3': init_ln(d_model), 'norm4': init_ln(d_model),
            'mlp1': init_mlp(kg, d_model, d_ff),
            'mlp2': init_mlp(kg, d_model, d_ff)}


def build_crossformer(kg, cfg):
    enc_blocks = []
    for l in range(cfg['e_layers']):
        win = 1 if l == 0 else cfg['win_size']
        seg_num_l = cfg['in_seg_num'] if l == 0 else ceil(cfg['in_seg_num'] / cfg['win_size'] ** l)
        blk = {'merge': None, 'layers': []}
        if win > 1:
            blk['merge'] = {'norm': init_ln(win * cfg['d_model']),
                            'lin': init_linear(kg, win * cfg['d_model'], cfg['d_model'])}
        blk['layers'].append(init_tsa(kg, seg_num_l, cfg['factor'], cfg['d_model'], cfg['d_ff']))
        enc_blocks.append(blk)

    out_seg_dec = cfg['pad_out_len'] // cfg['seg_len']
    dec_layers = []
    for _ in range(cfg['e_layers'] + 1):
        dec_layers.append({
            'self_attn': init_tsa(kg, out_seg_dec, cfg['factor'], cfg['d_model'], cfg['d_ff']),
            'cross_attn': init_attention(kg, cfg['d_model']),
            'norm1': init_ln(cfg['d_model']),
            'norm2': init_ln(cfg['d_model']),
            'mlp1': init_mlp(kg, cfg['d_model'], cfg['d_model']),   # hidden = d_model (per spec)
            'pred': init_linear(kg, cfg['d_model'], cfg['seg_len']),
        })

    return {
        'patch': {'w_val': jax.random.normal(kg(), (cfg['seg_len'], cfg['d_model']),
                                             jnp.float32) * 0.02},
        'enc_pos': jax.random.normal(kg(), (1, cfg['enc_in'], cfg['in_seg_num'], cfg['d_model']),
                                     jnp.float32) * 0.02,
        'pre_norm': init_ln(cfg['d_model']),
        'enc_blocks': enc_blocks,
        'dec_pos': jax.random.normal(kg(), (1, cfg['enc_in'], out_seg_dec, cfg['d_model']),
                                     jnp.float32) * 0.02,
        'dec_layers': dec_layers,
    }


# ---------------------------------------------------------------------------
if __name__ == "__main__":
    # Small, consistent config (task_name='long_term_forecast')
    seq_len, pred_len, enc_in = 24, 24, 4
    d_model, n_heads, d_ff, e_layers, factor = 32, 2, 64, 2, 1
    seg_len, win_size = 12, 2
    pad_in_len = ceil(1.0 * seq_len / seg_len) * seg_len
    pad_out_len = ceil(1.0 * pred_len / seg_len) * seg_len
    cfg = dict(seq_len=seq_len, pred_len=pred_len, enc_in=enc_in, d_model=d_model,
               n_heads=n_heads, d_ff=d_ff, e_layers=e_layers, factor=factor,
               seg_len=seg_len, win_size=win_size, pad_in_len=pad_in_len,
               pad_out_len=pad_out_len, in_seg_num=pad_in_len // seg_len)

    key = jax.random.PRNGKey(0)
    k_param, k_data = jax.random.split(key)
    params = build_crossformer(KeyGen(k_param), cfg)

    B = 2
    x_enc = jax.random.normal(k_data, (B, seq_len, enc_in), jnp.float32)

    fwd = jax.jit(lambda p, x: crossformer_forward(p, cfg, x))
    out = jax.block_until_ready(fwd(params, x_enc))

    assert out.shape == (B, pred_len, enc_in), out.shape
    assert bool(jnp.all(jnp.isfinite(out)))
    print("KERNEL_OK")
</pallas_src>

<mosaic_0001>
module attributes {stable_mosaic.version = 11 : i64} {
  func.func @_tsa_kernel(%arg0: i32, %arg1: memref<16x32xf32, #tpu.memory_space<vmem>>, %arg2: memref<4x32xf32, #tpu.memory_space<vmem>>, %arg3: memref<16x16xf32, #tpu.memory_space<vmem>>, %arg4: memref<4x16xf32, #tpu.memory_space<vmem>>, %arg5: memref<16x4xf32, #tpu.memory_space<vmem>>, %arg6: memref<32x128xbf16, #tpu.memory_space<vmem>>, %arg7: memref<1x128xf32, #tpu.memory_space<vmem>>, %arg8: memref<1x32xf32, #tpu.memory_space<vmem>>, %arg9: memref<1x32xf32, #tpu.memory_space<vmem>>, %arg10: memref<32x64xbf16, #tpu.memory_space<vmem>>, %arg11: memref<1x64xf32, #tpu.memory_space<vmem>>, %arg12: memref<64x32xbf16, #tpu.memory_space<vmem>>, %arg13: memref<1x32xf32, #tpu.memory_space<vmem>>, %arg14: memref<1x32xf32, #tpu.memory_space<vmem>>, %arg15: memref<1x32xf32, #tpu.memory_space<vmem>>, %arg16: memref<32x128xbf16, #tpu.memory_space<vmem>>, %arg17: memref<1x128xf32, #tpu.memory_space<vmem>>, %arg18: memref<32x128xbf16, #tpu.memory_space<vmem>>, %arg19: memref<1x128xf32, #tpu.memory_space<vmem>>, %arg20: memref<1x32xf32, #tpu.memory_space<vmem>>, %arg21: memref<1x32xf32, #tpu.memory_space<vmem>>, %arg22: memref<32x64xbf16, #tpu.memory_space<vmem>>, %arg23: memref<1x64xf32, #tpu.memory_space<vmem>>, %arg24: memref<64x32xbf16, #tpu.memory_space<vmem>>, %arg25: memref<1x32xf32, #tpu.memory_space<vmem>>, %arg26: memref<1x32xf32, #tpu.memory_space<vmem>>, %arg27: memref<1x32xf32, #tpu.memory_space<vmem>>, %arg28: memref<16x32xf32, #tpu.memory_space<vmem>>) attributes {dimension_semantics = [#tpu.dimension_semantics<parallel>], iteration_bounds = array<i64: 1>, scalar_prefetch = 0 : i64, scratch_operands = 0 : i64, tpu.core_type = #tpu.core_type<tc>, window_params = [{transform_indices = @transform_0, window_bounds = array<i64: 16, 32>}, {transform_indices = @transform_1, window_bounds = array<i64: 4, 32>}, {pipeline_mode = #tpu.pipeline_mode<synchronous>, transform_indices = @transform_2, window_bounds = array<i64: 16, 16>}, {pipeline_mode = #tpu.pipeline_mode<synchronous>, transform_indices = @transform_3, window_bounds = array<i64: 4, 16>}, {pipeline_mode = #tpu.pipeline_mode<synchronous>, transform_indices = @transform_4, window_bounds = array<i64: 16, 4>}, {pipeline_mode = #tpu.pipeline_mode<synchronous>, transform_indices = @transform_5, window_bounds = array<i64: 32, 128>}, {pipeline_mode = #tpu.pipeline_mode<synchronous>, transform_indices = @transform_6, window_bounds = array<i64: 1, 128>}, {pipeline_mode = #tpu.pipeline_mode<synchronous>, transform_indices = @transform_7, window_bounds = array<i64: 1, 32>}, {pipeline_mode = #tpu.pipeline_mode<synchronous>, transform_indices = @transform_8, window_bounds = array<i64: 1, 32>}, {pipeline_mode = #tpu.pipeline_mode<synchronous>, transform_indices = @transform_9, window_bounds = array<i64: 32, 64>}, {pipeline_mode = #tpu.pipeline_mode<synchronous>, transform_indices = @transform_10, window_bounds = array<i64: 1, 64>}, {pipeline_mode = #tpu.pipeline_mode<synchronous>, transform_indices = @transform_11, window_bounds = array<i64: 64, 32>}, {pipeline_mode = #tpu.pipeline_mode<synchronous>, transform_indices = @transform_12, window_bounds = array<i64: 1, 32>}, {pipeline_mode = #tpu.pipeline_mode<synchronous>, transform_indices = @transform_13, window_bounds = array<i64: 1, 32>}, {pipeline_mode = #tpu.pipeline_mode<synchronous>, transform_indices = @transform_14, window_bounds = array<i64: 1, 32>}, {pipeline_mode = #tpu.pipeline_mode<synchronous>, transform_indices = @transform_15, window_bounds = array<i64: 32, 128>}, {pipeline_mode = #tpu.pipeline_mode<synchronous>, transform_indices = @transform_16, window_bounds = array<i64: 1, 128>}, {pipeline_mode = #tpu.pipeline_mode<synchronous>, transform_indices = @transform_17, window_bounds = array<i64: 32, 128>}, {pipeline_mode = #tpu.pipeline_mode<synchronous>, transform_indices = @transform_18, window_bounds = array<i64: 1, 128>}, {pipeline_mode = #tpu.pipeline_mode<synchronous>, transform_indices = @transform_19, window_bounds = array<i64: 1, 32>}, {pipeline_mode = #tpu.pipeline_mode<synchronous>, transform_indices = @transform_20, window_bounds = array<i64: 1, 32>}, {pipeline_mode = #tpu.pipeline_mode<synchronous>, transform_indices = @transform_21, window_bounds = array<i64: 32, 64>}, {pipeline_mode = #tpu.pipeline_mode<synchronous>, transform_indices = @transform_22, window_bounds = array<i64: 1, 64>}, {pipeline_mode = #tpu.pipeline_mode<synchronous>, transform_indices = @transform_23, window_bounds = array<i64: 64, 32>}, {pipeline_mode = #tpu.pipeline_mode<synchronous>, transform_indices = @transform_24, window_bounds = array<i64: 1, 32>}, {pipeline_mode = #tpu.pipeline_mode<synchronous>, transform_indices = @transform_25, window_bounds = array<i64: 1, 32>}, {pipeline_mode = #tpu.pipeline_mode<synchronous>, transform_indices = @transform_26, window_bounds = array<i64: 1, 32>}, {transform_indices = @transform_27, window_bounds = array<i64: 16, 32>}]} {
    %c0 = arith.constant 0 : index
    %c0_0 = arith.constant 0 : index
    %0 = vector.load %arg1[%c0, %c0_0] : memref<16x32xf32, #tpu.memory_space<vmem>>, vector<16x32xf32>
    %c0_1 = arith.constant 0 : index
    %c0_2 = arith.constant 0 : index
    %1 = vector.load %arg2[%c0_1, %c0_2] : memref<4x32xf32, #tpu.memory_space<vmem>>, vector<4x32xf32>
    %c0_3 = arith.constant 0 : index
    %c0_4 = arith.constant 0 : index
    %2 = vector.load %arg3[%c0_3, %c0_4] : memref<16x16xf32, #tpu.memory_space<vmem>>, vector<16x16xf32>
    %c0_5 = arith.constant 0 : index
    %c0_6 = arith.constant 0 : index
    %3 = vector.load %arg6[%c0_5, %c0_6] : memref<32x128xbf16, #tpu.memory_space<vmem>>, vector<32x128xbf16>
    %c0_7 = arith.constant 0 : index
    %c0_8 = arith.constant 0 : index
    %4 = vector.load %arg7[%c0_7, %c0_8] : memref<1x128xf32, #tpu.memory_space<vmem>>, vector<1x128xf32>
    %5 = vector.extract_strided_slice %3 {offsets = [0, 96], sizes = [32, 32], strides = [1, 1]} : vector<32x128xbf16> to vector<32x32xbf16>
    %6 = vector.extract_strided_slice %4 {offsets = [0, 96], sizes = [1, 32], strides = [1, 1]} : vector<1x128xf32> to vector<1x32xf32>
    %7 = vector.extract_strided_slice %3 {offsets = [0, 0], sizes = [32, 96], strides = [1, 1]} : vector<32x128xbf16> to vector<32x96xbf16>
    %8 = vector.extract_strided_slice %4 {offsets = [0, 0], sizes = [1, 96], strides = [1, 1]} : vector<1x128xf32> to vector<1x96xf32>
    %9 = arith.truncf %0 : vector<16x32xf32> to vector<16x32xbf16>
    %cst = arith.constant dense<0.000000e+00> : vector<16x96xf32>
    %10 = tpu.matmul %9, %7, %cst {dimension_numbers = #tpu.dot_dimension_numbers<[1], [0], [0], [1], [0, 0, 1, 1], [], []>} : vector<16x32xbf16>, vector<32x96xbf16>, vector<16x96xf32> -> vector<16x96xf32>
    %11 = vector.broadcast %8 : vector<1x96xf32> to vector<16x96xf32>
    %12 = arith.addf %10, %11 : vector<16x96xf32>
    %13 = vector.extract_strided_slice %12 {offsets = [0, 0], sizes = [16, 32], strides = [1, 1]} : vector<16x96xf32> to vector<16x32xf32>
    %14 = vector.extract_strided_slice %12 {offsets = [0, 32], sizes = [16, 32], strides = [1, 1]} : vector<16x96xf32> to vector<16x32xf32>
    %15 = vector.extract_strided_slice %12 {offsets = [0, 64], sizes = [16, 32], strides = [1, 1]} : vector<16x96xf32> to vector<16x32xf32>
    %16 = arith.truncf %13 : vector<16x32xf32> to vector<16x32xbf16>
    %17 = arith.truncf %14 : vector<16x32xf32> to vector<16x32xbf16>
    %18 = arith.truncf %15 : vector<16x32xf32> to vector<16x32xbf16>
    %19 = vector.extract_strided_slice %16 {offsets = [0, 0], sizes = [16, 16], strides = [1, 1]} : vector<16x32xbf16> to vector<16x16xbf16>
    %20 = vector.extract_strided_slice %17 {offsets = [0, 0], sizes = [16, 16], strides = [1, 1]} : vector<16x32xbf16> to vector<16x16xbf16>
    %cst_9 = arith.constant dense<0.000000e+00> : vector<16x16xf32>
    %21 = tpu.matmul %19, %20, %cst_9 {dimension_numbers = #tpu.dot_dimension_numbers<[1], [1], [0], [0], [0, 0, 1, 0], [], []>} : vector<16x16xbf16>, vector<16x16xbf16>, vector<16x16xf32> -> vector<16x16xf32>
    %cst_10 = arith.constant 2.500000e-01 : f32
    %22 = vector.broadcast %cst_10 : f32 to vector<16x16xf32>
    %23 = arith.mulf %21, %22 : vector<16x16xf32>
    %24 = arith.addf %23, %2 : vector<16x16xf32>
    %cst_11 = arith.constant dense<0xFF800000> : vector<16xf32>
    %25 = vector.multi_reduction <maximumf>, %24, %cst_11 [1] : vector<16x16xf32> to vector<16xf32>
    %26 = vector.shape_cast %25 : vector<16xf32> to vector<16x1xf32>
    %27 = vector.broadcast %26 : vector<16x1xf32> to vector<16x16xf32>
    %28 = arith.subf %24, %27 : vector<16x16xf32>
    %29 = math.exp %28 : vector<16x16xf32>
    %cst_12 = arith.constant dense<0.000000e+00> : vector<16xf32>
    %30 = vector.multi_reduction <add>, %29, %cst_12 [1] : vector<16x16xf32> to vector<16xf32>
    %31 = vector.shape_cast %30 : vector<16xf32> to vector<16x1xf32>
    %32 = tpu.reciprocal %31 {approx = true} : vector<16x1xf32> -> vector<16x1xf32>
    %33 = vector.broadcast %32 : vector<16x1xf32> to vector<16x16xf32>
    %34 = arith.mulf %29, %33 : vector<16x16xf32>
    %35 = arith.truncf %34 : vector<16x16xf32> to vector<16x16xbf16>
    %36 = vector.extract_strided_slice %18 {offsets = [0, 0], sizes = [16, 16], strides = [1, 1]} : vector<16x32xbf16> to vector<16x16xbf16>
    %cst_13 = arith.constant dense<0.000000e+00> : vector<16x16xf32>
    %37 = tpu.matmul %35, %36, %cst_13 {dimension_numbers = #tpu.dot_dimension_numbers<[1], [0], [0], [1], [0, 0, 1, 1], [], []>} : vector<16x16xbf16>, vector<16x16xbf16>, vector<16x16xf32> -> vector<16x16xf32>
    %38 = vector.extract_strided_slice %16 {offsets = [0, 16], sizes = [16, 16], strides = [1, 1]} : vector<16x32xbf16> to vector<16x16xbf16>
    %39 = vector.extract_strided_slice %17 {offsets = [0, 16], sizes = [16, 16], strides = [1, 1]} : vector<16x32xbf16> to vector<16x16xbf16>
    %cst_14 = arith.constant dense<0.000000e+00> : vector<16x16xf32>
    %40 = tpu.matmul %38, %39, %cst_14 {dimension_numbers = #tpu.dot_dimension_numbers<[1], [1], [0], [0], [0, 0, 1, 0], [], []>} : vector<16x16xbf16>, vector<16x16xbf16>, vector<16x16xf32> -> vector<16x16xf32>
    %cst_15 = arith.constant 2.500000e-01 : f32
    %41 = vector.broadcast %cst_15 : f32 to vector<16x16xf32>
    %42 = arith.mulf %40, %41 : vector<16x16xf32>
    %43 = arith.addf %42, %2 : vector<16x16xf32>
    %cst_16 = arith.constant dense<0xFF800000> : vector<16xf32>
    %44 = vector.multi_reduction <maximumf>, %43, %cst_16 [1] : vector<16x16xf32> to vector<16xf32>
    %45 = vector.shape_cast %44 : vector<16xf32> to vector<16x1xf32>
    %46 = vector.broadcast %45 : vector<16x1xf32> to vector<16x16xf32>
    %47 = arith.subf %43, %46 : vector<16x16xf32>
    %48 = math.exp %47 : vector<16x16xf32>
    %cst_17 = arith.constant dense<0.000000e+00> : vector<16xf32>
    %49 = vector.multi_reduction <add>, %48, %cst_17 [1] : vector<16x16xf32> to vector<16xf32>
    %50 = vector.shape_cast %49 : vector<16xf32> to vector<16x1xf32>
    %51 = tpu.reciprocal %50 {approx = true} : vector<16x1xf32> -> vector<16x1xf32>
    %52 = vector.broadcast %51 : vector<16x1xf32> to vector<16x16xf32>
    %53 = arith.mulf %48, %52 : vector<16x16xf32>
    %54 = arith.truncf %53 : vector<16x16xf32> to vector<16x16xbf16>
    %55 = vector.extract_strided_slice %18 {offsets = [0, 16], sizes = [16, 16], strides = [1, 1]} : vector<16x32xbf16> to vector<16x16xbf16>
    %cst_18 = arith.constant dense<0.000000e+00> : vector<16x16xf32>
    %56 = tpu.matmul %54, %55, %cst_18 {dimension_numbers = #tpu.dot_dimension_numbers<[1], [0], [0], [1], [0, 0, 1, 1], [], []>} : vector<16x16xbf16>, vector<16x16xbf16>, vector<16x16xf32> -> vector<16x16xf32>
    %57 = tpu.concatenate %37, %56 in 1 : vector<16x16xf32>, vector<16x16xf32> -> vector<16x32xf32>
    %58 = arith.truncf %57 : vector<16x32xf32> to vector<16x32xbf16>
    %cst_19 = arith.constant dense<0.000000e+00> : vector<16x32xf32>
    %59 = tpu.matmul %58, %5, %cst_19 {dimension_numbers = #tpu.dot_dimension_numbers<[1], [0], [0], [1], [0, 0, 1, 1], [], []>} : vector<16x32xbf16>, vector<32x32xbf16>, vector<16x32xf32> -> vector<16x32xf32>
    %60 = vector.broadcast %6 : vector<1x32xf32> to vector<16x32xf32>
    %61 = arith.addf %59, %60 : vector<16x32xf32>
    %62 = arith.addf %0, %61 : vector<16x32xf32>
    %c0_20 = arith.constant 0 : index
    %c0_21 = arith.constant 0 : index
    %63 = vector.load %arg8[%c0_20, %c0_21] : memref<1x32xf32, #tpu.memory_space<vmem>>, vector<1x32xf32>
    %c0_22 = arith.constant 0 : index
    %c0_23 = arith.constant 0 : index
    %64 = vector.load %arg9[%c0_22, %c0_23] : memref<1x32xf32, #tpu.memory_space<vmem>>, vector<1x32xf32>
    %cst_24 = arith.constant dense<0.000000e+00> : vector<16xf32>
    %65 = vector.multi_reduction <add>, %62, %cst_24 [1] : vector<16x32xf32> to vector<16xf32>
    %66 = vector.shape_cast %65 : vector<16xf32> to vector<16x1xf32>
    %cst_25 = arith.constant 3.200000e+01 : f32
    %67 = vector.broadcast %cst_25 : f32 to vector<16x1xf32>
    %68 = arith.divf %66, %67 : vector<16x1xf32>
    %69 = vector.broadcast %68 : vector<16x1xf32> to vector<16x32xf32>
    %70 = arith.subf %62, %69 : vector<16x32xf32>
    %71 = arith.mulf %70, %70 : vector<16x32xf32>
    %cst_26 = arith.constant dense<0.000000e+00> : vector<16xf32>
    %72 = vector.multi_reduction <add>, %71, %cst_26 [1] : vector<16x32xf32> to vector<16xf32>
    %73 = vector.shape_cast %72 : vector<16xf32> to vector<16x1xf32>
    %cst_27 = arith.constant 3.200000e+01 : f32
    %74 = vector.broadcast %cst_27 : f32 to vector<16x1xf32>
    %75 = arith.divf %73, %74 : vector<16x1xf32>
    %76 = vector.broadcast %68 : vector<16x1xf32> to vector<16x32xf32>
    %77 = arith.subf %62, %76 : vector<16x32xf32>
    %cst_28 = arith.constant 9.99999974E-6 : f32
    %78 = vector.broadcast %cst_28 : f32 to vector<16x1xf32>
    %79 = arith.addf %75, %78 : vector<16x1xf32>
    %80 = math.rsqrt %79 : vector<16x1xf32>
    %81 = vector.broadcast %80 : vector<16x1xf32> to vector<16x32xf32>
    %82 = arith.mulf %77, %81 : vector<16x32xf32>
    %83 = vector.broadcast %63 : vector<1x32xf32> to vector<16x32xf32>
    %84 = arith.mulf %82, %83 : vector<16x32xf32>
    %85 = vector.broadcast %64 : vector<1x32xf32> to vector<16x32xf32>
    %86 = arith.addf %84, %85 : vector<16x32xf32>
    %c0_29 = arith.constant 0 : index
    %c0_30 = arith.constant 0 : index
    %87 = vector.load %arg10[%c0_29, %c0_30] : memref<32x64xbf16, #tpu.memory_space<vmem>>, vector<32x64xbf16>
    %c0_31 = arith.constant 0 : index
    %c0_32 = arith.constant 0 : index
    %88 = vector.load %arg11[%c0_31, %c0_32] : memref<1x64xf32, #tpu.memory_space<vmem>>, vector<1x64xf32>
    %c0_33 = arith.constant 0 : index
    %c0_34 = arith.constant 0 : index
    %89 = vector.load %arg12[%c0_33, %c0_34] : memref<64x32xbf16, #tpu.memory_space<vmem>>, vector<64x32xbf16>
    %c0_35 = arith.constant 0 : index
    %c0_36 = arith.constant 0 : index
    %90 = vector.load %arg13[%c0_35, %c0_36] : memref<1x32xf32, #tpu.memory_space<vmem>>, vector<1x32xf32>
    %91 = arith.truncf %86 : vector<16x32xf32> to vector<16x32xbf16>
    %cst_37 = arith.constant dense<0.000000e+00> : vector<16x64xf32>
    %92 = tpu.matmul %91, %87, %cst_37 {dimension_numbers = #tpu.dot_dimension_numbers<[1], [0], [0], [1], [0, 0, 1, 1], [], []>} : vector<16x32xbf16>, vector<32x64xbf16>, vector<16x64xf32> -> vector<16x64xf32>
    %93 = vector.broadcast %88 : vector<1x64xf32> to vector<16x64xf32>
    %94 = arith.addf %92, %93 : vector<16x64xf32>
    %cst_38 = arith.constant 5.000000e-01 : f32
    %95 = vector.broadcast %cst_38 : f32 to vector<16x64xf32>
    %96 = arith.mulf %95, %94 : vector<16x64xf32>
    %cst_39 = arith.constant 0.707106769 : f32
    %97 = vector.broadcast %cst_39 : f32 to vector<16x64xf32>
    %98 = arith.mulf %94, %97 : vector<16x64xf32>
    %cst_40 = arith.constant 0.000000e+00 : f32
    %99 = vector.broadcast %cst_40 : f32 to vector<16x64xf32>
    %100 = arith.cmpf oge, %98, %99 : vector<16x64xf32>
    %cst_41 = arith.constant 1.000000e+00 : f32
    %cst_42 = arith.constant -1.000000e+00 : f32
    %101 = vector.broadcast %cst_41 : f32 to vector<16x64xf32>
    %102 = vector.broadcast %cst_42 : f32 to vector<16x64xf32>
    %103 = arith.select %100, %101, %102 : vector<16x64xi1>, vector<16x64xf32>
    %104 = math.absf %98 : vector<16x64xf32>
    %cst_43 = arith.constant 0.327591091 : f32
    %105 = vector.broadcast %cst_43 : f32 to vector<16x64xf32>
    %106 = arith.mulf %105, %104 : vector<16x64xf32>
    %cst_44 = arith.constant 1.000000e+00 : f32
    %107 = vector.broadcast %cst_44 : f32 to vector<16x64xf32>
    %108 = arith.addf %107, %106 : vector<16x64xf32>
    %cst_45 = arith.constant 1.000000e+00 : f32
    %109 = vector.broadcast %cst_45 : f32 to vector<16x64xf32>
    %110 = arith.divf %109, %108 : vector<16x64xf32>
    %cst_46 = arith.constant 1.06140542 : f32
    %111 = vector.broadcast %cst_46 : f32 to vector<16x64xf32>
    %112 = arith.mulf %111, %110 : vector<16x64xf32>
    %cst_47 = arith.constant -1.45315206 : f32
    %113 = vector.broadcast %cst_47 : f32 to vector<16x64xf32>
    %114 = arith.addf %112, %113 : vector<16x64xf32>
    %115 = arith.mulf %114, %110 : vector<16x64xf32>
    %cst_48 = arith.constant 1.42141378 : f32
    %116 = vector.broadcast %cst_48 : f32 to vector<16x64xf32>
    %117 = arith.addf %115, %116 : vector<16x64xf32>
    %118 = arith.mulf %117, %110 : vector<16x64xf32>
    %cst_49 = arith.constant -0.284496725 : f32
    %119 = vector.broadcast %cst_49 : f32 to vector<16x64xf32>
    %120 = arith.addf %118, %119 : vector<16x64xf32>
    %121 = arith.mulf %120, %110 : vector<16x64xf32>
    %cst_50 = arith.constant 0.254829586 : f32
    %122 = vector.broadcast %cst_50 : f32 to vector<16x64xf32>
    %123 = arith.addf %121, %122 : vector<16x64xf32>
    %124 = arith.mulf %123, %110 : vector<16x64xf32>
    %cst_51 = arith.constant 0.000000e+00 : f32
    %125 = vector.broadcast %cst_51 : f32 to vector<16x64xf32>
    %126 = arith.subf %125, %104 : vector<16x64xf32>
    %127 = arith.mulf %126, %104 : vector<16x64xf32>
    %128 = math.exp %127 : vector<16x64xf32>
    %129 = arith.mulf %124, %128 : vector<16x64xf32>
    %cst_52 = arith.constant 1.000000e+00 : f32
    %130 = vector.broadcast %cst_52 : f32 to vector<16x64xf32>
    %131 = arith.subf %130, %129 : vector<16x64xf32>
    %132 = arith.mulf %103, %131 : vector<16x64xf32>
    %cst_53 = arith.constant 1.000000e+00 : f32
    %133 = vector.broadcast %cst_53 : f32 to vector<16x64xf32>
    %134 = arith.addf %133, %132 : vector<16x64xf32>
    %135 = arith.mulf %96, %134 : vector<16x64xf32>
    %136 = arith.truncf %135 : vector<16x64xf32> to vector<16x64xbf16>
    %cst_54 = arith.constant dense<0.000000e+00> : vector<16x32xf32>
    %137 = tpu.matmul %136, %89, %cst_54 {dimension_numbers = #tpu.dot_dimension_numbers<[1], [0], [0], [1], [0, 0, 1, 1], [], []>} : vector<16x64xbf16>, vector<64x32xbf16>, vector<16x32xf32> -> vector<16x32xf32>
    %138 = vector.broadcast %90 : vector<1x32xf32> to vector<16x32xf32>
    %139 = arith.addf %137, %138 : vector<16x32xf32>
    %140 = arith.addf %86, %139 : vector<16x32xf32>
    %c0_55 = arith.constant 0 : index
    %c0_56 = arith.constant 0 : index
    %141 = vector.load %arg14[%c0_55, %c0_56] : memref<1x32xf32, #tpu.memory_space<vmem>>, vector<1x32xf32>
    %c0_57 = arith.constant 0 : index
    %c0_58 = arith.constant 0 : index
    %142 = vector.load %arg15[%c0_57, %c0_58] : memref<1x32xf32, #tpu.memory_space<vmem>>, vector<1x32xf32>
    %cst_59 = arith.constant dense<0.000000e+00> : vector<16xf32>
    %143 = vector.multi_reduction <add>, %140, %cst_59 [1] : vector<16x32xf32> to vector<16xf32>
    %144 = vector.shape_cast %143 : vector<16xf32> to vector<16x1xf32>
    %cst_60 = arith.constant 3.200000e+01 : f32
    %145 = vector.broadcast %cst_60 : f32 to vector<16x1xf32>
    %146 = arith.divf %144, %145 : vector<16x1xf32>
    %147 = vector.broadcast %146 : vector<16x1xf32> to vector<16x32xf32>
    %148 = arith.subf %140, %147 : vector<16x32xf32>
    %149 = arith.mulf %148, %148 : vector<16x32xf32>
    %cst_61 = arith.constant dense<0.000000e+00> : vector<16xf32>
    %150 = vector.multi_reduction <add>, %149, %cst_61 [1] : vector<16x32xf32> to vector<16xf32>
    %151 = vector.shape_cast %150 : vector<16xf32> to vector<16x1xf32>
    %cst_62 = arith.constant 3.200000e+01 : f32
    %152 = vector.broadcast %cst_62 : f32 to vector<16x1xf32>
    %153 = arith.divf %151, %152 : vector<16x1xf32>
    %154 = vector.broadcast %146 : vector<16x1xf32> to vector<16x32xf32>
    %155 = arith.subf %140, %154 : vector<16x32xf32>
    %cst_63 = arith.constant 9.99999974E-6 : f32
    %156 = vector.broadcast %cst_63 : f32 to vector<16x1xf32>
    %157 = arith.addf %153, %156 : vector<16x1xf32>
    %158 = math.rsqrt %157 : vector<16x1xf32>
    %159 = vector.broadcast %158 : vector<16x1xf32> to vector<16x32xf32>
    %160 = arith.mulf %155, %159 : vector<16x32xf32>
    %161 = vector.broadcast %141 : vector<1x32xf32> to vector<16x32xf32>
    %162 = arith.mulf %160, %161 : vector<16x32xf32>
    %163 = vector.broadcast %142 : vector<1x32xf32> to vector<16x32xf32>
    %164 = arith.addf %162, %163 : vector<16x32xf32>
    %c0_64 = arith.constant 0 : index
    %c0_65 = arith.constant 0 : index
    %165 = vector.load %arg4[%c0_64, %c0_65] : memref<4x16xf32, #tpu.memory_space<vmem>>, vector<4x16xf32>
    %c0_66 = arith.constant 0 : index
    %c0_67 = arith.constant 0 : index
    %166 = vector.load %arg16[%c0_66, %c0_67] : memref<32x128xbf16, #tpu.memory_space<vmem>>, vector<32x128xbf16>
    %c0_68 = arith.constant 0 : index
    %c0_69 = arith.constant 0 : index
    %167 = vector.load %arg17[%c0_68, %c0_69] : memref<1x128xf32, #tpu.memory_space<vmem>>, vector<1x128xf32>
    %168 = vector.extract_strided_slice %166 {offsets = [0, 96], sizes = [32, 32], strides = [1, 1]} : vector<32x128xbf16> to vector<32x32xbf16>
    %169 = vector.extract_strided_slice %167 {offsets = [0, 96], sizes = [1, 32], strides = [1, 1]} : vector<1x128xf32> to vector<1x32xf32>
    %170 = vector.extract_strided_slice %166 {offsets = [0, 0], sizes = [32, 32], strides = [1, 1]} : vector<32x128xbf16> to vector<32x32xbf16>
    %171 = vector.extract_strided_slice %167 {offsets = [0, 0], sizes = [1, 32], strides = [1, 1]} : vector<1x128xf32> to vector<1x32xf32>
    %172 = arith.truncf %1 : vector<4x32xf32> to vector<4x32xbf16>
    %cst_70 = arith.constant dense<0.000000e+00> : vector<4x32xf32>
    %173 = tpu.matmul %172, %170, %cst_70 {dimension_numbers = #tpu.dot_dimension_numbers<[1], [0], [0], [1], [0, 0, 1, 1], [], []>} : vector<4x32xbf16>, vector<32x32xbf16>, vector<4x32xf32> -> vector<4x32xf32>
    %174 = vector.broadcast %171 : vector<1x32xf32> to vector<4x32xf32>
    %175 = arith.addf %173, %174 : vector<4x32xf32>
    %176 = vector.extract_strided_slice %166 {offsets = [0, 32], sizes = [32, 64], strides = [1, 1]} : vector<32x128xbf16> to vector<32x64xbf16>
    %177 = vector.extract_strided_slice %167 {offsets = [0, 32], sizes = [1, 64], strides = [1, 1]} : vector<1x128xf32> to vector<1x64xf32>
    %178 = arith.truncf %164 : vector<16x32xf32> to vector<16x32xbf16>
    %cst_71 = arith.constant dense<0.000000e+00> : vector<16x64xf32>
    %179 = tpu.matmul %178, %176, %cst_71 {dimension_numbers = #tpu.dot_dimension_numbers<[1], [0], [0], [1], [0, 0, 1, 1], [], []>} : vector<16x32xbf16>, vector<32x64xbf16>, vector<16x64xf32> -> vector<16x64xf32>
    %180 = vector.broadcast %177 : vector<1x64xf32> to vector<16x64xf32>
    %181 = arith.addf %179, %180 : vector<16x64xf32>
    %182 = vector.extract_strided_slice %181 {offsets = [0, 0], sizes = [16, 32], strides = [1, 1]} : vector<16x64xf32> to vector<16x32xf32>
    %183 = vector.extract_strided_slice %181 {offsets = [0, 32], sizes = [16, 32], strides = [1, 1]} : vector<16x64xf32> to vector<16x32xf32>
    %184 = arith.truncf %175 : vector<4x32xf32> to vector<4x32xbf16>
    %185 = arith.truncf %182 : vector<16x32xf32> to vector<16x32xbf16>
    %186 = arith.truncf %183 : vector<16x32xf32> to vector<16x32xbf16>
    %187 = vector.extract_strided_slice %184 {offsets = [0, 0], sizes = [4, 16], strides = [1, 1]} : vector<4x32xbf16> to vector<4x16xbf16>
    %188 = vector.extract_strided_slice %185 {offsets = [0, 0], sizes = [16, 16], strides = [1, 1]} : vector<16x32xbf16> to vector<16x16xbf16>
    %cst_72 = arith.constant dense<0.000000e+00> : vector<4x16xf32>
    %189 = tpu.matmul %187, %188, %cst_72 {dimension_numbers = #tpu.dot_dimension_numbers<[1], [1], [0], [0], [0, 0, 1, 0], [], []>} : vector<4x16xbf16>, vector<16x16xbf16>, vector<4x16xf32> -> vector<4x16xf32>
    %cst_73 = arith.constant 2.500000e-01 : f32
    %190 = vector.broadcast %cst_73 : f32 to vector<4x16xf32>
    %191 = arith.mulf %189, %190 : vector<4x16xf32>
    %192 = arith.addf %191, %165 : vector<4x16xf32>
    %cst_74 = arith.constant dense<0xFF800000> : vector<4xf32>
    %193 = vector.multi_reduction <maximumf>, %192, %cst_74 [1] : vector<4x16xf32> to vector<4xf32>
    %194 = vector.shape_cast %193 : vector<4xf32> to vector<4x1xf32>
    %195 = vector.broadcast %194 : vector<4x1xf32> to vector<4x16xf32>
    %196 = arith.subf %192, %195 : vector<4x16xf32>
    %197 = math.exp %196 : vector<4x16xf32>
    %cst_75 = arith.constant dense<0.000000e+00> : vector<4xf32>
    %198 = vector.multi_reduction <add>, %197, %cst_75 [1] : vector<4x16xf32> to vector<4xf32>
    %199 = vector.shape_cast %198 : vector<4xf32> to vector<4x1xf32>
    %200 = tpu.reciprocal %199 {approx = true} : vector<4x1xf32> -> vector<4x1xf32>
    %201 = vector.broadcast %200 : vector<4x1xf32> to vector<4x16xf32>
    %202 = arith.mulf %197, %201 : vector<4x16xf32>
    %203 = arith.truncf %202 : vector<4x16xf32> to vector<4x16xbf16>
    %204 = vector.extract_strided_slice %186 {offsets = [0, 0], sizes = [16, 16], strides = [1, 1]} : vector<16x32xbf16> to vector<16x16xbf16>
    %cst_76 = arith.constant dense<0.000000e+00> : vector<4x16xf32>
    %205 = tpu.matmul %203, %204, %cst_76 {dimension_numbers = #tpu.dot_dimension_numbers<[1], [0], [0], [1], [0, 0, 1, 1], [], []>} : vector<4x16xbf16>, vector<16x16xbf16>, vector<4x16xf32> -> vector<4x16xf32>
    %206 = vector.extract_strided_slice %184 {offsets = [0, 16], sizes = [4, 16], strides = [1, 1]} : vector<4x32xbf16> to vector<4x16xbf16>
    %207 = vector.extract_strided_slice %185 {offsets = [0, 16], sizes = [16, 16], strides = [1, 1]} : vector<16x32xbf16> to vector<16x16xbf16>
    %cst_77 = arith.constant dense<0.000000e+00> : vector<4x16xf32>
    %208 = tpu.matmul %206, %207, %cst_77 {dimension_numbers = #tpu.dot_dimension_numbers<[1], [1], [0], [0], [0, 0, 1, 0], [], []>} : vector<4x16xbf16>, vector<16x16xbf16>, vector<4x16xf32> -> vector<4x16xf32>
    %cst_78 = arith.constant 2.500000e-01 : f32
    %209 = vector.broadcast %cst_78 : f32 to vector<4x16xf32>
    %210 = arith.mulf %208, %209 : vector<4x16xf32>
    %211 = arith.addf %210, %165 : vector<4x16xf32>
    %cst_79 = arith.constant dense<0xFF800000> : vector<4xf32>
    %212 = vector.multi_reduction <maximumf>, %211, %cst_79 [1] : vector<4x16xf32> to vector<4xf32>
    %213 = vector.shape_cast %212 : vector<4xf32> to vector<4x1xf32>
    %214 = vector.broadcast %213 : vector<4x1xf32> to vector<4x16xf32>
    %215 = arith.subf %211, %214 : vector<4x16xf32>
    %216 = math.exp %215 : vector<4x16xf32>
    %cst_80 = arith.constant dense<0.000000e+00> : vector<4xf32>
    %217 = vector.multi_reduction <add>, %216, %cst_80 [1] : vector<4x16xf32> to vector<4xf32>
    %218 = vector.shape_cast %217 : vector<4xf32> to vector<4x1xf32>
    %219 = tpu.reciprocal %218 {approx = true} : vector<4x1xf32> -> vector<4x1xf32>
    %220 = vector.broadcast %219 : vector<4x1xf32> to vector<4x16xf32>
    %221 = arith.mulf %216, %220 : vector<4x16xf32>
    %222 = arith.truncf %221 : vector<4x16xf32> to vector<4x16xbf16>
    %223 = vector.extract_strided_slice %186 {offsets = [0, 16], sizes = [16, 16], strides = [1, 1]} : vector<16x32xbf16> to vector<16x16xbf16>
    %cst_81 = arith.constant dense<0.000000e+00> : vector<4x16xf32>
    %224 = tpu.matmul %222, %223, %cst_81 {dimension_numbers = #tpu.dot_dimension_numbers<[1], [0], [0], [1], [0, 0, 1, 1], [], []>} : vector<4x16xbf16>, vector<16x16xbf16>, vector<4x16xf32> -> vector<4x16xf32>
    %225 = tpu.concatenate %205, %224 in 1 : vector<4x16xf32>, vector<4x16xf32> -> vector<4x32xf32>
    %226 = arith.truncf %225 : vector<4x32xf32> to vector<4x32xbf16>
    %cst_82 = arith.constant dense<0.000000e+00> : vector<4x32xf32>
    %227 = tpu.matmul %226, %168, %cst_82 {dimension_numbers = #tpu.dot_dimension_numbers<[1], [0], [0], [1], [0, 0, 1, 1], [], []>} : vector<4x32xbf16>, vector<32x32xbf16>, vector<4x32xf32> -> vector<4x32xf32>
    %228 = vector.broadcast %169 : vector<1x32xf32> to vector<4x32xf32>
    %229 = arith.addf %227, %228 : vector<4x32xf32>
    %c0_83 = arith.constant 0 : index
    %c0_84 = arith.constant 0 : index
    %230 = vector.load %arg5[%c0_83, %c0_84] : memref<16x4xf32, #tpu.memory_space<vmem>>, vector<16x4xf32>
    %c0_85 = arith.constant 0 : index
    %c0_86 = arith.constant 0 : index
    %231 = vector.load %arg18[%c0_85, %c0_86] : memref<32x128xbf16, #tpu.memory_space<vmem>>, vector<32x128xbf16>
    %c0_87 = arith.constant 0 : index
    %c0_88 = arith.constant 0 : index
    %232 = vector.load %arg19[%c0_87, %c0_88] : memref<1x128xf32, #tpu.memory_space<vmem>>, vector<1x128xf32>
    %233 = vector.extract_strided_slice %231 {offsets = [0, 96], sizes = [32, 32], strides = [1, 1]} : vector<32x128xbf16> to vector<32x32xbf16>
    %234 = vector.extract_strided_slice %232 {offsets = [0, 96], sizes = [1, 32], strides = [1, 1]} : vector<1x128xf32> to vector<1x32xf32>
    %235 = vector.extract_strided_slice %231 {offsets = [0, 64], sizes = [32, 32], strides = [1, 1]} : vector<32x128xbf16> to vector<32x32xbf16>
    %236 = vector.extract_strided_slice %232 {offsets = [0, 64], sizes = [1, 32], strides = [1, 1]} : vector<1x128xf32> to vector<1x32xf32>
    %237 = arith.truncf %229 : vector<4x32xf32> to vector<4x32xbf16>
    %cst_89 = arith.constant dense<0.000000e+00> : vector<4x32xf32>
    %238 = tpu.matmul %237, %235, %cst_89 {dimension_numbers = #tpu.dot_dimension_numbers<[1], [0], [0], [1], [0, 0, 1, 1], [], []>} : vector<4x32xbf16>, vector<32x32xbf16>, vector<4x32xf32> -> vector<4x32xf32>
    %239 = vector.broadcast %236 : vector<1x32xf32> to vector<4x32xf32>
    %240 = arith.addf %238, %239 : vector<4x32xf32>
    %cst_90 = arith.constant -5.000000e-01 : f32
    %241 = vector.broadcast %cst_90 : f32 to vector<16x4xf32>
    %242 = arith.cmpf oge, %230, %241 : vector<16x4xf32>
    %cst_91 = arith.constant 1.000000e+00 : f32
    %cst_92 = arith.constant 0.000000e+00 : f32
    %243 = vector.broadcast %cst_91 : f32 to vector<16x4xf32>
    %244 = vector.broadcast %cst_92 : f32 to vector<16x4xf32>
    %245 = arith.select %242, %243, %244 : vector<16x4xi1>, vector<16x4xf32>
    %246 = arith.truncf %245 : vector<16x4xf32> to vector<16x4xbf16>
    %247 = arith.truncf %240 : vector<4x32xf32> to vector<4x32xbf16>
    %cst_93 = arith.constant dense<0.000000e+00> : vector<16x32xf32>
    %248 = tpu.matmul %246, %247, %cst_93 {dimension_numbers = #tpu.dot_dimension_numbers<[1], [0], [0], [1], [0, 0, 1, 1], [], []>} : vector<16x4xbf16>, vector<4x32xbf16>, vector<16x32xf32> -> vector<16x32xf32>
    %249 = arith.truncf %248 : vector<16x32xf32> to vector<16x32xbf16>
    %cst_94 = arith.constant dense<0.000000e+00> : vector<16x32xf32>
    %250 = tpu.matmul %249, %233, %cst_94 {dimension_numbers = #tpu.dot_dimension_numbers<[1], [0], [0], [1], [0, 0, 1, 1], [], []>} : vector<16x32xbf16>, vector<32x32xbf16>, vector<16x32xf32> -> vector<16x32xf32>
    %251 = vector.broadcast %234 : vector<1x32xf32> to vector<16x32xf32>
    %252 = arith.addf %250, %251 : vector<16x32xf32>
    %253 = arith.addf %164, %252 : vector<16x32xf32>
    %c0_95 = arith.constant 0 : index
    %c0_96 = arith.constant 0 : index
    %254 = vector.load %arg20[%c0_95, %c0_96] : memref<1x32xf32, #tpu.memory_space<vmem>>, vector<1x32xf32>
    %c0_97 = arith.constant 0 : index
    %c0_98 = arith.constant 0 : index
    %255 = vector.load %arg21[%c0_97, %c0_98] : memref<1x32xf32, #tpu.memory_space<vmem>>, vector<1x32xf32>
    %cst_99 = arith.constant dense<0.000000e+00> : vector<16xf32>
    %256 = vector.multi_reduction <add>, %253, %cst_99 [1] : vector<16x32xf32> to vector<16xf32>
    %257 = vector.shape_cast %256 : vector<16xf32> to vector<16x1xf32>
    %cst_100 = arith.constant 3.200000e+01 : f32
    %258 = vector.broadcast %cst_100 : f32 to vector<16x1xf32>
    %259 = arith.divf %257, %258 : vector<16x1xf32>
    %260 = vector.broadcast %259 : vector<16x1xf32> to vector<16x32xf32>
    %261 = arith.subf %253, %260 : vector<16x32xf32>
    %262 = arith.mulf %261, %261 : vector<16x32xf32>
    %cst_101 = arith.constant dense<0.000000e+00> : vector<16xf32>
    %263 = vector.multi_reduction <add>, %262, %cst_101 [1] : vector<16x32xf32> to vector<16xf32>
    %264 = vector.shape_cast %263 : vector<16xf32> to vector<16x1xf32>
    %cst_102 = arith.constant 3.200000e+01 : f32
    %265 = vector.broadcast %cst_102 : f32 to vector<16x1xf32>
    %266 = arith.divf %264, %265 : vector<16x1xf32>
    %267 = vector.broadcast %259 : vector<16x1xf32> to vector<16x32xf32>
    %268 = arith.subf %253, %267 : vector<16x32xf32>
    %cst_103 = arith.constant 9.99999974E-6 : f32
    %269 = vector.broadcast %cst_103 : f32 to vector<16x1xf32>
    %270 = arith.addf %266, %269 : vector<16x1xf32>
    %271 = math.rsqrt %270 : vector<16x1xf32>
    %272 = vector.broadcast %271 : vector<16x1xf32> to vector<16x32xf32>
    %273 = arith.mulf %268, %272 : vector<16x32xf32>
    %274 = vector.broadcast %254 : vector<1x32xf32> to vector<16x32xf32>
    %275 = arith.mulf %273, %274 : vector<16x32xf32>
    %276 = vector.broadcast %255 : vector<1x32xf32> to vector<16x32xf32>
    %277 = arith.addf %275, %276 : vector<16x32xf32>
    %c0_104 = arith.constant 0 : index
    %c0_105 = arith.constant 0 : index
    %278 = vector.load %arg22[%c0_104, %c0_105] : memref<32x64xbf16, #tpu.memory_space<vmem>>, vector<32x64xbf16>
    %c0_106 = arith.constant 0 : index
    %c0_107 = arith.constant 0 : index
    %279 = vector.load %arg23[%c0_106, %c0_107] : memref<1x64xf32, #tpu.memory_space<vmem>>, vector<1x64xf32>
    %c0_108 = arith.constant 0 : index
    %c0_109 = arith.constant 0 : index
    %280 = vector.load %arg24[%c0_108, %c0_109] : memref<64x32xbf16, #tpu.memory_space<vmem>>, vector<64x32xbf16>
    %c0_110 = arith.constant 0 : index
    %c0_111 = arith.constant 0 : index
    %281 = vector.load %arg25[%c0_110, %c0_111] : memref<1x32xf32, #tpu.memory_space<vmem>>, vector<1x32xf32>
    %282 = arith.truncf %277 : vector<16x32xf32> to vector<16x32xbf16>
    %cst_112 = arith.constant dense<0.000000e+00> : vector<16x64xf32>
    %283 = tpu.matmul %282, %278, %cst_112 {dimension_numbers = #tpu.dot_dimension_numbers<[1], [0], [0], [1], [0, 0, 1, 1], [], []>} : vector<16x32xbf16>, vector<32x64xbf16>, vector<16x64xf32> -> vector<16x64xf32>
    %284 = vector.broadcast %279 : vector<1x64xf32> to vector<16x64xf32>
    %285 = arith.addf %283, %284 : vector<16x64xf32>
    %cst_113 = arith.constant 5.000000e-01 : f32
    %286 = vector.broadcast %cst_113 : f32 to vector<16x64xf32>
    %287 = arith.mulf %286, %285 : vector<16x64xf32>
    %cst_114 = arith.constant 0.707106769 : f32
    %288 = vector.broadcast %cst_114 : f32 to vector<16x64xf32>
    %289 = arith.mulf %285, %288 : vector<16x64xf32>
    %cst_115 = arith.constant 0.000000e+00 : f32
    %290 = vector.broadcast %cst_115 : f32 to vector<16x64xf32>
    %291 = arith.cmpf oge, %289, %290 : vector<16x64xf32>
    %cst_116 = arith.constant 1.000000e+00 : f32
    %cst_117 = arith.constant -1.000000e+00 : f32
    %292 = vector.broadcast %cst_116 : f32 to vector<16x64xf32>
    %293 = vector.broadcast %cst_117 : f32 to vector<16x64xf32>
    %294 = arith.select %291, %292, %293 : vector<16x64xi1>, vector<16x64xf32>
    %295 = math.absf %289 : vector<16x64xf32>
    %cst_118 = arith.constant 0.327591091 : f32
    %296 = vector.broadcast %cst_118 : f32 to vector<16x64xf32>
    %297 = arith.mulf %296, %295 : vector<16x64xf32>
    %cst_119 = arith.constant 1.000000e+00 : f32
    %298 = vector.broadcast %cst_119 : f32 to vector<16x64xf32>
    %299 = arith.addf %298, %297 : vector<16x64xf32>
    %cst_120 = arith.constant 1.000000e+00 : f32
    %300 = vector.broadcast %cst_120 : f32 to vector<16x64xf32>
    %301 = arith.divf %300, %299 : vector<16x64xf32>
    %cst_121 = arith.constant 1.06140542 : f32
    %302 = vector.broadcast %cst_121 : f32 to vector<16x64xf32>
    %303 = arith.mulf %302, %301 : vector<16x64xf32>
    %cst_122 = arith.constant -1.45315206 : f32
    %304 = vector.broadcast %cst_122 : f32 to vector<16x64xf32>
    %305 = arith.addf %303, %304 : vector<16x64xf32>
    %306 = arith.mulf %305, %301 : vector<16x64xf32>
    %cst_123 = arith.constant 1.42141378 : f32
    %307 = vector.broadcast %cst_123 : f32 to vector<16x64xf32>
    %308 = arith.addf %306, %307 : vector<16x64xf32>
    %309 = arith.mulf %308, %301 : vector<16x64xf32>
    %cst_124 = arith.constant -0.284496725 : f32
    %310 = vector.broadcast %cst_124 : f32 to vector<16x64xf32>
    %311 = arith.addf %309, %310 : vector<16x64xf32>
    %312 = arith.mulf %311, %301 : vector<16x64xf32>
    %cst_125 = arith.constant 0.254829586 : f32
    %313 = vector.broadcast %cst_125 : f32 to vector<16x64xf32>
    %314 = arith.addf %312, %313 : vector<16x64xf32>
    %315 = arith.mulf %314, %301 : vector<16x64xf32>
    %cst_126 = arith.constant 0.000000e+00 : f32
    %316 = vector.broadcast %cst_126 : f32 to vector<16x64xf32>
    %317 = arith.subf %316, %295 : vector<16x64xf32>
    %318 = arith.mulf %317, %295 : vector<16x64xf32>
    %319 = math.exp %318 : vector<16x64xf32>
    %320 = arith.mulf %315, %319 : vector<16x64xf32>
    %cst_127 = arith.constant 1.000000e+00 : f32
    %321 = vector.broadcast %cst_127 : f32 to vector<16x64xf32>
    %322 = arith.subf %321, %320 : vector<16x64xf32>
    %323 = arith.mulf %294, %322 : vector<16x64xf32>
    %cst_128 = arith.constant 1.000000e+00 : f32
    %324 = vector.broadcast %cst_128 : f32 to vector<16x64xf32>
    %325 = arith.addf %324, %323 : vector<16x64xf32>
    %326 = arith.mulf %287, %325 : vector<16x64xf32>
    %327 = arith.truncf %326 : vector<16x64xf32> to vector<16x64xbf16>
    %cst_129 = arith.constant dense<0.000000e+00> : vector<16x32xf32>
    %328 = tpu.matmul %327, %280, %cst_129 {dimension_numbers = #tpu.dot_dimension_numbers<[1], [0], [0], [1], [0, 0, 1, 1], [], []>} : vector<16x64xbf16>, vector<64x32xbf16>, vector<16x32xf32> -> vector<16x32xf32>
    %329 = vector.broadcast %281 : vector<1x32xf32> to vector<16x32xf32>
    %330 = arith.addf %328, %329 : vector<16x32xf32>
    %331 = arith.addf %277, %330 : vector<16x32xf32>
    %c0_130 = arith.constant 0 : index
    %c0_131 = arith.constant 0 : index
    %332 = vector.load %arg26[%c0_130, %c0_131] : memref<1x32xf32, #tpu.memory_space<vmem>>, vector<1x32xf32>
    %c0_132 = arith.constant 0 : index
    %c0_133 = arith.constant 0 : index
    %333 = vector.load %arg27[%c0_132, %c0_133] : memref<1x32xf32, #tpu.memory_space<vmem>>, vector<1x32xf32>
    %cst_134 = arith.constant dense<0.000000e+00> : vector<16xf32>
    %334 = vector.multi_reduction <add>, %331, %cst_134 [1] : vector<16x32xf32> to vector<16xf32>
    %335 = vector.shape_cast %334 : vector<16xf32> to vector<16x1xf32>
    %cst_135 = arith.constant 3.200000e+01 : f32
    %336 = vector.broadcast %cst_135 : f32 to vector<16x1xf32>
    %337 = arith.divf %335, %336 : vector<16x1xf32>
    %338 = vector.broadcast %337 : vector<16x1xf32> to vector<16x32xf32>
    %339 = arith.subf %331, %338 : vector<16x32xf32>
    %340 = arith.mulf %339, %339 : vector<16x32xf32>
    %cst_136 = arith.constant dense<0.000000e+00> : vector<16xf32>
    %341 = vector.multi_reduction <add>, %340, %cst_136 [1] : vector<16x32xf32> to vector<16xf32>
    %342 = vector.shape_cast %341 : vector<16xf32> to vector<16x1xf32>
    %cst_137 = arith.constant 3.200000e+01 : f32
    %343 = vector.broadcast %cst_137 : f32 to vector<16x1xf32>
    %344 = arith.divf %342, %343 : vector<16x1xf32>
    %345 = vector.broadcast %337 : vector<16x1xf32> to vector<16x32xf32>
    %346 = arith.subf %331, %345 : vector<16x32xf32>
    %cst_138 = arith.constant 9.99999974E-6 : f32
    %347 = vector.broadcast %cst_138 : f32 to vector<16x1xf32>
    %348 = arith.addf %344, %347 : vector<16x1xf32>
    %349 = math.rsqrt %348 : vector<16x1xf32>
    %350 = vector.broadcast %349 : vector<16x1xf32> to vector<16x32xf32>
    %351 = arith.mulf %346, %350 : vector<16x32xf32>
    %352 = vector.broadcast %332 : vector<1x32xf32> to vector<16x32xf32>
    %353 = arith.mulf %351, %352 : vector<16x32xf32>
    %354 = vector.broadcast %333 : vector<1x32xf32> to vector<16x32xf32>
    %355 = arith.addf %353, %354 : vector<16x32xf32>
    %c0_139 = arith.constant 0 : index
    %c0_140 = arith.constant 0 : index
    %356 = vector.load %arg28[%c0_139, %c0_140] : memref<16x32xf32, #tpu.memory_space<vmem>>, vector<16x32xf32>
    tpu.vector_store %arg28[%c0_139, %c0_140], %355 {strides = array<i32>} : memref<16x32xf32, #tpu.memory_space<vmem>>, vector<16x32xf32>,
    return
  }
  func.func @transform_0(%arg0: i32) -> (i32, i32) {
    %c0_i32 = arith.constant 0 : i32
    %c0_i32_0 = arith.constant 0 : i32
    return %arg0, %c0_i32 : i32, i32
  }
  func.func @transform_1(%arg0: i32) -> (i32, i32) {
    %c0_i32 = arith.constant 0 : i32
    %c0_i32_0 = arith.constant 0 : i32
    return %arg0, %c0_i32 : i32, i32
  }
  func.func @transform_2(%arg0: i32) -> (i32, i32) {
    %c0_i32 = arith.constant 0 : i32
    %c0_i32_0 = arith.constant 0 : i32
    %c0_i32_1 = arith.constant 0 : i32
    return %c0_i32, %c0_i32_0 : i32, i32
  }
  func.func @transform_3(%arg0: i32) -> (i32, i32) {
    %c0_i32 = arith.constant 0 : i32
    %c0_i32_0 = arith.constant 0 : i32
    %c0_i32_1 = arith.constant 0 : i32
    return %c0_i32, %c0_i32_0 : i32, i32
  }
  func.func @transform_4(%arg0: i32) -> (i32, i32) {
    %c0_i32 = arith.constant 0 : i32
    %c0_i32_0 = arith.constant 0 : i32
    %c0_i32_1 = arith.constant 0 : i32
    return %c0_i32, %c0_i32_0 : i32, i32
  }
  func.func @transform_5(%arg0: i32) -> (i32, i32) {
    %c0_i32 = arith.constant 0 : i32
    %c0_i32_0 = arith.constant 0 : i32
    %c0_i32_1 = arith.constant 0 : i32
    return %c0_i32, %c0_i32_0 : i32, i32
  }
  func.func @transform_6(%arg0: i32) -> (i32, i32) {
    %c0_i32 = arith.constant 0 : i32
    %c0_i32_0 = arith.constant 0 : i32
    %c0_i32_1 = arith.constant 0 : i32
    return %c0_i32, %c0_i32_0 : i32, i32
  }
  func.func @transform_7(%arg0: i32) -> (i32, i32) {
    %c0_i32 = arith.constant 0 : i32
    %c0_i32_0 = arith.constant 0 : i32
    %c0_i32_1 = arith.constant 0 : i32
    return %c0_i32, %c0_i32_0 : i32, i32
  }
  func.func @transform_8(%arg0: i32) -> (i32, i32) {
    %c0_i32 = arith.constant 0 : i32
    %c0_i32_0 = arith.constant 0 : i32
    %c0_i32_1 = arith.constant 0 : i32
    return %c0_i32, %c0_i32_0 : i32, i32
  }
  func.func @transform_9(%arg0: i32) -> (i32, i32) {
    %c0_i32 = arith.constant 0 : i32
    %c0_i32_0 = arith.constant 0 : i32
    %c0_i32_1 = arith.constant 0 : i32
    return %c0_i32, %c0_i32_0 : i32, i32
  }
  func.func @transform_10(%arg0: i32) -> (i32, i32) {
    %c0_i32 = arith.constant 0 : i32
    %c0_i32_0 = arith.constant 0 : i32
    %c0_i32_1 = arith.constant 0 : i32
    return %c0_i32, %c0_i32_0 : i32, i32
  }
  func.func @transform_11(%arg0: i32) -> (i32, i32) {
    %c0_i32 = arith.constant 0 : i32
    %c0_i32_0 = arith.constant 0 : i32
    %c0_i32_1 = arith.constant 0 : i32
    return %c0_i32, %c0_i32_0 : i32, i32
  }
  func.func @transform_12(%arg0: i32) -> (i32, i32) {
    %c0_i32 = arith.constant 0 : i32
    %c0_i32_0 = arith.constant 0 : i32
    %c0_i32_1 = arith.constant 0 : i32
    return %c0_i32, %c0_i32_0 : i32, i32
  }
  func.func @transform_13(%arg0: i32) -> (i32, i32) {
    %c0_i32 = arith.constant 0 : i32
    %c0_i32_0 = arith.constant 0 : i32
    %c0_i32_1 = arith.constant 0 : i32
    return %c0_i32, %c0_i32_0 : i32, i32
  }
  func.func @transform_14(%arg0: i32) -> (i32, i32) {
    %c0_i32 = arith.constant 0 : i32
    %c0_i32_0 = arith.constant 0 : i32
    %c0_i32_1 = arith.constant 0 : i32
    return %c0_i32, %c0_i32_0 : i32, i32
  }
  func.func @transform_15(%arg0: i32) -> (i32, i32) {
    %c0_i32 = arith.constant 0 : i32
    %c0_i32_0 = arith.constant 0 : i32
    %c0_i32_1 = arith.constant 0 : i32
    return %c0_i32, %c0_i32_0 : i32, i32
  }
  func.func @transform_16(%arg0: i32) -> (i32, i32) {
    %c0_i32 = arith.constant 0 : i32
    %c0_i32_0 = arith.constant 0 : i32
    %c0_i32_1 = arith.constant 0 : i32
    return %c0_i32, %c0_i32_0 : i32, i32
  }
  func.func @transform_17(%arg0: i32) -> (i32, i32) {
    %c0_i32 = arith.constant 0 : i32
    %c0_i32_0 = arith.constant 0 : i32
    %c0_i32_1 = arith.constant 0 : i32
    return %c0_i32, %c0_i32_0 : i32, i32
  }
  func.func @transform_18(%arg0: i32) -> (i32, i32) {
    %c0_i32 = arith.constant 0 : i32
    %c0_i32_0 = arith.constant 0 : i32
    %c0_i32_1 = arith.constant 0 : i32
    return %c0_i32, %c0_i32_0 : i32, i32
  }
  func.func @transform_19(%arg0: i32) -> (i32, i32) {
    %c0_i32 = arith.constant 0 : i32
    %c0_i32_0 = arith.constant 0 : i32
    %c0_i32_1 = arith.constant 0 : i32
    return %c0_i32, %c0_i32_0 : i32, i32
  }
  func.func @transform_20(%arg0: i32) -> (i32, i32) {
    %c0_i32 = arith.constant 0 : i32
    %c0_i32_0 = arith.constant 0 : i32
    %c0_i32_1 = arith.constant 0 : i32
    return %c0_i32, %c0_i32_0 : i32, i32
  }
  func.func @transform_21(%arg0: i32) -> (i32, i32) {
    %c0_i32 = arith.constant 0 : i32
    %c0_i32_0 = arith.constant 0 : i32
    %c0_i32_1 = arith.constant 0 : i32
    return %c0_i32, %c0_i32_0 : i32, i32
  }
  func.func @transform_22(%arg0: i32) -> (i32, i32) {
    %c0_i32 = arith.constant 0 : i32
    %c0_i32_0 = arith.constant 0 : i32
    %c0_i32_1 = arith.constant 0 : i32
    return %c0_i32, %c0_i32_0 : i32, i32
  }
  func.func @transform_23(%arg0: i32) -> (i32, i32) {
    %c0_i32 = arith.constant 0 : i32
    %c0_i32_0 = arith.constant 0 : i32
    %c0_i32_1 = arith.constant 0 : i32
    return %c0_i32, %c0_i32_0 : i32, i32
  }
  func.func @transform_24(%arg0: i32) -> (i32, i32) {
    %c0_i32 = arith.constant 0 : i32
    %c0_i32_0 = arith.constant 0 : i32
    %c0_i32_1 = arith.constant 0 : i32
    return %c0_i32, %c0_i32_0 : i32, i32
  }
  func.func @transform_25(%arg0: i32) -> (i32, i32) {
    %c0_i32 = arith.constant 0 : i32
    %c0_i32_0 = arith.constant 0 : i32
    %c0_i32_1 = arith.constant 0 : i32
    return %c0_i32, %c0_i32_0 : i32, i32
  }
  func.func @transform_26(%arg0: i32) -> (i32, i32) {
    %c0_i32 = arith.constant 0 : i32
    %c0_i32_0 = arith.constant 0 : i32
    %c0_i32_1 = arith.constant 0 : i32
    return %c0_i32, %c0_i32_0 : i32, i32
  }
  func.func @transform_27(%arg0: i32) -> (i32, i32) {
    %c0_i32 = arith.constant 0 : i32
    %c0_i32_0 = arith.constant 0 : i32
    return %arg0, %c0_i32 : i32, i32
  }
}

module attributes {stable_mosaic.version = 11 : i64} {
  func.func @_embed_kernel(%arg0: memref<16x12xf32, #tpu.memory_space<vmem>>, %arg1: memref<8x32xf32, #tpu.memory_space<vmem>>, %arg2: memref<12x32xbf16, #tpu.memory_space<vmem>>, %arg3: memref<1x32xf32, #tpu.memory_space<vmem>>, %arg4: memref<1x32xf32, #tpu.memory_space<vmem>>, %arg5: memref<16x32xf32, #tpu.memory_space<vmem>>) attributes {dimension_semantics = [], scalar_prefetch = 0 : i64, scratch_operands = 0 : i64, tpu.core_type = #tpu.core_type<tc>} {
    %c0 = arith.constant 0 : index
    %c0_0 = arith.constant 0 : index
    %0 = vector.load %arg0[%c0, %c0_0] : memref<16x12xf32, #tpu.memory_space<vmem>>, vector<16x12xf32>
    %1 = arith.truncf %0 : vector<16x12xf32> to vector<16x12xbf16>
    %c0_1 = arith.constant 0 : index
    %c0_2 = arith.constant 0 : index
    %2 = vector.load %arg2[%c0_1, %c0_2] : memref<12x32xbf16, #tpu.memory_space<vmem>>, vector<12x32xbf16>
    %cst = arith.constant dense<0.000000e+00> : vector<16x32xf32>
    %3 = tpu.matmul %1, %2, %cst {dimension_numbers = #tpu.dot_dimension_numbers<[1], [0], [0], [1], [0, 0, 1, 1], [], []>} : vector<16x12xbf16>, vector<12x32xbf16>, vector<16x32xf32> -> vector<16x32xf32>
    %c0_3 = arith.constant 0 : index
    %c0_4 = arith.constant 0 : index
    %4 = vector.load %arg1[%c0_3, %c0_4] : memref<8x32xf32, #tpu.memory_space<vmem>>, vector<8x32xf32>
    %5 = tpu.concatenate %4, %4 in 0 : vector<8x32xf32>, vector<8x32xf32> -> vector<16x32xf32>
    %6 = arith.addf %3, %5 : vector<16x32xf32>
    %c0_5 = arith.constant 0 : index
    %c0_6 = arith.constant 0 : index
    %7 = vector.load %arg3[%c0_5, %c0_6] : memref<1x32xf32, #tpu.memory_space<vmem>>, vector<1x32xf32>
    %c0_7 = arith.constant 0 : index
    %c0_8 = arith.constant 0 : index
    %8 = vector.load %arg4[%c0_7, %c0_8] : memref<1x32xf32, #tpu.memory_space<vmem>>, vector<1x32xf32>
    %cst_9 = arith.constant dense<0.000000e+00> : vector<16xf32>
    %9 = vector.multi_reduction <add>, %6, %cst_9 [1] : vector<16x32xf32> to vector<16xf32>
    %10 = vector.shape_cast %9 : vector<16xf32> to vector<16x1xf32>
    %cst_10 = arith.constant 3.200000e+01 : f32
    %11 = vector.broadcast %cst_10 : f32 to vector<16x1xf32>
    %12 = arith.divf %10, %11 : vector<16x1xf32>
    %13 = vector.broadcast %12 : vector<16x1xf32> to vector<16x32xf32>
    %14 = arith.subf %6, %13 : vector<16x32xf32>
    %15 = arith.mulf %14, %14 : vector<16x32xf32>
    %cst_11 = arith.constant dense<0.000000e+00> : vector<16xf32>
    %16 = vector.multi_reduction <add>, %15, %cst_11 [1] : vector<16x32xf32> to vector<16xf32>
    %17 = vector.shape_cast %16 : vector<16xf32> to vector<16x1xf32>
    %cst_12 = arith.constant 3.200000e+01 : f32
    %18 = vector.broadcast %cst_12 : f32 to vector<16x1xf32>
    %19 = arith.divf %17, %18 : vector<16x1xf32>
    %20 = vector.broadcast %12 : vector<16x1xf32> to vector<16x32xf32>
    %21 = arith.subf %6, %20 : vector<16x32xf32>
    %cst_13 = arith.constant 9.99999974E-6 : f32
    %22 = vector.broadcast %cst_13 : f32 to vector<16x1xf32>
    %23 = arith.addf %19, %22 : vector<16x1xf32>
    %24 = math.rsqrt %23 : vector<16x1xf32>
    %25 = vector.broadcast %24 : vector<16x1xf32> to vector<16x32xf32>
    %26 = arith.mulf %21, %25 : vector<16x32xf32>
    %27 = vector.broadcast %7 : vector<1x32xf32> to vector<16x32xf32>
    %28 = arith.mulf %26, %27 : vector<16x32xf32>
    %29 = vector.broadcast %8 : vector<1x32xf32> to vector<16x32xf32>
    %30 = arith.addf %28, %29 : vector<16x32xf32>
    %c0_14 = arith.constant 0 : index
    %c0_15 = arith.constant 0 : index
    %31 = vector.load %arg5[%c0_14, %c0_15] : memref<16x32xf32, #tpu.memory_space<vmem>>, vector<16x32xf32>
    tpu.vector_store %arg5[%c0_14, %c0_15], %30 {strides = array<i32>} : memref<16x32xf32, #tpu.memory_space<vmem>>, vector<16x32xf32>,
    return
  }
}

module attributes {stable_mosaic.version = 11 : i64} {
  func.func @_merge_kernel(%arg0: memref<8x64xf32, #tpu.memory_space<vmem>>, %arg1: memref<1x64xf32, #tpu.memory_space<vmem>>, %arg2: memref<1x64xf32, #tpu.memory_space<vmem>>, %arg3: memref<64x32xbf16, #tpu.memory_space<vmem>>, %arg4: memref<1x32xf32, #tpu.memory_space<vmem>>, %arg5: memref<8x32xf32, #tpu.memory_space<vmem>>) attributes {dimension_semantics = [], scalar_prefetch = 0 : i64, scratch_operands = 0 : i64, tpu.core_type = #tpu.core_type<tc>} {
    %c0 = arith.constant 0 : index
    %c0_0 = arith.constant 0 : index
    %0 = vector.load %arg0[%c0, %c0_0] : memref<8x64xf32, #tpu.memory_space<vmem>>, vector<8x64xf32>
    %c0_1 = arith.constant 0 : index
    %c0_2 = arith.constant 0 : index
    %1 = vector.load %arg1[%c0_1, %c0_2] : memref<1x64xf32, #tpu.memory_space<vmem>>, vector<1x64xf32>
    %c0_3 = arith.constant 0 : index
    %c0_4 = arith.constant 0 : index
    %2 = vector.load %arg2[%c0_3, %c0_4] : memref<1x64xf32, #tpu.memory_space<vmem>>, vector<1x64xf32>
    %cst = arith.constant dense<0.000000e+00> : vector<8xf32>
    %3 = vector.multi_reduction <add>, %0, %cst [1] : vector<8x64xf32> to vector<8xf32>
    %4 = vector.shape_cast %3 : vector<8xf32> to vector<8x1xf32>
    %cst_5 = arith.constant 6.400000e+01 : f32
    %5 = vector.broadcast %cst_5 : f32 to vector<8x1xf32>
    %6 = arith.divf %4, %5 : vector<8x1xf32>
    %7 = vector.broadcast %6 : vector<8x1xf32> to vector<8x64xf32>
    %8 = arith.subf %0, %7 : vector<8x64xf32>
    %9 = arith.mulf %8, %8 : vector<8x64xf32>
    %cst_6 = arith.constant dense<0.000000e+00> : vector<8xf32>
    %10 = vector.multi_reduction <add>, %9, %cst_6 [1] : vector<8x64xf32> to vector<8xf32>
    %11 = vector.shape_cast %10 : vector<8xf32> to vector<8x1xf32>
    %cst_7 = arith.constant 6.400000e+01 : f32
    %12 = vector.broadcast %cst_7 : f32 to vector<8x1xf32>
    %13 = arith.divf %11, %12 : vector<8x1xf32>
    %14 = vector.broadcast %6 : vector<8x1xf32> to vector<8x64xf32>
    %15 = arith.subf %0, %14 : vector<8x64xf32>
    %cst_8 = arith.constant 9.99999974E-6 : f32
    %16 = vector.broadcast %cst_8 : f32 to vector<8x1xf32>
    %17 = arith.addf %13, %16 : vector<8x1xf32>
    %18 = math.rsqrt %17 : vector<8x1xf32>
    %19 = vector.broadcast %18 : vector<8x1xf32> to vector<8x64xf32>
    %20 = arith.mulf %15, %19 : vector<8x64xf32>
    %21 = vector.broadcast %1 : vector<1x64xf32> to vector<8x64xf32>
    %22 = arith.mulf %20, %21 : vector<8x64xf32>
    %23 = vector.broadcast %2 : vector<1x64xf32> to vector<8x64xf32>
    %24 = arith.addf %22, %23 : vector<8x64xf32>
    %c0_9 = arith.constant 0 : index
    %c0_10 = arith.constant 0 : index
    %25 = vector.load %arg3[%c0_9, %c0_10] : memref<64x32xbf16, #tpu.memory_space<vmem>>, vector<64x32xbf16>
    %c0_11 = arith.constant 0 : index
    %c0_12 = arith.constant 0 : index
    %26 = vector.load %arg4[%c0_11, %c0_12] : memref<1x32xf32, #tpu.memory_space<vmem>>, vector<1x32xf32>
    %27 = arith.truncf %24 : vector<8x64xf32> to vector<8x64xbf16>
    %cst_13 = arith.constant dense<0.000000e+00> : vector<8x32xf32>
    %28 = tpu.matmul %27, %25, %cst_13 {dimension_numbers = #tpu.dot_dimension_numbers<[1], [0], [0], [1], [0, 0, 1, 1], [], []>} : vector<8x64xbf16>, vector<64x32xbf16>, vector<8x32xf32> -> vector<8x32xf32>
    %29 = vector.broadcast %26 : vector<1x32xf32> to vector<8x32xf32>
    %30 = arith.addf %28, %29 : vector<8x32xf32>
    %c0_14 = arith.constant 0 : index
    %c0_15 = arith.constant 0 : index
    %31 = vector.load %arg5[%c0_14, %c0_15] : memref<8x32xf32, #tpu.memory_space<vmem>>, vector<8x32xf32>
    tpu.vector_store %arg5[%c0_14, %c0_15], %30 {strides = array<i32>} : memref<8x32xf32, #tpu.memory_space<vmem>>, vector<8x32xf32>,
    return
  }
}

module attributes {stable_mosaic.version = 11 : i64} {
  func.func @_tsa_kernel(%arg0: i32, %arg1: memref<8x32xf32, #tpu.memory_space<vmem>>, %arg2: memref<2x32xf32, #tpu.memory_space<vmem>>, %arg3: memref<8x8xf32, #tpu.memory_space<vmem>>, %arg4: memref<2x8xf32, #tpu.memory_space<vmem>>, %arg5: memref<8x2xf32, #tpu.memory_space<vmem>>, %arg6: memref<32x128xbf16, #tpu.memory_space<vmem>>, %arg7: memref<1x128xf32, #tpu.memory_space<vmem>>, %arg8: memref<1x32xf32, #tpu.memory_space<vmem>>, %arg9: memref<1x32xf32, #tpu.memory_space<vmem>>, %arg10: memref<32x64xbf16, #tpu.memory_space<vmem>>, %arg11: memref<1x64xf32, #tpu.memory_space<vmem>>, %arg12: memref<64x32xbf16, #tpu.memory_space<vmem>>, %arg13: memref<1x32xf32, #tpu.memory_space<vmem>>, %arg14: memref<1x32xf32, #tpu.memory_space<vmem>>, %arg15: memref<1x32xf32, #tpu.memory_space<vmem>>, %arg16: memref<32x128xbf16, #tpu.memory_space<vmem>>, %arg17: memref<1x128xf32, #tpu.memory_space<vmem>>, %arg18: memref<32x128xbf16, #tpu.memory_space<vmem>>, %arg19: memref<1x128xf32, #tpu.memory_space<vmem>>, %arg20: memref<1x32xf32, #tpu.memory_space<vmem>>, %arg21: memref<1x32xf32, #tpu.memory_space<vmem>>, %arg22: memref<32x64xbf16, #tpu.memory_space<vmem>>, %arg23: memref<1x64xf32, #tpu.memory_space<vmem>>, %arg24: memref<64x32xbf16, #tpu.memory_space<vmem>>, %arg25: memref<1x32xf32, #tpu.memory_space<vmem>>, %arg26: memref<1x32xf32, #tpu.memory_space<vmem>>, %arg27: memref<1x32xf32, #tpu.memory_space<vmem>>, %arg28: memref<8x32xf32, #tpu.memory_space<vmem>>) attributes {dimension_semantics = [#tpu.dimension_semantics<parallel>], iteration_bounds = array<i64: 1>, scalar_prefetch = 0 : i64, scratch_operands = 0 : i64, tpu.core_type = #tpu.core_type<tc>, window_params = [{transform_indices = @transform_0, window_bounds = array<i64: 8, 32>}, {transform_indices = @transform_1, window_bounds = array<i64: 2, 32>}, {pipeline_mode = #tpu.pipeline_mode<synchronous>, transform_indices = @transform_2, window_bounds = array<i64: 8, 8>}, {pipeline_mode = #tpu.pipeline_mode<synchronous>, transform_indices = @transform_3, window_bounds = array<i64: 2, 8>}, {pipeline_mode = #tpu.pipeline_mode<synchronous>, transform_indices = @transform_4, window_bounds = array<i64: 8, 2>}, {pipeline_mode = #tpu.pipeline_mode<synchronous>, transform_indices = @transform_5, window_bounds = array<i64: 32, 128>}, {pipeline_mode = #tpu.pipeline_mode<synchronous>, transform_indices = @transform_6, window_bounds = array<i64: 1, 128>}, {pipeline_mode = #tpu.pipeline_mode<synchronous>, transform_indices = @transform_7, window_bounds = array<i64: 1, 32>}, {pipeline_mode = #tpu.pipeline_mode<synchronous>, transform_indices = @transform_8, window_bounds = array<i64: 1, 32>}, {pipeline_mode = #tpu.pipeline_mode<synchronous>, transform_indices = @transform_9, window_bounds = array<i64: 32, 64>}, {pipeline_mode = #tpu.pipeline_mode<synchronous>, transform_indices = @transform_10, window_bounds = array<i64: 1, 64>}, {pipeline_mode = #tpu.pipeline_mode<synchronous>, transform_indices = @transform_11, window_bounds = array<i64: 64, 32>}, {pipeline_mode = #tpu.pipeline_mode<synchronous>, transform_indices = @transform_12, window_bounds = array<i64: 1, 32>}, {pipeline_mode = #tpu.pipeline_mode<synchronous>, transform_indices = @transform_13, window_bounds = array<i64: 1, 32>}, {pipeline_mode = #tpu.pipeline_mode<synchronous>, transform_indices = @transform_14, window_bounds = array<i64: 1, 32>}, {pipeline_mode = #tpu.pipeline_mode<synchronous>, transform_indices = @transform_15, window_bounds = array<i64: 32, 128>}, {pipeline_mode = #tpu.pipeline_mode<synchronous>, transform_indices = @transform_16, window_bounds = array<i64: 1, 128>}, {pipeline_mode = #tpu.pipeline_mode<synchronous>, transform_indices = @transform_17, window_bounds = array<i64: 32, 128>}, {pipeline_mode = #tpu.pipeline_mode<synchronous>, transform_indices = @transform_18, window_bounds = array<i64: 1, 128>}, {pipeline_mode = #tpu.pipeline_mode<synchronous>, transform_indices = @transform_19, window_bounds = array<i64: 1, 32>}, {pipeline_mode = #tpu.pipeline_mode<synchronous>, transform_indices = @transform_20, window_bounds = array<i64: 1, 32>}, {pipeline_mode = #tpu.pipeline_mode<synchronous>, transform_indices = @transform_21, window_bounds = array<i64: 32, 64>}, {pipeline_mode = #tpu.pipeline_mode<synchronous>, transform_indices = @transform_22, window_bounds = array<i64: 1, 64>}, {pipeline_mode = #tpu.pipeline_mode<synchronous>, transform_indices = @transform_23, window_bounds = array<i64: 64, 32>}, {pipeline_mode = #tpu.pipeline_mode<synchronous>, transform_indices = @transform_24, window_bounds = array<i64: 1, 32>}, {pipeline_mode = #tpu.pipeline_mode<synchronous>, transform_indices = @transform_25, window_bounds = array<i64: 1, 32>}, {pipeline_mode = #tpu.pipeline_mode<synchronous>, transform_indices = @transform_26, window_bounds = array<i64: 1, 32>}, {transform_indices = @transform_27, window_bounds = array<i64: 8, 32>}]} {
    %c0 = arith.constant 0 : index
    %c0_0 = arith.constant 0 : index
    %0 = vector.load %arg1[%c0, %c0_0] : memref<8x32xf32, #tpu.memory_space<vmem>>, vector<8x32xf32>
    %c0_1 = arith.constant 0 : index
    %c0_2 = arith.constant 0 : index
    %1 = vector.load %arg2[%c0_1, %c0_2] : memref<2x32xf32, #tpu.memory_space<vmem>>, vector<2x32xf32>
    %c0_3 = arith.constant 0 : index
    %c0_4 = arith.constant 0 : index
    %2 = vector.load %arg3[%c0_3, %c0_4] : memref<8x8xf32, #tpu.memory_space<vmem>>, vector<8x8xf32>
    %c0_5 = arith.constant 0 : index
    %c0_6 = arith.constant 0 : index
    %3 = vector.load %arg6[%c0_5, %c0_6] : memref<32x128xbf16, #tpu.memory_space<vmem>>, vector<32x128xbf16>
    %c0_7 = arith.constant 0 : index
    %c0_8 = arith.constant 0 : index
    %4 = vector.load %arg7[%c0_7, %c0_8] : memref<1x128xf32, #tpu.memory_space<vmem>>, vector<1x128xf32>
    %5 = vector.extract_strided_slice %3 {offsets = [0, 96], sizes = [32, 32], strides = [1, 1]} : vector<32x128xbf16> to vector<32x32xbf16>
    %6 = vector.extract_strided_slice %4 {offsets = [0, 96], sizes = [1, 32], strides = [1, 1]} : vector<1x128xf32> to vector<1x32xf32>
    %7 = vector.extract_strided_slice %3 {offsets = [0, 64], sizes = [32, 32], strides = [1, 1]} : vector<32x128xbf16> to vector<32x32xbf16>
    %8 = vector.extract_strided_slice %4 {offsets = [0, 64], sizes = [1, 32], strides = [1, 1]} : vector<1x128xf32> to vector<1x32xf32>
    %9 = arith.truncf %0 : vector<8x32xf32> to vector<8x32xbf16>
    %cst = arith.constant dense<0.000000e+00> : vector<8x32xf32>
    %10 = tpu.matmul %9, %7, %cst {dimension_numbers = #tpu.dot_dimension_numbers<[1], [0], [0], [1], [0, 0, 1, 1], [], []>} : vector<8x32xbf16>, vector<32x32xbf16>, vector<8x32xf32> -> vector<8x32xf32>
    %11 = vector.broadcast %8 : vector<1x32xf32> to vector<8x32xf32>
    %12 = arith.addf %10, %11 : vector<8x32xf32>
    %cst_9 = arith.constant -5.000000e-01 : f32
    %13 = vector.broadcast %cst_9 : f32 to vector<8x8xf32>
    %14 = arith.cmpf oge, %2, %13 : vector<8x8xf32>
    %cst_10 = arith.constant 1.000000e+00 : f32
    %cst_11 = arith.constant 0.000000e+00 : f32
    %15 = vector.broadcast %cst_10 : f32 to vector<8x8xf32>
    %16 = vector.broadcast %cst_11 : f32 to vector<8x8xf32>
    %17 = arith.select %14, %15, %16 : vector<8x8xi1>, vector<8x8xf32>
    %18 = arith.truncf %17 : vector<8x8xf32> to vector<8x8xbf16>
    %19 = arith.truncf %12 : vector<8x32xf32> to vector<8x32xbf16>
    %cst_12 = arith.constant dense<0.000000e+00> : vector<8x32xf32>
    %20 = tpu.matmul %18, %19, %cst_12 {dimension_numbers = #tpu.dot_dimension_numbers<[1], [0], [0], [1], [0, 0, 1, 1], [], []>} : vector<8x8xbf16>, vector<8x32xbf16>, vector<8x32xf32> -> vector<8x32xf32>
    %21 = arith.truncf %20 : vector<8x32xf32> to vector<8x32xbf16>
    %cst_13 = arith.constant dense<0.000000e+00> : vector<8x32xf32>
    %22 = tpu.matmul %21, %5, %cst_13 {dimension_numbers = #tpu.dot_dimension_numbers<[1], [0], [0], [1], [0, 0, 1, 1], [], []>} : vector<8x32xbf16>, vector<32x32xbf16>, vector<8x32xf32> -> vector<8x32xf32>
    %23 = vector.broadcast %6 : vector<1x32xf32> to vector<8x32xf32>
    %24 = arith.addf %22, %23 : vector<8x32xf32>
    %25 = arith.addf %0, %24 : vector<8x32xf32>
    %c0_14 = arith.constant 0 : index
    %c0_15 = arith.constant 0 : index
    %26 = vector.load %arg8[%c0_14, %c0_15] : memref<1x32xf32, #tpu.memory_space<vmem>>, vector<1x32xf32>
    %c0_16 = arith.constant 0 : index
    %c0_17 = arith.constant 0 : index
    %27 = vector.load %arg9[%c0_16, %c0_17] : memref<1x32xf32, #tpu.memory_space<vmem>>, vector<1x32xf32>
    %cst_18 = arith.constant dense<0.000000e+00> : vector<8xf32>
    %28 = vector.multi_reduction <add>, %25, %cst_18 [1] : vector<8x32xf32> to vector<8xf32>
    %29 = vector.shape_cast %28 : vector<8xf32> to vector<8x1xf32>
    %cst_19 = arith.constant 3.200000e+01 : f32
    %30 = vector.broadcast %cst_19 : f32 to vector<8x1xf32>
    %31 = arith.divf %29, %30 : vector<8x1xf32>
    %32 = vector.broadcast %31 : vector<8x1xf32> to vector<8x32xf32>
    %33 = arith.subf %25, %32 : vector<8x32xf32>
    %34 = arith.mulf %33, %33 : vector<8x32xf32>
    %cst_20 = arith.constant dense<0.000000e+00> : vector<8xf32>
    %35 = vector.multi_reduction <add>, %34, %cst_20 [1] : vector<8x32xf32> to vector<8xf32>
    %36 = vector.shape_cast %35 : vector<8xf32> to vector<8x1xf32>
    %cst_21 = arith.constant 3.200000e+01 : f32
    %37 = vector.broadcast %cst_21 : f32 to vector<8x1xf32>
    %38 = arith.divf %36, %37 : vector<8x1xf32>
    %39 = vector.broadcast %31 : vector<8x1xf32> to vector<8x32xf32>
    %40 = arith.subf %25, %39 : vector<8x32xf32>
    %cst_22 = arith.constant 9.99999974E-6 : f32
    %41 = vector.broadcast %cst_22 : f32 to vector<8x1xf32>
    %42 = arith.addf %38, %41 : vector<8x1xf32>
    %43 = math.rsqrt %42 : vector<8x1xf32>
    %44 = vector.broadcast %43 : vector<8x1xf32> to vector<8x32xf32>
    %45 = arith.mulf %40, %44 : vector<8x32xf32>
    %46 = vector.broadcast %26 : vector<1x32xf32> to vector<8x32xf32>
    %47 = arith.mulf %45, %46 : vector<8x32xf32>
    %48 = vector.broadcast %27 : vector<1x32xf32> to vector<8x32xf32>
    %49 = arith.addf %47, %48 : vector<8x32xf32>
    %c0_23 = arith.constant 0 : index
    %c0_24 = arith.constant 0 : index
    %50 = vector.load %arg10[%c0_23, %c0_24] : memref<32x64xbf16, #tpu.memory_space<vmem>>, vector<32x64xbf16>
    %c0_25 = arith.constant 0 : index
    %c0_26 = arith.constant 0 : index
    %51 = vector.load %arg11[%c0_25, %c0_26] : memref<1x64xf32, #tpu.memory_space<vmem>>, vector<1x64xf32>
    %c0_27 = arith.constant 0 : index
    %c0_28 = arith.constant 0 : index
    %52 = vector.load %arg12[%c0_27, %c0_28] : memref<64x32xbf16, #tpu.memory_space<vmem>>, vector<64x32xbf16>
    %c0_29 = arith.constant 0 : index
    %c0_30 = arith.constant 0 : index
    %53 = vector.load %arg13[%c0_29, %c0_30] : memref<1x32xf32, #tpu.memory_space<vmem>>, vector<1x32xf32>
    %54 = arith.truncf %49 : vector<8x32xf32> to vector<8x32xbf16>
    %cst_31 = arith.constant dense<0.000000e+00> : vector<8x64xf32>
    %55 = tpu.matmul %54, %50, %cst_31 {dimension_numbers = #tpu.dot_dimension_numbers<[1], [0], [0], [1], [0, 0, 1, 1], [], []>} : vector<8x32xbf16>, vector<32x64xbf16>, vector<8x64xf32> -> vector<8x64xf32>
    %56 = vector.broadcast %51 : vector<1x64xf32> to vector<8x64xf32>
    %57 = arith.addf %55, %56 : vector<8x64xf32>
    %cst_32 = arith.constant 5.000000e-01 : f32
    %58 = vector.broadcast %cst_32 : f32 to vector<8x64xf32>
    %59 = arith.mulf %58, %57 : vector<8x64xf32>
    %cst_33 = arith.constant 0.707106769 : f32
    %60 = vector.broadcast %cst_33 : f32 to vector<8x64xf32>
    %61 = arith.mulf %57, %60 : vector<8x64xf32>
    %cst_34 = arith.constant 0.000000e+00 : f32
    %62 = vector.broadcast %cst_34 : f32 to vector<8x64xf32>
    %63 = arith.cmpf oge, %61, %62 : vector<8x64xf32>
    %cst_35 = arith.constant 1.000000e+00 : f32
    %cst_36 = arith.constant -1.000000e+00 : f32
    %64 = vector.broadcast %cst_35 : f32 to vector<8x64xf32>
    %65 = vector.broadcast %cst_36 : f32 to vector<8x64xf32>
    %66 = arith.select %63, %64, %65 : vector<8x64xi1>, vector<8x64xf32>
    %67 = math.absf %61 : vector<8x64xf32>
    %cst_37 = arith.constant 0.327591091 : f32
    %68 = vector.broadcast %cst_37 : f32 to vector<8x64xf32>
    %69 = arith.mulf %68, %67 : vector<8x64xf32>
    %cst_38 = arith.constant 1.000000e+00 : f32
    %70 = vector.broadcast %cst_38 : f32 to vector<8x64xf32>
    %71 = arith.addf %70, %69 : vector<8x64xf32>
    %cst_39 = arith.constant 1.000000e+00 : f32
    %72 = vector.broadcast %cst_39 : f32 to vector<8x64xf32>
    %73 = arith.divf %72, %71 : vector<8x64xf32>
    %cst_40 = arith.constant 1.06140542 : f32
    %74 = vector.broadcast %cst_40 : f32 to vector<8x64xf32>
    %75 = arith.mulf %74, %73 : vector<8x64xf32>
    %cst_41 = arith.constant -1.45315206 : f32
    %76 = vector.broadcast %cst_41 : f32 to vector<8x64xf32>
    %77 = arith.addf %75, %76 : vector<8x64xf32>
    %78 = arith.mulf %77, %73 : vector<8x64xf32>
    %cst_42 = arith.constant 1.42141378 : f32
    %79 = vector.broadcast %cst_42 : f32 to vector<8x64xf32>
    %80 = arith.addf %78, %79 : vector<8x64xf32>
    %81 = arith.mulf %80, %73 : vector<8x64xf32>
    %cst_43 = arith.constant -0.284496725 : f32
    %82 = vector.broadcast %cst_43 : f32 to vector<8x64xf32>
    %83 = arith.addf %81, %82 : vector<8x64xf32>
    %84 = arith.mulf %83, %73 : vector<8x64xf32>
    %cst_44 = arith.constant 0.254829586 : f32
    %85 = vector.broadcast %cst_44 : f32 to vector<8x64xf32>
    %86 = arith.addf %84, %85 : vector<8x64xf32>
    %87 = arith.mulf %86, %73 : vector<8x64xf32>
    %cst_45 = arith.constant 0.000000e+00 : f32
    %88 = vector.broadcast %cst_45 : f32 to vector<8x64xf32>
    %89 = arith.subf %88, %67 : vector<8x64xf32>
    %90 = arith.mulf %89, %67 : vector<8x64xf32>
    %91 = math.exp %90 : vector<8x64xf32>
    %92 = arith.mulf %87, %91 : vector<8x64xf32>
    %cst_46 = arith.constant 1.000000e+00 : f32
    %93 = vector.broadcast %cst_46 : f32 to vector<8x64xf32>
    %94 = arith.subf %93, %92 : vector<8x64xf32>
    %95 = arith.mulf %66, %94 : vector<8x64xf32>
    %cst_47 = arith.constant 1.000000e+00 : f32
    %96 = vector.broadcast %cst_47 : f32 to vector<8x64xf32>
    %97 = arith.addf %96, %95 : vector<8x64xf32>
    %98 = arith.mulf %59, %97 : vector<8x64xf32>
    %99 = arith.truncf %98 : vector<8x64xf32> to vector<8x64xbf16>
    %cst_48 = arith.constant dense<0.000000e+00> : vector<8x32xf32>
    %100 = tpu.matmul %99, %52, %cst_48 {dimension_numbers = #tpu.dot_dimension_numbers<[1], [0], [0], [1], [0, 0, 1, 1], [], []>} : vector<8x64xbf16>, vector<64x32xbf16>, vector<8x32xf32> -> vector<8x32xf32>
    %101 = vector.broadcast %53 : vector<1x32xf32> to vector<8x32xf32>
    %102 = arith.addf %100, %101 : vector<8x32xf32>
    %103 = arith.addf %49, %102 : vector<8x32xf32>
    %c0_49 = arith.constant 0 : index
    %c0_50 = arith.constant 0 : index
    %104 = vector.load %arg14[%c0_49, %c0_50] : memref<1x32xf32, #tpu.memory_space<vmem>>, vector<1x32xf32>
    %c0_51 = arith.constant 0 : index
    %c0_52 = arith.constant 0 : index
    %105 = vector.load %arg15[%c0_51, %c0_52] : memref<1x32xf32, #tpu.memory_space<vmem>>, vector<1x32xf32>
    %cst_53 = arith.constant dense<0.000000e+00> : vector<8xf32>
    %106 = vector.multi_reduction <add>, %103, %cst_53 [1] : vector<8x32xf32> to vector<8xf32>
    %107 = vector.shape_cast %106 : vector<8xf32> to vector<8x1xf32>
    %cst_54 = arith.constant 3.200000e+01 : f32
    %108 = vector.broadcast %cst_54 : f32 to vector<8x1xf32>
    %109 = arith.divf %107, %108 : vector<8x1xf32>
    %110 = vector.broadcast %109 : vector<8x1xf32> to vector<8x32xf32>
    %111 = arith.subf %103, %110 : vector<8x32xf32>
    %112 = arith.mulf %111, %111 : vector<8x32xf32>
    %cst_55 = arith.constant dense<0.000000e+00> : vector<8xf32>
    %113 = vector.multi_reduction <add>, %112, %cst_55 [1] : vector<8x32xf32> to vector<8xf32>
    %114 = vector.shape_cast %113 : vector<8xf32> to vector<8x1xf32>
    %cst_56 = arith.constant 3.200000e+01 : f32
    %115 = vector.broadcast %cst_56 : f32 to vector<8x1xf32>
    %116 = arith.divf %114, %115 : vector<8x1xf32>
    %117 = vector.broadcast %109 : vector<8x1xf32> to vector<8x32xf32>
    %118 = arith.subf %103, %117 : vector<8x32xf32>
    %cst_57 = arith.constant 9.99999974E-6 : f32
    %119 = vector.broadcast %cst_57 : f32 to vector<8x1xf32>
    %120 = arith.addf %116, %119 : vector<8x1xf32>
    %121 = math.rsqrt %120 : vector<8x1xf32>
    %122 = vector.broadcast %121 : vector<8x1xf32> to vector<8x32xf32>
    %123 = arith.mulf %118, %122 : vector<8x32xf32>
    %124 = vector.broadcast %104 : vector<1x32xf32> to vector<8x32xf32>
    %125 = arith.mulf %123, %124 : vector<8x32xf32>
    %126 = vector.broadcast %105 : vector<1x32xf32> to vector<8x32xf32>
    %127 = arith.addf %125, %126 : vector<8x32xf32>
    %c0_58 = arith.constant 0 : index
    %c0_59 = arith.constant 0 : index
    %128 = vector.load %arg4[%c0_58, %c0_59] : memref<2x8xf32, #tpu.memory_space<vmem>>, vector<2x8xf32>
    %c0_60 = arith.constant 0 : index
    %c0_61 = arith.constant 0 : index
    %129 = vector.load %arg16[%c0_60, %c0_61] : memref<32x128xbf16, #tpu.memory_space<vmem>>, vector<32x128xbf16>
    %c0_62 = arith.constant 0 : index
    %c0_63 = arith.constant 0 : index
    %130 = vector.load %arg17[%c0_62, %c0_63] : memref<1x128xf32, #tpu.memory_space<vmem>>, vector<1x128xf32>
    %131 = vector.extract_strided_slice %129 {offsets = [0, 96], sizes = [32, 32], strides = [1, 1]} : vector<32x128xbf16> to vector<32x32xbf16>
    %132 = vector.extract_strided_slice %130 {offsets = [0, 96], sizes = [1, 32], strides = [1, 1]} : vector<1x128xf32> to vector<1x32xf32>
    %133 = vector.extract_strided_slice %129 {offsets = [0, 0], sizes = [32, 32], strides = [1, 1]} : vector<32x128xbf16> to vector<32x32xbf16>
    %134 = vector.extract_strided_slice %130 {offsets = [0, 0], sizes = [1, 32], strides = [1, 1]} : vector<1x128xf32> to vector<1x32xf32>
    %135 = arith.truncf %1 : vector<2x32xf32> to vector<2x32xbf16>
    %cst_64 = arith.constant dense<0.000000e+00> : vector<2x32xf32>
    %136 = tpu.matmul %135, %133, %cst_64 {dimension_numbers = #tpu.dot_dimension_numbers<[1], [0], [0], [1], [0, 0, 1, 1], [], []>} : vector<2x32xbf16>, vector<32x32xbf16>, vector<2x32xf32> -> vector<2x32xf32>
    %137 = vector.broadcast %134 : vector<1x32xf32> to vector<2x32xf32>
    %138 = arith.addf %136, %137 : vector<2x32xf32>
    %139 = vector.extract_strided_slice %129 {offsets = [0, 32], sizes = [32, 64], strides = [1, 1]} : vector<32x128xbf16> to vector<32x64xbf16>
    %140 = vector.extract_strided_slice %130 {offsets = [0, 32], sizes = [1, 64], strides = [1, 1]} : vector<1x128xf32> to vector<1x64xf32>
    %141 = arith.truncf %127 : vector<8x32xf32> to vector<8x32xbf16>
    %cst_65 = arith.constant dense<0.000000e+00> : vector<8x64xf32>
    %142 = tpu.matmul %141, %139, %cst_65 {dimension_numbers = #tpu.dot_dimension_numbers<[1], [0], [0], [1], [0, 0, 1, 1], [], []>} : vector<8x32xbf16>, vector<32x64xbf16>, vector<8x64xf32> -> vector<8x64xf32>
    %143 = vector.broadcast %140 : vector<1x64xf32> to vector<8x64xf32>
    %144 = arith.addf %142, %143 : vector<8x64xf32>
    %145 = vector.extract_strided_slice %144 {offsets = [0, 0], sizes = [8, 32], strides = [1, 1]} : vector<8x64xf32> to vector<8x32xf32>
    %146 = vector.extract_strided_slice %144 {offsets = [0, 32], sizes = [8, 32], strides = [1, 1]} : vector<8x64xf32> to vector<8x32xf32>
    %147 = arith.truncf %138 : vector<2x32xf32> to vector<2x32xbf16>
    %148 = arith.truncf %145 : vector<8x32xf32> to vector<8x32xbf16>
    %149 = arith.truncf %146 : vector<8x32xf32> to vector<8x32xbf16>
    %150 = vector.extract_strided_slice %147 {offsets = [0, 0], sizes = [2, 16], strides = [1, 1]} : vector<2x32xbf16> to vector<2x16xbf16>
    %151 = vector.extract_strided_slice %148 {offsets = [0, 0], sizes = [8, 16], strides = [1, 1]} : vector<8x32xbf16> to vector<8x16xbf16>
    %cst_66 = arith.constant dense<0.000000e+00> : vector<2x8xf32>
    %152 = tpu.matmul %150, %151, %cst_66 {dimension_numbers = #tpu.dot_dimension_numbers<[1], [1], [0], [0], [0, 0, 1, 0], [], []>} : vector<2x16xbf16>, vector<8x16xbf16>, vector<2x8xf32> -> vector<2x8xf32>
    %cst_67 = arith.constant 2.500000e-01 : f32
    %153 = vector.broadcast %cst_67 : f32 to vector<2x8xf32>
    %154 = arith.mulf %152, %153 : vector<2x8xf32>
    %155 = arith.addf %154, %128 : vector<2x8xf32>
    %cst_68 = arith.constant dense<0xFF800000> : vector<2xf32>
    %156 = vector.multi_reduction <maximumf>, %155, %cst_68 [1] : vector<2x8xf32> to vector<2xf32>
    %157 = vector.shape_cast %156 : vector<2xf32> to vector<2x1xf32>
    %158 = vector.broadcast %157 : vector<2x1xf32> to vector<2x8xf32>
    %159 = arith.subf %155, %158 : vector<2x8xf32>
    %160 = math.exp %159 : vector<2x8xf32>
    %cst_69 = arith.constant dense<0.000000e+00> : vector<2xf32>
    %161 = vector.multi_reduction <add>, %160, %cst_69 [1] : vector<2x8xf32> to vector<2xf32>
    %162 = vector.shape_cast %161 : vector<2xf32> to vector<2x1xf32>
    %163 = tpu.reciprocal %162 {approx = true} : vector<2x1xf32> -> vector<2x1xf32>
    %164 = vector.broadcast %163 : vector<2x1xf32> to vector<2x8xf32>
    %165 = arith.mulf %160, %164 : vector<2x8xf32>
    %166 = arith.truncf %165 : vector<2x8xf32> to vector<2x8xbf16>
    %167 = vector.extract_strided_slice %149 {offsets = [0, 0], sizes = [8, 16], strides = [1, 1]} : vector<8x32xbf16> to vector<8x16xbf16>
    %cst_70 = arith.constant dense<0.000000e+00> : vector<2x16xf32>
    %168 = tpu.matmul %166, %167, %cst_70 {dimension_numbers = #tpu.dot_dimension_numbers<[1], [0], [0], [1], [0, 0, 1, 1], [], []>} : vector<2x8xbf16>, vector<8x16xbf16>, vector<2x16xf32> -> vector<2x16xf32>
    %169 = vector.extract_strided_slice %147 {offsets = [0, 16], sizes = [2, 16], strides = [1, 1]} : vector<2x32xbf16> to vector<2x16xbf16>
    %170 = vector.extract_strided_slice %148 {offsets = [0, 16], sizes = [8, 16], strides = [1, 1]} : vector<8x32xbf16> to vector<8x16xbf16>
    %cst_71 = arith.constant dense<0.000000e+00> : vector<2x8xf32>
    %171 = tpu.matmul %169, %170, %cst_71 {dimension_numbers = #tpu.dot_dimension_numbers<[1], [1], [0], [0], [0, 0, 1, 0], [], []>} : vector<2x16xbf16>, vector<8x16xbf16>, vector<2x8xf32> -> vector<2x8xf32>
    %cst_72 = arith.constant 2.500000e-01 : f32
    %172 = vector.broadcast %cst_72 : f32 to vector<2x8xf32>
    %173 = arith.mulf %171, %172 : vector<2x8xf32>
    %174 = arith.addf %173, %128 : vector<2x8xf32>
    %cst_73 = arith.constant dense<0xFF800000> : vector<2xf32>
    %175 = vector.multi_reduction <maximumf>, %174, %cst_73 [1] : vector<2x8xf32> to vector<2xf32>
    %176 = vector.shape_cast %175 : vector<2xf32> to vector<2x1xf32>
    %177 = vector.broadcast %176 : vector<2x1xf32> to vector<2x8xf32>
    %178 = arith.subf %174, %177 : vector<2x8xf32>
    %179 = math.exp %178 : vector<2x8xf32>
    %cst_74 = arith.constant dense<0.000000e+00> : vector<2xf32>
    %180 = vector.multi_reduction <add>, %179, %cst_74 [1] : vector<2x8xf32> to vector<2xf32>
    %181 = vector.shape_cast %180 : vector<2xf32> to vector<2x1xf32>
    %182 = tpu.reciprocal %181 {approx = true} : vector<2x1xf32> -> vector<2x1xf32>
    %183 = vector.broadcast %182 : vector<2x1xf32> to vector<2x8xf32>
    %184 = arith.mulf %179, %183 : vector<2x8xf32>
    %185 = arith.truncf %184 : vector<2x8xf32> to vector<2x8xbf16>
    %186 = vector.extract_strided_slice %149 {offsets = [0, 16], sizes = [8, 16], strides = [1, 1]} : vector<8x32xbf16> to vector<8x16xbf16>
    %cst_75 = arith.constant dense<0.000000e+00> : vector<2x16xf32>
    %187 = tpu.matmul %185, %186, %cst_75 {dimension_numbers = #tpu.dot_dimension_numbers<[1], [0], [0], [1], [0, 0, 1, 1], [], []>} : vector<2x8xbf16>, vector<8x16xbf16>, vector<2x16xf32> -> vector<2x16xf32>
    %188 = tpu.concatenate %168, %187 in 1 : vector<2x16xf32>, vector<2x16xf32> -> vector<2x32xf32>
    %189 = arith.truncf %188 : vector<2x32xf32> to vector<2x32xbf16>
    %cst_76 = arith.constant dense<0.000000e+00> : vector<2x32xf32>
    %190 = tpu.matmul %189, %131, %cst_76 {dimension_numbers = #tpu.dot_dimension_numbers<[1], [0], [0], [1], [0, 0, 1, 1], [], []>} : vector<2x32xbf16>, vector<32x32xbf16>, vector<2x32xf32> -> vector<2x32xf32>
    %191 = vector.broadcast %132 : vector<1x32xf32> to vector<2x32xf32>
    %192 = arith.addf %190, %191 : vector<2x32xf32>
    %c0_77 = arith.constant 0 : index
    %c0_78 = arith.constant 0 : index
    %193 = vector.load %arg5[%c0_77, %c0_78] : memref<8x2xf32, #tpu.memory_space<vmem>>, vector<8x2xf32>
    %c0_79 = arith.constant 0 : index
    %c0_80 = arith.constant 0 : index
    %194 = vector.load %arg18[%c0_79, %c0_80] : memref<32x128xbf16, #tpu.memory_space<vmem>>, vector<32x128xbf16>
    %c0_81 = arith.constant 0 : index
    %c0_82 = arith.constant 0 : index
    %195 = vector.load %arg19[%c0_81, %c0_82] : memref<1x128xf32, #tpu.memory_space<vmem>>, vector<1x128xf32>
    %196 = vector.extract_strided_slice %194 {offsets = [0, 96], sizes = [32, 32], strides = [1, 1]} : vector<32x128xbf16> to vector<32x32xbf16>
    %197 = vector.extract_strided_slice %195 {offsets = [0, 96], sizes = [1, 32], strides = [1, 1]} : vector<1x128xf32> to vector<1x32xf32>
    %198 = vector.extract_strided_slice %194 {offsets = [0, 64], sizes = [32, 32], strides = [1, 1]} : vector<32x128xbf16> to vector<32x32xbf16>
    %199 = vector.extract_strided_slice %195 {offsets = [0, 64], sizes = [1, 32], strides = [1, 1]} : vector<1x128xf32> to vector<1x32xf32>
    %200 = arith.truncf %192 : vector<2x32xf32> to vector<2x32xbf16>
    %cst_83 = arith.constant dense<0.000000e+00> : vector<2x32xf32>
    %201 = tpu.matmul %200, %198, %cst_83 {dimension_numbers = #tpu.dot_dimension_numbers<[1], [0], [0], [1], [0, 0, 1, 1], [], []>} : vector<2x32xbf16>, vector<32x32xbf16>, vector<2x32xf32> -> vector<2x32xf32>
    %202 = vector.broadcast %199 : vector<1x32xf32> to vector<2x32xf32>
    %203 = arith.addf %201, %202 : vector<2x32xf32>
    %cst_84 = arith.constant -5.000000e-01 : f32
    %204 = vector.broadcast %cst_84 : f32 to vector<8x2xf32>
    %205 = arith.cmpf oge, %193, %204 : vector<8x2xf32>
    %cst_85 = arith.constant 1.000000e+00 : f32
    %cst_86 = arith.constant 0.000000e+00 : f32
    %206 = vector.broadcast %cst_85 : f32 to vector<8x2xf32>
    %207 = vector.broadcast %cst_86 : f32 to vector<8x2xf32>
    %208 = arith.select %205, %206, %207 : vector<8x2xi1>, vector<8x2xf32>
    %209 = arith.truncf %208 : vector<8x2xf32> to vector<8x2xbf16>
    %210 = arith.truncf %203 : vector<2x32xf32> to vector<2x32xbf16>
    %cst_87 = arith.constant dense<0.000000e+00> : vector<8x32xf32>
    %211 = tpu.matmul %209, %210, %cst_87 {dimension_numbers = #tpu.dot_dimension_numbers<[1], [0], [0], [1], [0, 0, 1, 1], [], []>} : vector<8x2xbf16>, vector<2x32xbf16>, vector<8x32xf32> -> vector<8x32xf32>
    %212 = arith.truncf %211 : vector<8x32xf32> to vector<8x32xbf16>
    %cst_88 = arith.constant dense<0.000000e+00> : vector<8x32xf32>
    %213 = tpu.matmul %212, %196, %cst_88 {dimension_numbers = #tpu.dot_dimension_numbers<[1], [0], [0], [1], [0, 0, 1, 1], [], []>} : vector<8x32xbf16>, vector<32x32xbf16>, vector<8x32xf32> -> vector<8x32xf32>
    %214 = vector.broadcast %197 : vector<1x32xf32> to vector<8x32xf32>
    %215 = arith.addf %213, %214 : vector<8x32xf32>
    %216 = arith.addf %127, %215 : vector<8x32xf32>
    %c0_89 = arith.constant 0 : index
    %c0_90 = arith.constant 0 : index
    %217 = vector.load %arg20[%c0_89, %c0_90] : memref<1x32xf32, #tpu.memory_space<vmem>>, vector<1x32xf32>
    %c0_91 = arith.constant 0 : index
    %c0_92 = arith.constant 0 : index
    %218 = vector.load %arg21[%c0_91, %c0_92] : memref<1x32xf32, #tpu.memory_space<vmem>>, vector<1x32xf32>
    %cst_93 = arith.constant dense<0.000000e+00> : vector<8xf32>
    %219 = vector.multi_reduction <add>, %216, %cst_93 [1] : vector<8x32xf32> to vector<8xf32>
    %220 = vector.shape_cast %219 : vector<8xf32> to vector<8x1xf32>
    %cst_94 = arith.constant 3.200000e+01 : f32
    %221 = vector.broadcast %cst_94 : f32 to vector<8x1xf32>
    %222 = arith.divf %220, %221 : vector<8x1xf32>
    %223 = vector.broadcast %222 : vector<8x1xf32> to vector<8x32xf32>
    %224 = arith.subf %216, %223 : vector<8x32xf32>
    %225 = arith.mulf %224, %224 : vector<8x32xf32>
    %cst_95 = arith.constant dense<0.000000e+00> : vector<8xf32>
    %226 = vector.multi_reduction <add>, %225, %cst_95 [1] : vector<8x32xf32> to vector<8xf32>
    %227 = vector.shape_cast %226 : vector<8xf32> to vector<8x1xf32>
    %cst_96 = arith.constant 3.200000e+01 : f32
    %228 = vector.broadcast %cst_96 : f32 to vector<8x1xf32>
    %229 = arith.divf %227, %228 : vector<8x1xf32>
    %230 = vector.broadcast %222 : vector<8x1xf32> to vector<8x32xf32>
    %231 = arith.subf %216, %230 : vector<8x32xf32>
    %cst_97 = arith.constant 9.99999974E-6 : f32
    %232 = vector.broadcast %cst_97 : f32 to vector<8x1xf32>
    %233 = arith.addf %229, %232 : vector<8x1xf32>
    %234 = math.rsqrt %233 : vector<8x1xf32>
    %235 = vector.broadcast %234 : vector<8x1xf32> to vector<8x32xf32>
    %236 = arith.mulf %231, %235 : vector<8x32xf32>
    %237 = vector.broadcast %217 : vector<1x32xf32> to vector<8x32xf32>
    %238 = arith.mulf %236, %237 : vector<8x32xf32>
    %239 = vector.broadcast %218 : vector<1x32xf32> to vector<8x32xf32>
    %240 = arith.addf %238, %239 : vector<8x32xf32>
    %c0_98 = arith.constant 0 : index
    %c0_99 = arith.constant 0 : index
    %241 = vector.load %arg22[%c0_98, %c0_99] : memref<32x64xbf16, #tpu.memory_space<vmem>>, vector<32x64xbf16>
    %c0_100 = arith.constant 0 : index
    %c0_101 = arith.constant 0 : index
    %242 = vector.load %arg23[%c0_100, %c0_101] : memref<1x64xf32, #tpu.memory_space<vmem>>, vector<1x64xf32>
    %c0_102 = arith.constant 0 : index
    %c0_103 = arith.constant 0 : index
    %243 = vector.load %arg24[%c0_102, %c0_103] : memref<64x32xbf16, #tpu.memory_space<vmem>>, vector<64x32xbf16>
    %c0_104 = arith.constant 0 : index
    %c0_105 = arith.constant 0 : index
    %244 = vector.load %arg25[%c0_104, %c0_105] : memref<1x32xf32, #tpu.memory_space<vmem>>, vector<1x32xf32>
    %245 = arith.truncf %240 : vector<8x32xf32> to vector<8x32xbf16>
    %cst_106 = arith.constant dense<0.000000e+00> : vector<8x64xf32>
    %246 = tpu.matmul %245, %241, %cst_106 {dimension_numbers = #tpu.dot_dimension_numbers<[1], [0], [0], [1], [0, 0, 1, 1], [], []>} : vector<8x32xbf16>, vector<32x64xbf16>, vector<8x64xf32> -> vector<8x64xf32>
    %247 = vector.broadcast %242 : vector<1x64xf32> to vector<8x64xf32>
    %248 = arith.addf %246, %247 : vector<8x64xf32>
    %cst_107 = arith.constant 5.000000e-01 : f32
    %249 = vector.broadcast %cst_107 : f32 to vector<8x64xf32>
    %250 = arith.mulf %249, %248 : vector<8x64xf32>
    %cst_108 = arith.constant 0.707106769 : f32
    %251 = vector.broadcast %cst_108 : f32 to vector<8x64xf32>
    %252 = arith.mulf %248, %251 : vector<8x64xf32>
    %cst_109 = arith.constant 0.000000e+00 : f32
    %253 = vector.broadcast %cst_109 : f32 to vector<8x64xf32>
    %254 = arith.cmpf oge, %252, %253 : vector<8x64xf32>
    %cst_110 = arith.constant 1.000000e+00 : f32
    %cst_111 = arith.constant -1.000000e+00 : f32
    %255 = vector.broadcast %cst_110 : f32 to vector<8x64xf32>
    %256 = vector.broadcast %cst_111 : f32 to vector<8x64xf32>
    %257 = arith.select %254, %255, %256 : vector<8x64xi1>, vector<8x64xf32>
    %258 = math.absf %252 : vector<8x64xf32>
    %cst_112 = arith.constant 0.327591091 : f32
    %259 = vector.broadcast %cst_112 : f32 to vector<8x64xf32>
    %260 = arith.mulf %259, %258 : vector<8x64xf32>
    %cst_113 = arith.constant 1.000000e+00 : f32
    %261 = vector.broadcast %cst_113 : f32 to vector<8x64xf32>
    %262 = arith.addf %261, %260 : vector<8x64xf32>
    %cst_114 = arith.constant 1.000000e+00 : f32
    %263 = vector.broadcast %cst_114 : f32 to vector<8x64xf32>
    %264 = arith.divf %263, %262 : vector<8x64xf32>
    %cst_115 = arith.constant 1.06140542 : f32
    %265 = vector.broadcast %cst_115 : f32 to vector<8x64xf32>
    %266 = arith.mulf %265, %264 : vector<8x64xf32>
    %cst_116 = arith.constant -1.45315206 : f32
    %267 = vector.broadcast %cst_116 : f32 to vector<8x64xf32>
    %268 = arith.addf %266, %267 : vector<8x64xf32>
    %269 = arith.mulf %268, %264 : vector<8x64xf32>
    %cst_117 = arith.constant 1.42141378 : f32
    %270 = vector.broadcast %cst_117 : f32 to vector<8x64xf32>
    %271 = arith.addf %269, %270 : vector<8x64xf32>
    %272 = arith.mulf %271, %264 : vector<8x64xf32>
    %cst_118 = arith.constant -0.284496725 : f32
    %273 = vector.broadcast %cst_118 : f32 to vector<8x64xf32>
    %274 = arith.addf %272, %273 : vector<8x64xf32>
    %275 = arith.mulf %274, %264 : vector<8x64xf32>
    %cst_119 = arith.constant 0.254829586 : f32
    %276 = vector.broadcast %cst_119 : f32 to vector<8x64xf32>
    %277 = arith.addf %275, %276 : vector<8x64xf32>
    %278 = arith.mulf %277, %264 : vector<8x64xf32>
    %cst_120 = arith.constant 0.000000e+00 : f32
    %279 = vector.broadcast %cst_120 : f32 to vector<8x64xf32>
    %280 = arith.subf %279, %258 : vector<8x64xf32>
    %281 = arith.mulf %280, %258 : vector<8x64xf32>
    %282 = math.exp %281 : vector<8x64xf32>
    %283 = arith.mulf %278, %282 : vector<8x64xf32>
    %cst_121 = arith.constant 1.000000e+00 : f32
    %284 = vector.broadcast %cst_121 : f32 to vector<8x64xf32>
    %285 = arith.subf %284, %283 : vector<8x64xf32>
    %286 = arith.mulf %257, %285 : vector<8x64xf32>
    %cst_122 = arith.constant 1.000000e+00 : f32
    %287 = vector.broadcast %cst_122 : f32 to vector<8x64xf32>
    %288 = arith.addf %287, %286 : vector<8x64xf32>
    %289 = arith.mulf %250, %288 : vector<8x64xf32>
    %290 = arith.truncf %289 : vector<8x64xf32> to vector<8x64xbf16>
    %cst_123 = arith.constant dense<0.000000e+00> : vector<8x32xf32>
    %291 = tpu.matmul %290, %243, %cst_123 {dimension_numbers = #tpu.dot_dimension_numbers<[1], [0], [0], [1], [0, 0, 1, 1], [], []>} : vector<8x64xbf16>, vector<64x32xbf16>, vector<8x32xf32> -> vector<8x32xf32>
    %292 = vector.broadcast %244 : vector<1x32xf32> to vector<8x32xf32>
    %293 = arith.addf %291, %292 : vector<8x32xf32>
    %294 = arith.addf %240, %293 : vector<8x32xf32>
    %c0_124 = arith.constant 0 : index
    %c0_125 = arith.constant 0 : index
    %295 = vector.load %arg26[%c0_124, %c0_125] : memref<1x32xf32, #tpu.memory_space<vmem>>, vector<1x32xf32>
    %c0_126 = arith.constant 0 : index
    %c0_127 = arith.constant 0 : index
    %296 = vector.load %arg27[%c0_126, %c0_127] : memref<1x32xf32, #tpu.memory_space<vmem>>, vector<1x32xf32>
    %cst_128 = arith.constant dense<0.000000e+00> : vector<8xf32>
    %297 = vector.multi_reduction <add>, %294, %cst_128 [1] : vector<8x32xf32> to vector<8xf32>
    %298 = vector.shape_cast %297 : vector<8xf32> to vector<8x1xf32>
    %cst_129 = arith.constant 3.200000e+01 : f32
    %299 = vector.broadcast %cst_129 : f32 to vector<8x1xf32>
    %300 = arith.divf %298, %299 : vector<8x1xf32>
    %301 = vector.broadcast %300 : vector<8x1xf32> to vector<8x32xf32>
    %302 = arith.subf %294, %301 : vector<8x32xf32>
    %303 = arith.mulf %302, %302 : vector<8x32xf32>
    %cst_130 = arith.constant dense<0.000000e+00> : vector<8xf32>
    %304 = vector.multi_reduction <add>, %303, %cst_130 [1] : vector<8x32xf32> to vector<8xf32>
    %305 = vector.shape_cast %304 : vector<8xf32> to vector<8x1xf32>
    %cst_131 = arith.constant 3.200000e+01 : f32
    %306 = vector.broadcast %cst_131 : f32 to vector<8x1xf32>
    %307 = arith.divf %305, %306 : vector<8x1xf32>
    %308 = vector.broadcast %300 : vector<8x1xf32> to vector<8x32xf32>
    %309 = arith.subf %294, %308 : vector<8x32xf32>
    %cst_132 = arith.constant 9.99999974E-6 : f32
    %310 = vector.broadcast %cst_132 : f32 to vector<8x1xf32>
    %311 = arith.addf %307, %310 : vector<8x1xf32>
    %312 = math.rsqrt %311 : vector<8x1xf32>
    %313 = vector.broadcast %312 : vector<8x1xf32> to vector<8x32xf32>
    %314 = arith.mulf %309, %313 : vector<8x32xf32>
    %315 = vector.broadcast %295 : vector<1x32xf32> to vector<8x32xf32>
    %316 = arith.mulf %314, %315 : vector<8x32xf32>
    %317 = vector.broadcast %296 : vector<1x32xf32> to vector<8x32xf32>
    %318 = arith.addf %316, %317 : vector<8x32xf32>
    %c0_133 = arith.constant 0 : index
    %c0_134 = arith.constant 0 : index
    %319 = vector.load %arg28[%c0_133, %c0_134] : memref<8x32xf32, #tpu.memory_space<vmem>>, vector<8x32xf32>
    tpu.vector_store %arg28[%c0_133, %c0_134], %318 {strides = array<i32>} : memref<8x32xf32, #tpu.memory_space<vmem>>, vector<8x32xf32>,
    return
  }
  func.func @transform_0(%arg0: i32) -> (i32, i32) {
    %c0_i32 = arith.constant 0 : i32
    %c0_i32_0 = arith.constant 0 : i32
    return %arg0, %c0_i32 : i32, i32
  }
  func.func @transform_1(%arg0: i32) -> (i32, i32) {
    %c0_i32 = arith.constant 0 : i32
    %c0_i32_0 = arith.constant 0 : i32
    return %arg0, %c0_i32 : i32, i32
  }
  func.func @transform_2(%arg0: i32) -> (i32, i32) {
    %c0_i32 = arith.constant 0 : i32
    %c0_i32_0 = arith.constant 0 : i32
    %c0_i32_1 = arith.constant 0 : i32
    return %c0_i32, %c0_i32_0 : i32, i32
  }
  func.func @transform_3(%arg0: i32) -> (i32, i32) {
    %c0_i32 = arith.constant 0 : i32
    %c0_i32_0 = arith.constant 0 : i32
    %c0_i32_1 = arith.constant 0 : i32
    return %c0_i32, %c0_i32_0 : i32, i32
  }
  func.func @transform_4(%arg0: i32) -> (i32, i32) {
    %c0_i32 = arith.constant 0 : i32
    %c0_i32_0 = arith.constant 0 : i32
    %c0_i32_1 = arith.constant 0 : i32
    return %c0_i32, %c0_i32_0 : i32, i32
  }
  func.func @transform_5(%arg0: i32) -> (i32, i32) {
    %c0_i32 = arith.constant 0 : i32
    %c0_i32_0 = arith.constant 0 : i32
    %c0_i32_1 = arith.constant 0 : i32
    return %c0_i32, %c0_i32_0 : i32, i32
  }
  func.func @transform_6(%arg0: i32) -> (i32, i32) {
    %c0_i32 = arith.constant 0 : i32
    %c0_i32_0 = arith.constant 0 : i32
    %c0_i32_1 = arith.constant 0 : i32
    return %c0_i32, %c0_i32_0 : i32, i32
  }
  func.func @transform_7(%arg0: i32) -> (i32, i32) {
    %c0_i32 = arith.constant 0 : i32
    %c0_i32_0 = arith.constant 0 : i32
    %c0_i32_1 = arith.constant 0 : i32
    return %c0_i32, %c0_i32_0 : i32, i32
  }
  func.func @transform_8(%arg0: i32) -> (i32, i32) {
    %c0_i32 = arith.constant 0 : i32
    %c0_i32_0 = arith.constant 0 : i32
    %c0_i32_1 = arith.constant 0 : i32
    return %c0_i32, %c0_i32_0 : i32, i32
  }
  func.func @transform_9(%arg0: i32) -> (i32, i32) {
    %c0_i32 = arith.constant 0 : i32
    %c0_i32_0 = arith.constant 0 : i32
    %c0_i32_1 = arith.constant 0 : i32
    return %c0_i32, %c0_i32_0 : i32, i32
  }
  func.func @transform_10(%arg0: i32) -> (i32, i32) {
    %c0_i32 = arith.constant 0 : i32
    %c0_i32_0 = arith.constant 0 : i32
    %c0_i32_1 = arith.constant 0 : i32
    return %c0_i32, %c0_i32_0 : i32, i32
  }
  func.func @transform_11(%arg0: i32) -> (i32, i32) {
    %c0_i32 = arith.constant 0 : i32
    %c0_i32_0 = arith.constant 0 : i32
    %c0_i32_1 = arith.constant 0 : i32
    return %c0_i32, %c0_i32_0 : i32, i32
  }
  func.func @transform_12(%arg0: i32) -> (i32, i32) {
    %c0_i32 = arith.constant 0 : i32
    %c0_i32_0 = arith.constant 0 : i32
    %c0_i32_1 = arith.constant 0 : i32
    return %c0_i32, %c0_i32_0 : i32, i32
  }
  func.func @transform_13(%arg0: i32) -> (i32, i32) {
    %c0_i32 = arith.constant 0 : i32
    %c0_i32_0 = arith.constant 0 : i32
    %c0_i32_1 = arith.constant 0 : i32
    return %c0_i32, %c0_i32_0 : i32, i32
  }
  func.func @transform_14(%arg0: i32) -> (i32, i32) {
    %c0_i32 = arith.constant 0 : i32
    %c0_i32_0 = arith.constant 0 : i32
    %c0_i32_1 = arith.constant 0 : i32
    return %c0_i32, %c0_i32_0 : i32, i32
  }
  func.func @transform_15(%arg0: i32) -> (i32, i32) {
    %c0_i32 = arith.constant 0 : i32
    %c0_i32_0 = arith.constant 0 : i32
    %c0_i32_1 = arith.constant 0 : i32
    return %c0_i32, %c0_i32_0 : i32, i32
  }
  func.func @transform_16(%arg0: i32) -> (i32, i32) {
    %c0_i32 = arith.constant 0 : i32
    %c0_i32_0 = arith.constant 0 : i32
    %c0_i32_1 = arith.constant 0 : i32
    return %c0_i32, %c0_i32_0 : i32, i32
  }
  func.func @transform_17(%arg0: i32) -> (i32, i32) {
    %c0_i32 = arith.constant 0 : i32
    %c0_i32_0 = arith.constant 0 : i32
    %c0_i32_1 = arith.constant 0 : i32
    return %c0_i32, %c0_i32_0 : i32, i32
  }
  func.func @transform_18(%arg0: i32) -> (i32, i32) {
    %c0_i32 = arith.constant 0 : i32
    %c0_i32_0 = arith.constant 0 : i32
    %c0_i32_1 = arith.constant 0 : i32
    return %c0_i32, %c0_i32_0 : i32, i32
  }
  func.func @transform_19(%arg0: i32) -> (i32, i32) {
    %c0_i32 = arith.constant 0 : i32
    %c0_i32_0 = arith.constant 0 : i32
    %c0_i32_1 = arith.constant 0 : i32
    return %c0_i32, %c0_i32_0 : i32, i32
  }
  func.func @transform_20(%arg0: i32) -> (i32, i32) {
    %c0_i32 = arith.constant 0 : i32
    %c0_i32_0 = arith.constant 0 : i32
    %c0_i32_1 = arith.constant 0 : i32
    return %c0_i32, %c0_i32_0 : i32, i32
  }
  func.func @transform_21(%arg0: i32) -> (i32, i32) {
    %c0_i32 = arith.constant 0 : i32
    %c0_i32_0 = arith.constant 0 : i32
    %c0_i32_1 = arith.constant 0 : i32
    return %c0_i32, %c0_i32_0 : i32, i32
  }
  func.func @transform_22(%arg0: i32) -> (i32, i32) {
    %c0_i32 = arith.constant 0 : i32
    %c0_i32_0 = arith.constant 0 : i32
    %c0_i32_1 = arith.constant 0 : i32
    return %c0_i32, %c0_i32_0 : i32, i32
  }
  func.func @transform_23(%arg0: i32) -> (i32, i32) {
    %c0_i32 = arith.constant 0 : i32
    %c0_i32_0 = arith.constant 0 : i32
    %c0_i32_1 = arith.constant 0 : i32
    return %c0_i32, %c0_i32_0 : i32, i32
  }
  func.func @transform_24(%arg0: i32) -> (i32, i32) {
    %c0_i32 = arith.constant 0 : i32
    %c0_i32_0 = arith.constant 0 : i32
    %c0_i32_1 = arith.constant 0 : i32
    return %c0_i32, %c0_i32_0 : i32, i32
  }
  func.func @transform_25(%arg0: i32) -> (i32, i32) {
    %c0_i32 = arith.constant 0 : i32
    %c0_i32_0 = arith.constant 0 : i32
    %c0_i32_1 = arith.constant 0 : i32
    return %c0_i32, %c0_i32_0 : i32, i32
  }
  func.func @transform_26(%arg0: i32) -> (i32, i32) {
    %c0_i32 = arith.constant 0 : i32
    %c0_i32_0 = arith.constant 0 : i32
    %c0_i32_1 = arith.constant 0 : i32
    return %c0_i32, %c0_i32_0 : i32, i32
  }
  func.func @transform_27(%arg0: i32) -> (i32, i32) {
    %c0_i32 = arith.constant 0 : i32
    %c0_i32_0 = arith.constant 0 : i32
    return %arg0, %c0_i32 : i32, i32
  }
}

module attributes {stable_mosaic.version = 11 : i64} {
  func.func @_cross_pred_kernel(%arg0: i32, %arg1: memref<16x32xf32, #tpu.memory_space<vmem>>, %arg2: memref<16x32xf32, #tpu.memory_space<vmem>>, %arg3: memref<16x16xf32, #tpu.memory_space<vmem>>, %arg4: memref<32x128xbf16, #tpu.memory_space<vmem>>, %arg5: memref<1x128xf32, #tpu.memory_space<vmem>>, %arg6: memref<1x32xf32, #tpu.memory_space<vmem>>, %arg7: memref<1x32xf32, #tpu.memory_space<vmem>>, %arg8: memref<32x32xbf16, #tpu.memory_space<vmem>>, %arg9: memref<1x32xf32, #tpu.memory_space<vmem>>, %arg10: memref<32x32xbf16, #tpu.memory_space<vmem>>, %arg11: memref<1x32xf32, #tpu.memory_space<vmem>>, %arg12: memref<1x32xf32, #tpu.memory_space<vmem>>, %arg13: memref<1x32xf32, #tpu.memory_space<vmem>>, %arg14: memref<32x12xbf16, #tpu.memory_space<vmem>>, %arg15: memref<1x12xf32, #tpu.memory_space<vmem>>, %arg16: memref<16x32xf32, #tpu.memory_space<vmem>>, %arg17: memref<16x12xf32, #tpu.memory_space<vmem>>) attributes {dimension_semantics = [#tpu.dimension_semantics<parallel>], iteration_bounds = array<i64: 1>, scalar_prefetch = 0 : i64, scratch_operands = 0 : i64, tpu.core_type = #tpu.core_type<tc>, window_params = [{transform_indices = @transform_0, window_bounds = array<i64: 16, 32>}, {transform_indices = @transform_1, window_bounds = array<i64: 16, 32>}, {pipeline_mode = #tpu.pipeline_mode<synchronous>, transform_indices = @transform_2, window_bounds = array<i64: 16, 16>}, {pipeline_mode = #tpu.pipeline_mode<synchronous>, transform_indices = @transform_3, window_bounds = array<i64: 32, 128>}, {pipeline_mode = #tpu.pipeline_mode<synchronous>, transform_indices = @transform_4, window_bounds = array<i64: 1, 128>}, {pipeline_mode = #tpu.pipeline_mode<synchronous>, transform_indices = @transform_5, window_bounds = array<i64: 1, 32>}, {pipeline_mode = #tpu.pipeline_mode<synchronous>, transform_indices = @transform_6, window_bounds = array<i64: 1, 32>}, {pipeline_mode = #tpu.pipeline_mode<synchronous>, transform_indices = @transform_7, window_bounds = array<i64: 32, 32>}, {pipeline_mode = #tpu.pipeline_mode<synchronous>, transform_indices = @transform_8, window_bounds = array<i64: 1, 32>}, {pipeline_mode = #tpu.pipeline_mode<synchronous>, transform_indices = @transform_9, window_bounds = array<i64: 32, 32>}, {pipeline_mode = #tpu.pipeline_mode<synchronous>, transform_indices = @transform_10, window_bounds = array<i64: 1, 32>}, {pipeline_mode = #tpu.pipeline_mode<synchronous>, transform_indices = @transform_11, window_bounds = array<i64: 1, 32>}, {pipeline_mode = #tpu.pipeline_mode<synchronous>, transform_indices = @transform_12, window_bounds = array<i64: 1, 32>}, {pipeline_mode = #tpu.pipeline_mode<synchronous>, transform_indices = @transform_13, window_bounds = array<i64: 32, 12>}, {pipeline_mode = #tpu.pipeline_mode<synchronous>, transform_indices = @transform_14, window_bounds = array<i64: 1, 12>}, {transform_indices = @transform_15, window_bounds = array<i64: 16, 32>}, {transform_indices = @transform_16, window_bounds = array<i64: 16, 12>}]} {
    %c0 = arith.constant 0 : index
    %c0_0 = arith.constant 0 : index
    %0 = vector.load %arg1[%c0, %c0_0] : memref<16x32xf32, #tpu.memory_space<vmem>>, vector<16x32xf32>
    %c0_1 = arith.constant 0 : index
    %c0_2 = arith.constant 0 : index
    %1 = vector.load %arg2[%c0_1, %c0_2] : memref<16x32xf32, #tpu.memory_space<vmem>>, vector<16x32xf32>
    %c0_3 = arith.constant 0 : index
    %c0_4 = arith.constant 0 : index
    %2 = vector.load %arg3[%c0_3, %c0_4] : memref<16x16xf32, #tpu.memory_space<vmem>>, vector<16x16xf32>
    %c0_5 = arith.constant 0 : index
    %c0_6 = arith.constant 0 : index
    %3 = vector.load %arg4[%c0_5, %c0_6] : memref<32x128xbf16, #tpu.memory_space<vmem>>, vector<32x128xbf16>
    %c0_7 = arith.constant 0 : index
    %c0_8 = arith.constant 0 : index
    %4 = vector.load %arg5[%c0_7, %c0_8] : memref<1x128xf32, #tpu.memory_space<vmem>>, vector<1x128xf32>
    %5 = vector.extract_strided_slice %3 {offsets = [0, 96], sizes = [32, 32], strides = [1, 1]} : vector<32x128xbf16> to vector<32x32xbf16>
    %6 = vector.extract_strided_slice %4 {offsets = [0, 96], sizes = [1, 32], strides = [1, 1]} : vector<1x128xf32> to vector<1x32xf32>
    %7 = vector.extract_strided_slice %3 {offsets = [0, 0], sizes = [32, 32], strides = [1, 1]} : vector<32x128xbf16> to vector<32x32xbf16>
    %8 = vector.extract_strided_slice %4 {offsets = [0, 0], sizes = [1, 32], strides = [1, 1]} : vector<1x128xf32> to vector<1x32xf32>
    %9 = arith.truncf %0 : vector<16x32xf32> to vector<16x32xbf16>
    %cst = arith.constant dense<0.000000e+00> : vector<16x32xf32>
    %10 = tpu.matmul %9, %7, %cst {dimension_numbers = #tpu.dot_dimension_numbers<[1], [0], [0], [1], [0, 0, 1, 1], [], []>} : vector<16x32xbf16>, vector<32x32xbf16>, vector<16x32xf32> -> vector<16x32xf32>
    %11 = vector.broadcast %8 : vector<1x32xf32> to vector<16x32xf32>
    %12 = arith.addf %10, %11 : vector<16x32xf32>
    %13 = vector.extract_strided_slice %3 {offsets = [0, 32], sizes = [32, 64], strides = [1, 1]} : vector<32x128xbf16> to vector<32x64xbf16>
    %14 = vector.extract_strided_slice %4 {offsets = [0, 32], sizes = [1, 64], strides = [1, 1]} : vector<1x128xf32> to vector<1x64xf32>
    %15 = arith.truncf %1 : vector<16x32xf32> to vector<16x32xbf16>
    %cst_9 = arith.constant dense<0.000000e+00> : vector<16x64xf32>
    %16 = tpu.matmul %15, %13, %cst_9 {dimension_numbers = #tpu.dot_dimension_numbers<[1], [0], [0], [1], [0, 0, 1, 1], [], []>} : vector<16x32xbf16>, vector<32x64xbf16>, vector<16x64xf32> -> vector<16x64xf32>
    %17 = vector.broadcast %14 : vector<1x64xf32> to vector<16x64xf32>
    %18 = arith.addf %16, %17 : vector<16x64xf32>
    %19 = vector.extract_strided_slice %18 {offsets = [0, 0], sizes = [16, 32], strides = [1, 1]} : vector<16x64xf32> to vector<16x32xf32>
    %20 = vector.extract_strided_slice %18 {offsets = [0, 32], sizes = [16, 32], strides = [1, 1]} : vector<16x64xf32> to vector<16x32xf32>
    %21 = arith.truncf %12 : vector<16x32xf32> to vector<16x32xbf16>
    %22 = arith.truncf %19 : vector<16x32xf32> to vector<16x32xbf16>
    %23 = arith.truncf %20 : vector<16x32xf32> to vector<16x32xbf16>
    %24 = vector.extract_strided_slice %21 {offsets = [0, 0], sizes = [16, 16], strides = [1, 1]} : vector<16x32xbf16> to vector<16x16xbf16>
    %25 = vector.extract_strided_slice %22 {offsets = [0, 0], sizes = [16, 16], strides = [1, 1]} : vector<16x32xbf16> to vector<16x16xbf16>
    %cst_10 = arith.constant dense<0.000000e+00> : vector<16x16xf32>
    %26 = tpu.matmul %24, %25, %cst_10 {dimension_numbers = #tpu.dot_dimension_numbers<[1], [1], [0], [0], [0, 0, 1, 0], [], []>} : vector<16x16xbf16>, vector<16x16xbf16>, vector<16x16xf32> -> vector<16x16xf32>
    %cst_11 = arith.constant 2.500000e-01 : f32
    %27 = vector.broadcast %cst_11 : f32 to vector<16x16xf32>
    %28 = arith.mulf %26, %27 : vector<16x16xf32>
    %29 = arith.addf %28, %2 : vector<16x16xf32>
    %cst_12 = arith.constant dense<0xFF800000> : vector<16xf32>
    %30 = vector.multi_reduction <maximumf>, %29, %cst_12 [1] : vector<16x16xf32> to vector<16xf32>
    %31 = vector.shape_cast %30 : vector<16xf32> to vector<16x1xf32>
    %32 = vector.broadcast %31 : vector<16x1xf32> to vector<16x16xf32>
    %33 = arith.subf %29, %32 : vector<16x16xf32>
    %34 = math.exp %33 : vector<16x16xf32>
    %cst_13 = arith.constant dense<0.000000e+00> : vector<16xf32>
    %35 = vector.multi_reduction <add>, %34, %cst_13 [1] : vector<16x16xf32> to vector<16xf32>
    %36 = vector.shape_cast %35 : vector<16xf32> to vector<16x1xf32>
    %37 = tpu.reciprocal %36 {approx = true} : vector<16x1xf32> -> vector<16x1xf32>
    %38 = vector.broadcast %37 : vector<16x1xf32> to vector<16x16xf32>
    %39 = arith.mulf %34, %38 : vector<16x16xf32>
    %40 = arith.truncf %39 : vector<16x16xf32> to vector<16x16xbf16>
    %41 = vector.extract_strided_slice %23 {offsets = [0, 0], sizes = [16, 16], strides = [1, 1]} : vector<16x32xbf16> to vector<16x16xbf16>
    %cst_14 = arith.constant dense<0.000000e+00> : vector<16x16xf32>
    %42 = tpu.matmul %40, %41, %cst_14 {dimension_numbers = #tpu.dot_dimension_numbers<[1], [0], [0], [1], [0, 0, 1, 1], [], []>} : vector<16x16xbf16>, vector<16x16xbf16>, vector<16x16xf32> -> vector<16x16xf32>
    %43 = vector.extract_strided_slice %21 {offsets = [0, 16], sizes = [16, 16], strides = [1, 1]} : vector<16x32xbf16> to vector<16x16xbf16>
    %44 = vector.extract_strided_slice %22 {offsets = [0, 16], sizes = [16, 16], strides = [1, 1]} : vector<16x32xbf16> to vector<16x16xbf16>
    %cst_15 = arith.constant dense<0.000000e+00> : vector<16x16xf32>
    %45 = tpu.matmul %43, %44, %cst_15 {dimension_numbers = #tpu.dot_dimension_numbers<[1], [1], [0], [0], [0, 0, 1, 0], [], []>} : vector<16x16xbf16>, vector<16x16xbf16>, vector<16x16xf32> -> vector<16x16xf32>
    %cst_16 = arith.constant 2.500000e-01 : f32
    %46 = vector.broadcast %cst_16 : f32 to vector<16x16xf32>
    %47 = arith.mulf %45, %46 : vector<16x16xf32>
    %48 = arith.addf %47, %2 : vector<16x16xf32>
    %cst_17 = arith.constant dense<0xFF800000> : vector<16xf32>
    %49 = vector.multi_reduction <maximumf>, %48, %cst_17 [1] : vector<16x16xf32> to vector<16xf32>
    %50 = vector.shape_cast %49 : vector<16xf32> to vector<16x1xf32>
    %51 = vector.broadcast %50 : vector<16x1xf32> to vector<16x16xf32>
    %52 = arith.subf %48, %51 : vector<16x16xf32>
    %53 = math.exp %52 : vector<16x16xf32>
    %cst_18 = arith.constant dense<0.000000e+00> : vector<16xf32>
    %54 = vector.multi_reduction <add>, %53, %cst_18 [1] : vector<16x16xf32> to vector<16xf32>
    %55 = vector.shape_cast %54 : vector<16xf32> to vector<16x1xf32>
    %56 = tpu.reciprocal %55 {approx = true} : vector<16x1xf32> -> vector<16x1xf32>
    %57 = vector.broadcast %56 : vector<16x1xf32> to vector<16x16xf32>
    %58 = arith.mulf %53, %57 : vector<16x16xf32>
    %59 = arith.truncf %58 : vector<16x16xf32> to vector<16x16xbf16>
    %60 = vector.extract_strided_slice %23 {offsets = [0, 16], sizes = [16, 16], strides = [1, 1]} : vector<16x32xbf16> to vector<16x16xbf16>
    %cst_19 = arith.constant dense<0.000000e+00> : vector<16x16xf32>
    %61 = tpu.matmul %59, %60, %cst_19 {dimension_numbers = #tpu.dot_dimension_numbers<[1], [0], [0], [1], [0, 0, 1, 1], [], []>} : vector<16x16xbf16>, vector<16x16xbf16>, vector<16x16xf32> -> vector<16x16xf32>
    %62 = tpu.concatenate %42, %61 in 1 : vector<16x16xf32>, vector<16x16xf32> -> vector<16x32xf32>
    %63 = arith.truncf %62 : vector<16x32xf32> to vector<16x32xbf16>
    %cst_20 = arith.constant dense<0.000000e+00> : vector<16x32xf32>
    %64 = tpu.matmul %63, %5, %cst_20 {dimension_numbers = #tpu.dot_dimension_numbers<[1], [0], [0], [1], [0, 0, 1, 1], [], []>} : vector<16x32xbf16>, vector<32x32xbf16>, vector<16x32xf32> -> vector<16x32xf32>
    %65 = vector.broadcast %6 : vector<1x32xf32> to vector<16x32xf32>
    %66 = arith.addf %64, %65 : vector<16x32xf32>
    %67 = arith.addf %0, %66 : vector<16x32xf32>
    %c0_21 = arith.constant 0 : index
    %c0_22 = arith.constant 0 : index
    %68 = vector.load %arg6[%c0_21, %c0_22] : memref<1x32xf32, #tpu.memory_space<vmem>>, vector<1x32xf32>
    %c0_23 = arith.constant 0 : index
    %c0_24 = arith.constant 0 : index
    %69 = vector.load %arg7[%c0_23, %c0_24] : memref<1x32xf32, #tpu.memory_space<vmem>>, vector<1x32xf32>
    %cst_25 = arith.constant dense<0.000000e+00> : vector<16xf32>
    %70 = vector.multi_reduction <add>, %67, %cst_25 [1] : vector<16x32xf32> to vector<16xf32>
    %71 = vector.shape_cast %70 : vector<16xf32> to vector<16x1xf32>
    %cst_26 = arith.constant 3.200000e+01 : f32
    %72 = vector.broadcast %cst_26 : f32 to vector<16x1xf32>
    %73 = arith.divf %71, %72 : vector<16x1xf32>
    %74 = vector.broadcast %73 : vector<16x1xf32> to vector<16x32xf32>
    %75 = arith.subf %67, %74 : vector<16x32xf32>
    %76 = arith.mulf %75, %75 : vector<16x32xf32>
    %cst_27 = arith.constant dense<0.000000e+00> : vector<16xf32>
    %77 = vector.multi_reduction <add>, %76, %cst_27 [1] : vector<16x32xf32> to vector<16xf32>
    %78 = vector.shape_cast %77 : vector<16xf32> to vector<16x1xf32>
    %cst_28 = arith.constant 3.200000e+01 : f32
    %79 = vector.broadcast %cst_28 : f32 to vector<16x1xf32>
    %80 = arith.divf %78, %79 : vector<16x1xf32>
    %81 = vector.broadcast %73 : vector<16x1xf32> to vector<16x32xf32>
    %82 = arith.subf %67, %81 : vector<16x32xf32>
    %cst_29 = arith.constant 9.99999974E-6 : f32
    %83 = vector.broadcast %cst_29 : f32 to vector<16x1xf32>
    %84 = arith.addf %80, %83 : vector<16x1xf32>
    %85 = math.rsqrt %84 : vector<16x1xf32>
    %86 = vector.broadcast %85 : vector<16x1xf32> to vector<16x32xf32>
    %87 = arith.mulf %82, %86 : vector<16x32xf32>
    %88 = vector.broadcast %68 : vector<1x32xf32> to vector<16x32xf32>
    %89 = arith.mulf %87, %88 : vector<16x32xf32>
    %90 = vector.broadcast %69 : vector<1x32xf32> to vector<16x32xf32>
    %91 = arith.addf %89, %90 : vector<16x32xf32>
    %c0_30 = arith.constant 0 : index
    %c0_31 = arith.constant 0 : index
    %92 = vector.load %arg8[%c0_30, %c0_31] : memref<32x32xbf16, #tpu.memory_space<vmem>>, vector<32x32xbf16>
    %c0_32 = arith.constant 0 : index
    %c0_33 = arith.constant 0 : index
    %93 = vector.load %arg9[%c0_32, %c0_33] : memref<1x32xf32, #tpu.memory_space<vmem>>, vector<1x32xf32>
    %c0_34 = arith.constant 0 : index
    %c0_35 = arith.constant 0 : index
    %94 = vector.load %arg10[%c0_34, %c0_35] : memref<32x32xbf16, #tpu.memory_space<vmem>>, vector<32x32xbf16>
    %c0_36 = arith.constant 0 : index
    %c0_37 = arith.constant 0 : index
    %95 = vector.load %arg11[%c0_36, %c0_37] : memref<1x32xf32, #tpu.memory_space<vmem>>, vector<1x32xf32>
    %96 = arith.truncf %91 : vector<16x32xf32> to vector<16x32xbf16>
    %cst_38 = arith.constant dense<0.000000e+00> : vector<16x32xf32>
    %97 = tpu.matmul %96, %92, %cst_38 {dimension_numbers = #tpu.dot_dimension_numbers<[1], [0], [0], [1], [0, 0, 1, 1], [], []>} : vector<16x32xbf16>, vector<32x32xbf16>, vector<16x32xf32> -> vector<16x32xf32>
    %98 = vector.broadcast %93 : vector<1x32xf32> to vector<16x32xf32>
    %99 = arith.addf %97, %98 : vector<16x32xf32>
    %cst_39 = arith.constant 5.000000e-01 : f32
    %100 = vector.broadcast %cst_39 : f32 to vector<16x32xf32>
    %101 = arith.mulf %100, %99 : vector<16x32xf32>
    %cst_40 = arith.constant 0.707106769 : f32
    %102 = vector.broadcast %cst_40 : f32 to vector<16x32xf32>
    %103 = arith.mulf %99, %102 : vector<16x32xf32>
    %cst_41 = arith.constant 0.000000e+00 : f32
    %104 = vector.broadcast %cst_41 : f32 to vector<16x32xf32>
    %105 = arith.cmpf oge, %103, %104 : vector<16x32xf32>
    %cst_42 = arith.constant 1.000000e+00 : f32
    %cst_43 = arith.constant -1.000000e+00 : f32
    %106 = vector.broadcast %cst_42 : f32 to vector<16x32xf32>
    %107 = vector.broadcast %cst_43 : f32 to vector<16x32xf32>
    %108 = arith.select %105, %106, %107 : vector<16x32xi1>, vector<16x32xf32>
    %109 = math.absf %103 : vector<16x32xf32>
    %cst_44 = arith.constant 0.327591091 : f32
    %110 = vector.broadcast %cst_44 : f32 to vector<16x32xf32>
    %111 = arith.mulf %110, %109 : vector<16x32xf32>
    %cst_45 = arith.constant 1.000000e+00 : f32
    %112 = vector.broadcast %cst_45 : f32 to vector<16x32xf32>
    %113 = arith.addf %112, %111 : vector<16x32xf32>
    %cst_46 = arith.constant 1.000000e+00 : f32
    %114 = vector.broadcast %cst_46 : f32 to vector<16x32xf32>
    %115 = arith.divf %114, %113 : vector<16x32xf32>
    %cst_47 = arith.constant 1.06140542 : f32
    %116 = vector.broadcast %cst_47 : f32 to vector<16x32xf32>
    %117 = arith.mulf %116, %115 : vector<16x32xf32>
    %cst_48 = arith.constant -1.45315206 : f32
    %118 = vector.broadcast %cst_48 : f32 to vector<16x32xf32>
    %119 = arith.addf %117, %118 : vector<16x32xf32>
    %120 = arith.mulf %119, %115 : vector<16x32xf32>
    %cst_49 = arith.constant 1.42141378 : f32
    %121 = vector.broadcast %cst_49 : f32 to vector<16x32xf32>
    %122 = arith.addf %120, %121 : vector<16x32xf32>
    %123 = arith.mulf %122, %115 : vector<16x32xf32>
    %cst_50 = arith.constant -0.284496725 : f32
    %124 = vector.broadcast %cst_50 : f32 to vector<16x32xf32>
    %125 = arith.addf %123, %124 : vector<16x32xf32>
    %126 = arith.mulf %125, %115 : vector<16x32xf32>
    %cst_51 = arith.constant 0.254829586 : f32
    %127 = vector.broadcast %cst_51 : f32 to vector<16x32xf32>
    %128 = arith.addf %126, %127 : vector<16x32xf32>
    %129 = arith.mulf %128, %115 : vector<16x32xf32>
    %cst_52 = arith.constant 0.000000e+00 : f32
    %130 = vector.broadcast %cst_52 : f32 to vector<16x32xf32>
    %131 = arith.subf %130, %109 : vector<16x32xf32>
    %132 = arith.mulf %131, %109 : vector<16x32xf32>
    %133 = math.exp %132 : vector<16x32xf32>
    %134 = arith.mulf %129, %133 : vector<16x32xf32>
    %cst_53 = arith.constant 1.000000e+00 : f32
    %135 = vector.broadcast %cst_53 : f32 to vector<16x32xf32>
    %136 = arith.subf %135, %134 : vector<16x32xf32>
    %137 = arith.mulf %108, %136 : vector<16x32xf32>
    %cst_54 = arith.constant 1.000000e+00 : f32
    %138 = vector.broadcast %cst_54 : f32 to vector<16x32xf32>
    %139 = arith.addf %138, %137 : vector<16x32xf32>
    %140 = arith.mulf %101, %139 : vector<16x32xf32>
    %141 = arith.truncf %140 : vector<16x32xf32> to vector<16x32xbf16>
    %cst_55 = arith.constant dense<0.000000e+00> : vector<16x32xf32>
    %142 = tpu.matmul %141, %94, %cst_55 {dimension_numbers = #tpu.dot_dimension_numbers<[1], [0], [0], [1], [0, 0, 1, 1], [], []>} : vector<16x32xbf16>, vector<32x32xbf16>, vector<16x32xf32> -> vector<16x32xf32>
    %143 = vector.broadcast %95 : vector<1x32xf32> to vector<16x32xf32>
    %144 = arith.addf %142, %143 : vector<16x32xf32>
    %145 = arith.addf %91, %144 : vector<16x32xf32>
    %c0_56 = arith.constant 0 : index
    %c0_57 = arith.constant 0 : index
    %146 = vector.load %arg12[%c0_56, %c0_57] : memref<1x32xf32, #tpu.memory_space<vmem>>, vector<1x32xf32>
    %c0_58 = arith.constant 0 : index
    %c0_59 = arith.constant 0 : index
    %147 = vector.load %arg13[%c0_58, %c0_59] : memref<1x32xf32, #tpu.memory_space<vmem>>, vector<1x32xf32>
    %cst_60 = arith.constant dense<0.000000e+00> : vector<16xf32>
    %148 = vector.multi_reduction <add>, %145, %cst_60 [1] : vector<16x32xf32> to vector<16xf32>
    %149 = vector.shape_cast %148 : vector<16xf32> to vector<16x1xf32>
    %cst_61 = arith.constant 3.200000e+01 : f32
    %150 = vector.broadcast %cst_61 : f32 to vector<16x1xf32>
    %151 = arith.divf %149, %150 : vector<16x1xf32>
    %152 = vector.broadcast %151 : vector<16x1xf32> to vector<16x32xf32>
    %153 = arith.subf %145, %152 : vector<16x32xf32>
    %154 = arith.mulf %153, %153 : vector<16x32xf32>
    %cst_62 = arith.constant dense<0.000000e+00> : vector<16xf32>
    %155 = vector.multi_reduction <add>, %154, %cst_62 [1] : vector<16x32xf32> to vector<16xf32>
    %156 = vector.shape_cast %155 : vector<16xf32> to vector<16x1xf32>
    %cst_63 = arith.constant 3.200000e+01 : f32
    %157 = vector.broadcast %cst_63 : f32 to vector<16x1xf32>
    %158 = arith.divf %156, %157 : vector<16x1xf32>
    %159 = vector.broadcast %151 : vector<16x1xf32> to vector<16x32xf32>
    %160 = arith.subf %145, %159 : vector<16x32xf32>
    %cst_64 = arith.constant 9.99999974E-6 : f32
    %161 = vector.broadcast %cst_64 : f32 to vector<16x1xf32>
    %162 = arith.addf %158, %161 : vector<16x1xf32>
    %163 = math.rsqrt %162 : vector<16x1xf32>
    %164 = vector.broadcast %163 : vector<16x1xf32> to vector<16x32xf32>
    %165 = arith.mulf %160, %164 : vector<16x32xf32>
    %166 = vector.broadcast %146 : vector<1x32xf32> to vector<16x32xf32>
    %167 = arith.mulf %165, %166 : vector<16x32xf32>
    %168 = vector.broadcast %147 : vector<1x32xf32> to vector<16x32xf32>
    %169 = arith.addf %167, %168 : vector<16x32xf32>
    %c0_65 = arith.constant 0 : index
    %c0_66 = arith.constant 0 : index
    %170 = vector.load %arg16[%c0_65, %c0_66] : memref<16x32xf32, #tpu.memory_space<vmem>>, vector<16x32xf32>
    tpu.vector_store %arg16[%c0_65, %c0_66], %169 {strides = array<i32>} : memref<16x32xf32, #tpu.memory_space<vmem>>, vector<16x32xf32>,
    %c0_67 = arith.constant 0 : index
    %c0_68 = arith.constant 0 : index
    %171 = vector.load %arg14[%c0_67, %c0_68] : memref<32x12xbf16, #tpu.memory_space<vmem>>, vector<32x12xbf16>
    %c0_69 = arith.constant 0 : index
    %c0_70 = arith.constant 0 : index
    %172 = vector.load %arg15[%c0_69, %c0_70] : memref<1x12xf32, #tpu.memory_space<vmem>>, vector<1x12xf32>
    %173 = arith.truncf %169 : vector<16x32xf32> to vector<16x32xbf16>
    %cst_71 = arith.constant dense<0.000000e+00> : vector<16x12xf32>
    %174 = tpu.matmul %173, %171, %cst_71 {dimension_numbers = #tpu.dot_dimension_numbers<[1], [0], [0], [1], [0, 0, 1, 1], [], []>} : vector<16x32xbf16>, vector<32x12xbf16>, vector<16x12xf32> -> vector<16x12xf32>
    %175 = vector.broadcast %172 : vector<1x12xf32> to vector<16x12xf32>
    %176 = arith.addf %174, %175 : vector<16x12xf32>
    %c0_72 = arith.constant 0 : index
    %c0_73 = arith.constant 0 : index
    %177 = vector.load %arg17[%c0_72, %c0_73] : memref<16x12xf32, #tpu.memory_space<vmem>>, vector<16x12xf32>
    tpu.vector_store %arg17[%c0_72, %c0_73], %176 {strides = array<i32>} : memref<16x12xf32, #tpu.memory_space<vmem>>, vector<16x12xf32>,
    return
  }
  func.func @transform_0(%arg0: i32) -> (i32, i32) {
    %c0_i32 = arith.constant 0 : i32
    %c0_i32_0 = arith.constant 0 : i32
    return %arg0, %c0_i32 : i32, i32
  }
  func.func @transform_1(%arg0: i32) -> (i32, i32) {
    %c0_i32 = arith.constant 0 : i32
    %c0_i32_0 = arith.constant 0 : i32
    return %arg0, %c0_i32 : i32, i32
  }
  func.func @transform_2(%arg0: i32) -> (i32, i32) {
    %c0_i32 = arith.constant 0 : i32
    %c0_i32_0 = arith.constant 0 : i32
    %c0_i32_1 = arith.constant 0 : i32
    return %c0_i32, %c0_i32_0 : i32, i32
  }
  func.func @transform_3(%arg0: i32) -> (i32, i32) {
    %c0_i32 = arith.constant 0 : i32
    %c0_i32_0 = arith.constant 0 : i32
    %c0_i32_1 = arith.constant 0 : i32
    return %c0_i32, %c0_i32_0 : i32, i32
  }
  func.func @transform_4(%arg0: i32) -> (i32, i32) {
    %c0_i32 = arith.constant 0 : i32
    %c0_i32_0 = arith.constant 0 : i32
    %c0_i32_1 = arith.constant 0 : i32
    return %c0_i32, %c0_i32_0 : i32, i32
  }
  func.func @transform_5(%arg0: i32) -> (i32, i32) {
    %c0_i32 = arith.constant 0 : i32
    %c0_i32_0 = arith.constant 0 : i32
    %c0_i32_1 = arith.constant 0 : i32
    return %c0_i32, %c0_i32_0 : i32, i32
  }
  func.func @transform_6(%arg0: i32) -> (i32, i32) {
    %c0_i32 = arith.constant 0 : i32
    %c0_i32_0 = arith.constant 0 : i32
    %c0_i32_1 = arith.constant 0 : i32
    return %c0_i32, %c0_i32_0 : i32, i32
  }
  func.func @transform_7(%arg0: i32) -> (i32, i32) {
    %c0_i32 = arith.constant 0 : i32
    %c0_i32_0 = arith.constant 0 : i32
    %c0_i32_1 = arith.constant 0 : i32
    return %c0_i32, %c0_i32_0 : i32, i32
  }
  func.func @transform_8(%arg0: i32) -> (i32, i32) {
    %c0_i32 = arith.constant 0 : i32
    %c0_i32_0 = arith.constant 0 : i32
    %c0_i32_1 = arith.constant 0 : i32
    return %c0_i32, %c0_i32_0 : i32, i32
  }
  func.func @transform_9(%arg0: i32) -> (i32, i32) {
    %c0_i32 = arith.constant 0 : i32
    %c0_i32_0 = arith.constant 0 : i32
    %c0_i32_1 = arith.constant 0 : i32
    return %c0_i32, %c0_i32_0 : i32, i32
  }
  func.func @transform_10(%arg0: i32) -> (i32, i32) {
    %c0_i32 = arith.constant 0 : i32
    %c0_i32_0 = arith.constant 0 : i32
    %c0_i32_1 = arith.constant 0 : i32
    return %c0_i32, %c0_i32_0 : i32, i32
  }
  func.func @transform_11(%arg0: i32) -> (i32, i32) {
    %c0_i32 = arith.constant 0 : i32
    %c0_i32_0 = arith.constant 0 : i32
    %c0_i32_1 = arith.constant 0 : i32
    return %c0_i32, %c0_i32_0 : i32, i32
  }
  func.func @transform_12(%arg0: i32) -> (i32, i32) {
    %c0_i32 = arith.constant 0 : i32
    %c0_i32_0 = arith.constant 0 : i32
    %c0_i32_1 = arith.constant 0 : i32
    return %c0_i32, %c0_i32_0 : i32, i32
  }
  func.func @transform_13(%arg0: i32) -> (i32, i32) {
    %c0_i32 = arith.constant 0 : i32
    %c0_i32_0 = arith.constant 0 : i32
    %c0_i32_1 = arith.constant 0 : i32
    return %c0_i32, %c0_i32_0 : i32, i32
  }
  func.func @transform_14(%arg0: i32) -> (i32, i32) {
    %c0_i32 = arith.constant 0 : i32
    %c0_i32_0 = arith.constant 0 : i32
    %c0_i32_1 = arith.constant 0 : i32
    return %c0_i32, %c0_i32_0 : i32, i32
  }
  func.func @transform_15(%arg0: i32) -> (i32, i32) {
    %c0_i32 = arith.constant 0 : i32
    %c0_i32_0 = arith.constant 0 : i32
    return %arg0, %c0_i32 : i32, i32
  }
  func.func @transform_16(%arg0: i32) -> (i32, i32) {
    %c0_i32 = arith.constant 0 : i32
    %c0_i32_0 = arith.constant 0 : i32
    return %arg0, %c0_i32 : i32, i32
  }
}

module attributes {stable_mosaic.version = 11 : i64} {
  func.func @_cross_pred_kernel(%arg0: i32, %arg1: memref<16x32xf32, #tpu.memory_space<vmem>>, %arg2: memref<8x32xf32, #tpu.memory_space<vmem>>, %arg3: memref<16x8xf32, #tpu.memory_space<vmem>>, %arg4: memref<32x128xbf16, #tpu.memory_space<vmem>>, %arg5: memref<1x128xf32, #tpu.memory_space<vmem>>, %arg6: memref<1x32xf32, #tpu.memory_space<vmem>>, %arg7: memref<1x32xf32, #tpu.memory_space<vmem>>, %arg8: memref<32x32xbf16, #tpu.memory_space<vmem>>, %arg9: memref<1x32xf32, #tpu.memory_space<vmem>>, %arg10: memref<32x32xbf16, #tpu.memory_space<vmem>>, %arg11: memref<1x32xf32, #tpu.memory_space<vmem>>, %arg12: memref<1x32xf32, #tpu.memory_space<vmem>>, %arg13: memref<1x32xf32, #tpu.memory_space<vmem>>, %arg14: memref<32x12xbf16, #tpu.memory_space<vmem>>, %arg15: memref<1x12xf32, #tpu.memory_space<vmem>>, %arg16: memref<16x32xf32, #tpu.memory_space<vmem>>, %arg17: memref<16x12xf32, #tpu.memory_space<vmem>>) attributes {dimension_semantics = [#tpu.dimension_semantics<parallel>], iteration_bounds = array<i64: 1>, scalar_prefetch = 0 : i64, scratch_operands = 0 : i64, tpu.core_type = #tpu.core_type<tc>, window_params = [{transform_indices = @transform_0, window_bounds = array<i64: 16, 32>}, {transform_indices = @transform_1, window_bounds = array<i64: 8, 32>}, {pipeline_mode = #tpu.pipeline_mode<synchronous>, transform_indices = @transform_2, window_bounds = array<i64: 16, 8>}, {pipeline_mode = #tpu.pipeline_mode<synchronous>, transform_indices = @transform_3, window_bounds = array<i64: 32, 128>}, {pipeline_mode = #tpu.pipeline_mode<synchronous>, transform_indices = @transform_4, window_bounds = array<i64: 1, 128>}, {pipeline_mode = #tpu.pipeline_mode<synchronous>, transform_indices = @transform_5, window_bounds = array<i64: 1, 32>}, {pipeline_mode = #tpu.pipeline_mode<synchronous>, transform_indices = @transform_6, window_bounds = array<i64: 1, 32>}, {pipeline_mode = #tpu.pipeline_mode<synchronous>, transform_indices = @transform_7, window_bounds = array<i64: 32, 32>}, {pipeline_mode = #tpu.pipeline_mode<synchronous>, transform_indices = @transform_8, window_bounds = array<i64: 1, 32>}, {pipeline_mode = #tpu.pipeline_mode<synchronous>, transform_indices = @transform_9, window_bounds = array<i64: 32, 32>}, {pipeline_mode = #tpu.pipeline_mode<synchronous>, transform_indices = @transform_10, window_bounds = array<i64: 1, 32>}, {pipeline_mode = #tpu.pipeline_mode<synchronous>, transform_indices = @transform_11, window_bounds = array<i64: 1, 32>}, {pipeline_mode = #tpu.pipeline_mode<synchronous>, transform_indices = @transform_12, window_bounds = array<i64: 1, 32>}, {pipeline_mode = #tpu.pipeline_mode<synchronous>, transform_indices = @transform_13, window_bounds = array<i64: 32, 12>}, {pipeline_mode = #tpu.pipeline_mode<synchronous>, transform_indices = @transform_14, window_bounds = array<i64: 1, 12>}, {transform_indices = @transform_15, window_bounds = array<i64: 16, 32>}, {transform_indices = @transform_16, window_bounds = array<i64: 16, 12>}]} {
    %c0 = arith.constant 0 : index
    %c0_0 = arith.constant 0 : index
    %0 = vector.load %arg1[%c0, %c0_0] : memref<16x32xf32, #tpu.memory_space<vmem>>, vector<16x32xf32>
    %c0_1 = arith.constant 0 : index
    %c0_2 = arith.constant 0 : index
    %1 = vector.load %arg2[%c0_1, %c0_2] : memref<8x32xf32, #tpu.memory_space<vmem>>, vector<8x32xf32>
    %c0_3 = arith.constant 0 : index
    %c0_4 = arith.constant 0 : index
    %2 = vector.load %arg3[%c0_3, %c0_4] : memref<16x8xf32, #tpu.memory_space<vmem>>, vector<16x8xf32>
    %c0_5 = arith.constant 0 : index
    %c0_6 = arith.constant 0 : index
    %3 = vector.load %arg4[%c0_5, %c0_6] : memref<32x128xbf16, #tpu.memory_space<vmem>>, vector<32x128xbf16>
    %c0_7 = arith.constant 0 : index
    %c0_8 = arith.constant 0 : index
    %4 = vector.load %arg5[%c0_7, %c0_8] : memref<1x128xf32, #tpu.memory_space<vmem>>, vector<1x128xf32>
    %5 = vector.extract_strided_slice %3 {offsets = [0, 96], sizes = [32, 32], strides = [1, 1]} : vector<32x128xbf16> to vector<32x32xbf16>
    %6 = vector.extract_strided_slice %4 {offsets = [0, 96], sizes = [1, 32], strides = [1, 1]} : vector<1x128xf32> to vector<1x32xf32>
    %7 = vector.extract_strided_slice %3 {offsets = [0, 64], sizes = [32, 32], strides = [1, 1]} : vector<32x128xbf16> to vector<32x32xbf16>
    %8 = vector.extract_strided_slice %4 {offsets = [0, 64], sizes = [1, 32], strides = [1, 1]} : vector<1x128xf32> to vector<1x32xf32>
    %9 = arith.truncf %1 : vector<8x32xf32> to vector<8x32xbf16>
    %cst = arith.constant dense<0.000000e+00> : vector<8x32xf32>
    %10 = tpu.matmul %9, %7, %cst {dimension_numbers = #tpu.dot_dimension_numbers<[1], [0], [0], [1], [0, 0, 1, 1], [], []>} : vector<8x32xbf16>, vector<32x32xbf16>, vector<8x32xf32> -> vector<8x32xf32>
    %11 = vector.broadcast %8 : vector<1x32xf32> to vector<8x32xf32>
    %12 = arith.addf %10, %11 : vector<8x32xf32>
    %cst_9 = arith.constant -5.000000e-01 : f32
    %13 = vector.broadcast %cst_9 : f32 to vector<16x8xf32>
    %14 = arith.cmpf oge, %2, %13 : vector<16x8xf32>
    %cst_10 = arith.constant 1.000000e+00 : f32
    %cst_11 = arith.constant 0.000000e+00 : f32
    %15 = vector.broadcast %cst_10 : f32 to vector<16x8xf32>
    %16 = vector.broadcast %cst_11 : f32 to vector<16x8xf32>
    %17 = arith.select %14, %15, %16 : vector<16x8xi1>, vector<16x8xf32>
    %18 = arith.truncf %17 : vector<16x8xf32> to vector<16x8xbf16>
    %19 = arith.truncf %12 : vector<8x32xf32> to vector<8x32xbf16>
    %cst_12 = arith.constant dense<0.000000e+00> : vector<16x32xf32>
    %20 = tpu.matmul %18, %19, %cst_12 {dimension_numbers = #tpu.dot_dimension_numbers<[1], [0], [0], [1], [0, 0, 1, 1], [], []>} : vector<16x8xbf16>, vector<8x32xbf16>, vector<16x32xf32> -> vector<16x32xf32>
    %21 = arith.truncf %20 : vector<16x32xf32> to vector<16x32xbf16>
    %cst_13 = arith.constant dense<0.000000e+00> : vector<16x32xf32>
    %22 = tpu.matmul %21, %5, %cst_13 {dimension_numbers = #tpu.dot_dimension_numbers<[1], [0], [0], [1], [0, 0, 1, 1], [], []>} : vector<16x32xbf16>, vector<32x32xbf16>, vector<16x32xf32> -> vector<16x32xf32>
    %23 = vector.broadcast %6 : vector<1x32xf32> to vector<16x32xf32>
    %24 = arith.addf %22, %23 : vector<16x32xf32>
    %25 = arith.addf %0, %24 : vector<16x32xf32>
    %c0_14 = arith.constant 0 : index
    %c0_15 = arith.constant 0 : index
    %26 = vector.load %arg6[%c0_14, %c0_15] : memref<1x32xf32, #tpu.memory_space<vmem>>, vector<1x32xf32>
    %c0_16 = arith.constant 0 : index
    %c0_17 = arith.constant 0 : index
    %27 = vector.load %arg7[%c0_16, %c0_17] : memref<1x32xf32, #tpu.memory_space<vmem>>, vector<1x32xf32>
    %cst_18 = arith.constant dense<0.000000e+00> : vector<16xf32>
    %28 = vector.multi_reduction <add>, %25, %cst_18 [1] : vector<16x32xf32> to vector<16xf32>
    %29 = vector.shape_cast %28 : vector<16xf32> to vector<16x1xf32>
    %cst_19 = arith.constant 3.200000e+01 : f32
    %30 = vector.broadcast %cst_19 : f32 to vector<16x1xf32>
    %31 = arith.divf %29, %30 : vector<16x1xf32>
    %32 = vector.broadcast %31 : vector<16x1xf32> to vector<16x32xf32>
    %33 = arith.subf %25, %32 : vector<16x32xf32>
    %34 = arith.mulf %33, %33 : vector<16x32xf32>
    %cst_20 = arith.constant dense<0.000000e+00> : vector<16xf32>
    %35 = vector.multi_reduction <add>, %34, %cst_20 [1] : vector<16x32xf32> to vector<16xf32>
    %36 = vector.shape_cast %35 : vector<16xf32> to vector<16x1xf32>
    %cst_21 = arith.constant 3.200000e+01 : f32
    %37 = vector.broadcast %cst_21 : f32 to vector<16x1xf32>
    %38 = arith.divf %36, %37 : vector<16x1xf32>
    %39 = vector.broadcast %31 : vector<16x1xf32> to vector<16x32xf32>
    %40 = arith.subf %25, %39 : vector<16x32xf32>
    %cst_22 = arith.constant 9.99999974E-6 : f32
    %41 = vector.broadcast %cst_22 : f32 to vector<16x1xf32>
    %42 = arith.addf %38, %41 : vector<16x1xf32>
    %43 = math.rsqrt %42 : vector<16x1xf32>
    %44 = vector.broadcast %43 : vector<16x1xf32> to vector<16x32xf32>
    %45 = arith.mulf %40, %44 : vector<16x32xf32>
    %46 = vector.broadcast %26 : vector<1x32xf32> to vector<16x32xf32>
    %47 = arith.mulf %45, %46 : vector<16x32xf32>
    %48 = vector.broadcast %27 : vector<1x32xf32> to vector<16x32xf32>
    %49 = arith.addf %47, %48 : vector<16x32xf32>
    %c0_23 = arith.constant 0 : index
    %c0_24 = arith.constant 0 : index
    %50 = vector.load %arg8[%c0_23, %c0_24] : memref<32x32xbf16, #tpu.memory_space<vmem>>, vector<32x32xbf16>
    %c0_25 = arith.constant 0 : index
    %c0_26 = arith.constant 0 : index
    %51 = vector.load %arg9[%c0_25, %c0_26] : memref<1x32xf32, #tpu.memory_space<vmem>>, vector<1x32xf32>
    %c0_27 = arith.constant 0 : index
    %c0_28 = arith.constant 0 : index
    %52 = vector.load %arg10[%c0_27, %c0_28] : memref<32x32xbf16, #tpu.memory_space<vmem>>, vector<32x32xbf16>
    %c0_29 = arith.constant 0 : index
    %c0_30 = arith.constant 0 : index
    %53 = vector.load %arg11[%c0_29, %c0_30] : memref<1x32xf32, #tpu.memory_space<vmem>>, vector<1x32xf32>
    %54 = arith.truncf %49 : vector<16x32xf32> to vector<16x32xbf16>
    %cst_31 = arith.constant dense<0.000000e+00> : vector<16x32xf32>
    %55 = tpu.matmul %54, %50, %cst_31 {dimension_numbers = #tpu.dot_dimension_numbers<[1], [0], [0], [1], [0, 0, 1, 1], [], []>} : vector<16x32xbf16>, vector<32x32xbf16>, vector<16x32xf32> -> vector<16x32xf32>
    %56 = vector.broadcast %51 : vector<1x32xf32> to vector<16x32xf32>
    %57 = arith.addf %55, %56 : vector<16x32xf32>
    %cst_32 = arith.constant 5.000000e-01 : f32
    %58 = vector.broadcast %cst_32 : f32 to vector<16x32xf32>
    %59 = arith.mulf %58, %57 : vector<16x32xf32>
    %cst_33 = arith.constant 0.707106769 : f32
    %60 = vector.broadcast %cst_33 : f32 to vector<16x32xf32>
    %61 = arith.mulf %57, %60 : vector<16x32xf32>
    %cst_34 = arith.constant 0.000000e+00 : f32
    %62 = vector.broadcast %cst_34 : f32 to vector<16x32xf32>
    %63 = arith.cmpf oge, %61, %62 : vector<16x32xf32>
    %cst_35 = arith.constant 1.000000e+00 : f32
    %cst_36 = arith.constant -1.000000e+00 : f32
    %64 = vector.broadcast %cst_35 : f32 to vector<16x32xf32>
    %65 = vector.broadcast %cst_36 : f32 to vector<16x32xf32>
    %66 = arith.select %63, %64, %65 : vector<16x32xi1>, vector<16x32xf32>
    %67 = math.absf %61 : vector<16x32xf32>
    %cst_37 = arith.constant 0.327591091 : f32
    %68 = vector.broadcast %cst_37 : f32 to vector<16x32xf32>
    %69 = arith.mulf %68, %67 : vector<16x32xf32>
    %cst_38 = arith.constant 1.000000e+00 : f32
    %70 = vector.broadcast %cst_38 : f32 to vector<16x32xf32>
    %71 = arith.addf %70, %69 : vector<16x32xf32>
    %cst_39 = arith.constant 1.000000e+00 : f32
    %72 = vector.broadcast %cst_39 : f32 to vector<16x32xf32>
    %73 = arith.divf %72, %71 : vector<16x32xf32>
    %cst_40 = arith.constant 1.06140542 : f32
    %74 = vector.broadcast %cst_40 : f32 to vector<16x32xf32>
    %75 = arith.mulf %74, %73 : vector<16x32xf32>
    %cst_41 = arith.constant -1.45315206 : f32
    %76 = vector.broadcast %cst_41 : f32 to vector<16x32xf32>
    %77 = arith.addf %75, %76 : vector<16x32xf32>
    %78 = arith.mulf %77, %73 : vector<16x32xf32>
    %cst_42 = arith.constant 1.42141378 : f32
    %79 = vector.broadcast %cst_42 : f32 to vector<16x32xf32>
    %80 = arith.addf %78, %79 : vector<16x32xf32>
    %81 = arith.mulf %80, %73 : vector<16x32xf32>
    %cst_43 = arith.constant -0.284496725 : f32
    %82 = vector.broadcast %cst_43 : f32 to vector<16x32xf32>
    %83 = arith.addf %81, %82 : vector<16x32xf32>
    %84 = arith.mulf %83, %73 : vector<16x32xf32>
    %cst_44 = arith.constant 0.254829586 : f32
    %85 = vector.broadcast %cst_44 : f32 to vector<16x32xf32>
    %86 = arith.addf %84, %85 : vector<16x32xf32>
    %87 = arith.mulf %86, %73 : vector<16x32xf32>
    %cst_45 = arith.constant 0.000000e+00 : f32
    %88 = vector.broadcast %cst_45 : f32 to vector<16x32xf32>
    %89 = arith.subf %88, %67 : vector<16x32xf32>
    %90 = arith.mulf %89, %67 : vector<16x32xf32>
    %91 = math.exp %90 : vector<16x32xf32>
    %92 = arith.mulf %87, %91 : vector<16x32xf32>
    %cst_46 = arith.constant 1.000000e+00 : f32
    %93 = vector.broadcast %cst_46 : f32 to vector<16x32xf32>
    %94 = arith.subf %93, %92 : vector<16x32xf32>
    %95 = arith.mulf %66, %94 : vector<16x32xf32>
    %cst_47 = arith.constant 1.000000e+00 : f32
    %96 = vector.broadcast %cst_47 : f32 to vector<16x32xf32>
    %97 = arith.addf %96, %95 : vector<16x32xf32>
    %98 = arith.mulf %59, %97 : vector<16x32xf32>
    %99 = arith.truncf %98 : vector<16x32xf32> to vector<16x32xbf16>
    %cst_48 = arith.constant dense<0.000000e+00> : vector<16x32xf32>
    %100 = tpu.matmul %99, %52, %cst_48 {dimension_numbers = #tpu.dot_dimension_numbers<[1], [0], [0], [1], [0, 0, 1, 1], [], []>} : vector<16x32xbf16>, vector<32x32xbf16>, vector<16x32xf32> -> vector<16x32xf32>
    %101 = vector.broadcast %53 : vector<1x32xf32> to vector<16x32xf32>
    %102 = arith.addf %100, %101 : vector<16x32xf32>
    %103 = arith.addf %49, %102 : vector<16x32xf32>
    %c0_49 = arith.constant 0 : index
    %c0_50 = arith.constant 0 : index
    %104 = vector.load %arg12[%c0_49, %c0_50] : memref<1x32xf32, #tpu.memory_space<vmem>>, vector<1x32xf32>
    %c0_51 = arith.constant 0 : index
    %c0_52 = arith.constant 0 : index
    %105 = vector.load %arg13[%c0_51, %c0_52] : memref<1x32xf32, #tpu.memory_space<vmem>>, vector<1x32xf32>
    %cst_53 = arith.constant dense<0.000000e+00> : vector<16xf32>
    %106 = vector.multi_reduction <add>, %103, %cst_53 [1] : vector<16x32xf32> to vector<16xf32>
    %107 = vector.shape_cast %106 : vector<16xf32> to vector<16x1xf32>
    %cst_54 = arith.constant 3.200000e+01 : f32
    %108 = vector.broadcast %cst_54 : f32 to vector<16x1xf32>
    %109 = arith.divf %107, %108 : vector<16x1xf32>
    %110 = vector.broadcast %109 : vector<16x1xf32> to vector<16x32xf32>
    %111 = arith.subf %103, %110 : vector<16x32xf32>
    %112 = arith.mulf %111, %111 : vector<16x32xf32>
    %cst_55 = arith.constant dense<0.000000e+00> : vector<16xf32>
    %113 = vector.multi_reduction <add>, %112, %cst_55 [1] : vector<16x32xf32> to vector<16xf32>
    %114 = vector.shape_cast %113 : vector<16xf32> to vector<16x1xf32>
    %cst_56 = arith.constant 3.200000e+01 : f32
    %115 = vector.broadcast %cst_56 : f32 to vector<16x1xf32>
    %116 = arith.divf %114, %115 : vector<16x1xf32>
    %117 = vector.broadcast %109 : vector<16x1xf32> to vector<16x32xf32>
    %118 = arith.subf %103, %117 : vector<16x32xf32>
    %cst_57 = arith.constant 9.99999974E-6 : f32
    %119 = vector.broadcast %cst_57 : f32 to vector<16x1xf32>
    %120 = arith.addf %116, %119 : vector<16x1xf32>
    %121 = math.rsqrt %120 : vector<16x1xf32>
    %122 = vector.broadcast %121 : vector<16x1xf32> to vector<16x32xf32>
    %123 = arith.mulf %118, %122 : vector<16x32xf32>
    %124 = vector.broadcast %104 : vector<1x32xf32> to vector<16x32xf32>
    %125 = arith.mulf %123, %124 : vector<16x32xf32>
    %126 = vector.broadcast %105 : vector<1x32xf32> to vector<16x32xf32>
    %127 = arith.addf %125, %126 : vector<16x32xf32>
    %c0_58 = arith.constant 0 : index
    %c0_59 = arith.constant 0 : index
    %128 = vector.load %arg16[%c0_58, %c0_59] : memref<16x32xf32, #tpu.memory_space<vmem>>, vector<16x32xf32>
    tpu.vector_store %arg16[%c0_58, %c0_59], %127 {strides = array<i32>} : memref<16x32xf32, #tpu.memory_space<vmem>>, vector<16x32xf32>,
    %c0_60 = arith.constant 0 : index
    %c0_61 = arith.constant 0 : index
    %129 = vector.load %arg14[%c0_60, %c0_61] : memref<32x12xbf16, #tpu.memory_space<vmem>>, vector<32x12xbf16>
    %c0_62 = arith.constant 0 : index
    %c0_63 = arith.constant 0 : index
    %130 = vector.load %arg15[%c0_62, %c0_63] : memref<1x12xf32, #tpu.memory_space<vmem>>, vector<1x12xf32>
    %131 = arith.truncf %127 : vector<16x32xf32> to vector<16x32xbf16>
    %cst_64 = arith.constant dense<0.000000e+00> : vector<16x12xf32>
    %132 = tpu.matmul %131, %129, %cst_64 {dimension_numbers = #tpu.dot_dimension_numbers<[1], [0], [0], [1], [0, 0, 1, 1], [], []>} : vector<16x32xbf16>, vector<32x12xbf16>, vector<16x12xf32> -> vector<16x12xf32>
    %133 = vector.broadcast %130 : vector<1x12xf32> to vector<16x12xf32>
    %134 = arith.addf %132, %133 : vector<16x12xf32>
    %c0_65 = arith.constant 0 : index
    %c0_66 = arith.constant 0 : index
    %135 = vector.load %arg17[%c0_65, %c0_66] : memref<16x12xf32, #tpu.memory_space<vmem>>, vector<16x12xf32>
    tpu.vector_store %arg17[%c0_65, %c0_66], %134 {strides = array<i32>} : memref<16x12xf32, #tpu.memory_space<vmem>>, vector<16x12xf32>,
    return
  }
  func.func @transform_0(%arg0: i32) -> (i32, i32) {
    %c0_i32 = arith.constant 0 : i32
    %c0_i32_0 = arith.constant 0 : i32
    return %arg0, %c0_i32 : i32, i32
  }
  func.func @transform_1(%arg0: i32) -> (i32, i32) {
    %c0_i32 = arith.constant 0 : i32
    %c0_i32_0 = arith.constant 0 : i32
    return %arg0, %c0_i32 : i32, i32
  }
  func.func @transform_2(%arg0: i32) -> (i32, i32) {
    %c0_i32 = arith.constant 0 : i32
    %c0_i32_0 = arith.constant 0 : i32
    %c0_i32_1 = arith.constant 0 : i32
    return %c0_i32, %c0_i32_0 : i32, i32
  }
  func.func @transform_3(%arg0: i32) -> (i32, i32) {
    %c0_i32 = arith.constant 0 : i32
    %c0_i32_0 = arith.constant 0 : i32
    %c0_i32_1 = arith.constant 0 : i32
    return %c0_i32, %c0_i32_0 : i32, i32
  }
  func.func @transform_4(%arg0: i32) -> (i32, i32) {
    %c0_i32 = arith.constant 0 : i32
    %c0_i32_0 = arith.constant 0 : i32
    %c0_i32_1 = arith.constant 0 : i32
    return %c0_i32, %c0_i32_0 : i32, i32
  }
  func.func @transform_5(%arg0: i32) -> (i32, i32) {
    %c0_i32 = arith.constant 0 : i32
    %c0_i32_0 = arith.constant 0 : i32
    %c0_i32_1 = arith.constant 0 : i32
    return %c0_i32, %c0_i32_0 : i32, i32
  }
  func.func @transform_6(%arg0: i32) -> (i32, i32) {
    %c0_i32 = arith.constant 0 : i32
    %c0_i32_0 = arith.constant 0 : i32
    %c0_i32_1 = arith.constant 0 : i32
    return %c0_i32, %c0_i32_0 : i32, i32
  }
  func.func @transform_7(%arg0: i32) -> (i32, i32) {
    %c0_i32 = arith.constant 0 : i32
    %c0_i32_0 = arith.constant 0 : i32
    %c0_i32_1 = arith.constant 0 : i32
    return %c0_i32, %c0_i32_0 : i32, i32
  }
  func.func @transform_8(%arg0: i32) -> (i32, i32) {
    %c0_i32 = arith.constant 0 : i32
    %c0_i32_0 = arith.constant 0 : i32
    %c0_i32_1 = arith.constant 0 : i32
    return %c0_i32, %c0_i32_0 : i32, i32
  }
  func.func @transform_9(%arg0: i32) -> (i32, i32) {
    %c0_i32 = arith.constant 0 : i32
    %c0_i32_0 = arith.constant 0 : i32
    %c0_i32_1 = arith.constant 0 : i32
    return %c0_i32, %c0_i32_0 : i32, i32
  }
  func.func @transform_10(%arg0: i32) -> (i32, i32) {
    %c0_i32 = arith.constant 0 : i32
    %c0_i32_0 = arith.constant 0 : i32
    %c0_i32_1 = arith.constant 0 : i32
    return %c0_i32, %c0_i32_0 : i32, i32
  }
  func.func @transform_11(%arg0: i32) -> (i32, i32) {
    %c0_i32 = arith.constant 0 : i32
    %c0_i32_0 = arith.constant 0 : i32
    %c0_i32_1 = arith.constant 0 : i32
    return %c0_i32, %c0_i32_0 : i32, i32
  }
  func.func @transform_12(%arg0: i32) -> (i32, i32) {
    %c0_i32 = arith.constant 0 : i32
    %c0_i32_0 = arith.constant 0 : i32
    %c0_i32_1 = arith.constant 0 : i32
    return %c0_i32, %c0_i32_0 : i32, i32
  }
  func.func @transform_13(%arg0: i32) -> (i32, i32) {
    %c0_i32 = arith.constant 0 : i32
    %c0_i32_0 = arith.constant 0 : i32
    %c0_i32_1 = arith.constant 0 : i32
    return %c0_i32, %c0_i32_0 : i32, i32
  }
  func.func @transform_14(%arg0: i32) -> (i32, i32) {
    %c0_i32 = arith.constant 0 : i32
    %c0_i32_0 = arith.constant 0 : i32
    %c0_i32_1 = arith.constant 0 : i32
    return %c0_i32, %c0_i32_0 : i32, i32
  }
  func.func @transform_15(%arg0: i32) -> (i32, i32) {
    %c0_i32 = arith.constant 0 : i32
    %c0_i32_0 = arith.constant 0 : i32
    return %arg0, %c0_i32 : i32, i32
  }
  func.func @transform_16(%arg0: i32) -> (i32, i32) {
    %c0_i32 = arith.constant 0 : i32
    %c0_i32_0 = arith.constant 0 : i32
    return %arg0, %c0_i32 : i32, i32
  }
}

</mosaic_0001>

<llo_original>
// kernel: _lambda_.10
$region0: #{_lambda_.10}
  #allocation0 [shape = 'u32[]', space=smem, size = 0x4, offset = 0x4, fixed_abs, tag = 'smem constant byte address 0x4 - core index']
  #allocation1 [shape = 'u32[144,128]{1,0:T(1,128)}', space=vmem, size = 0x12000, scoped, tag = 'internal scratch']
  %s0 = inlined_call_operand.vmem [shape: f32[16,12], index: 0, kind: input, shape index: {}]
  %s1 = inlined_call_operand.vmem [shape: f32[8,32], index: 1, kind: input, shape index: {}]
  %s2 = inlined_call_operand.vmem [shape: bf16[12,32], index: 2, kind: input, shape index: {}]
  %s3 = inlined_call_operand.vmem [shape: f32[1,32], index: 3, kind: input, shape index: {}]
  %s4 = inlined_call_operand.vmem [shape: f32[1,32], index: 4, kind: input, shape index: {}]
  %s5 = inlined_call_operand.vmem [shape: f32[16,32], index: 5, kind: output, shape index: {}]
  %s6 = sld [smem:[#allocation0]]
  $region30: #{_lambda_.10} parent=0
    _
  %s8 = ssub.s32 1, %s6
  %s9 = scalar_select 0, %s8, %s6
  // Predicated region
  $region2: #{_lambda_.10} parent=0 // pred_check
    _
  $region3: #{_lambda_.10} parent=0 // pred_check_branch
    %11 = sbr.rel (0) target = $region5
  $region4: #{_lambda_.10} parent=0 // pred_region
    _
  $region5: #{_lambda_.10} parent=0 // pred_fallthru
    _
  // Predicated region
  $region6: #{_lambda_.10} parent=0 // pred_check
    _
  $region7: #{_lambda_.10} parent=0 // pred_check_branch
    %13 = sbr.rel (0) target = $region9
  $region8: #{_lambda_.10} parent=0 // pred_region
    _
  $region9: #{_lambda_.10} parent=0 // pred_fallthru
    _
  // Predicated region
  $region10: #{_lambda_.10} parent=0 // pred_check
    _
  $region11: #{_lambda_.10} parent=0 // pred_check_branch
    %15 = sbr.rel (0) target = $region13
  $region12: #{_lambda_.10} parent=0 // pred_region
    _
  $region13: #{_lambda_.10} parent=0 // pred_fallthru
    _
  // Predicated region
  $region14: #{_lambda_.10} parent=0 // pred_check
    _
  $region15: #{_lambda_.10} parent=0 // pred_check_branch
    %17 = sbr.rel (0) target = $region17
  $region16: #{_lambda_.10} parent=0 // pred_region
    _
  $region17: #{_lambda_.10} parent=0 // pred_fallthru
    _
  // Predicated region
  $region18: #{_lambda_.10} parent=0 // pred_check
    _
  $region19: #{_lambda_.10} parent=0 // pred_check_branch
    %19 = sbr.rel (0) target = $region21
  $region20: #{_lambda_.10} parent=0 // pred_region
    _
  $region21: #{_lambda_.10} parent=0 // pred_fallthru
    _
  %v21 = vld [vmem:[%s0] sm:$0xff]
  %v22 = vld [vmem:[%s0 + $0x8] sm:$0xff]
  %v23 = vpack.c.bf16 %v22, %v21
  %v24 = vld [vmem:[%s2] sm:$0xf]
  %v25 = vld [vmem:[%s2 + $0x4] sm:$0x3]
  %v26 = vld [vmem:[%s1] sm:$0xff]
  %v29 = vunpack.c.l.b16 %v24
  %v30 = vunpack.c.l.b16 %v25
  %v31 = vpack.c.b16 %v30, %v29
  %vm32 = vcmask 97280
  %v34 = vsel %vm32, %v23, 0
  %vm36 = vcmask 1045504
  %v38 = vsel %vm36, %v31, 0
  %40 = vmatprep.subr.bf16.mxu0 0
  %41 = vmatpush1.bf16.msra.mxu0 0
  %42 = vmatprep.subr.bf16.mxu0 0
  %43 = vmatpush1.bf16.msra.mxu0 0
  %44 = vmatprep.subr.bf16.mxu0 0
  %45 = vmatpush1.bf16.msra.mxu0 0
  %46 = vmatprep.subr.bf16.mxu0 0
  %47 = vmatpush1.bf16.msra.mxu0 0
  %48 = vmatprep.subr.bf16.mxu0 0
  %49 = vmatpush1.bf16.msra.mxu0 0
  %50 = vmatprep.subr.bf16.mxu0 0
  %51 = vmatpush1.bf16.msra.mxu0 0
  %52 = vmatprep.subr.bf16.mxu0 0
  %53 = vmatpush1.bf16.msra.mxu0 0
  %54 = vmatprep.subr.bf16.mxu0 0
  %55 = vmatpush1.bf16.msra.mxu0 %v38
  %56 = vmatprep.subr.bf16.mxu0 0
  %57 = vmatpush2.bf16.msra.mxu0 0
  %58 = vmatprep.subr.bf16.mxu0 0
  %59 = vmatpush2.bf16.msra.mxu0 0
  %60 = vmatprep.subr.bf16.mxu0 0
  %61 = vmatpush2.bf16.msra.mxu0 0
  %62 = vmatprep.subr.bf16.mxu0 0
  %63 = vmatpush2.bf16.msra.mxu0 0
  %64 = vmatprep.subr.bf16.mxu0 0
  %65 = vmatpush2.bf16.msra.mxu0 0
  %66 = vmatprep.subr.bf16.mxu0 0
  %67 = vmatpush2.bf16.msra.mxu0 0
  %68 = vmatprep.subr.bf16.mxu0 0
  %69 = vmatpush2.bf16.msra.mxu0 0
  %70 = vmatprep.subr.bf16.mxu0 0
  %71 = vmatpush2.bf16.msra.mxu0 0
  %72 = vmatprep.mubr.bf16.mxu0 0
  %73 = vmatmul.mubr.bf16.gmra.mxu0 %v34
  %v74 = vpop.f32.mrf.mxu0
  %v75 = vadd.f32 %v26, %v74
  %v76 = vpop.f32.mrf.mxu0
  %v77 = vpop.f32.mrf.mxu0
  %v78 = vadd.f32 %v26, %v77
  %v79 = vpop.f32.mrf.mxu0
  %80 = vdwg.mxu0
  %v81 = vld [vmem:[%s3] sm:$0x1]
  %v82 = vld [vmem:[%s4] sm:$0x1]
  %vm83 = vcmask 261120
  %v84 = vsel %vm83, %v75, 0.0
  %85 = vadd.xlane.f32.xlu0 %v84
  %v86 = vpop.xlane.xlu0 %85
  %v87 = vsel %vm83, %v78, 0.0
  %88 = vadd.xlane.f32.xlu0 %v87
  %v89 = vpop.xlane.xlu0 %88
  %v90 = vrcp.pop 32.0
  %v91 = vmul.f32 %v86, %v90
  %v92 = vmul.f32 %v89, %v90
  %v93 = vsub.f32 %v75, %v91
  %v94 = vsub.f32 %v78, %v92
  %v95 = vmul.f32 %v93, %v93
  %v96 = vmul.f32 %v94, %v94
  %v97 = vsel %vm83, %v95, 0.0
  %98 = vadd.xlane.f32.xlu0 %v97
  %v99 = vpop.xlane.xlu0 %98
  %v100 = vsel %vm83, %v96, 0.0
  %101 = vadd.xlane.f32.xlu0 %v100
  %v102 = vpop.xlane.xlu0 %101
  %v103 = vmul.f32 %v99, %v90
  %v104 = vmul.f32 %v102, %v90
  %v105 = vadd.f32 %v103, 1e-05
  %v106 = vadd.f32 %v104, 1e-05
  %v107 = vrsqrt.pop %v105
  %v108 = vrsqrt.pop %v106
  %v109 = vmul.f32 %v93, %v107
  %v110 = vmul.f32 %v94, %v108
  %v112 = vlaneseq
  %v113 = vshrl.u32 %v112, 7
  %v114 = vsub.s32 0, %v113
  %v115 = vrot.slane %v81, %v114
  %v117 = vmul.f32 %v109, %v115
  %v118 = vmul.f32 %v110, %v115
  %v120 = vlaneseq
  %v121 = vshrl.u32 %v120, 7
  %v122 = vsub.s32 0, %v121
  %v123 = vrot.slane %v82, %v122
  %v125 = vadd.f32 %v117, %v123
  %v126 = vadd.f32 %v118, %v123
  %127 = vst.msk [vmem:[%s5] sm:$0xff] %vm83, %v125
  %128 = vst.msk [vmem:[%s5 + $0x8] sm:$0xff] %vm83, %v126
  // Predicated region
  $region22: #{_lambda_.10} parent=0 // pred_check
    _
  $region23: #{_lambda_.10} parent=0 // pred_check_branch
    %130 = sbr.rel (0) target = $region25
  $region24: #{_lambda_.10} parent=0 // pred_region
    _
  $region25: #{_lambda_.10} parent=0 // pred_fallthru
    _
  // Predicated region
  $region26: #{_lambda_.10} parent=0 // pred_check
    _
  $region27: #{_lambda_.10} parent=0 // pred_check_branch
    %132 = sbr.rel (0) target = $region29
  $region28: #{_lambda_.10} parent=0 // pred_region
    _
  $region29: #{_lambda_.10} parent=0 // pred_fallthru
    _

// kernel: _lambda_.12
$region0: #{_lambda_.12}
  #allocation0 [shape = 'u32[]', space=smem, size = 0x4, offset = 0x4, fixed_abs, tag = 'smem constant byte address 0x4 - core index']
  #allocation1 [shape = 'u32[144,128]{1,0:T(1,128)}', space=vmem, size = 0x12000, scoped, tag = 'internal scratch']
  %s0 = inlined_call_operand.vmem [shape: f32[8,64], index: 0, kind: input, shape index: {}]
  %s1 = inlined_call_operand.vmem [shape: f32[1,64], index: 1, kind: input, shape index: {}]
  %s2 = inlined_call_operand.vmem [shape: f32[1,64], index: 2, kind: input, shape index: {}]
  %s3 = inlined_call_operand.vmem [shape: bf16[64,32], index: 3, kind: input, shape index: {}]
  %s4 = inlined_call_operand.vmem [shape: f32[1,32], index: 4, kind: input, shape index: {}]
  %s5 = inlined_call_operand.vmem [shape: f32[8,32], index: 5, kind: output, shape index: {}]
  %s6 = sld [smem:[#allocation0]]
  $region30: #{_lambda_.12} parent=0
    _
  %s8 = ssub.s32 1, %s6
  %s9 = scalar_select 0, %s8, %s6
  // Predicated region
  $region2: #{_lambda_.12} parent=0 // pred_check
    _
  $region3: #{_lambda_.12} parent=0 // pred_check_branch
    %11 = sbr.rel (0) target = $region5
  $region4: #{_lambda_.12} parent=0 // pred_region
    _
  $region5: #{_lambda_.12} parent=0 // pred_fallthru
    _
  // Predicated region
  $region6: #{_lambda_.12} parent=0 // pred_check
    _
  $region7: #{_lambda_.12} parent=0 // pred_check_branch
    %13 = sbr.rel (0) target = $region9
  $region8: #{_lambda_.12} parent=0 // pred_region
    _
  $region9: #{_lambda_.12} parent=0 // pred_fallthru
    _
  // Predicated region
  $region10: #{_lambda_.12} parent=0 // pred_check
    _
  $region11: #{_lambda_.12} parent=0 // pred_check_branch
    %15 = sbr.rel (0) target = $region13
  $region12: #{_lambda_.12} parent=0 // pred_region
    _
  $region13: #{_lambda_.12} parent=0 // pred_fallthru
    _
  // Predicated region
  $region14: #{_lambda_.12} parent=0 // pred_check
    _
  $region15: #{_lambda_.12} parent=0 // pred_check_branch
    %17 = sbr.rel (0) target = $region17
  $region16: #{_lambda_.12} parent=0 // pred_region
    _
  $region17: #{_lambda_.12} parent=0 // pred_fallthru
    _
  // Predicated region
  $region18: #{_lambda_.12} parent=0 // pred_check
    _
  $region19: #{_lambda_.12} parent=0 // pred_check_branch
    %19 = sbr.rel (0) target = $region21
  $region20: #{_lambda_.12} parent=0 // pred_region
    _
  $region21: #{_lambda_.12} parent=0 // pred_fallthru
    _
  %v21 = vld [vmem:[%s0] sm:$0xff]
  %v22 = vld [vmem:[%s1] sm:$0x1]
  %v23 = vld [vmem:[%s2] sm:$0x1]
  %vm24 = vcmask 523264
  %v25 = vsel %vm24, %v21, 0.0
  %26 = vadd.xlane.f32.xlu0 %v25
  %v27 = vpop.xlane.xlu0 %26
  %v28 = vrcp.pop 64.0
  %v29 = vmul.f32 %v27, %v28
  %v30 = vsub.f32 %v21, %v29
  %v31 = vmul.f32 %v30, %v30
  %v32 = vsel %vm24, %v31, 0.0
  %33 = vadd.xlane.f32.xlu0 %v32
  %v34 = vpop.xlane.xlu0 %33
  %v35 = vmul.f32 %v34, %v28
  %v36 = vadd.f32 %v35, 1e-05
  %v37 = vrsqrt.pop %v36
  %v38 = vmul.f32 %v30, %v37
  %v40 = vlaneseq
  %v41 = vshrl.u32 %v40, 7
  %v42 = vsub.s32 0, %v41
  %v43 = vrot.slane %v22, %v42
  %v45 = vmul.f32 %v38, %v43
  %v47 = vlaneseq
  %v48 = vshrl.u32 %v47, 7
  %v49 = vsub.s32 0, %v48
  %v50 = vrot.slane %v23, %v49
  %v52 = vadd.f32 %v45, %v50
  %v53 = vld [vmem:[%s3] sm:$0xf]
  %v54 = vld [vmem:[%s3 + $0x4] sm:$0xf]
  %v55 = vld [vmem:[%s3 + $0x8] sm:$0xf]
  %v56 = vld [vmem:[%s3 + $0xc] sm:$0xf]
  %v57 = vld [vmem:[%s3 + $0x10] sm:$0xf]
  %v58 = vld [vmem:[%s3 + $0x14] sm:$0xf]
  %v59 = vld [vmem:[%s3 + $0x18] sm:$0xf]
  %v60 = vld [vmem:[%s3 + $0x1c] sm:$0xf]
  %v61 = vld [vmem:[%s4] sm:$0x1]
  %v62 = vpack.c.bf16 %v52, %v52
  %v64 = vlaneseq
  %v65 = vshrl.u32 %v64, 7
  %v66 = vsub.s32 0, %v65
  %v67 = vrot.slane %v61, %v66
  %v77 = vunpack.c.l.b16 %v53
  %v78 = vunpack.c.l.b16 %v54
  %v79 = vunpack.c.l.b16 %v55
  %v80 = vunpack.c.l.b16 %v56
  %v81 = vunpack.c.l.b16 %v57
  %v82 = vunpack.c.l.b16 %v58
  %v83 = vunpack.c.l.b16 %v59
  %v84 = vunpack.c.l.b16 %v60
  %v85 = vpack.c.b16 %v78, %v77
  %v86 = vpack.c.b16 %v80, %v79
  %v87 = vpack.c.b16 %v82, %v81
  %v88 = vpack.c.b16 %v84, %v83
  %v94 = vsel %vm24, %v62, 0
  %96 = vmatprep.subr.bf16.mxu0 0
  %97 = vmatpush1.bf16.msra.mxu0 0
  %98 = vmatprep.subr.bf16.mxu0 0
  %99 = vmatpush1.bf16.msra.mxu0 0
  %100 = vmatprep.subr.bf16.mxu0 0
  %101 = vmatpush1.bf16.msra.mxu0 0
  %102 = vmatprep.subr.bf16.mxu0 0
  %103 = vmatpush1.bf16.msra.mxu0 0
  %104 = vmatprep.subr.bf16.mxu0 0
  %105 = vmatpush1.bf16.msra.mxu0 %v88
  %106 = vmatprep.subr.bf16.mxu0 0
  %107 = vmatpush1.bf16.msra.mxu0 %v87
  %108 = vmatprep.subr.bf16.mxu0 0
  %109 = vmatpush1.bf16.msra.mxu0 %v86
  %110 = vmatprep.subr.bf16.mxu0 0
  %111 = vmatpush1.bf16.msra.mxu0 %v85
  %112 = vmatprep.subr.bf16.mxu0 0
  %113 = vmatpush2.bf16.msra.mxu0 0
  %114 = vmatprep.subr.bf16.mxu0 0
  %115 = vmatpush2.bf16.msra.mxu0 0
  %116 = vmatprep.subr.bf16.mxu0 0
  %117 = vmatpush2.bf16.msra.mxu0 0
  %118 = vmatprep.subr.bf16.mxu0 0
  %119 = vmatpush2.bf16.msra.mxu0 0
  %120 = vmatprep.subr.bf16.mxu0 0
  %121 = vmatpush2.bf16.msra.mxu0 0
  %122 = vmatprep.subr.bf16.mxu0 0
  %123 = vmatpush2.bf16.msra.mxu0 0
  %124 = vmatprep.subr.bf16.mxu0 0
  %125 = vmatpush2.bf16.msra.mxu0 0
  %126 = vmatprep.subr.bf16.mxu0 0
  %127 = vmatpush2.bf16.msra.mxu0 0
  %128 = vmatprep.mubr.bf16.mxu0 0
  %129 = vmatmul.mubr.bf16.gmra.mxu0 %v94
  %v130 = vpop.f32.mrf.mxu0
  %v131 = vadd.f32 %v67, %v130
  %v132 = vpop.f32.mrf.mxu0
  %v133 = vpop.f32.mrf.mxu0
  %v134 = vpop.f32.mrf.mxu0
  %135 = vdwg.mxu0
  %vm136 = vcmask 261120
  %137 = vst.msk [vmem:[%s5] sm:$0xff] %vm136, %v131
  // Predicated region
  $region22: #{_lambda_.12} parent=0 // pred_check
    _
  $region23: #{_lambda_.12} parent=0 // pred_check_branch
    %139 = sbr.rel (0) target = $region25
  $region24: #{_lambda_.12} parent=0 // pred_region
    _
  $region25: #{_lambda_.12} parent=0 // pred_fallthru
    _
  // Predicated region
  $region26: #{_lambda_.12} parent=0 // pred_check
    _
  $region27: #{_lambda_.12} parent=0 // pred_check_branch
    %141 = sbr.rel (0) target = $region29
  $region28: #{_lambda_.12} parent=0 // pred_region
    _
  $region29: #{_lambda_.12} parent=0 // pred_fallthru
    _

// kernel: _lambda_.11
$region0: #{_lambda_.11}
  #allocation0 [shape = 'u32[]', space=smem, size = 0x4, offset = 0x4, fixed_abs, tag = 'smem constant byte address 0x4 - core index']
  #allocation1 [shape = 'u32[144,128]{1,0:T(1,128)}', space=vmem, size = 0x12000, scoped, tag = 'internal scratch']
  %s0 = inlined_call_operand.vmem [shape: f32[16,32], index: 0, kind: input, shape index: {}]
  %s1 = inlined_call_operand.vmem [shape: f32[4,32], index: 1, kind: input, shape index: {}]
  %s2 = inlined_call_operand.vmem [shape: f32[16,16], index: 2, kind: input, shape index: {}]
  %s3 = inlined_call_operand.vmem [shape: f32[4,16], index: 3, kind: input, shape index: {}]
  %s4 = inlined_call_operand.vmem [shape: f32[16,4], index: 4, kind: input, shape index: {}]
  %s5 = inlined_call_operand.vmem [shape: bf16[32,128], index: 5, kind: input, shape index: {}]
  %s6 = inlined_call_operand.vmem [shape: f32[1,128], index: 6, kind: input, shape index: {}]
  %s7 = inlined_call_operand.vmem [shape: f32[1,32], index: 7, kind: input, shape index: {}]
  %s8 = inlined_call_operand.vmem [shape: f32[1,32], index: 8, kind: input, shape index: {}]
  %s9 = inlined_call_operand.vmem [shape: bf16[32,64], index: 9, kind: input, shape index: {}]
  %s10 = inlined_call_operand.vmem [shape: f32[1,64], index: 10, kind: input, shape index: {}]
  %s11 = inlined_call_operand.vmem [shape: bf16[64,32], index: 11, kind: input, shape index: {}]
  %s12 = inlined_call_operand.vmem [shape: f32[1,32], index: 12, kind: input, shape index: {}]
  %s13 = inlined_call_operand.vmem [shape: f32[1,32], index: 13, kind: input, shape index: {}]
  %s14 = inlined_call_operand.vmem [shape: f32[1,32], index: 14, kind: input, shape index: {}]
  %s15 = inlined_call_operand.vmem [shape: bf16[32,128], index: 15, kind: input, shape index: {}]
  %s16 = inlined_call_operand.vmem [shape: f32[1,128], index: 16, kind: input, shape index: {}]
  %s17 = inlined_call_operand.vmem [shape: bf16[32,128], index: 17, kind: input, shape index: {}]
  %s18 = inlined_call_operand.vmem [shape: f32[1,128], index: 18, kind: input, shape index: {}]
  %s19 = inlined_call_operand.vmem [shape: f32[1,32], index: 19, kind: input, shape index: {}]
  %s20 = inlined_call_operand.vmem [shape: f32[1,32], index: 20, kind: input, shape index: {}]
  %s21 = inlined_call_operand.vmem [shape: bf16[32,64], index: 21, kind: input, shape index: {}]
  %s22 = inlined_call_operand.vmem [shape: f32[1,64], index: 22, kind: input, shape index: {}]
  %s23 = inlined_call_operand.vmem [shape: bf16[64,32], index: 23, kind: input, shape index: {}]
  %s24 = inlined_call_operand.vmem [shape: f32[1,32], index: 24, kind: input, shape index: {}]
  %s25 = inlined_call_operand.vmem [shape: f32[1,32], index: 25, kind: input, shape index: {}]
  %s26 = inlined_call_operand.vmem [shape: f32[1,32], index: 26, kind: input, shape index: {}]
  %s27 = inlined_call_operand.vmem [shape: f32[16,32], index: 27, kind: output, shape index: {}]
  %s28 = sld [smem:[#allocation0]]
  $region118: #{_lambda_.11} parent=0
    _
  %s30 = ssub.s32 1, %s28
  %s31 = scalar_select 0, %s30, %s28
  // Predicated region
  $region2: #{_lambda_.11} parent=0 // pred_check
    _
  $region3: #{_lambda_.11} parent=0 // pred_check_branch
    %33 = sbr.rel (0) target = $region5
  $region4: #{_lambda_.11} parent=0 // pred_region
    _
  $region5: #{_lambda_.11} parent=0 // pred_fallthru
    _
  // Predicated region
  $region6: #{_lambda_.11} parent=0 // pred_check
    _
  $region7: #{_lambda_.11} parent=0 // pred_check_branch
    %35 = sbr.rel (0) target = $region9
  $region8: #{_lambda_.11} parent=0 // pred_region
    _
  $region9: #{_lambda_.11} parent=0 // pred_fallthru
    _
  // Predicated region
  $region10: #{_lambda_.11} parent=0 // pred_check
    _
  $region11: #{_lambda_.11} parent=0 // pred_check_branch
    %37 = sbr.rel (0) target = $region13
  $region12: #{_lambda_.11} parent=0 // pred_region
    _
  $region13: #{_lambda_.11} parent=0 // pred_fallthru
    _
  // Predicated region
  $region14: #{_lambda_.11} parent=0 // pred_check
    _
  $region15: #{_lambda_.11} parent=0 // pred_check_branch
    %39 = sbr.rel (0) target = $region17
  $region16: #{_lambda_.11} parent=0 // pred_region
    _
  $region17: #{_lambda_.11} parent=0 // pred_fallthru
    _
  // Predicated region
  $region18: #{_lambda_.11} parent=0 // pred_check
    _
  $region19: #{_lambda_.11} parent=0 // pred_check_branch
    %41 = sbr.rel (0) target = $region21
  $region20: #{_lambda_.11} parent=0 // pred_region
    _
  $region21: #{_lambda_.11} parent=0 // pred_fallthru
    _
  // Predicated region
  $region22: #{_lambda_.11} parent=0 // pred_check
    _
  $region23: #{_lambda_.11} parent=0 // pred_check_branch
    %43 = sbr.rel (0) target = $region25
  $region24: #{_lambda_.11} parent=0 // pred_region
    _
  $region25: #{_lambda_.11} parent=0 // pred_fallthru
    _
  // Predicated region
  $region26: #{_lambda_.11} parent=0 // pred_check
    _
  $region27: #{_lambda_.11} parent=0 // pred_check_branch
    %45 = sbr.rel (0) target = $region29
  $region28: #{_lambda_.11} parent=0 // pred_region
    _
  $region29: #{_lambda_.11} parent=0 // pred_fallthru
    _
  // Predicated region
  $region30: #{_lambda_.11} parent=0 // pred_check
    _
  $region31: #{_lambda_.11} parent=0 // pred_check_branch
    %47 = sbr.rel (0) target = $region33
  $region32: #{_lambda_.11} parent=0 // pred_region
    _
  $region33: #{_lambda_.11} parent=0 // pred_fallthru
    _
  // Predicated region
  $region34: #{_lambda_.11} parent=0 // pred_check
    _
  $region35: #{_lambda_.11} parent=0 // pred_check_branch
    %49 = sbr.rel (0) target = $region37
  $region36: #{_lambda_.11} parent=0 // pred_region
    _
  $region37: #{_lambda_.11} parent=0 // pred_fallthru
    _
  // Predicated region
  $region38: #{_lambda_.11} parent=0 // pred_check
    _
  $region39: #{_lambda_.11} parent=0 // pred_check_branch
    %51 = sbr.rel (0) target = $region41
  $region40: #{_lambda_.11} parent=0 // pred_region
    _
  $region41: #{_lambda_.11} parent=0 // pred_fallthru
    _
  // Predicated region
  $region42: #{_lambda_.11} parent=0 // pred_check
    _
  $region43: #{_lambda_.11} parent=0 // pred_check_branch
    %53 = sbr.rel (0) target = $region45
  $region44: #{_lambda_.11} parent=0 // pred_region
    _
  $region45: #{_lambda_.11} parent=0 // pred_fallthru
    _
  // Predicated region
  $region46: #{_lambda_.11} parent=0 // pred_check
    _
  $region47: #{_lambda_.11} parent=0 // pred_check_branch
    %55 = sbr.rel (0) target = $region49
  $region48: #{_lambda_.11} parent=0 // pred_region
    _
  $region49: #{_lambda_.11} parent=0 // pred_fallthru
    _
  // Predicated region
  $region50: #{_lambda_.11} parent=0 // pred_check
    _
  $region51: #{_lambda_.11} parent=0 // pred_check_branch
    %57 = sbr.rel (0) target = $region53
  $region52: #{_lambda_.11} parent=0 // pred_region
    _
  $region53: #{_lambda_.11} parent=0 // pred_fallthru
    _
  // Predicated region
  $region54: #{_lambda_.11} parent=0 // pred_check
    _
  $region55: #{_lambda_.11} parent=0 // pred_check_branch
    %59 = sbr.rel (0) target = $region57
  $region56: #{_lambda_.11} parent=0 // pred_region
    _
  $region57: #{_lambda_.11} parent=0 // pred_fallthru
    _
  // Predicated region
  $region58: #{_lambda_.11} parent=0 // pred_check
    _
  $region59: #{_lambda_.11} parent=0 // pred_check_branch
    %61 = sbr.rel (0) target = $region61
  $region60: #{_lambda_.11} parent=0 // pred_region
    _
  $region61: #{_lambda_.11} parent=0 // pred_fallthru
    _
  // Predicated region
  $region62: #{_lambda_.11} parent=0 // pred_check
    _
  $region63: #{_lambda_.11} parent=0 // pred_check_branch
    %63 = sbr.rel (0) target = $region65
  $region64: #{_lambda_.11} parent=0 // pred_region
    _
  $region65: #{_lambda_.11} parent=0 // pred_fallthru
    _
  // Predicated region
  $region66: #{_lambda_.11} parent=0 // pred_check
    _
  $region67: #{_lambda_.11} parent=0 // pred_check_branch
    %65 = sbr.rel (0) target = $region69
  $region68: #{_lambda_.11} parent=0 // pred_region
    _
  $region69: #{_lambda_.11} parent=0 // pred_fallthru
    _
  // Predicated region
  $region70: #{_lambda_.11} parent=0 // pred_check
    _
  $region71: #{_lambda_.11} parent=0 // pred_check_branch
    %67 = sbr.rel (0) target = $region73
  $region72: #{_lambda_.11} parent=0 // pred_region
    _
  $region73: #{_lambda_.11} parent=0 // pred_fallthru
    _
  // Predicated region
  $region74: #{_lambda_.11} parent=0 // pred_check
    _
  $region75: #{_lambda_.11} parent=0 // pred_check_branch
    %69 = sbr.rel (0) target = $region77
  $region76: #{_lambda_.11} parent=0 // pred_region
    _
  $region77: #{_lambda_.11} parent=0 // pred_fallthru
    _
  // Predicated region
  $region78: #{_lambda_.11} parent=0 // pred_check
    _
  $region79: #{_lambda_.11} parent=0 // pred_check_branch
    %71 = sbr.rel (0) target = $region81
  $region80: #{_lambda_.11} parent=0 // pred_region
    _
  $region81: #{_lambda_.11} parent=0 // pred_fallthru
    _
  // Predicated region
  $region82: #{_lambda_.11} parent=0 // pred_check
    _
  $region83: #{_lambda_.11} parent=0 // pred_check_branch
    %73 = sbr.rel (0) target = $region85
  $region84: #{_lambda_.11} parent=0 // pred_region
    _
  $region85: #{_lambda_.11} parent=0 // pred_fallthru
    _
  // Predicated region
  $region86: #{_lambda_.11} parent=0 // pred_check
    _
  $region87: #{_lambda_.11} parent=0 // pred_check_branch
    %75 = sbr.rel (0) target = $region89
  $region88: #{_lambda_.11} parent=0 // pred_region
    _
  $region89: #{_lambda_.11} parent=0 // pred_fallthru
    _
  // Predicated region
  $region90: #{_lambda_.11} parent=0 // pred_check
    _
  $region91: #{_lambda_.11} parent=0 // pred_check_branch
    %77 = sbr.rel (0) target = $region93
  $region92: #{_lambda_.11} parent=0 // pred_region
    _
  $region93: #{_lambda_.11} parent=0 // pred_fallthru
    _
  // Predicated region
  $region94: #{_lambda_.11} parent=0 // pred_check
    _
  $region95: #{_lambda_.11} parent=0 // pred_check_branch
    %79 = sbr.rel (0) target = $region97
  $region96: #{_lambda_.11} parent=0 // pred_region
    _
  $region97: #{_lambda_.11} parent=0 // pred_fallthru
    _
  // Predicated region
  $region98: #{_lambda_.11} parent=0 // pred_check
    _
  $region99: #{_lambda_.11} parent=0 // pred_check_branch
    %81 = sbr.rel (0) target = $region101
  $region100: #{_lambda_.11} parent=0 // pred_region
    _
  $region101: #{_lambda_.11} parent=0 // pred_fallthru
    _
  // Predicated region
  $region102: #{_lambda_.11} parent=0 // pred_check
    _
  $region103: #{_lambda_.11} parent=0 // pred_check_branch
    %83 = sbr.rel (0) target = $region105
  $region104: #{_lambda_.11} parent=0 // pred_region
    _
  $region105: #{_lambda_.11} parent=0 // pred_fallthru
    _
  // Predicated region
  $region106: #{_lambda_.11} parent=0 // pred_check
    _
  $region107: #{_lambda_.11} parent=0 // pred_check_branch
    %85 = sbr.rel (0) target = $region109
  $region108: #{_lambda_.11} parent=0 // pred_region
    _
  $region109: #{_lambda_.11} parent=0 // pred_fallthru
    _
  %v87 = vld [vmem:[%s0] sm:$0xff]
  %v88 = vld [vmem:[%s0 + $0x8] sm:$0xff]
  %v89 = vld [vmem:[%s1] sm:$0xf]
  %v90 = vld [vmem:[%s2] sm:$0xff]
  %v91 = vld [vmem:[%s2 + $0x8] sm:$0xff]
  %v92 = vld [vmem:[%s5] sm:$0xf]
  %v93 = vld [vmem:[%s5 + $0x4] sm:$0xf]
  %v94 = vld [vmem:[%s5 + $0x8] sm:$0xf]
  %v95 = vld [vmem:[%s5 + $0xc] sm:$0xf]
  %v96 = vld [vmem:[%s6] sm:$0x1]
  %v97 = vpack.c.bf16 %v88, %v87
  %v99 = vlaneseq
  %v100 = vshrl.u32 %v99, 7
  %v101 = vsub.s32 0, %v100
  %v102 = vrot.slane %v96, %v101
  %v108 = vunpack.c.l.b16 %v92
  %v109 = vunpack.c.l.b16 %v93
  %v110 = vunpack.c.l.b16 %v94
  %v111 = vunpack.c.l.b16 %v95
  %v112 = vpack.c.b16 %v109, %v108
  %v113 = vpack.c.b16 %v111, %v110
  %vm116 = vcmask 261120
  %v118 = vsel %vm116, %v97, 0
  %120 = vmatprep.subr.bf16.mxu0 0
  %121 = vmatpush1.bf16.msra.mxu0 0
  %122 = vmatprep.subr.bf16.mxu0 0
  %123 = vmatpush1.bf16.msra.mxu0 0
  %124 = vmatprep.subr.bf16.mxu0 0
  %125 = vmatpush1.bf16.msra.mxu0 0
  %126 = vmatprep.subr.bf16.mxu0 0
  %127 = vmatpush1.bf16.msra.mxu0 0
  %128 = vmatprep.subr.bf16.mxu0 0
  %129 = vmatpush1.bf16.msra.mxu0 0
  %130 = vmatprep.subr.bf16.mxu0 0
  %131 = vmatpush1.bf16.msra.mxu0 0
  %132 = vmatprep.subr.bf16.mxu0 0
  %133 = vmatpush1.bf16.msra.mxu0 %v113
  %134 = vmatprep.subr.bf16.mxu0 0
  %135 = vmatpush1.bf16.msra.mxu0 %v112
  %136 = vmatprep.subr.bf16.mxu0 0
  %137 = vmatpush2.bf16.msra.mxu0 0
  %138 = vmatprep.subr.bf16.mxu0 0
  %139 = vmatpush2.bf16.msra.mxu0 0
  %140 = vmatprep.subr.bf16.mxu0 0
  %141 = vmatpush2.bf16.msra.mxu0 0
  %142 = vmatprep.subr.bf16.mxu0 0
  %143 = vmatpush2.bf16.msra.mxu0 0
  %144 = vmatprep.subr.bf16.mxu0 0
  %145 = vmatpush2.bf16.msra.mxu0 0
  %146 = vmatprep.subr.bf16.mxu0 0
  %147 = vmatpush2.bf16.msra.mxu0 0
  %148 = vmatprep.subr.bf16.mxu0 0
  %149 = vmatpush2.bf16.msra.mxu0 0
  %150 = vmatprep.subr.bf16.mxu0 0
  %151 = vmatpush2.bf16.msra.mxu0 0
  %152 = vmatprep.mubr.bf16.mxu0 0
  %153 = vmatmul.mubr.bf16.gmra.mxu0 %v118
  %v154 = vpop.f32.mrf.mxu0
  %v155 = vadd.f32 %v102, %v154
  %v156 = vpop.f32.mrf.mxu0
  %v157 = vpop.f32.mrf.mxu0
  %v158 = vadd.f32 %v102, %v157
  %v159 = vpop.f32.mrf.mxu0
  %160 = vdwg.mxu0
  %v161 = vpack.c.bf16 %v158, %v155
  %163 = vrot.lane.b32.xlu0 %v161, 96
  %v164 = vpop.permute.xlu0 %163
  %vm165 = vcmask 130048
  %v167 = vsel %vm165, %v161, 0
  %v170 = vsel %vm165, %v164, 0
  %172 = vmatprep.subr.bf16.mxu0 0
  %173 = vmatpush1.bf16.xpose.msra.mxu0 0
  %174 = vmatprep.subr.bf16.mxu0 0
  %175 = vmatpush1.bf16.xpose.msra.mxu0 0
  %176 = vmatprep.subr.bf16.mxu0 0
  %177 = vmatpush1.bf16.xpose.msra.mxu0 0
  %178 = vmatprep.subr.bf16.mxu0 0
  %179 = vmatpush1.bf16.xpose.msra.mxu0 0
  %180 = vmatprep.subr.bf16.mxu0 0
  %181 = vmatpush1.bf16.xpose.msra.mxu0 0
  %182 = vmatprep.subr.bf16.mxu0 0
  %183 = vmatpush1.bf16.xpose.msra.mxu0 0
  %184 = vmatprep.subr.bf16.mxu0 0
  %185 = vmatpush1.bf16.xpose.msra.mxu0 0
  %186 = vmatprep.subr.bf16.mxu0 0
  %187 = vmatpush1.bf16.xpose.msra.mxu0 %v170
  %188 = vmatprep.subr.bf16.mxu0 0
  %189 = vmatpush2.bf16.xpose.msra.mxu0 0
  %190 = vmatprep.subr.bf16.mxu0 0
  %191 = vmatpush2.bf16.xpose.msra.mxu0 0
  %192 = vmatprep.subr.bf16.mxu0 0
  %193 = vmatpush2.bf16.xpose.msra.mxu0 0
  %194 = vmatprep.subr.bf16.mxu0 0
  %195 = vmatpush2.bf16.xpose.msra.mxu0 0
  %196 = vmatprep.subr.bf16.mxu0 0
  %197 = vmatpush2.bf16.xpose.msra.mxu0 0
  %198 = vmatprep.subr.bf16.mxu0 0
  %199 = vmatpush2.bf16.xpose.msra.mxu0 0
  %200 = vmatprep.subr.bf16.mxu0 0
  %201 = vmatpush2.bf16.xpose.msra.mxu0 0
  %202 = vmatprep.subr.bf16.mxu0 0
  %203 = vmatpush2.bf16.xpose.msra.mxu0 0
  %204 = vmatprep.mubr.bf16.mxu0 0
  %205 = vmatmul.mubr.bf16.gmra.mxu0 %v167
  %v206 = vpop.f32.mrf.mxu0
  %v207 = vadd.f32 0.0, %v206
  %v208 = vpop.f32.mrf.mxu0
  %v209 = vpop.f32.mrf.mxu0
  %v210 = vadd.f32 0.0, %v209
  %v211 = vpop.f32.mrf.mxu0
  %212 = vdwg.mxu0
  %v213 = vmul.f32 %v207, 0.25
  %v214 = vmul.f32 %v210, 0.25
  %v215 = vadd.f32 %v213, %v90
  %v216 = vadd.f32 %v214, %v91
  %v217 = vsel %vm165, %v215, -inf
  %218 = vmax.xlane.f32.xlu0 %v217
  %v219 = vpop.xlane.xlu0 %218
  %v220 = vsel %vm165, %v216, -inf
  %221 = vmax.xlane.f32.xlu0 %v220
  %v222 = vpop.xlane.xlu0 %221
  %v223 = vsub.f32 %v215, %v219
  %v224 = vsub.f32 %v216, %v222
  %v225 = vmul.f32 %v223, 1.442695
  %v226 = vpow.pop %v225
  %v227 = vmul.f32 %v224, 1.442695
  %v228 = vpow.pop %v227
  %v229 = vsel %vm165, %v226, 0.0
  %230 = vadd.xlane.f32.xlu0 %v229
  %v231 = vpop.xlane.xlu0 %230
  %v232 = vsel %vm165, %v228, 0.0
  %233 = vadd.xlane.f32.xlu0 %v232
  %v234 = vpop.xlane.xlu0 %233
  %v235 = vrcp.pop %v231
  %v236 = vrcp.pop %v234
  %v237 = vmul.f32 %v226, %v235
  %v238 = vmul.f32 %v228, %v236
  %v239 = vpack.c.bf16 %v238, %v237
  %240 = vrot.lane.b32.xlu0 %v161, 64
  %v241 = vpop.permute.xlu0 %240
  %v244 = vsel %vm165, %v239, 0
  %246 = vmatprep.subr.bf16.mxu0 0
  %247 = vmatpush1.bf16.msra.mxu0 0
  %248 = vmatprep.subr.bf16.mxu0 0
  %249 = vmatpush1.bf16.msra.mxu0 0
  %250 = vmatprep.subr.bf16.mxu0 0
  %251 = vmatpush1.bf16.msra.mxu0 0
  %252 = vmatprep.subr.bf16.mxu0 0
  %253 = vmatpush1.bf16.msra.mxu0 0
  %254 = vmatprep.subr.bf16.mxu0 0
  %255 = vmatpush1.bf16.msra.mxu0 0
  %256 = vmatprep.subr.bf16.mxu0 0
  %257 = vmatpush1.bf16.msra.mxu0 0
  %258 = vmatprep.subr.bf16.mxu0 0
  %259 = vmatpush1.bf16.msra.mxu0 0
  %260 = vmatprep.subr.bf16.mxu0 0
  %261 = vmatpush1.bf16.msra.mxu0 %v241
  %262 = vmatprep.subr.bf16.mxu0 0
  %263 = vmatpush2.bf16.msra.mxu0 0
  %264 = vmatprep.subr.bf16.mxu0 0
  %265 = vmatpush2.bf16.msra.mxu0 0
  %266 = vmatprep.subr.bf16.mxu0 0
  %267 = vmatpush2.bf16.msra.mxu0 0
  %268 = vmatprep.subr.bf16.mxu0 0
  %269 = vmatpush2.bf16.msra.mxu0 0
  %270 = vmatprep.subr.bf16.mxu0 0
  %271 = vmatpush2.bf16.msra.mxu0 0
  %272 = vmatprep.subr.bf16.mxu0 0
  %273 = vmatpush2.bf16.msra.mxu0 0
  %274 = vmatprep.subr.bf16.mxu0 0
  %275 = vmatpush2.bf16.msra.mxu0 0
  %276 = vmatprep.subr.bf16.mxu0 0
  %277 = vmatpush2.bf16.msra.mxu0 0
  %278 = vmatprep.mubr.bf16.mxu0 0
  %279 = vmatmul.mubr.bf16.gmra.mxu0 %v244
  %v280 = vpop.f32.mrf.mxu0
  %v281 = vadd.f32 0.0, %v280
  %v282 = vpop.f32.mrf.mxu0
  %v283 = vpop.f32.mrf.mxu0
  %v284 = vadd.f32 0.0, %v283
  %v285 = vpop.f32.mrf.mxu0
  %286 = vdwg.mxu0
  %287 = vrot.lane.b32.xlu0 %v161, 112
  %v288 = vpop.permute.xlu0 %287
  %289 = vrot.lane.b32.xlu0 %v161, 80
  %v290 = vpop.permute.xlu0 %289
  %v292 = vsel %vm165, %v288, 0
  %v295 = vsel %vm165, %v290, 0
  %297 = vmatprep.subr.bf16.mxu0 0
  %298 = vmatpush1.bf16.xpose.msra.mxu0 0
  %299 = vmatprep.subr.bf16.mxu0 0
  %300 = vmatpush1.bf16.xpose.msra.mxu0 0
  %301 = vmatprep.subr.bf16.mxu0 0
  %302 = vmatpush1.bf16.xpose.msra.mxu0 0
  %303 = vmatprep.subr.bf16.mxu0 0
  %304 = vmatpush1.bf16.xpose.msra.mxu0 0
  %305 = vmatprep.subr.bf16.mxu0 0
  %306 = vmatpush1.bf16.xpose.msra.mxu0 0
  %307 = vmatprep.subr.bf16.mxu0 0
  %308 = vmatpush1.bf16.xpose.msra.mxu0 0
  %309 = vmatprep.subr.bf16.mxu0 0
  %310 = vmatpush1.bf16.xpose.msra.mxu0 0
  %311 = vmatprep.subr.bf16.mxu0 0
  %312 = vmatpush1.bf16.xpose.msra.mxu0 %v295
  %313 = vmatprep.subr.bf16.mxu0 0
  %314 = vmatpush2.bf16.xpose.msra.mxu0 0
  %315 = vmatprep.subr.bf16.mxu0 0
  %316 = vmatpush2.bf16.xpose.msra.mxu0 0
  %317 = vmatprep.subr.bf16.mxu0 0
  %318 = vmatpush2.bf16.xpose.msra.mxu0 0
  %319 = vmatprep.subr.bf16.mxu0 0
  %320 = vmatpush2.bf16.xpose.msra.mxu0 0
  %321 = vmatprep.subr.bf16.mxu0 0
  %322 = vmatpush2.bf16.xpose.msra.mxu0 0
  %323 = vmatprep.subr.bf16.mxu0 0
  %324 = vmatpush2.bf16.xpose.msra.mxu0 0
  %325 = vmatprep.subr.bf16.mxu0 0
  %326 = vmatpush2.bf16.xpose.msra.mxu0 0
  %327 = vmatprep.subr.bf16.mxu0 0
  %328 = vmatpush2.bf16.xpose.msra.mxu0 0
  %329 = vmatprep.mubr.bf16.mxu0 0
  %330 = vmatmul.mubr.bf16.gmra.mxu0 %v292
  %v331 = vpop.f32.mrf.mxu0
  %v332 = vadd.f32 0.0, %v331
  %v333 = vpop.f32.mrf.mxu0
  %v334 = vpop.f32.mrf.mxu0
  %v335 = vadd.f32 0.0, %v334
  %v336 = vpop.f32.mrf.mxu0
  %337 = vdwg.mxu0
  %v338 = vmul.f32 %v332, 0.25
  %v339 = vmul.f32 %v335, 0.25
  %v340 = vadd.f32 %v338, %v90
  %v341 = vadd.f32 %v339, %v91
  %v342 = vsel %vm165, %v340, -inf
  %343 = vmax.xlane.f32.xlu0 %v342
  %v344 = vpop.xlane.xlu0 %343
  %v345 = vsel %vm165, %v341, -inf
  %346 = vmax.xlane.f32.xlu0 %v345
  %v347 = vpop.xlane.xlu0 %346
  %v348 = vsub.f32 %v340, %v344
  %v349 = vsub.f32 %v341, %v347
  %v350 = vmul.f32 %v348, 1.442695
  %v351 = vpow.pop %v350
  %v352 = vmul.f32 %v349, 1.442695
  %v353 = vpow.pop %v352
  %v354 = vsel %vm165, %v351, 0.0
  %355 = vadd.xlane.f32.xlu0 %v354
  %v356 = vpop.xlane.xlu0 %355
  %v357 = vsel %vm165, %v353, 0.0
  %358 = vadd.xlane.f32.xlu0 %v357
  %v359 = vpop.xlane.xlu0 %358
  %v360 = vrcp.pop %v356
  %v361 = vrcp.pop %v359
  %v362 = vmul.f32 %v351, %v360
  %v363 = vmul.f32 %v353, %v361
  %v364 = vpack.c.bf16 %v363, %v362
  %365 = vrot.lane.b32.xlu0 %v161, 48
  %v366 = vpop.permute.xlu0 %365
  %v369 = vsel %vm165, %v364, 0
  %371 = vmatprep.subr.bf16.mxu0 0
  %372 = vmatpush1.bf16.msra.mxu0 0
  %373 = vmatprep.subr.bf16.mxu0 0
  %374 = vmatpush1.bf16.msra.mxu0 0
  %375 = vmatprep.subr.bf16.mxu0 0
  %376 = vmatpush1.bf16.msra.mxu0 0
  %377 = vmatprep.subr.bf16.mxu0 0
  %378 = vmatpush1.bf16.msra.mxu0 0
  %379 = vmatprep.subr.bf16.mxu0 0
  %380 = vmatpush1.bf16.msra.mxu0 0
  %381 = vmatprep.subr.bf16.mxu0 0
  %382 = vmatpush1.bf16.msra.mxu0 0
  %383 = vmatprep.subr.bf16.mxu0 0
  %384 = vmatpush1.bf16.msra.mxu0 0
  %385 = vmatprep.subr.bf16.mxu0 0
  %386 = vmatpush1.bf16.msra.mxu0 %v366
  %387 = vmatprep.subr.bf16.mxu0 0
  %388 = vmatpush2.bf16.msra.mxu0 0
  %389 = vmatprep.subr.bf16.mxu0 0
  %390 = vmatpush2.bf16.msra.mxu0 0
  %391 = vmatprep.subr.bf16.mxu0 0
  %392 = vmatpush2.bf16.msra.mxu0 0
  %393 = vmatprep.subr.bf16.mxu0 0
  %394 = vmatpush2.bf16.msra.mxu0 0
  %395 = vmatprep.subr.bf16.mxu0 0
  %396 = vmatpush2.bf16.msra.mxu0 0
  %397 = vmatprep.subr.bf16.mxu0 0
  %398 = vmatpush2.bf16.msra.mxu0 0
  %399 = vmatprep.subr.bf16.mxu0 0
  %400 = vmatpush2.bf16.msra.mxu0 0
  %401 = vmatprep.subr.bf16.mxu0 0
  %402 = vmatpush2.bf16.msra.mxu0 0
  %403 = vmatprep.mubr.bf16.mxu0 0
  %404 = vmatmul.mubr.bf16.gmra.mxu0 %v369
  %v405 = vpop.f32.mrf.mxu0
  %v406 = vadd.f32 0.0, %v405
  %v407 = vpop.f32.mrf.mxu0
  %v408 = vpop.f32.mrf.mxu0
  %v409 = vadd.f32 0.0, %v408
  %v410 = vpop.f32.mrf.mxu0
  %411 = vdwg.mxu0
  %414 = vrot.lane.b32.xlu0 %v406, 16
  %v415 = vpop.permute.xlu0 %414
  %416 = vrot.lane.b32.xlu0 %v409, 16
  %v417 = vpop.permute.xlu0 %416
  %v420 = vsel %vm165, %v281, %v415
  %v421 = vsel %vm165, %v284, %v417
  %v422 = vpack.c.bf16 %v421, %v420
  %423 = vrot.lane.b32.xlu0 %v112, 32
  %v424 = vpop.permute.xlu0 %423
  %425 = vrot.lane.b32.xlu0 %v113, 32
  %v426 = vpop.permute.xlu0 %425
  %429 = vrot.lane.b32.xlu0 %v102, 32
  %v430 = vpop.permute.xlu0 %429
  %v433 = vsel %vm116, %v422, 0
  %435 = vmatprep.subr.bf16.mxu0 0
  %436 = vmatpush1.bf16.msra.mxu0 0
  %437 = vmatprep.subr.bf16.mxu0 0
  %438 = vmatpush1.bf16.msra.mxu0 0
  %439 = vmatprep.subr.bf16.mxu0 0
  %440 = vmatpush1.bf16.msra.mxu0 0
  %441 = vmatprep.subr.bf16.mxu0 0
  %442 = vmatpush1.bf16.msra.mxu0 0
  %443 = vmatprep.subr.bf16.mxu0 0
  %444 = vmatpush1.bf16.msra.mxu0 0
  %445 = vmatprep.subr.bf16.mxu0 0
  %446 = vmatpush1.bf16.msra.mxu0 0
  %447 = vmatprep.subr.bf16.mxu0 0
  %448 = vmatpush1.bf16.msra.mxu0 %v426
  %449 = vmatprep.subr.bf16.mxu0 0
  %450 = vmatpush1.bf16.msra.mxu0 %v424
  %451 = vmatprep.subr.bf16.mxu0 0
  %452 = vmatpush2.bf16.msra.mxu0 0
  %453 = vmatprep.subr.bf16.mxu0 0
  %454 = vmatpush2.bf16.msra.mxu0 0
  %455 = vmatprep.subr.bf16.mxu0 0
  %456 = vmatpush2.bf16.msra.mxu0 0
  %457 = vmatprep.subr.bf16.mxu0 0
  %458 = vmatpush2.bf16.msra.mxu0 0
  %459 = vmatprep.subr.bf16.mxu0 0
  %460 = vmatpush2.bf16.msra.mxu0 0
  %461 = vmatprep.subr.bf16.mxu0 0
  %462 = vmatpush2.bf16.msra.mxu0 0
  %463 = vmatprep.subr.bf16.mxu0 0
  %464 = vmatpush2.bf16.msra.mxu0 0
  %465 = vmatprep.subr.bf16.mxu0 0
  %466 = vmatpush2.bf16.msra.mxu0 0
  %467 = vmatprep.mubr.bf16.mxu0 0
  %468 = vmatmul.mubr.bf16.gmra.mxu0 %v433
  %v469 = vpop.f32.mrf.mxu0
  %v470 = vadd.f32 %v430, %v469
  %v471 = vpop.f32.mrf.mxu0
  %v472 = vpop.f32.mrf.mxu0
  %v473 = vadd.f32 %v430, %v472
  %v474 = vpop.f32.mrf.mxu0
  %475 = vdwg.mxu0
  %v476 = vadd.f32 %v87, %v470
  %v477 = vadd.f32 %v88, %v473
  %v478 = vld [vmem:[%s7] sm:$0x1]
  %v479 = vld [vmem:[%s8] sm:$0x1]
  %v480 = vsel %vm116, %v476, 0.0
  %481 = vadd.xlane.f32.xlu0 %v480
  %v482 = vpop.xlane.xlu0 %481
  %v483 = vsel %vm116, %v477, 0.0
  %484 = vadd.xlane.f32.xlu0 %v483
  %v485 = vpop.xlane.xlu0 %484
  %v486 = vrcp.pop 32.0
  %v487 = vmul.f32 %v482, %v486
  %v488 = vmul.f32 %v485, %v486
  %v489 = vsub.f32 %v476, %v487
  %v490 = vsub.f32 %v477, %v488
  %v491 = vmul.f32 %v489, %v489
  %v492 = vmul.f32 %v490, %v490
  %v493 = vsel %vm116, %v491, 0.0
  %494 = vadd.xlane.f32.xlu0 %v493
  %v495 = vpop.xlane.xlu0 %494
  %v496 = vsel %vm116, %v492, 0.0
  %497 = vadd.xlane.f32.xlu0 %v496
  %v498 = vpop.xlane.xlu0 %497
  %v499 = vmul.f32 %v495, %v486
  %v500 = vmul.f32 %v498, %v486
  %v501 = vadd.f32 %v499, 1e-05
  %v502 = vadd.f32 %v500, 1e-05
  %v503 = vrsqrt.pop %v501
  %v504 = vrsqrt.pop %v502
  %v505 = vmul.f32 %v489, %v503
  %v506 = vmul.f32 %v490, %v504
  %v508 = vlaneseq
  %v509 = vshrl.u32 %v508, 7
  %v510 = vsub.s32 0, %v509
  %v511 = vrot.slane %v478, %v510
  %v513 = vmul.f32 %v505, %v511
  %v514 = vmul.f32 %v506, %v511
  %v516 = vlaneseq
  %v517 = vshrl.u32 %v516, 7
  %v518 = vsub.s32 0, %v517
  %v519 = vrot.slane %v479, %v518
  %v521 = vadd.f32 %v513, %v519
  %v522 = vadd.f32 %v514, %v519
  %v523 = vld [vmem:[%s9] sm:$0xf]
  %v524 = vld [vmem:[%s9 + $0x4] sm:$0xf]
  %v525 = vld [vmem:[%s9 + $0x8] sm:$0xf]
  %v526 = vld [vmem:[%s9 + $0xc] sm:$0xf]
  %v527 = vld [vmem:[%s10] sm:$0x1]
  %v528 = vld [vmem:[%s11] sm:$0xf]
  %v529 = vld [vmem:[%s11 + $0x4] sm:$0xf]
  %v530 = vld [vmem:[%s11 + $0x8] sm:$0xf]
  %v531 = vld [vmem:[%s11 + $0xc] sm:$0xf]
  %v532 = vld [vmem:[%s11 + $0x10] sm:$0xf]
  %v533 = vld [vmem:[%s11 + $0x14] sm:$0xf]
  %v534 = vld [vmem:[%s11 + $0x18] sm:$0xf]
  %v535 = vld [vmem:[%s11 + $0x1c] sm:$0xf]
  %v536 = vld [vmem:[%s12] sm:$0x1]
  %v537 = vpack.c.bf16 %v522, %v521
  %v539 = vlaneseq
  %v540 = vshrl.u32 %v539, 7
  %v541 = vsub.s32 0, %v540
  %v542 = vrot.slane %v527, %v541
  %v548 = vunpack.c.l.b16 %v523
  %v549 = vunpack.c.l.b16 %v524
  %v550 = vunpack.c.l.b16 %v525
  %v551 = vunpack.c.l.b16 %v526
  %v552 = vpack.c.b16 %v549, %v548
  %v553 = vpack.c.b16 %v551, %v550
  %v557 = vsel %vm116, %v537, 0
  %559 = vmatprep.subr.bf16.mxu0 0
  %560 = vmatpush1.bf16.msra.mxu0 0
  %561 = vmatprep.subr.bf16.mxu0 0
  %562 = vmatpush1.bf16.msra.mxu0 0
  %563 = vmatprep.subr.bf16.mxu0 0
  %564 = vmatpush1.bf16.msra.mxu0 0
  %565 = vmatprep.subr.bf16.mxu0 0
  %566 = vmatpush1.bf16.msra.mxu0 0
  %567 = vmatprep.subr.bf16.mxu0 0
  %568 = vmatpush1.bf16.msra.mxu0 0
  %569 = vmatprep.subr.bf16.mxu0 0
  %570 = vmatpush1.bf16.msra.mxu0 0
  %571 = vmatprep.subr.bf16.mxu0 0
  %572 = vmatpush1.bf16.msra.mxu0 %v553
  %573 = vmatprep.subr.bf16.mxu0 0
  %574 = vmatpush1.bf16.msra.mxu0 %v552
  %575 = vmatprep.subr.bf16.mxu0 0
  %576 = vmatpush2.bf16.msra.mxu0 0
  %577 = vmatprep.subr.bf16.mxu0 0
  %578 = vmatpush2.bf16.msra.mxu0 0
  %579 = vmatprep.subr.bf16.mxu0 0
  %580 = vmatpush2.bf16.msra.mxu0 0
  %581 = vmatprep.subr.bf16.mxu0 0
  %582 = vmatpush2.bf16.msra.mxu0 0
  %583 = vmatprep.subr.bf16.mxu0 0
  %584 = vmatpush2.bf16.msra.mxu0 0
  %585 = vmatprep.subr.bf16.mxu0 0
  %586 = vmatpush2.bf16.msra.mxu0 0
  %587 = vmatprep.subr.bf16.mxu0 0
  %588 = vmatpush2.bf16.msra.mxu0 0
  %589 = vmatprep.subr.bf16.mxu0 0
  %590 = vmatpush2.bf16.msra.mxu0 0
  %591 = vmatprep.mubr.bf16.mxu0 0
  %592 = vmatmul.mubr.bf16.gmra.mxu0 %v557
  %v593 = vpop.f32.mrf.mxu0
  %v594 = vadd.f32 %v542, %v593
  %v595 = vpop.f32.mrf.mxu0
  %v596 = vpop.f32.mrf.mxu0
  %v597 = vadd.f32 %v542, %v596
  %v598 = vpop.f32.mrf.mxu0
  %599 = vdwg.mxu0
  %v600 = vmul.f32 %v594, 0.5
  %v601 = vmul.f32 %v597, 0.5
  %v602 = vmul.f32 %v594, 0.70710677
  %v603 = vmul.f32 %v597, 0.70710677
  %vm604 = vcmp.ge.f32.partialorder %v602, 0.0
  %vm605 = vcmp.ge.f32.partialorder %v603, 0.0
  %v606 = vsel %vm604, 1.0, -1.0
  %v607 = vsel %vm605, 1.0, -1.0
  %v608 = vand.u32 2147483647, %v602
  %v609 = vand.u32 2147483647, %v603
  %v610 = vmul.f32 %v608, 0.3275911
  %v611 = vmul.f32 %v609, 0.3275911
  %v612 = vadd.f32 %v610, 1.0
  %v613 = vadd.f32 %v611, 1.0
  %v614 = vrcp.pop %v612
  %v615 = vmul.f32 1.0, %v614
  %v616 = vrcp.pop %v613
  %v617 = vmul.f32 1.0, %v616
  %v618 = vmul.f32 %v615, 1.0614054
  %v619 = vmul.f32 %v617, 1.0614054
  %v620 = vadd.f32 %v618, -1.4531521
  %v621 = vadd.f32 %v619, -1.4531521
  %v622 = vmul.f32 %v620, %v615
  %v623 = vmul.f32 %v621, %v617
  %v624 = vadd.f32 %v622, 1.4214138
  %v625 = vadd.f32 %v623, 1.4214138
  %v626 = vmul.f32 %v624, %v615
  %v627 = vmul.f32 %v625, %v617
  %v628 = vadd.f32 %v626, -0.28449672
  %v629 = vadd.f32 %v627, -0.28449672
  %v630 = vmul.f32 %v628, %v615
  %v631 = vmul.f32 %v629, %v617
  %v632 = vadd.f32 %v630, 0.2548296
  %v633 = vadd.f32 %v631, 0.2548296
  %v634 = vmul.f32 %v632, %v615
  %v635 = vmul.f32 %v633, %v617
  %v636 = vsub.f32 0.0, %v608
  %v637 = vsub.f32 0.0, %v609
  %v638 = vmul.f32 %v636, %v608
  %v639 = vmul.f32 %v637, %v609
  %v640 = vmul.f32 %v638, 1.442695
  %v641 = vpow.pop %v640
  %v642 = vmul.f32 %v639, 1.442695
  %v643 = vpow.pop %v642
  %v644 = vmul.f32 %v634, %v641
  %v645 = vmul.f32 %v635, %v643
  %v646 = vsub.f32 1.0, %v644
  %v647 = vsub.f32 1.0, %v645
  %v648 = vmul.f32 %v606, %v646
  %v649 = vmul.f32 %v607, %v647
  %v650 = vadd.f32 %v648, 1.0
  %v651 = vadd.f32 %v649, 1.0
  %v652 = vmul.f32 %v600, %v650
  %v653 = vmul.f32 %v601, %v651
  %v654 = vpack.c.bf16 %v653, %v652
  %v656 = vlaneseq
  %v657 = vshrl.u32 %v656, 7
  %v658 = vsub.s32 0, %v657
  %v659 = vrot.slane %v536, %v658
  %v669 = vunpack.c.l.b16 %v528
  %v670 = vunpack.c.l.b16 %v529
  %v671 = vunpack.c.l.b16 %v530
  %v672 = vunpack.c.l.b16 %v531
  %v673 = vunpack.c.l.b16 %v532
  %v674 = vunpack.c.l.b16 %v533
  %v675 = vunpack.c.l.b16 %v534
  %v676 = vunpack.c.l.b16 %v535
  %v677 = vpack.c.b16 %v670, %v669
  %v678 = vpack.c.b16 %v672, %v671
  %v679 = vpack.c.b16 %v674, %v673
  %v680 = vpack.c.b16 %v676, %v675
  %vm685 = vcmask 523264
  %v687 = vsel %vm685, %v654, 0
  %689 = vmatprep.subr.bf16.mxu0 0
  %690 = vmatpush1.bf16.msra.mxu0 0
  %691 = vmatprep.subr.bf16.mxu0 0
  %692 = vmatpush1.bf16.msra.mxu0 0
  %693 = vmatprep.subr.bf16.mxu0 0
  %694 = vmatpush1.bf16.msra.mxu0 0
  %695 = vmatprep.subr.bf16.mxu0 0
  %696 = vmatpush1.bf16.msra.mxu0 0
  %697 = vmatprep.subr.bf16.mxu0 0
  %698 = vmatpush1.bf16.msra.mxu0 %v680
  %699 = vmatprep.subr.bf16.mxu0 0
  %700 = vmatpush1.bf16.msra.mxu0 %v679
  %701 = vmatprep.subr.bf16.mxu0 0
  %702 = vmatpush1.bf16.msra.mxu0 %v678
  %703 = vmatprep.subr.bf16.mxu0 0
  %704 = vmatpush1.bf16.msra.mxu0 %v677
  %705 = vmatprep.subr.bf16.mxu0 0
  %706 = vmatpush2.bf16.msra.mxu0 0
  %707 = vmatprep.subr.bf16.mxu0 0
  %708 = vmatpush2.bf16.msra.mxu0 0
  %709 = vmatprep.subr.bf16.mxu0 0
  %710 = vmatpush2.bf16.msra.mxu0 0
  %711 = vmatprep.subr.bf16.mxu0 0
  %712 = vmatpush2.bf16.msra.mxu0 0
  %713 = vmatprep.subr.bf16.mxu0 0
  %714 = vmatpush2.bf16.msra.mxu0 0
  %715 = vmatprep.subr.bf16.mxu0 0
  %716 = vmatpush2.bf16.msra.mxu0 0
  %717 = vmatprep.subr.bf16.mxu0 0
  %718 = vmatpush2.bf16.msra.mxu0 0
  %719 = vmatprep.subr.bf16.mxu0 0
  %720 = vmatpush2.bf16.msra.mxu0 0
  %721 = vmatprep.mubr.bf16.mxu0 0
  %722 = vmatmul.mubr.bf16.gmra.mxu0 %v687
  %v723 = vpop.f32.mrf.mxu0
  %v724 = vadd.f32 %v659, %v723
  %v725 = vpop.f32.mrf.mxu0
  %v726 = vpop.f32.mrf.mxu0
  %v727 = vadd.f32 %v659, %v726
  %v728 = vpop.f32.mrf.mxu0
  %729 = vdwg.mxu0
  %v730 = vadd.f32 %v521, %v724
  %v731 = vadd.f32 %v522, %v727
  %v732 = vld [vmem:[%s13] sm:$0x1]
  %v733 = vld [vmem:[%s14] sm:$0x1]
  %v734 = vsel %vm116, %v730, 0.0
  %735 = vadd.xlane.f32.xlu0 %v734
  %v736 = vpop.xlane.xlu0 %735
  %v737 = vsel %vm116, %v731, 0.0
  %738 = vadd.xlane.f32.xlu0 %v737
  %v739 = vpop.xlane.xlu0 %738
  %v740 = vmul.f32 %v736, %v486
  %v741 = vmul.f32 %v739, %v486
  %v742 = vsub.f32 %v730, %v740
  %v743 = vsub.f32 %v731, %v741
  %v744 = vmul.f32 %v742, %v742
  %v745 = vmul.f32 %v743, %v743
  %v746 = vsel %vm116, %v744, 0.0
  %747 = vadd.xlane.f32.xlu0 %v746
  %v748 = vpop.xlane.xlu0 %747
  %v749 = vsel %vm116, %v745, 0.0
  %750 = vadd.xlane.f32.xlu0 %v749
  %v751 = vpop.xlane.xlu0 %750
  %v752 = vmul.f32 %v748, %v486
  %v753 = vmul.f32 %v751, %v486
  %v754 = vadd.f32 %v752, 1e-05
  %v755 = vadd.f32 %v753, 1e-05
  %v756 = vrsqrt.pop %v754
  %v757 = vrsqrt.pop %v755
  %v758 = vmul.f32 %v742, %v756
  %v759 = vmul.f32 %v743, %v757
  %v761 = vlaneseq
  %v762 = vshrl.u32 %v761, 7
  %v763 = vsub.s32 0, %v762
  %v764 = vrot.slane %v732, %v763
  %v766 = vmul.f32 %v758, %v764
  %v767 = vmul.f32 %v759, %v764
  %v769 = vlaneseq
  %v770 = vshrl.u32 %v769, 7
  %v771 = vsub.s32 0, %v770
  %v772 = vrot.slane %v733, %v771
  %v774 = vadd.f32 %v766, %v772
  %v775 = vadd.f32 %v767, %v772
  %v776 = vld [vmem:[%s3] sm:$0xf]
  %v777 = vld [vmem:[%s15] sm:$0xf]
  %v778 = vld [vmem:[%s15 + $0x4] sm:$0xf]
  %v779 = vld [vmem:[%s15 + $0x8] sm:$0xf]
  %v780 = vld [vmem:[%s15 + $0xc] sm:$0xf]
  %v781 = vld [vmem:[%s16] sm:$0x1]
  %v782 = vpack.c.bf16 %v89, %v89
  %v784 = vlaneseq
  %v785 = vshrl.u32 %v784, 7
  %v786 = vsub.s32 0, %v785
  %v787 = vrot.slane %v781, %v786
  %v793 = vunpack.c.l.b16 %v777
  %v794 = vunpack.c.l.b16 %v778
  %v795 = vunpack.c.l.b16 %v779
  %v796 = vunpack.c.l.b16 %v780
  %v797 = vpack.c.b16 %v794, %v793
  %v798 = vpack.c.b16 %v796, %v795
  %v802 = vsel %vm116, %v782, 0
  %804 = vmatprep.subr.bf16.mxu0 0
  %805 = vmatpush1.bf16.msra.mxu0 0
  %806 = vmatprep.subr.bf16.mxu0 0
  %807 = vmatpush1.bf16.msra.mxu0 0
  %808 = vmatprep.subr.bf16.mxu0 0
  %809 = vmatpush1.bf16.msra.mxu0 0
  %810 = vmatprep.subr.bf16.mxu0 0
  %811 = vmatpush1.bf16.msra.mxu0 0
  %812 = vmatprep.subr.bf16.mxu0 0
  %813 = vmatpush1.bf16.msra.mxu0 0
  %814 = vmatprep.subr.bf16.mxu0 0
  %815 = vmatpush1.bf16.msra.mxu0 0
  %816 = vmatprep.subr.bf16.mxu0 0
  %817 = vmatpush1.bf16.msra.mxu0 %v798
  %818 = vmatprep.subr.bf16.mxu0 0
  %819 = vmatpush1.bf16.msra.mxu0 %v797
  %820 = vmatprep.subr.bf16.mxu0 0
  %821 = vmatpush2.bf16.msra.mxu0 0
  %822 = vmatprep.subr.bf16.mxu0 0
  %823 = vmatpush2.bf16.msra.mxu0 0
  %824 = vmatprep.subr.bf16.mxu0 0
  %825 = vmatpush2.bf16.msra.mxu0 0
  %826 = vmatprep.subr.bf16.mxu0 0
  %827 = vmatpush2.bf16.msra.mxu0 0
  %828 = vmatprep.subr.bf16.mxu0 0
  %829 = vmatpush2.bf16.msra.mxu0 0
  %830 = vmatprep.subr.bf16.mxu0 0
  %831 = vmatpush2.bf16.msra.mxu0 0
  %832 = vmatprep.subr.bf16.mxu0 0
  %833 = vmatpush2.bf16.msra.mxu0 0
  %834 = vmatprep.subr.bf16.mxu0 0
  %835 = vmatpush2.bf16.msra.mxu0 0
  %836 = vmatprep.mubr.bf16.mxu0 0
  %837 = vmatmul.mubr.bf16.gmra.mxu0 %v802
  %v838 = vpop.f32.mrf.mxu0
  %v839 = vadd.f32 %v787, %v838
  %v840 = vpop.f32.mrf.mxu0
  %v841 = vpop.f32.mrf.mxu0
  %v842 = vpop.f32.mrf.mxu0
  %843 = vdwg.mxu0
  %v844 = vpack.c.bf16 %v775, %v774
  %845 = vrot.lane.b32.xlu0 %v797, 96
  %v846 = vpop.permute.xlu0 %845
  %847 = vrot.lane.b32.xlu0 %v798, 96
  %v848 = vpop.permute.xlu0 %847
  %851 = vrot.lane.b32.xlu0 %v787, 96
  %v852 = vpop.permute.xlu0 %851
  %v855 = vsel %vm116, %v844, 0
  %857 = vmatprep.subr.bf16.mxu0 0
  %858 = vmatpush1.bf16.msra.mxu0 0
  %859 = vmatprep.subr.bf16.mxu0 0
  %860 = vmatpush1.bf16.msra.mxu0 0
  %861 = vmatprep.subr.bf16.mxu0 0
  %862 = vmatpush1.bf16.msra.mxu0 0
  %863 = vmatprep.subr.bf16.mxu0 0
  %864 = vmatpush1.bf16.msra.mxu0 0
  %865 = vmatprep.subr.bf16.mxu0 0
  %866 = vmatpush1.bf16.msra.mxu0 0
  %867 = vmatprep.subr.bf16.mxu0 0
  %868 = vmatpush1.bf16.msra.mxu0 0
  %869 = vmatprep.subr.bf16.mxu0 0
  %870 = vmatpush1.bf16.msra.mxu0 %v848
  %871 = vmatprep.subr.bf16.mxu0 0
  %872 = vmatpush1.bf16.msra.mxu0 %v846
  %873 = vmatprep.subr.bf16.mxu0 0
  %874 = vmatpush2.bf16.msra.mxu0 0
  %875 = vmatprep.subr.bf16.mxu0 0
  %876 = vmatpush2.bf16.msra.mxu0 0
  %877 = vmatprep.subr.bf16.mxu0 0
  %878 = vmatpush2.bf16.msra.mxu0 0
  %879 = vmatprep.subr.bf16.mxu0 0
  %880 = vmatpush2.bf16.msra.mxu0 0
  %881 = vmatprep.subr.bf16.mxu0 0
  %882 = vmatpush2.bf16.msra.mxu0 0
  %883 = vmatprep.subr.bf16.mxu0 0
  %884 = vmatpush2.bf16.msra.mxu0 0
  %885 = vmatprep.subr.bf16.mxu0 0
  %886 = vmatpush2.bf16.msra.mxu0 0
  %887 = vmatprep.subr.bf16.mxu0 0
  %888 = vmatpush2.bf16.msra.mxu0 0
  %889 = vmatprep.mubr.bf16.mxu0 0
  %890 = vmatmul.mubr.bf16.gmra.mxu0 %v855
  %v891 = vpop.f32.mrf.mxu0
  %v892 = vadd.f32 %v852, %v891
  %v893 = vpop.f32.mrf.mxu0
  %v894 = vpop.f32.mrf.mxu0
  %v895 = vadd.f32 %v852, %v894
  %v896 = vpop.f32.mrf.mxu0
  %897 = vdwg.mxu0
  %v898 = vpack.c.bf16 %v839, %v839
  %v899 = vpack.c.bf16 %v895, %v892
  %v901 = vsel %vm165, %v898, 0
  %v904 = vsel %vm165, %v899, 0
  %906 = vmatprep.subr.bf16.mxu0 0
  %907 = vmatpush1.bf16.xpose.msra.mxu0 0
  %908 = vmatprep.subr.bf16.mxu0 0
  %909 = vmatpush1.bf16.xpose.msra.mxu0 0
  %910 = vmatprep.subr.bf16.mxu0 0
  %911 = vmatpush1.bf16.xpose.msra.mxu0 0
  %912 = vmatprep.subr.bf16.mxu0 0
  %913 = vmatpush1.bf16.xpose.msra.mxu0 0
  %914 = vmatprep.subr.bf16.mxu0 0
  %915 = vmatpush1.bf16.xpose.msra.mxu0 0
  %916 = vmatprep.subr.bf16.mxu0 0
  %917 = vmatpush1.bf16.xpose.msra.mxu0 0
  %918 = vmatprep.subr.bf16.mxu0 0
  %919 = vmatpush1.bf16.xpose.msra.mxu0 0
  %920 = vmatprep.subr.bf16.mxu0 0
  %921 = vmatpush1.bf16.xpose.msra.mxu0 %v904
  %922 = vmatprep.subr.bf16.mxu0 0
  %923 = vmatpush2.bf16.xpose.msra.mxu0 0
  %924 = vmatprep.subr.bf16.mxu0 0
  %925 = vmatpush2.bf16.xpose.msra.mxu0 0
  %926 = vmatprep.subr.bf16.mxu0 0
  %927 = vmatpush2.bf16.xpose.msra.mxu0 0
  %928 = vmatprep.subr.bf16.mxu0 0
  %929 = vmatpush2.bf16.xpose.msra.mxu0 0
  %930 = vmatprep.subr.bf16.mxu0 0
  %931 = vmatpush2.bf16.xpose.msra.mxu0 0
  %932 = vmatprep.subr.bf16.mxu0 0
  %933 = vmatpush2.bf16.xpose.msra.mxu0 0
  %934 = vmatprep.subr.bf16.mxu0 0
  %935 = vmatpush2.bf16.xpose.msra.mxu0 0
  %936 = vmatprep.subr.bf16.mxu0 0
  %937 = vmatpush2.bf16.xpose.msra.mxu0 0
  %938 = vmatprep.mubr.bf16.mxu0 0
  %939 = vmatmul.mubr.bf16.gmra.mxu0 %v901
  %v940 = vpop.f32.mrf.mxu0
  %v941 = vadd.f32 0.0, %v940
  %v942 = vpop.f32.mrf.mxu0
  %v943 = vpop.f32.mrf.mxu0
  %v944 = vpop.f32.mrf.mxu0
  %945 = vdwg.mxu0
  %v946 = vmul.f32 %v941, 0.25
  %v947 = vadd.f32 %v946, %v776
  %vm948 = vcmask 125952
  %v949 = vsel %vm948, %v947, -inf
  %950 = vmax.xlane.f32.xlu0 %v949
  %v951 = vpop.xlane.xlu0 %950
  %v952 = vsub.f32 %v947, %v951
  %v953 = vmul.f32 %v952, 1.442695
  %v954 = vpow.pop %v953
  %v955 = vsel %vm948, %v954, 0.0
  %956 = vadd.xlane.f32.xlu0 %v955
  %v957 = vpop.xlane.xlu0 %956
  %v958 = vrcp.pop %v957
  %v959 = vmul.f32 %v954, %v958
  %v960 = vpack.c.bf16 %v959, %v959
  %962 = vrot.lane.b32.xlu0 %v899, 96
  %v963 = vpop.permute.xlu0 %962
  %v966 = vsel %vm165, %v960, 0
  %968 = vmatprep.subr.bf16.mxu0 0
  %969 = vmatpush1.bf16.msra.mxu0 0
  %970 = vmatprep.subr.bf16.mxu0 0
  %971 = vmatpush1.bf16.msra.mxu0 0
  %972 = vmatprep.subr.bf16.mxu0 0
  %973 = vmatpush1.bf16.msra.mxu0 0
  %974 = vmatprep.subr.bf16.mxu0 0
  %975 = vmatpush1.bf16.msra.mxu0 0
  %976 = vmatprep.subr.bf16.mxu0 0
  %977 = vmatpush1.bf16.msra.mxu0 0
  %978 = vmatprep.subr.bf16.mxu0 0
  %979 = vmatpush1.bf16.msra.mxu0 0
  %980 = vmatprep.subr.bf16.mxu0 0
  %981 = vmatpush1.bf16.msra.mxu0 0
  %982 = vmatprep.subr.bf16.mxu0 0
  %983 = vmatpush1.bf16.msra.mxu0 %v963
  %984 = vmatprep.subr.bf16.mxu0 0
  %985 = vmatpush2.bf16.msra.mxu0 0
  %986 = vmatprep.subr.bf16.mxu0 0
  %987 = vmatpush2.bf16.msra.mxu0 0
  %988 = vmatprep.subr.bf16.mxu0 0
  %989 = vmatpush2.bf16.msra.mxu0 0
  %990 = vmatprep.subr.bf16.mxu0 0
  %991 = vmatpush2.bf16.msra.mxu0 0
  %992 = vmatprep.subr.bf16.mxu0 0
  %993 = vmatpush2.bf16.msra.mxu0 0
  %994 = vmatprep.subr.bf16.mxu0 0
  %995 = vmatpush2.bf16.msra.mxu0 0
  %996 = vmatprep.subr.bf16.mxu0 0
  %997 = vmatpush2.bf16.msra.mxu0 0
  %998 = vmatprep.subr.bf16.mxu0 0
  %999 = vmatpush2.bf16.msra.mxu0 0
  %1000 = vmatprep.mubr.bf16.mxu0 0
  %1001 = vmatmul.mubr.bf16.gmra.mxu0 %v966
  %v1002 = vpop.f32.mrf.mxu0
  %v1003 = vadd.f32 0.0, %v1002
  %v1004 = vpop.f32.mrf.mxu0
  %v1005 = vpop.f32.mrf.mxu0
  %v1006 = vpop.f32.mrf.mxu0
  %1007 = vdwg.mxu0
  %1009 = vrot.lane.b32.xlu0 %v898, 112
  %v1010 = vpop.permute.xlu0 %1009
  %1011 = vrot.lane.b32.xlu0 %v899, 112
  %v1012 = vpop.permute.xlu0 %1011
  %v1014 = vsel %vm165, %v1010, 0
  %v1017 = vsel %vm165, %v1012, 0
  %1019 = vmatprep.subr.bf16.mxu0 0
  %1020 = vmatpush1.bf16.xpose.msra.mxu0 0
  %1021 = vmatprep.subr.bf16.mxu0 0
  %1022 = vmatpush1.bf16.xpose.msra.mxu0 0
  %1023 = vmatprep.subr.bf16.mxu0 0
  %1024 = vmatpush1.bf16.xpose.msra.mxu0 0
  %1025 = vmatprep.subr.bf16.mxu0 0
  %1026 = vmatpush1.bf16.xpose.msra.mxu0 0
  %1027 = vmatprep.subr.bf16.mxu0 0
  %1028 = vmatpush1.bf16.xpose.msra.mxu0 0
  %1029 = vmatprep.subr.bf16.mxu0 0
  %1030 = vmatpush1.bf16.xpose.msra.mxu0 0
  %1031 = vmatprep.subr.bf16.mxu0 0
  %1032 = vmatpush1.bf16.xpose.msra.mxu0 0
  %1033 = vmatprep.subr.bf16.mxu0 0
  %1034 = vmatpush1.bf16.xpose.msra.mxu0 %v1017
  %1035 = vmatprep.subr.bf16.mxu0 0
  %1036 = vmatpush2.bf16.xpose.msra.mxu0 0
  %1037 = vmatprep.subr.bf16.mxu0 0
  %1038 = vmatpush2.bf16.xpose.msra.mxu0 0
  %1039 = vmatprep.subr.bf16.mxu0 0
  %1040 = vmatpush2.bf16.xpose.msra.mxu0 0
  %1041 = vmatprep.subr.bf16.mxu0 0
  %1042 = vmatpush2.bf16.xpose.msra.mxu0 0
  %1043 = vmatprep.subr.bf16.mxu0 0
  %1044 = vmatpush2.bf16.xpose.msra.mxu0 0
  %1045 = vmatprep.subr.bf16.mxu0 0
  %1046 = vmatpush2.bf16.xpose.msra.mxu0 0
  %1047 = vmatprep.subr.bf16.mxu0 0
  %1048 = vmatpush2.bf16.xpose.msra.mxu0 0
  %1049 = vmatprep.subr.bf16.mxu0 0
  %1050 = vmatpush2.bf16.xpose.msra.mxu0 0
  %1051 = vmatprep.mubr.bf16.mxu0 0
  %1052 = vmatmul.mubr.bf16.gmra.mxu0 %v1014
  %v1053 = vpop.f32.mrf.mxu0
  %v1054 = vadd.f32 0.0, %v1053
  %v1055 = vpop.f32.mrf.mxu0
  %v1056 = vpop.f32.mrf.mxu0
  %v1057 = vpop.f32.mrf.mxu0
  %1058 = vdwg.mxu0
  %v1059 = vmul.f32 %v1054, 0.25
  %v1060 = vadd.f32 %v1059, %v776
  %v1061 = vsel %vm948, %v1060, -inf
  %1062 = vmax.xlane.f32.xlu0 %v1061
  %v1063 = vpop.xlane.xlu0 %1062
  %v1064 = vsub.f32 %v1060, %v1063
  %v1065 = vmul.f32 %v1064, 1.442695
  %v1066 = vpow.pop %v1065
  %v1067 = vsel %vm948, %v1066, 0.0
  %1068 = vadd.xlane.f32.xlu0 %v1067
  %v1069 = vpop.xlane.xlu0 %1068
  %v1070 = vrcp.pop %v1069
  %v1071 = vmul.f32 %v1066, %v1070
  %v1072 = vpack.c.bf16 %v1071, %v1071
  %1073 = vrot.lane.b32.xlu0 %v899, 80
  %v1074 = vpop.permute.xlu0 %1073
  %v1077 = vsel %vm165, %v1072, 0
  %1079 = vmatprep.subr.bf16.mxu0 0
  %1080 = vmatpush1.bf16.msra.mxu0 0
  %1081 = vmatprep.subr.bf16.mxu0 0
  %1082 = vmatpush1.bf16.msra.mxu0 0
  %1083 = vmatprep.subr.bf16.mxu0 0
  %1084 = vmatpush1.bf16.msra.mxu0 0
  %1085 = vmatprep.subr.bf16.mxu0 0
  %1086 = vmatpush1.bf16.msra.mxu0 0
  %1087 = vmatprep.subr.bf16.mxu0 0
  %1088 = vmatpush1.bf16.msra.mxu0 0
  %1089 = vmatprep.subr.bf16.mxu0 0
  %1090 = vmatpush1.bf16.msra.mxu0 0
  %1091 = vmatprep.subr.bf16.mxu0 0
  %1092 = vmatpush1.bf16.msra.mxu0 0
  %1093 = vmatprep.subr.bf16.mxu0 0
  %1094 = vmatpush1.bf16.msra.mxu0 %v1074
  %1095 = vmatprep.subr.bf16.mxu0 0
  %1096 = vmatpush2.bf16.msra.mxu0 0
  %1097 = vmatprep.subr.bf16.mxu0 0
  %1098 = vmatpush2.bf16.msra.mxu0 0
  %1099 = vmatprep.subr.bf16.mxu0 0
  %1100 = vmatpush2.bf16.msra.mxu0 0
  %1101 = vmatprep.subr.bf16.mxu0 0
  %1102 = vmatpush2.bf16.msra.mxu0 0
  %1103 = vmatprep.subr.bf16.mxu0 0
  %1104 = vmatpush2.bf16.msra.mxu0 0
  %1105 = vmatprep.subr.bf16.mxu0 0
  %1106 = vmatpush2.bf16.msra.mxu0 0
  %1107 = vmatprep.subr.bf16.mxu0 0
  %1108 = vmatpush2.bf16.msra.mxu0 0
  %1109 = vmatprep.subr.bf16.mxu0 0
  %1110 = vmatpush2.bf16.msra.mxu0 0
  %1111 = vmatprep.mubr.bf16.mxu0 0
  %1112 = vmatmul.mubr.bf16.gmra.mxu0 %v1077
  %v1113 = vpop.f32.mrf.mxu0
  %v1114 = vadd.f32 0.0, %v1113
  %v1115 = vpop.f32.mrf.mxu0
  %v1116 = vpop.f32.mrf.mxu0
  %v1117 = vpop.f32.mrf.mxu0
  %1118 = vdwg.mxu0
  %1120 = vrot.lane.b32.xlu0 %v1114, 16
  %v1121 = vpop.permute.xlu0 %1120
  %v1123 = vsel %vm165, %v1003, %v1121
  %v1124 = vpack.c.bf16 %v1123, %v1123
  %1125 = vrot.lane.b32.xlu0 %v797, 32
  %v1126 = vpop.permute.xlu0 %1125
  %1127 = vrot.lane.b32.xlu0 %v798, 32
  %v1128 = vpop.permute.xlu0 %1127
  %1131 = vrot.lane.b32.xlu0 %v787, 32
  %v1132 = vpop.permute.xlu0 %1131
  %v1135 = vsel %vm116, %v1124, 0
  %1137 = vmatprep.subr.bf16.mxu0 0
  %1138 = vmatpush1.bf16.msra.mxu0 0
  %1139 = vmatprep.subr.bf16.mxu0 0
  %1140 = vmatpush1.bf16.msra.mxu0 0
  %1141 = vmatprep.subr.bf16.mxu0 0
  %1142 = vmatpush1.bf16.msra.mxu0 0
  %1143 = vmatprep.subr.bf16.mxu0 0
  %1144 = vmatpush1.bf16.msra.mxu0 0
  %1145 = vmatprep.subr.bf16.mxu0 0
  %1146 = vmatpush1.bf16.msra.mxu0 0
  %1147 = vmatprep.subr.bf16.mxu0 0
  %1148 = vmatpush1.bf16.msra.mxu0 0
  %1149 = vmatprep.subr.bf16.mxu0 0
  %1150 = vmatpush1.bf16.msra.mxu0 %v1128
  %1151 = vmatprep.subr.bf16.mxu0 0
  %1152 = vmatpush1.bf16.msra.mxu0 %v1126
  %1153 = vmatprep.subr.bf16.mxu0 0
  %1154 = vmatpush2.bf16.msra.mxu0 0
  %1155 = vmatprep.subr.bf16.mxu0 0
  %1156 = vmatpush2.bf16.msra.mxu0 0
  %1157 = vmatprep.subr.bf16.mxu0 0
  %1158 = vmatpush2.bf16.msra.mxu0 0
  %1159 = vmatprep.subr.bf16.mxu0 0
  %1160 = vmatpush2.bf16.msra.mxu0 0
  %1161 = vmatprep.subr.bf16.mxu0 0
  %1162 = vmatpush2.bf16.msra.mxu0 0
  %1163 = vmatprep.subr.bf16.mxu0 0
  %1164 = vmatpush2.bf16.msra.mxu0 0
  %1165 = vmatprep.subr.bf16.mxu0 0
  %1166 = vmatpush2.bf16.msra.mxu0 0
  %1167 = vmatprep.subr.bf16.mxu0 0
  %1168 = vmatpush2.bf16.msra.mxu0 0
  %1169 = vmatprep.mubr.bf16.mxu0 0
  %1170 = vmatmul.mubr.bf16.gmra.mxu0 %v1135
  %v1171 = vpop.f32.mrf.mxu0
  %v1172 = vadd.f32 %v1132, %v1171
  %v1173 = vpop.f32.mrf.mxu0
  %v1174 = vpop.f32.mrf.mxu0
  %v1175 = vpop.f32.mrf.mxu0
  %1176 = vdwg.mxu0
  %v1177 = vld [vmem:[%s4] sm:$0xff]
  %v1178 = vld [vmem:[%s4 + $0x8] sm:$0xff]
  %v1179 = vld [vmem:[%s17] sm:$0xf]
  %v1180 = vld [vmem:[%s17 + $0x4] sm:$0xf]
  %v1181 = vld [vmem:[%s17 + $0x8] sm:$0xf]
  %v1182 = vld [vmem:[%s17 + $0xc] sm:$0xf]
  %v1183 = vld [vmem:[%s18] sm:$0x1]
  %v1184 = vpack.c.bf16 %v1172, %v1172
  %v1186 = vlaneseq
  %v1187 = vshrl.u32 %v1186, 7
  %v1188 = vsub.s32 0, %v1187
  %v1189 = vrot.slane %v1183, %v1188
  %v1194 = vunpack.c.l.b16 %v1179
  %v1195 = vunpack.c.l.b16 %v1180
  %v1196 = vunpack.c.l.b16 %v1181
  %v1197 = vunpack.c.l.b16 %v1182
  %v1198 = vpack.c.b16 %v1195, %v1194
  %v1199 = vpack.c.b16 %v1197, %v1196
  %1200 = vrot.lane.b32.xlu0 %v1198, 64
  %v1201 = vpop.permute.xlu0 %1200
  %1202 = vrot.lane.b32.xlu0 %v1199, 64
  %v1203 = vpop.permute.xlu0 %1202
  %1206 = vrot.lane.b32.xlu0 %v1189, 64
  %v1207 = vpop.permute.xlu0 %1206
  %v1210 = vsel %vm116, %v1184, 0
  %1212 = vmatprep.subr.bf16.mxu0 0
  %1213 = vmatpush1.bf16.msra.mxu0 0
  %1214 = vmatprep.subr.bf16.mxu0 0
  %1215 = vmatpush1.bf16.msra.mxu0 0
  %1216 = vmatprep.subr.bf16.mxu0 0
  %1217 = vmatpush1.bf16.msra.mxu0 0
  %1218 = vmatprep.subr.bf16.mxu0 0
  %1219 = vmatpush1.bf16.msra.mxu0 0
  %1220 = vmatprep.subr.bf16.mxu0 0
  %1221 = vmatpush1.bf16.msra.mxu0 0
  %1222 = vmatprep.subr.bf16.mxu0 0
  %1223 = vmatpush1.bf16.msra.mxu0 0
  %1224 = vmatprep.subr.bf16.mxu0 0
  %1225 = vmatpush1.bf16.msra.mxu0 %v1203
  %1226 = vmatprep.subr.bf16.mxu0 0
  %1227 = vmatpush1.bf16.msra.mxu0 %v1201
  %1228 = vmatprep.subr.bf16.mxu0 0
  %1229 = vmatpush2.bf16.msra.mxu0 0
  %1230 = vmatprep.subr.bf16.mxu0 0
  %1231 = vmatpush2.bf16.msra.mxu0 0
  %1232 = vmatprep.subr.bf16.mxu0 0
  %1233 = vmatpush2.bf16.msra.mxu0 0
  %1234 = vmatprep.subr.bf16.mxu0 0
  %1235 = vmatpush2.bf16.msra.mxu0 0
  %1236 = vmatprep.subr.bf16.mxu0 0
  %1237 = vmatpush2.bf16.msra.mxu0 0
  %1238 = vmatprep.subr.bf16.mxu0 0
  %1239 = vmatpush2.bf16.msra.mxu0 0
  %1240 = vmatprep.subr.bf16.mxu0 0
  %1241 = vmatpush2.bf16.msra.mxu0 0
  %1242 = vmatprep.subr.bf16.mxu0 0
  %1243 = vmatpush2.bf16.msra.mxu0 0
  %1244 = vmatprep.mubr.bf16.mxu0 0
  %1245 = vmatmul.mubr.bf16.gmra.mxu0 %v1210
  %v1246 = vpop.f32.mrf.mxu0
  %v1247 = vadd.f32 %v1207, %v1246
  %v1248 = vpop.f32.mrf.mxu0
  %v1249 = vpop.f32.mrf.mxu0
  %v1250 = vpop.f32.mrf.mxu0
  %1251 = vdwg.mxu0
  %vm1252 = vcmp.ge.f32.partialorder %v1177, -0.5
  %vm1253 = vcmp.ge.f32.partialorder %v1178, -0.5
  %v1254 = vsel %vm1252, 1.0, 0.0
  %v1255 = vsel %vm1253, 1.0, 0.0
  %v1256 = vpack.c.bf16 %v1255, %v1254
  %v1257 = vpack.c.bf16 %v1247, %v1247
  %vm1258 = vcmask 31744
  %v1260 = vsel %vm1258, %v1256, 0
  %vm1262 = vcmask 1041408
  %v1264 = vsel %vm1262, %v1257, 0
  %1266 = vmatprep.subr.bf16.mxu0 0
  %1267 = vmatpush1.bf16.msra.mxu0 0
  %1268 = vmatprep.subr.bf16.mxu0 0
  %1269 = vmatpush1.bf16.msra.mxu0 0
  %1270 = vmatprep.subr.bf16.mxu0 0
  %1271 = vmatpush1.bf16.msra.mxu0 0
  %1272 = vmatprep.subr.bf16.mxu0 0
  %1273 = vmatpush1.bf16.msra.mxu0 0
  %1274 = vmatprep.subr.bf16.mxu0 0
  %1275 = vmatpush1.bf16.msra.mxu0 0
  %1276 = vmatprep.subr.bf16.mxu0 0
  %1277 = vmatpush1.bf16.msra.mxu0 0
  %1278 = vmatprep.subr.bf16.mxu0 0
  %1279 = vmatpush1.bf16.msra.mxu0 0
  %1280 = vmatprep.subr.bf16.mxu0 0
  %1281 = vmatpush1.bf16.msra.mxu0 %v1264
  %1282 = vmatprep.subr.bf16.mxu0 0
  %1283 = vmatpush2.bf16.msra.mxu0 0
  %1284 = vmatprep.subr.bf16.mxu0 0
  %1285 = vmatpush2.bf16.msra.mxu0 0
  %1286 = vmatprep.subr.bf16.mxu0 0
  %1287 = vmatpush2.bf16.msra.mxu0 0
  %1288 = vmatprep.subr.bf16.mxu0 0
  %1289 = vmatpush2.bf16.msra.mxu0 0
  %1290 = vmatprep.subr.bf16.mxu0 0
  %1291 = vmatpush2.bf16.msra.mxu0 0
  %1292 = vmatprep.subr.bf16.mxu0 0
  %1293 = vmatpush2.bf16.msra.mxu0 0
  %1294 = vmatprep.subr.bf16.mxu0 0
  %1295 = vmatpush2.bf16.msra.mxu0 0
  %1296 = vmatprep.subr.bf16.mxu0 0
  %1297 = vmatpush2.bf16.msra.mxu0 0
  %1298 = vmatprep.mubr.bf16.mxu0 0
  %1299 = vmatmul.mubr.bf16.gmra.mxu0 %v1260
  %v1300 = vpop.f32.mrf.mxu0
  %v1301 = vadd.f32 0.0, %v1300
  %v1302 = vpop.f32.mrf.mxu0
  %v1303 = vpop.f32.mrf.mxu0
  %v1304 = vadd.f32 0.0, %v1303
  %v1305 = vpop.f32.mrf.mxu0
  %1306 = vdwg.mxu0
  %v1307 = vpack.c.bf16 %v1304, %v1301
  %1308 = vrot.lane.b32.xlu0 %v1198, 32
  %v1309 = vpop.permute.xlu0 %1308
  %1310 = vrot.lane.b32.xlu0 %v1199, 32
  %v1311 = vpop.permute.xlu0 %1310
  %1314 = vrot.lane.b32.xlu0 %v1189, 32
  %v1315 = vpop.permute.xlu0 %1314
  %v1318 = vsel %vm116, %v1307, 0
  %1320 = vmatprep.subr.bf16.mxu0 0
  %1321 = vmatpush1.bf16.msra.mxu0 0
  %1322 = vmatprep.subr.bf16.mxu0 0
  %1323 = vmatpush1.bf16.msra.mxu0 0
  %1324 = vmatprep.subr.bf16.mxu0 0
  %1325 = vmatpush1.bf16.msra.mxu0 0
  %1326 = vmatprep.subr.bf16.mxu0 0
  %1327 = vmatpush1.bf16.msra.mxu0 0
  %1328 = vmatprep.subr.bf16.mxu0 0
  %1329 = vmatpush1.bf16.msra.mxu0 0
  %1330 = vmatprep.subr.bf16.mxu0 0
  %1331 = vmatpush1.bf16.msra.mxu0 0
  %1332 = vmatprep.subr.bf16.mxu0 0
  %1333 = vmatpush1.bf16.msra.mxu0 %v1311
  %1334 = vmatprep.subr.bf16.mxu0 0
  %1335 = vmatpush1.bf16.msra.mxu0 %v1309
  %1336 = vmatprep.subr.bf16.mxu0 0
  %1337 = vmatpush2.bf16.msra.mxu0 0
  %1338 = vmatprep.subr.bf16.mxu0 0
  %1339 = vmatpush2.bf16.msra.mxu0 0
  %1340 = vmatprep.subr.bf16.mxu0 0
  %1341 = vmatpush2.bf16.msra.mxu0 0
  %1342 = vmatprep.subr.bf16.mxu0 0
  %1343 = vmatpush2.bf16.msra.mxu0 0
  %1344 = vmatprep.subr.bf16.mxu0 0
  %1345 = vmatpush2.bf16.msra.mxu0 0
  %1346 = vmatprep.subr.bf16.mxu0 0
  %1347 = vmatpush2.bf16.msra.mxu0 0
  %1348 = vmatprep.subr.bf16.mxu0 0
  %1349 = vmatpush2.bf16.msra.mxu0 0
  %1350 = vmatprep.subr.bf16.mxu0 0
  %1351 = vmatpush2.bf16.msra.mxu0 0
  %1352 = vmatprep.mubr.bf16.mxu0 0
  %1353 = vmatmul.mubr.bf16.gmra.mxu0 %v1318
  %v1354 = vpop.f32.mrf.mxu0
  %v1355 = vadd.f32 %v1315, %v1354
  %v1356 = vpop.f32.mrf.mxu0
  %v1357 = vpop.f32.mrf.mxu0
  %v1358 = vadd.f32 %v1315, %v1357
  %v1359 = vpop.f32.mrf.mxu0
  %1360 = vdwg.mxu0
  %v1361 = vadd.f32 %v774, %v1355
  %v1362 = vadd.f32 %v775, %v1358
  %v1363 = vld [vmem:[%s19] sm:$0x1]
  %v1364 = vld [vmem:[%s20] sm:$0x1]
  %v1365 = vsel %vm116, %v1361, 0.0
  %1366 = vadd.xlane.f32.xlu0 %v1365
  %v1367 = vpop.xlane.xlu0 %1366
  %v1368 = vsel %vm116, %v1362, 0.0
  %1369 = vadd.xlane.f32.xlu0 %v1368
  %v1370 = vpop.xlane.xlu0 %1369
  %v1371 = vmul.f32 %v1367, %v486
  %v1372 = vmul.f32 %v1370, %v486
  %v1373 = vsub.f32 %v1361, %v1371
  %v1374 = vsub.f32 %v1362, %v1372
  %v1375 = vmul.f32 %v1373, %v1373
  %v1376 = vmul.f32 %v1374, %v1374
  %v1377 = vsel %vm116, %v1375, 0.0
  %1378 = vadd.xlane.f32.xlu0 %v1377
  %v1379 = vpop.xlane.xlu0 %1378
  %v1380 = vsel %vm116, %v1376, 0.0
  %1381 = vadd.xlane.f32.xlu0 %v1380
  %v1382 = vpop.xlane.xlu0 %1381
  %v1383 = vmul.f32 %v1379, %v486
  %v1384 = vmul.f32 %v1382, %v486
  %v1385 = vadd.f32 %v1383, 1e-05
  %v1386 = vadd.f32 %v1384, 1e-05
  %v1387 = vrsqrt.pop %v1385
  %v1388 = vrsqrt.pop %v1386
  %v1389 = vmul.f32 %v1373, %v1387
  %v1390 = vmul.f32 %v1374, %v1388
  %v1392 = vlaneseq
  %v1393 = vshrl.u32 %v1392, 7
  %v1394 = vsub.s32 0, %v1393
  %v1395 = vrot.slane %v1363, %v1394
  %v1397 = vmul.f32 %v1389, %v1395
  %v1398 = vmul.f32 %v1390, %v1395
  %v1400 = vlaneseq
  %v1401 = vshrl.u32 %v1400, 7
  %v1402 = vsub.s32 0, %v1401
  %v1403 = vrot.slane %v1364, %v1402
  %v1405 = vadd.f32 %v1397, %v1403
  %v1406 = vadd.f32 %v1398, %v1403
  %v1407 = vld [vmem:[%s21] sm:$0xf]
  %v1408 = vld [vmem:[%s21 + $0x4] sm:$0xf]
  %v1409 = vld [vmem:[%s21 + $0x8] sm:$0xf]
  %v1410 = vld [vmem:[%s21 + $0xc] sm:$0xf]
  %v1411 = vld [vmem:[%s22] sm:$0x1]
  %v1412 = vld [vmem:[%s23] sm:$0xf]
  %v1413 = vld [vmem:[%s23 + $0x4] sm:$0xf]
  %v1414 = vld [vmem:[%s23 + $0x8] sm:$0xf]
  %v1415 = vld [vmem:[%s23 + $0xc] sm:$0xf]
  %v1416 = vld [vmem:[%s23 + $0x10] sm:$0xf]
  %v1417 = vld [vmem:[%s23 + $0x14] sm:$0xf]
  %v1418 = vld [vmem:[%s23 + $0x18] sm:$0xf]
  %v1419 = vld [vmem:[%s23 + $0x1c] sm:$0xf]
  %v1420 = vld [vmem:[%s24] sm:$0x1]
  %v1421 = vpack.c.bf16 %v1406, %v1405
  %v1423 = vlaneseq
  %v1424 = vshrl.u32 %v1423, 7
  %v1425 = vsub.s32 0, %v1424
  %v1426 = vrot.slane %v1411, %v1425
  %v1432 = vunpack.c.l.b16 %v1407
  %v1433 = vunpack.c.l.b16 %v1408
  %v1434 = vunpack.c.l.b16 %v1409
  %v1435 = vunpack.c.l.b16 %v1410
  %v1436 = vpack.c.b16 %v1433, %v1432
  %v1437 = vpack.c.b16 %v1435, %v1434
  %v1441 = vsel %vm116, %v1421, 0
  %1443 = vmatprep.subr.bf16.mxu0 0
  %1444 = vmatpush1.bf16.msra.mxu0 0
  %1445 = vmatprep.subr.bf16.mxu0 0
  %1446 = vmatpush1.bf16.msra.mxu0 0
  %1447 = vmatprep.subr.bf16.mxu0 0
  %1448 = vmatpush1.bf16.msra.mxu0 0
  %1449 = vmatprep.subr.bf16.mxu0 0
  %1450 = vmatpush1.bf16.msra.mxu0 0
  %1451 = vmatprep.subr.bf16.mxu0 0
  %1452 = vmatpush1.bf16.msra.mxu0 0
  %1453 = vmatprep.subr.bf16.mxu0 0
  %1454 = vmatpush1.bf16.msra.mxu0 0
  %1455 = vmatprep.subr.bf16.mxu0 0
  %1456 = vmatpush1.bf16.msra.mxu0 %v1437
  %1457 = vmatprep.subr.bf16.mxu0 0
  %1458 = vmatpush1.bf16.msra.mxu0 %v1436
  %1459 = vmatprep.subr.bf16.mxu0 0
  %1460 = vmatpush2.bf16.msra.mxu0 0
  %1461 = vmatprep.subr.bf16.mxu0 0
  %1462 = vmatpush2.bf16.msra.mxu0 0
  %1463 = vmatprep.subr.bf16.mxu0 0
  %1464 = vmatpush2.bf16.msra.mxu0 0
  %1465 = vmatprep.subr.bf16.mxu0 0
  %1466 = vmatpush2.bf16.msra.mxu0 0
  %1467 = vmatprep.subr.bf16.mxu0 0
  %1468 = vmatpush2.bf16.msra.mxu0 0
  %1469 = vmatprep.subr.bf16.mxu0 0
  %1470 = vmatpush2.bf16.msra.mxu0 0
  %1471 = vmatprep.subr.bf16.mxu0 0
  %1472 = vmatpush2.bf16.msra.mxu0 0
  %1473 = vmatprep.subr.bf16.mxu0 0
  %1474 = vmatpush2.bf16.msra.mxu0 0
  %1475 = vmatprep.mubr.bf16.mxu0 0
  %1476 = vmatmul.mubr.bf16.gmra.mxu0 %v1441
  %v1477 = vpop.f32.mrf.mxu0
  %v1478 = vadd.f32 %v1426, %v1477
  %v1479 = vpop.f32.mrf.mxu0
  %v1480 = vpop.f32.mrf.mxu0
  %v1481 = vadd.f32 %v1426, %v1480
  %v1482 = vpop.f32.mrf.mxu0
  %1483 = vdwg.mxu0
  %v1484 = vmul.f32 %v1478, 0.5
  %v1485 = vmul.f32 %v1481, 0.5
  %v1486 = vmul.f32 %v1478, 0.70710677
  %v1487 = vmul.f32 %v1481, 0.70710677
  %vm1488 = vcmp.ge.f32.partialorder %v1486, 0.0
  %vm1489 = vcmp.ge.f32.partialorder %v1487, 0.0
  %v1490 = vsel %vm1488, 1.0, -1.0
  %v1491 = vsel %vm1489, 1.0, -1.0
  %v1492 = vand.u32 2147483647, %v1486
  %v1493 = vand.u32 2147483647, %v1487
  %v1494 = vmul.f32 %v1492, 0.3275911
  %v1495 = vmul.f32 %v1493, 0.3275911
  %v1496 = vadd.f32 %v1494, 1.0
  %v1497 = vadd.f32 %v1495, 1.0
  %v1498 = vrcp.pop %v1496
  %v1499 = vmul.f32 1.0, %v1498
  %v1500 = vrcp.pop %v1497
  %v1501 = vmul.f32 1.0, %v1500
  %v1502 = vmul.f32 %v1499, 1.0614054
  %v1503 = vmul.f32 %v1501, 1.0614054
  %v1504 = vadd.f32 %v1502, -1.4531521
  %v1505 = vadd.f32 %v1503, -1.4531521
  %v1506 = vmul.f32 %v1504, %v1499
  %v1507 = vmul.f32 %v1505, %v1501
  %v1508 = vadd.f32 %v1506, 1.4214138
  %v1509 = vadd.f32 %v1507, 1.4214138
  %v1510 = vmul.f32 %v1508, %v1499
  %v1511 = vmul.f32 %v1509, %v1501
  %v1512 = vadd.f32 %v1510, -0.28449672
  %v1513 = vadd.f32 %v1511, -0.28449672
  %v1514 = vmul.f32 %v1512, %v1499
  %v1515 = vmul.f32 %v1513, %v1501
  %v1516 = vadd.f32 %v1514, 0.2548296
  %v1517 = vadd.f32 %v1515, 0.2548296
  %v1518 = vmul.f32 %v1516, %v1499
  %v1519 = vmul.f32 %v1517, %v1501
  %v1520 = vsub.f32 0.0, %v1492
  %v1521 = vsub.f32 0.0, %v1493
  %v1522 = vmul.f32 %v1520, %v1492
  %v1523 = vmul.f32 %v1521, %v1493
  %v1524 = vmul.f32 %v1522, 1.442695
  %v1525 = vpow.pop %v1524
  %v1526 = vmul.f32 %v1523, 1.442695
  %v1527 = vpow.pop %v1526
  %v1528 = vmul.f32 %v1518, %v1525
  %v1529 = vmul.f32 %v1519, %v1527
  %v1530 = vsub.f32 1.0, %v1528
  %v1531 = vsub.f32 1.0, %v1529
  %v1532 = vmul.f32 %v1490, %v1530
  %v1533 = vmul.f32 %v1491, %v1531
  %v1534 = vadd.f32 %v1532, 1.0
  %v1535 = vadd.f32 %v1533, 1.0
  %v1536 = vmul.f32 %v1484, %v1534
  %v1537 = vmul.f32 %v1485, %v1535
  %v1538 = vpack.c.bf16 %v1537, %v1536
  %v1540 = vlaneseq
  %v1541 = vshrl.u32 %v1540, 7
  %v1542 = vsub.s32 0, %v1541
  %v1543 = vrot.slane %v1420, %v1542
  %v1553 = vunpack.c.l.b16 %v1412
  %v1554 = vunpack.c.l.b16 %v1413
  %v1555 = vunpack.c.l.b16 %v1414
  %v1556 = vunpack.c.l.b16 %v1415
  %v1557 = vunpack.c.l.b16 %v1416
  %v1558 = vunpack.c.l.b16 %v1417
  %v1559 = vunpack.c.l.b16 %v1418
  %v1560 = vunpack.c.l.b16 %v1419
  %v1561 = vpack.c.b16 %v1554, %v1553
  %v1562 = vpack.c.b16 %v1556, %v1555
  %v1563 = vpack.c.b16 %v1558, %v1557
  %v1564 = vpack.c.b16 %v1560, %v1559
  %v1570 = vsel %vm685, %v1538, 0
  %1572 = vmatprep.subr.bf16.mxu0 0
  %1573 = vmatpush1.bf16.msra.mxu0 0
  %1574 = vmatprep.subr.bf16.mxu0 0
  %1575 = vmatpush1.bf16.msra.mxu0 0
  %1576 = vmatprep.subr.bf16.mxu0 0
  %1577 = vmatpush1.bf16.msra.mxu0 0
  %1578 = vmatprep.subr.bf16.mxu0 0
  %1579 = vmatpush1.bf16.msra.mxu0 0
  %1580 = vmatprep.subr.bf16.mxu0 0
  %1581 = vmatpush1.bf16.msra.mxu0 %v1564
  %1582 = vmatprep.subr.bf16.mxu0 0
  %1583 = vmatpush1.bf16.msra.mxu0 %v1563
  %1584 = vmatprep.subr.bf16.mxu0 0
  %1585 = vmatpush1.bf16.msra.mxu0 %v1562
  %1586 = vmatprep.subr.bf16.mxu0 0
  %1587 = vmatpush1.bf16.msra.mxu0 %v1561
  %1588 = vmatprep.subr.bf16.mxu0 0
  %1589 = vmatpush2.bf16.msra.mxu0 0
  %1590 = vmatprep.subr.bf16.mxu0 0
  %1591 = vmatpush2.bf16.msra.mxu0 0
  %1592 = vmatprep.subr.bf16.mxu0 0
  %1593 = vmatpush2.bf16.msra.mxu0 0
  %1594 = vmatprep.subr.bf16.mxu0 0
  %1595 = vmatpush2.bf16.msra.mxu0 0
  %1596 = vmatprep.subr.bf16.mxu0 0
  %1597 = vmatpush2.bf16.msra.mxu0 0
  %1598 = vmatprep.subr.bf16.mxu0 0
  %1599 = vmatpush2.bf16.msra.mxu0 0
  %1600 = vmatprep.subr.bf16.mxu0 0
  %1601 = vmatpush2.bf16.msra.mxu0 0
  %1602 = vmatprep.subr.bf16.mxu0 0
  %1603 = vmatpush2.bf16.msra.mxu0 0
  %1604 = vmatprep.mubr.bf16.mxu0 0
  %1605 = vmatmul.mubr.bf16.gmra.mxu0 %v1570
  %v1606 = vpop.f32.mrf.mxu0
  %v1607 = vadd.f32 %v1543, %v1606
  %v1608 = vpop.f32.mrf.mxu0
  %v1609 = vpop.f32.mrf.mxu0
  %v1610 = vadd.f32 %v1543, %v1609
  %v1611 = vpop.f32.mrf.mxu0
  %1612 = vdwg.mxu0
  %v1613 = vadd.f32 %v1405, %v1607
  %v1614 = vadd.f32 %v1406, %v1610
  %v1615 = vld [vmem:[%s25] sm:$0x1]
  %v1616 = vld [vmem:[%s26] sm:$0x1]
  %v1617 = vsel %vm116, %v1613, 0.0
  %1618 = vadd.xlane.f32.xlu0 %v1617
  %v1619 = vpop.xlane.xlu0 %1618
  %v1620 = vsel %vm116, %v1614, 0.0
  %1621 = vadd.xlane.f32.xlu0 %v1620
  %v1622 = vpop.xlane.xlu0 %1621
  %v1623 = vmul.f32 %v1619, %v486
  %v1624 = vmul.f32 %v1622, %v486
  %v1625 = vsub.f32 %v1613, %v1623
  %v1626 = vsub.f32 %v1614, %v1624
  %v1627 = vmul.f32 %v1625, %v1625
  %v1628 = vmul.f32 %v1626, %v1626
  %v1629 = vsel %vm116, %v1627, 0.0
  %1630 = vadd.xlane.f32.xlu0 %v1629
  %v1631 = vpop.xlane.xlu0 %1630
  %v1632 = vsel %vm116, %v1628, 0.0
  %1633 = vadd.xlane.f32.xlu0 %v1632
  %v1634 = vpop.xlane.xlu0 %1633
  %v1635 = vmul.f32 %v1631, %v486
  %v1636 = vmul.f32 %v1634, %v486
  %v1637 = vadd.f32 %v1635, 1e-05
  %v1638 = vadd.f32 %v1636, 1e-05
  %v1639 = vrsqrt.pop %v1637
  %v1640 = vrsqrt.pop %v1638
  %v1641 = vmul.f32 %v1625, %v1639
  %v1642 = vmul.f32 %v1626, %v1640
  %v1644 = vlaneseq
  %v1645 = vshrl.u32 %v1644, 7
  %v1646 = vsub.s32 0, %v1645
  %v1647 = vrot.slane %v1615, %v1646
  %v1649 = vmul.f32 %v1641, %v1647
  %v1650 = vmul.f32 %v1642, %v1647
  %v1652 = vlaneseq
  %v1653 = vshrl.u32 %v1652, 7
  %v1654 = vsub.s32 0, %v1653
  %v1655 = vrot.slane %v1616, %v1654
  %v1657 = vadd.f32 %v1649, %v1655
  %v1658 = vadd.f32 %v1650, %v1655
  %1659 = vst.msk [vmem:[%s27] sm:$0xff] %vm116, %v1657
  %1660 = vst.msk [vmem:[%s27 + $0x8] sm:$0xff] %vm116, %v1658
  // Predicated region
  $region110: #{_lambda_.11} parent=0 // pred_check
    _
  $region111: #{_lambda_.11} parent=0 // pred_check_branch
    %1662 = sbr.rel (0) target = $region113
  $region112: #{_lambda_.11} parent=0 // pred_region
    _
  $region113: #{_lambda_.11} parent=0 // pred_fallthru
    _
  // Predicated region
  $region114: #{_lambda_.11} parent=0 // pred_check
    _
  $region115: #{_lambda_.11} parent=0 // pred_check_branch
    %1664 = sbr.rel (0) target = $region117
  $region116: #{_lambda_.11} parent=0 // pred_region
    _
  $region117: #{_lambda_.11} parent=0 // pred_fallthru
    _

// kernel: _lambda_.19
$region0: #{_lambda_.19}
  #allocation0 [shape = 'u32[]', space=smem, size = 0x4, offset = 0x4, fixed_abs, tag = 'smem constant byte address 0x4 - core index']
  #allocation1 [shape = 'u32[144,128]{1,0:T(1,128)}', space=vmem, size = 0x12000, scoped, tag = 'internal scratch']
  %s0 = inlined_call_operand.vmem [shape: f32[16,32], index: 0, kind: input, shape index: {}]
  %s1 = inlined_call_operand.vmem [shape: f32[8,32], index: 1, kind: input, shape index: {}]
  %s2 = inlined_call_operand.vmem [shape: f32[16,8], index: 2, kind: input, shape index: {}]
  %s3 = inlined_call_operand.vmem [shape: bf16[32,128], index: 3, kind: input, shape index: {}]
  %s4 = inlined_call_operand.vmem [shape: f32[1,128], index: 4, kind: input, shape index: {}]
  %s5 = inlined_call_operand.vmem [shape: f32[1,32], index: 5, kind: input, shape index: {}]
  %s6 = inlined_call_operand.vmem [shape: f32[1,32], index: 6, kind: input, shape index: {}]
  %s7 = inlined_call_operand.vmem [shape: bf16[32,32], index: 7, kind: input, shape index: {}]
  %s8 = inlined_call_operand.vmem [shape: f32[1,32], index: 8, kind: input, shape index: {}]
  %s9 = inlined_call_operand.vmem [shape: bf16[32,32], index: 9, kind: input, shape index: {}]
  %s10 = inlined_call_operand.vmem [shape: f32[1,32], index: 10, kind: input, shape index: {}]
  %s11 = inlined_call_operand.vmem [shape: f32[1,32], index: 11, kind: input, shape index: {}]
  %s12 = inlined_call_operand.vmem [shape: f32[1,32], index: 12, kind: input, shape index: {}]
  %s13 = inlined_call_operand.vmem [shape: bf16[32,12], index: 13, kind: input, shape index: {}]
  %s14 = inlined_call_operand.vmem [shape: f32[1,12], index: 14, kind: input, shape index: {}]
  %s15 = inlined_call_operand.hbm [shape: f32[16,32], index: 15, kind: output, shape index: {0}]
  %s16 = inlined_call_operand.vmem [shape: f32[16,12], index: 16, kind: output, shape index: {1}]
  %17 = xla_tuple %s15, %s16
  %s18 = sld [smem:[#allocation0]]
  $region78: #{_lambda_.19} parent=0
    _
  %s20 = ssub.s32 1, %s18
  %s21 = scalar_select 0, %s20, %s18
  $region1: #{_lambda_.19} parent=0
    #allocation2 [shape = 'u8[8192]{0}', space=vmem, size = 0x2000, scoped, tag = 'output window, operand 0, single buffered']
    #allocation3 [shape = 's32[1]{0}', space=sflag, size = 0x4, scoped, tag = 'scoped memory for _lambda_.19']
    %22 = vsyncpa [#allocation3], 0
    // Predicated region
    $region2: #{_lambda_.19} parent=1 // pred_check
      _
    $region3: #{_lambda_.19} parent=1 // pred_check_branch
      %24 = sbr.rel (0) target = $region5
    $region4: #{_lambda_.19} parent=1 // pred_region
      _
    $region5: #{_lambda_.19} parent=1 // pred_fallthru
      _
    // Predicated region
    $region6: #{_lambda_.19} parent=1 // pred_check
      _
    $region7: #{_lambda_.19} parent=1 // pred_check_branch
      %26 = sbr.rel (0) target = $region9
    $region8: #{_lambda_.19} parent=1 // pred_region
      _
    $region9: #{_lambda_.19} parent=1 // pred_fallthru
      _
    // Predicated region
    $region10: #{_lambda_.19} parent=1 // pred_check
      _
    $region11: #{_lambda_.19} parent=1 // pred_check_branch
      %28 = sbr.rel (0) target = $region13
    $region12: #{_lambda_.19} parent=1 // pred_region
      _
    $region13: #{_lambda_.19} parent=1 // pred_fallthru
      _
    // Predicated region
    $region14: #{_lambda_.19} parent=1 // pred_check
      _
    $region15: #{_lambda_.19} parent=1 // pred_check_branch
      %30 = sbr.rel (0) target = $region17
    $region16: #{_lambda_.19} parent=1 // pred_region
      _
    $region17: #{_lambda_.19} parent=1 // pred_fallthru
      _
    // Predicated region
    $region18: #{_lambda_.19} parent=1 // pred_check
      _
    $region19: #{_lambda_.19} parent=1 // pred_check_branch
      %32 = sbr.rel (0) target = $region21
    $region20: #{_lambda_.19} parent=1 // pred_region
      _
    $region21: #{_lambda_.19} parent=1 // pred_fallthru
      _
    // Predicated region
    $region22: #{_lambda_.19} parent=1 // pred_check
      _
    $region23: #{_lambda_.19} parent=1 // pred_check_branch
      %34 = sbr.rel (0) target = $region25
    $region24: #{_lambda_.19} parent=1 // pred_region
      _
    $region25: #{_lambda_.19} parent=1 // pred_fallthru
      _
    // Predicated region
    $region26: #{_lambda_.19} parent=1 // pred_check
      _
    $region27: #{_lambda_.19} parent=1 // pred_check_branch
      %36 = sbr.rel (0) target = $region29
    $region28: #{_lambda_.19} parent=1 // pred_region
      _
    $region29: #{_lambda_.19} parent=1 // pred_fallthru
      _
    // Predicated region
    $region30: #{_lambda_.19} parent=1 // pred_check
      _
    $region31: #{_lambda_.19} parent=1 // pred_check_branch
      %38 = sbr.rel (0) target = $region33
    $region32: #{_lambda_.19} parent=1 // pred_region
      _
    $region33: #{_lambda_.19} parent=1 // pred_fallthru
      _
    // Predicated region
    $region34: #{_lambda_.19} parent=1 // pred_check
      _
    $region35: #{_lambda_.19} parent=1 // pred_check_branch
      %40 = sbr.rel (0) target = $region37
    $region36: #{_lambda_.19} parent=1 // pred_region
      _
    $region37: #{_lambda_.19} parent=1 // pred_fallthru
      _
    // Predicated region
    $region38: #{_lambda_.19} parent=1 // pred_check
      _
    $region39: #{_lambda_.19} parent=1 // pred_check_branch
      %42 = sbr.rel (0) target = $region41
    $region40: #{_lambda_.19} parent=1 // pred_region
      _
    $region41: #{_lambda_.19} parent=1 // pred_fallthru
      _
    // Predicated region
    $region42: #{_lambda_.19} parent=1 // pred_check
      _
    $region43: #{_lambda_.19} parent=1 // pred_check_branch
      %44 = sbr.rel (0) target = $region45
    $region44: #{_lambda_.19} parent=1 // pred_region
      _
    $region45: #{_lambda_.19} parent=1 // pred_fallthru
      _
    // Predicated region
    $region46: #{_lambda_.19} parent=1 // pred_check
      _
    $region47: #{_lambda_.19} parent=1 // pred_check_branch
      %46 = sbr.rel (0) target = $region49
    $region48: #{_lambda_.19} parent=1 // pred_region
      _
    $region49: #{_lambda_.19} parent=1 // pred_fallthru
      _
    // Predicated region
    $region50: #{_lambda_.19} parent=1 // pred_check
      _
    $region51: #{_lambda_.19} parent=1 // pred_check_branch
      %48 = sbr.rel (0) target = $region53
    $region52: #{_lambda_.19} parent=1 // pred_region
      _
    $region53: #{_lambda_.19} parent=1 // pred_fallthru
      _
    // Predicated region
    $region54: #{_lambda_.19} parent=1 // pred_check
      _
    $region55: #{_lambda_.19} parent=1 // pred_check_branch
      %50 = sbr.rel (0) target = $region57
    $region56: #{_lambda_.19} parent=1 // pred_region
      _
    $region57: #{_lambda_.19} parent=1 // pred_fallthru
      _
    // Predicated region
    $region58: #{_lambda_.19} parent=1 // pred_check
      _
    $region59: #{_lambda_.19} parent=1 // pred_check_branch
      %52 = sbr.rel (0) target = $region61
    $region60: #{_lambda_.19} parent=1 // pred_region
      _
    $region61: #{_lambda_.19} parent=1 // pred_fallthru
      _
    %v54 = vld [vmem:[%s0] sm:$0xff]
    %v55 = vld [vmem:[%s0 + $0x8] sm:$0xff]
    %v56 = vld [vmem:[%s1] sm:$0xff]
    %v57 = vld [vmem:[%s2] sm:$0xff]
    %v58 = vld [vmem:[%s2 + $0x8] sm:$0xff]
    %v59 = vld [vmem:[%s3] sm:$0xf]
    %v60 = vld [vmem:[%s3 + $0x4] sm:$0xf]
    %v61 = vld [vmem:[%s3 + $0x8] sm:$0xf]
    %v62 = vld [vmem:[%s3 + $0xc] sm:$0xf]
    %v63 = vld [vmem:[%s4] sm:$0x1]
    %v64 = vpack.c.bf16 %v56, %v56
    %v66 = vlaneseq
    %v67 = vshrl.u32 %v66, 7
    %v68 = vsub.s32 0, %v67
    %v69 = vrot.slane %v63, %v68
    %v74 = vunpack.c.l.b16 %v59
    %v75 = vunpack.c.l.b16 %v60
    %v76 = vunpack.c.l.b16 %v61
    %v77 = vunpack.c.l.b16 %v62
    %v78 = vpack.c.b16 %v75, %v74
    %v79 = vpack.c.b16 %v77, %v76
    %80 = vrot.lane.b32.xlu0 %v78, 64
    %v81 = vpop.permute.xlu0 %80
    %82 = vrot.lane.b32.xlu0 %v79, 64
    %v83 = vpop.permute.xlu0 %82
    %86 = vrot.lane.b32.xlu0 %v69, 64
    %v87 = vpop.permute.xlu0 %86
    %vm89 = vcmask 261120
    %v91 = vsel %vm89, %v64, 0
    %93 = vmatprep.subr.bf16.mxu0 0
    %94 = vmatpush1.bf16.msra.mxu0 0
    %95 = vmatprep.subr.bf16.mxu0 0
    %96 = vmatpush1.bf16.msra.mxu0 0
    %97 = vmatprep.subr.bf16.mxu0 0
    %98 = vmatpush1.bf16.msra.mxu0 0
    %99 = vmatprep.subr.bf16.mxu0 0
    %100 = vmatpush1.bf16.msra.mxu0 0
    %101 = vmatprep.subr.bf16.mxu0 0
    %102 = vmatpush1.bf16.msra.mxu0 0
    %103 = vmatprep.subr.bf16.mxu0 0
    %104 = vmatpush1.bf16.msra.mxu0 0
    %105 = vmatprep.subr.bf16.mxu0 0
    %106 = vmatpush1.bf16.msra.mxu0 %v83
    %107 = vmatprep.subr.bf16.mxu0 0
    %108 = vmatpush1.bf16.msra.mxu0 %v81
    %109 = vmatprep.subr.bf16.mxu0 0
    %110 = vmatpush2.bf16.msra.mxu0 0
    %111 = vmatprep.subr.bf16.mxu0 0
    %112 = vmatpush2.bf16.msra.mxu0 0
    %113 = vmatprep.subr.bf16.mxu0 0
    %114 = vmatpush2.bf16.msra.mxu0 0
    %115 = vmatprep.subr.bf16.mxu0 0
    %116 = vmatpush2.bf16.msra.mxu0 0
    %117 = vmatprep.subr.bf16.mxu0 0
    %118 = vmatpush2.bf16.msra.mxu0 0
    %119 = vmatprep.subr.bf16.mxu0 0
    %120 = vmatpush2.bf16.msra.mxu0 0
    %121 = vmatprep.subr.bf16.mxu0 0
    %122 = vmatpush2.bf16.msra.mxu0 0
    %123 = vmatprep.subr.bf16.mxu0 0
    %124 = vmatpush2.bf16.msra.mxu0 0
    %125 = vmatprep.mubr.bf16.mxu0 0
    %126 = vmatmul.mubr.bf16.gmra.mxu0 %v91
    %v127 = vpop.f32.mrf.mxu0
    %v128 = vadd.f32 %v87, %v127
    %v129 = vpop.f32.mrf.mxu0
    %v130 = vpop.f32.mrf.mxu0
    %v131 = vpop.f32.mrf.mxu0
    %132 = vdwg.mxu0
    %vm133 = vcmp.ge.f32.partialorder %v57, -0.5
    %vm134 = vcmp.ge.f32.partialorder %v58, -0.5
    %v135 = vsel %vm133, 1.0, 0.0
    %v136 = vsel %vm134, 1.0, 0.0
    %v137 = vpack.c.bf16 %v136, %v135
    %v138 = vpack.c.bf16 %v128, %v128
    %vm139 = vcmask 64512
    %v141 = vsel %vm139, %v137, 0
    %vm143 = vcmask 1043456
    %v145 = vsel %vm143, %v138, 0
    %147 = vmatprep.subr.bf16.mxu0 0
    %148 = vmatpush1.bf16.msra.mxu0 0
    %149 = vmatprep.subr.bf16.mxu0 0
    %150 = vmatpush1.bf16.msra.mxu0 0
    %151 = vmatprep.subr.bf16.mxu0 0
    %152 = vmatpush1.bf16.msra.mxu0 0
    %153 = vmatprep.subr.bf16.mxu0 0
    %154 = vmatpush1.bf16.msra.mxu0 0
    %155 = vmatprep.subr.bf16.mxu0 0
    %156 = vmatpush1.bf16.msra.mxu0 0
    %157 = vmatprep.subr.bf16.mxu0 0
    %158 = vmatpush1.bf16.msra.mxu0 0
    %159 = vmatprep.subr.bf16.mxu0 0
    %160 = vmatpush1.bf16.msra.mxu0 0
    %161 = vmatprep.subr.bf16.mxu0 0
    %162 = vmatpush1.bf16.msra.mxu0 %v145
    %163 = vmatprep.subr.bf16.mxu0 0
    %164 = vmatpush2.bf16.msra.mxu0 0
    %165 = vmatprep.subr.bf16.mxu0 0
    %166 = vmatpush2.bf16.msra.mxu0 0
    %167 = vmatprep.subr.bf16.mxu0 0
    %168 = vmatpush2.bf16.msra.mxu0 0
    %169 = vmatprep.subr.bf16.mxu0 0
    %170 = vmatpush2.bf16.msra.mxu0 0
    %171 = vmatprep.subr.bf16.mxu0 0
    %172 = vmatpush2.bf16.msra.mxu0 0
    %173 = vmatprep.subr.bf16.mxu0 0
    %174 = vmatpush2.bf16.msra.mxu0 0
    %175 = vmatprep.subr.bf16.mxu0 0
    %176 = vmatpush2.bf16.msra.mxu0 0
    %177 = vmatprep.subr.bf16.mxu0 0
    %178 = vmatpush2.bf16.msra.mxu0 0
    %179 = vmatprep.mubr.bf16.mxu0 0
    %180 = vmatmul.mubr.bf16.gmra.mxu0 %v141
    %v181 = vpop.f32.mrf.mxu0
    %v182 = vadd.f32 0.0, %v181
    %v183 = vpop.f32.mrf.mxu0
    %v184 = vpop.f32.mrf.mxu0
    %v185 = vadd.f32 0.0, %v184
    %v186 = vpop.f32.mrf.mxu0
    %187 = vdwg.mxu0
    %v188 = vpack.c.bf16 %v185, %v182
    %189 = vrot.lane.b32.xlu0 %v78, 32
    %v190 = vpop.permute.xlu0 %189
    %191 = vrot.lane.b32.xlu0 %v79, 32
    %v192 = vpop.permute.xlu0 %191
    %195 = vrot.lane.b32.xlu0 %v69, 32
    %v196 = vpop.permute.xlu0 %195
    %v199 = vsel %vm89, %v188, 0
    %201 = vmatprep.subr.bf16.mxu0 0
    %202 = vmatpush1.bf16.msra.mxu0 0
    %203 = vmatprep.subr.bf16.mxu0 0
    %204 = vmatpush1.bf16.msra.mxu0 0
    %205 = vmatprep.subr.bf16.mxu0 0
    %206 = vmatpush1.bf16.msra.mxu0 0
    %207 = vmatprep.subr.bf16.mxu0 0
    %208 = vmatpush1.bf16.msra.mxu0 0
    %209 = vmatprep.subr.bf16.mxu0 0
    %210 = vmatpush1.bf16.msra.mxu0 0
    %211 = vmatprep.subr.bf16.mxu0 0
    %212 = vmatpush1.bf16.msra.mxu0 0
    %213 = vmatprep.subr.bf16.mxu0 0
    %214 = vmatpush1.bf16.msra.mxu0 %v192
    %215 = vmatprep.subr.bf16.mxu0 0
    %216 = vmatpush1.bf16.msra.mxu0 %v190
    %217 = vmatprep.subr.bf16.mxu0 0
    %218 = vmatpush2.bf16.msra.mxu0 0
    %219 = vmatprep.subr.bf16.mxu0 0
    %220 = vmatpush2.bf16.msra.mxu0 0
    %221 = vmatprep.subr.bf16.mxu0 0
    %222 = vmatpush2.bf16.msra.mxu0 0
    %223 = vmatprep.subr.bf16.mxu0 0
    %224 = vmatpush2.bf16.msra.mxu0 0
    %225 = vmatprep.subr.bf16.mxu0 0
    %226 = vmatpush2.bf16.msra.mxu0 0
    %227 = vmatprep.subr.bf16.mxu0 0
    %228 = vmatpush2.bf16.msra.mxu0 0
    %229 = vmatprep.subr.bf16.mxu0 0
    %230 = vmatpush2.bf16.msra.mxu0 0
    %231 = vmatprep.subr.bf16.mxu0 0
    %232 = vmatpush2.bf16.msra.mxu0 0
    %233 = vmatprep.mubr.bf16.mxu0 0
    %234 = vmatmul.mubr.bf16.gmra.mxu0 %v199
    %v235 = vpop.f32.mrf.mxu0
    %v236 = vadd.f32 %v196, %v235
    %v237 = vpop.f32.mrf.mxu0
    %v238 = vpop.f32.mrf.mxu0
    %v239 = vadd.f32 %v196, %v238
    %v240 = vpop.f32.mrf.mxu0
    %241 = vdwg.mxu0
    %v242 = vadd.f32 %v54, %v236
    %v243 = vadd.f32 %v55, %v239
    %v244 = vld [vmem:[%s5] sm:$0x1]
    %v245 = vld [vmem:[%s6] sm:$0x1]
    %v246 = vsel %vm89, %v242, 0.0
    %247 = vadd.xlane.f32.xlu0 %v246
    %v248 = vpop.xlane.xlu0 %247
    %v249 = vsel %vm89, %v243, 0.0
    %250 = vadd.xlane.f32.xlu0 %v249
    %v251 = vpop.xlane.xlu0 %250
    %v252 = vrcp.pop 32.0
    %v253 = vmul.f32 %v248, %v252
    %v254 = vmul.f32 %v251, %v252
    %v255 = vsub.f32 %v242, %v253
    %v256 = vsub.f32 %v243, %v254
    %v257 = vmul.f32 %v255, %v255
    %v258 = vmul.f32 %v256, %v256
    %v259 = vsel %vm89, %v257, 0.0
    %260 = vadd.xlane.f32.xlu0 %v259
    %v261 = vpop.xlane.xlu0 %260
    %v262 = vsel %vm89, %v258, 0.0
    %263 = vadd.xlane.f32.xlu0 %v262
    %v264 = vpop.xlane.xlu0 %263
    %v265 = vmul.f32 %v261, %v252
    %v266 = vmul.f32 %v264, %v252
    %v267 = vadd.f32 %v265, 1e-05
    %v268 = vadd.f32 %v266, 1e-05
    %v269 = vrsqrt.pop %v267
    %v270 = vrsqrt.pop %v268
    %v271 = vmul.f32 %v255, %v269
    %v272 = vmul.f32 %v256, %v270
    %v274 = vlaneseq
    %v275 = vshrl.u32 %v274, 7
    %v276 = vsub.s32 0, %v275
    %v277 = vrot.slane %v244, %v276
    %v279 = vmul.f32 %v271, %v277
    %v280 = vmul.f32 %v272, %v277
    %v282 = vlaneseq
    %v283 = vshrl.u32 %v282, 7
    %v284 = vsub.s32 0, %v283
    %v285 = vrot.slane %v245, %v284
    %v287 = vadd.f32 %v279, %v285
    %v288 = vadd.f32 %v280, %v285
    %v289 = vld [vmem:[%s7] sm:$0xf]
    %v290 = vld [vmem:[%s7 + $0x4] sm:$0xf]
    %v291 = vld [vmem:[%s7 + $0x8] sm:$0xf]
    %v292 = vld [vmem:[%s7 + $0xc] sm:$0xf]
    %v293 = vld [vmem:[%s8] sm:$0x1]
    %v294 = vld [vmem:[%s9] sm:$0xf]
    %v295 = vld [vmem:[%s9 + $0x4] sm:$0xf]
    %v296 = vld [vmem:[%s9 + $0x8] sm:$0xf]
    %v297 = vld [vmem:[%s9 + $0xc] sm:$0xf]
    %v298 = vld [vmem:[%s10] sm:$0x1]
    %v299 = vpack.c.bf16 %v288, %v287
    %v301 = vlaneseq
    %v302 = vshrl.u32 %v301, 7
    %v303 = vsub.s32 0, %v302
    %v304 = vrot.slane %v293, %v303
    %v310 = vunpack.c.l.b16 %v289
    %v311 = vunpack.c.l.b16 %v290
    %v312 = vunpack.c.l.b16 %v291
    %v313 = vunpack.c.l.b16 %v292
    %v314 = vpack.c.b16 %v311, %v310
    %v315 = vpack.c.b16 %v313, %v312
    %v319 = vsel %vm89, %v299, 0
    %321 = vmatprep.subr.bf16.mxu0 0
    %322 = vmatpush1.bf16.msra.mxu0 0
    %323 = vmatprep.subr.bf16.mxu0 0
    %324 = vmatpush1.bf16.msra.mxu0 0
    %325 = vmatprep.subr.bf16.mxu0 0
    %326 = vmatpush1.bf16.msra.mxu0 0
    %327 = vmatprep.subr.bf16.mxu0 0
    %328 = vmatpush1.bf16.msra.mxu0 0
    %329 = vmatprep.subr.bf16.mxu0 0
    %330 = vmatpush1.bf16.msra.mxu0 0
    %331 = vmatprep.subr.bf16.mxu0 0
    %332 = vmatpush1.bf16.msra.mxu0 0
    %333 = vmatprep.subr.bf16.mxu0 0
    %334 = vmatpush1.bf16.msra.mxu0 %v315
    %335 = vmatprep.subr.bf16.mxu0 0
    %336 = vmatpush1.bf16.msra.mxu0 %v314
    %337 = vmatprep.subr.bf16.mxu0 0
    %338 = vmatpush2.bf16.msra.mxu0 0
    %339 = vmatprep.subr.bf16.mxu0 0
    %340 = vmatpush2.bf16.msra.mxu0 0
    %341 = vmatprep.subr.bf16.mxu0 0
    %342 = vmatpush2.bf16.msra.mxu0 0
    %343 = vmatprep.subr.bf16.mxu0 0
    %344 = vmatpush2.bf16.msra.mxu0 0
    %345 = vmatprep.subr.bf16.mxu0 0
    %346 = vmatpush2.bf16.msra.mxu0 0
    %347 = vmatprep.subr.bf16.mxu0 0
    %348 = vmatpush2.bf16.msra.mxu0 0
    %349 = vmatprep.subr.bf16.mxu0 0
    %350 = vmatpush2.bf16.msra.mxu0 0
    %351 = vmatprep.subr.bf16.mxu0 0
    %352 = vmatpush2.bf16.msra.mxu0 0
    %353 = vmatprep.mubr.bf16.mxu0 0
    %354 = vmatmul.mubr.bf16.gmra.mxu0 %v319
    %v355 = vpop.f32.mrf.mxu0
    %v356 = vadd.f32 %v304, %v355
    %v357 = vpop.f32.mrf.mxu0
    %v358 = vpop.f32.mrf.mxu0
    %v359 = vadd.f32 %v304, %v358
    %v360 = vpop.f32.mrf.mxu0
    %361 = vdwg.mxu0
    %v362 = vmul.f32 %v356, 0.5
    %v363 = vmul.f32 %v359, 0.5
    %v364 = vmul.f32 %v356, 0.70710677
    %v365 = vmul.f32 %v359, 0.70710677
    %vm366 = vcmp.ge.f32.partialorder %v364, 0.0
    %vm367 = vcmp.ge.f32.partialorder %v365, 0.0
    %v368 = vsel %vm366, 1.0, -1.0
    %v369 = vsel %vm367, 1.0, -1.0
    %v370 = vand.u32 2147483647, %v364
    %v371 = vand.u32 2147483647, %v365
    %v372 = vmul.f32 %v370, 0.3275911
    %v373 = vmul.f32 %v371, 0.3275911
    %v374 = vadd.f32 %v372, 1.0
    %v375 = vadd.f32 %v373, 1.0
    %v376 = vrcp.pop %v374
    %v377 = vmul.f32 1.0, %v376
    %v378 = vrcp.pop %v375
    %v379 = vmul.f32 1.0, %v378
    %v380 = vmul.f32 %v377, 1.0614054
    %v381 = vmul.f32 %v379, 1.0614054
    %v382 = vadd.f32 %v380, -1.4531521
    %v383 = vadd.f32 %v381, -1.4531521
    %v384 = vmul.f32 %v382, %v377
    %v385 = vmul.f32 %v383, %v379
    %v386 = vadd.f32 %v384, 1.4214138
    %v387 = vadd.f32 %v385, 1.4214138
    %v388 = vmul.f32 %v386, %v377
    %v389 = vmul.f32 %v387, %v379
    %v390 = vadd.f32 %v388, -0.28449672
    %v391 = vadd.f32 %v389, -0.28449672
    %v392 = vmul.f32 %v390, %v377
    %v393 = vmul.f32 %v391, %v379
    %v394 = vadd.f32 %v392, 0.2548296
    %v395 = vadd.f32 %v393, 0.2548296
    %v396 = vmul.f32 %v394, %v377
    %v397 = vmul.f32 %v395, %v379
    %v398 = vsub.f32 0.0, %v370
    %v399 = vsub.f32 0.0, %v371
    %v400 = vmul.f32 %v398, %v370
    %v401 = vmul.f32 %v399, %v371
    %v402 = vmul.f32 %v400, 1.442695
    %v403 = vpow.pop %v402
    %v404 = vmul.f32 %v401, 1.442695
    %v405 = vpow.pop %v404
    %v406 = vmul.f32 %v396, %v403
    %v407 = vmul.f32 %v397, %v405
    %v408 = vsub.f32 1.0, %v406
    %v409 = vsub.f32 1.0, %v407
    %v410 = vmul.f32 %v368, %v408
    %v411 = vmul.f32 %v369, %v409
    %v412 = vadd.f32 %v410, 1.0
    %v413 = vadd.f32 %v411, 1.0
    %v414 = vmul.f32 %v362, %v412
    %v415 = vmul.f32 %v363, %v413
    %v416 = vpack.c.bf16 %v415, %v414
    %v418 = vlaneseq
    %v419 = vshrl.u32 %v418, 7
    %v420 = vsub.s32 0, %v419
    %v421 = vrot.slane %v298, %v420
    %v427 = vunpack.c.l.b16 %v294
    %v428 = vunpack.c.l.b16 %v295
    %v429 = vunpack.c.l.b16 %v296
    %v430 = vunpack.c.l.b16 %v297
    %v431 = vpack.c.b16 %v428, %v427
    %v432 = vpack.c.b16 %v430, %v429
    %v436 = vsel %vm89, %v416, 0
    %438 = vmatprep.subr.bf16.mxu0 0
    %439 = vmatpush1.bf16.msra.mxu0 0
    %440 = vmatprep.subr.bf16.mxu0 0
    %441 = vmatpush1.bf16.msra.mxu0 0
    %442 = vmatprep.subr.bf16.mxu0 0
    %443 = vmatpush1.bf16.msra.mxu0 0
    %444 = vmatprep.subr.bf16.mxu0 0
    %445 = vmatpush1.bf16.msra.mxu0 0
    %446 = vmatprep.subr.bf16.mxu0 0
    %447 = vmatpush1.bf16.msra.mxu0 0
    %448 = vmatprep.subr.bf16.mxu0 0
    %449 = vmatpush1.bf16.msra.mxu0 0
    %450 = vmatprep.subr.bf16.mxu0 0
    %451 = vmatpush1.bf16.msra.mxu0 %v432
    %452 = vmatprep.subr.bf16.mxu0 0
    %453 = vmatpush1.bf16.msra.mxu0 %v431
    %454 = vmatprep.subr.bf16.mxu0 0
    %455 = vmatpush2.bf16.msra.mxu0 0
    %456 = vmatprep.subr.bf16.mxu0 0
    %457 = vmatpush2.bf16.msra.mxu0 0
    %458 = vmatprep.subr.bf16.mxu0 0
    %459 = vmatpush2.bf16.msra.mxu0 0
    %460 = vmatprep.subr.bf16.mxu0 0
    %461 = vmatpush2.bf16.msra.mxu0 0
    %462 = vmatprep.subr.bf16.mxu0 0
    %463 = vmatpush2.bf16.msra.mxu0 0
    %464 = vmatprep.subr.bf16.mxu0 0
    %465 = vmatpush2.bf16.msra.mxu0 0
    %466 = vmatprep.subr.bf16.mxu0 0
    %467 = vmatpush2.bf16.msra.mxu0 0
    %468 = vmatprep.subr.bf16.mxu0 0
    %469 = vmatpush2.bf16.msra.mxu0 0
    %470 = vmatprep.mubr.bf16.mxu0 0
    %471 = vmatmul.mubr.bf16.gmra.mxu0 %v436
    %v472 = vpop.f32.mrf.mxu0
    %v473 = vadd.f32 %v421, %v472
    %v474 = vpop.f32.mrf.mxu0
    %v475 = vpop.f32.mrf.mxu0
    %v476 = vadd.f32 %v421, %v475
    %v477 = vpop.f32.mrf.mxu0
    %478 = vdwg.mxu0
    %v479 = vadd.f32 %v287, %v473
    %v480 = vadd.f32 %v288, %v476
    %v481 = vld [vmem:[%s11] sm:$0x1]
    %v482 = vld [vmem:[%s12] sm:$0x1]
    %v483 = vsel %vm89, %v479, 0.0
    %484 = vadd.xlane.f32.xlu0 %v483
    %v485 = vpop.xlane.xlu0 %484
    %v486 = vsel %vm89, %v480, 0.0
    %487 = vadd.xlane.f32.xlu0 %v486
    %v488 = vpop.xlane.xlu0 %487
    %v489 = vmul.f32 %v485, %v252
    %v490 = vmul.f32 %v488, %v252
    %v491 = vsub.f32 %v479, %v489
    %v492 = vsub.f32 %v480, %v490
    %v493 = vmul.f32 %v491, %v491
    %v494 = vmul.f32 %v492, %v492
    %v495 = vsel %vm89, %v493, 0.0
    %496 = vadd.xlane.f32.xlu0 %v495
    %v497 = vpop.xlane.xlu0 %496
    %v498 = vsel %vm89, %v494, 0.0
    %499 = vadd.xlane.f32.xlu0 %v498
    %v500 = vpop.xlane.xlu0 %499
    %v501 = vmul.f32 %v497, %v252
    %v502 = vmul.f32 %v500, %v252
    %v503 = vadd.f32 %v501, 1e-05
    %v504 = vadd.f32 %v502, 1e-05
    %v505 = vrsqrt.pop %v503
    %v506 = vrsqrt.pop %v504
    %v507 = vmul.f32 %v491, %v505
    %v508 = vmul.f32 %v492, %v506
    %v510 = vlaneseq
    %v511 = vshrl.u32 %v510, 7
    %v512 = vsub.s32 0, %v511
    %v513 = vrot.slane %v481, %v512
    %v515 = vmul.f32 %v507, %v513
    %v516 = vmul.f32 %v508, %v513
    %v518 = vlaneseq
    %v519 = vshrl.u32 %v518, 7
    %v520 = vsub.s32 0, %v519
    %v521 = vrot.slane %v482, %v520
    %v523 = vadd.f32 %v515, %v521
    %v524 = vadd.f32 %v516, %v521
    %525 = vst.msk [vmem:[#allocation2] sm:$0xff] %vm89, %v523
    %526 = vst.msk [vmem:[#allocation2 + $0x8] sm:$0xff] %vm89, %v524
    %v527 = vld [vmem:[%s13] sm:$0xf]
    %v528 = vld [vmem:[%s13 + $0x4] sm:$0xf]
    %v529 = vld [vmem:[%s13 + $0x8] sm:$0xf]
    %v530 = vld [vmem:[%s13 + $0xc] sm:$0xf]
    %v531 = vld [vmem:[%s14] sm:$0x1]
    %v532 = vpack.c.bf16 %v524, %v523
    %v534 = vlaneseq
    %v535 = vshrl.u32 %v534, 7
    %v536 = vsub.s32 0, %v535
    %v537 = vrot.slane %v531, %v536
    %v543 = vunpack.c.l.b16 %v527
    %v544 = vunpack.c.l.b16 %v528
    %v545 = vunpack.c.l.b16 %v529
    %v546 = vunpack.c.l.b16 %v530
    %v547 = vpack.c.b16 %v544, %v543
    %v548 = vpack.c.b16 %v546, %v545
    %v552 = vsel %vm89, %v532, 0
    %554 = vmatprep.subr.bf16.mxu0 0
    %555 = vmatpush1.bf16.msra.mxu0 0
    %556 = vmatprep.subr.bf16.mxu0 0
    %557 = vmatpush1.bf16.msra.mxu0 0
    %558 = vmatprep.subr.bf16.mxu0 0
    %559 = vmatpush1.bf16.msra.mxu0 0
    %560 = vmatprep.subr.bf16.mxu0 0
    %561 = vmatpush1.bf16.msra.mxu0 0
    %562 = vmatprep.subr.bf16.mxu0 0
    %563 = vmatpush1.bf16.msra.mxu0 0
    %564 = vmatprep.subr.bf16.mxu0 0
    %565 = vmatpush1.bf16.msra.mxu0 0
    %566 = vmatprep.subr.bf16.mxu0 0
    %567 = vmatpush1.bf16.msra.mxu0 %v548
    %568 = vmatprep.subr.bf16.mxu0 0
    %569 = vmatpush1.bf16.msra.mxu0 %v547
    %570 = vmatprep.subr.bf16.mxu0 0
    %571 = vmatpush2.bf16.msra.mxu0 0
    %572 = vmatprep.subr.bf16.mxu0 0
    %573 = vmatpush2.bf16.msra.mxu0 0
    %574 = vmatprep.subr.bf16.mxu0 0
    %575 = vmatpush2.bf16.msra.mxu0 0
    %576 = vmatprep.subr.bf16.mxu0 0
    %577 = vmatpush2.bf16.msra.mxu0 0
    %578 = vmatprep.subr.bf16.mxu0 0
    %579 = vmatpush2.bf16.msra.mxu0 0
    %580 = vmatprep.subr.bf16.mxu0 0
    %581 = vmatpush2.bf16.msra.mxu0 0
    %582 = vmatprep.subr.bf16.mxu0 0
    %583 = vmatpush2.bf16.msra.mxu0 0
    %584 = vmatprep.subr.bf16.mxu0 0
    %585 = vmatpush2.bf16.msra.mxu0 0
    %586 = vmatprep.mubr.bf16.mxu0 0
    %587 = vmatmul.mubr.bf16.gmra.mxu0 %v552
    %v588 = vpop.f32.mrf.mxu0
    %v589 = vadd.f32 %v537, %v588
    %v590 = vpop.f32.mrf.mxu0
    %v591 = vpop.f32.mrf.mxu0
    %v592 = vadd.f32 %v537, %v591
    %v593 = vpop.f32.mrf.mxu0
    %594 = vdwg.mxu0
    %vm595 = vcmask 97280
    %596 = vst.msk [vmem:[%s16] sm:$0xff] %vm595, %v589
    %597 = vst.msk [vmem:[%s16 + $0x8] sm:$0xff] %vm595, %v592
    // Predicated region
    $region62: #{_lambda_.19} parent=1 // pred_check
      _
    $region63: #{_lambda_.19} parent=1 // pred_check_branch
      %599 = sbr.rel (0) target = $region65
    $region64: #{_lambda_.19} parent=1 // pred_region
      %s601 = ssub.s32 256, 256
      %602 = vsyncadd [#allocation3], %s601
      %s603 = sshll.u32 [#allocation2], 4
      %s604 = int_to_ptr.vmem [resolvable:$true] %s603
      %609 = dma.vmem_to_hbm [thread:$0]  %s604, 256, %s15, [#allocation3], 128, 128, 8
    $region65: #{_lambda_.19} parent=1 // pred_fallthru
      _
    // Predicated region
    $region66: #{_lambda_.19} parent=1 // pred_check
      _
    $region67: #{_lambda_.19} parent=1 // pred_check_branch
      %611 = sbr.rel (0) target = $region69
    $region68: #{_lambda_.19} parent=1 // pred_region
      _
    $region69: #{_lambda_.19} parent=1 // pred_fallthru
      _
    // Predicated region
    $region70: #{_lambda_.19} parent=1 // pred_check
      _
    $region71: #{_lambda_.19} parent=1 // pred_check_branch
      %613 = sbr.rel (0) target = $region73
    $region72: #{_lambda_.19} parent=1 // pred_region
      %614 = dma.done [#allocation3], 256
    $region73: #{_lambda_.19} parent=1 // pred_fallthru
      _
    // Predicated region
    $region74: #{_lambda_.19} parent=1 // pred_check
      _
    $region75: #{_lambda_.19} parent=1 // pred_check_branch
      %616 = sbr.rel (0) target = $region77
    $region76: #{_lambda_.19} parent=1 // pred_region
      _
    $region77: #{_lambda_.19} parent=1 // pred_fallthru
      _
    %617 = vsyncpa [#allocation3], 1

// kernel: _lambda_.13
$region0: #{_lambda_.13}
  #allocation0 [shape = 'u32[]', space=smem, size = 0x4, offset = 0x4, fixed_abs, tag = 'smem constant byte address 0x4 - core index']
  #allocation1 [shape = 'u32[144,128]{1,0:T(1,128)}', space=vmem, size = 0x12000, scoped, tag = 'internal scratch']
  %s0 = inlined_call_operand.vmem [shape: f32[8,32], index: 0, kind: input, shape index: {}]
  %s1 = inlined_call_operand.vmem [shape: f32[2,32], index: 1, kind: input, shape index: {}]
  %s2 = inlined_call_operand.vmem [shape: f32[8,8], index: 2, kind: input, shape index: {}]
  %s3 = inlined_call_operand.vmem [shape: f32[2,8], index: 3, kind: input, shape index: {}]
  %s4 = inlined_call_operand.vmem [shape: f32[8,2], index: 4, kind: input, shape index: {}]
  %s5 = inlined_call_operand.vmem [shape: bf16[32,128], index: 5, kind: input, shape index: {}]
  %s6 = inlined_call_operand.vmem [shape: f32[1,128], index: 6, kind: input, shape index: {}]
  %s7 = inlined_call_operand.vmem [shape: f32[1,32], index: 7, kind: input, shape index: {}]
  %s8 = inlined_call_operand.vmem [shape: f32[1,32], index: 8, kind: input, shape index: {}]
  %s9 = inlined_call_operand.vmem [shape: bf16[32,64], index: 9, kind: input, shape index: {}]
  %s10 = inlined_call_operand.vmem [shape: f32[1,64], index: 10, kind: input, shape index: {}]
  %s11 = inlined_call_operand.vmem [shape: bf16[64,32], index: 11, kind: input, shape index: {}]
  %s12 = inlined_call_operand.vmem [shape: f32[1,32], index: 12, kind: input, shape index: {}]
  %s13 = inlined_call_operand.vmem [shape: f32[1,32], index: 13, kind: input, shape index: {}]
  %s14 = inlined_call_operand.vmem [shape: f32[1,32], index: 14, kind: input, shape index: {}]
  %s15 = inlined_call_operand.vmem [shape: bf16[32,128], index: 15, kind: input, shape index: {}]
  %s16 = inlined_call_operand.vmem [shape: f32[1,128], index: 16, kind: input, shape index: {}]
  %s17 = inlined_call_operand.vmem [shape: bf16[32,128], index: 17, kind: input, shape index: {}]
  %s18 = inlined_call_operand.vmem [shape: f32[1,128], index: 18, kind: input, shape index: {}]
  %s19 = inlined_call_operand.vmem [shape: f32[1,32], index: 19, kind: input, shape index: {}]
  %s20 = inlined_call_operand.vmem [shape: f32[1,32], index: 20, kind: input, shape index: {}]
  %s21 = inlined_call_operand.vmem [shape: bf16[32,64], index: 21, kind: input, shape index: {}]
  %s22 = inlined_call_operand.vmem [shape: f32[1,64], index: 22, kind: input, shape index: {}]
  %s23 = inlined_call_operand.vmem [shape: bf16[64,32], index: 23, kind: input, shape index: {}]
  %s24 = inlined_call_operand.vmem [shape: f32[1,32], index: 24, kind: input, shape index: {}]
  %s25 = inlined_call_operand.vmem [shape: f32[1,32], index: 25, kind: input, shape index: {}]
  %s26 = inlined_call_operand.vmem [shape: f32[1,32], index: 26, kind: input, shape index: {}]
  %s27 = inlined_call_operand.vmem [shape: f32[8,32], index: 27, kind: output, shape index: {}]
  %s28 = sld [smem:[#allocation0]]
  $region118: #{_lambda_.13} parent=0
    _
  %s30 = ssub.s32 1, %s28
  %s31 = scalar_select 0, %s30, %s28
  // Predicated region
  $region2: #{_lambda_.13} parent=0 // pred_check
    _
  $region3: #{_lambda_.13} parent=0 // pred_check_branch
    %33 = sbr.rel (0) target = $region5
  $region4: #{_lambda_.13} parent=0 // pred_region
    _
  $region5: #{_lambda_.13} parent=0 // pred_fallthru
    _
  // Predicated region
  $region6: #{_lambda_.13} parent=0 // pred_check
    _
  $region7: #{_lambda_.13} parent=0 // pred_check_branch
    %35 = sbr.rel (0) target = $region9
  $region8: #{_lambda_.13} parent=0 // pred_region
    _
  $region9: #{_lambda_.13} parent=0 // pred_fallthru
    _
  // Predicated region
  $region10: #{_lambda_.13} parent=0 // pred_check
    _
  $region11: #{_lambda_.13} parent=0 // pred_check_branch
    %37 = sbr.rel (0) target = $region13
  $region12: #{_lambda_.13} parent=0 // pred_region
    _
  $region13: #{_lambda_.13} parent=0 // pred_fallthru
    _
  // Predicated region
  $region14: #{_lambda_.13} parent=0 // pred_check
    _
  $region15: #{_lambda_.13} parent=0 // pred_check_branch
    %39 = sbr.rel (0) target = $region17
  $region16: #{_lambda_.13} parent=0 // pred_region
    _
  $region17: #{_lambda_.13} parent=0 // pred_fallthru
    _
  // Predicated region
  $region18: #{_lambda_.13} parent=0 // pred_check
    _
  $region19: #{_lambda_.13} parent=0 // pred_check_branch
    %41 = sbr.rel (0) target = $region21
  $region20: #{_lambda_.13} parent=0 // pred_region
    _
  $region21: #{_lambda_.13} parent=0 // pred_fallthru
    _
  // Predicated region
  $region22: #{_lambda_.13} parent=0 // pred_check
    _
  $region23: #{_lambda_.13} parent=0 // pred_check_branch
    %43 = sbr.rel (0) target = $region25
  $region24: #{_lambda_.13} parent=0 // pred_region
    _
  $region25: #{_lambda_.13} parent=0 // pred_fallthru
    _
  // Predicated region
  $region26: #{_lambda_.13} parent=0 // pred_check
    _
  $region27: #{_lambda_.13} parent=0 // pred_check_branch
    %45 = sbr.rel (0) target = $region29
  $region28: #{_lambda_.13} parent=0 // pred_region
    _
  $region29: #{_lambda_.13} parent=0 // pred_fallthru
    _
  // Predicated region
  $region30: #{_lambda_.13} parent=0 // pred_check
    _
  $region31: #{_lambda_.13} parent=0 // pred_check_branch
    %47 = sbr.rel (0) target = $region33
  $region32: #{_lambda_.13} parent=0 // pred_region
    _
  $region33: #{_lambda_.13} parent=0 // pred_fallthru
    _
  // Predicated region
  $region34: #{_lambda_.13} parent=0 // pred_check
    _
  $region35: #{_lambda_.13} parent=0 // pred_check_branch
    %49 = sbr.rel (0) target = $region37
  $region36: #{_lambda_.13} parent=0 // pred_region
    _
  $region37: #{_lambda_.13} parent=0 // pred_fallthru
    _
  // Predicated region
  $region38: #{_lambda_.13} parent=0 // pred_check
    _
  $region39: #{_lambda_.13} parent=0 // pred_check_branch
    %51 = sbr.rel (0) target = $region41
  $region40: #{_lambda_.13} parent=0 // pred_region
    _
  $region41: #{_lambda_.13} parent=0 // pred_fallthru
    _
  // Predicated region
  $region42: #{_lambda_.13} parent=0 // pred_check
    _
  $region43: #{_lambda_.13} parent=0 // pred_check_branch
    %53 = sbr.rel (0) target = $region45
  $region44: #{_lambda_.13} parent=0 // pred_region
    _
  $region45: #{_lambda_.13} parent=0 // pred_fallthru
    _
  // Predicated region
  $region46: #{_lambda_.13} parent=0 // pred_check
    _
  $region47: #{_lambda_.13} parent=0 // pred_check_branch
    %55 = sbr.rel (0) target = $region49
  $region48: #{_lambda_.13} parent=0 // pred_region
    _
  $region49: #{_lambda_.13} parent=0 // pred_fallthru
    _
  // Predicated region
  $region50: #{_lambda_.13} parent=0 // pred_check
    _
  $region51: #{_lambda_.13} parent=0 // pred_check_branch
    %57 = sbr.rel (0) target = $region53
  $region52: #{_lambda_.13} parent=0 // pred_region
    _
  $region53: #{_lambda_.13} parent=0 // pred_fallthru
    _
  // Predicated region
  $region54: #{_lambda_.13} parent=0 // pred_check
    _
  $region55: #{_lambda_.13} parent=0 // pred_check_branch
    %59 = sbr.rel (0) target = $region57
  $region56: #{_lambda_.13} parent=0 // pred_region
    _
  $region57: #{_lambda_.13} parent=0 // pred_fallthru
    _
  // Predicated region
  $region58: #{_lambda_.13} parent=0 // pred_check
    _
  $region59: #{_lambda_.13} parent=0 // pred_check_branch
    %61 = sbr.rel (0) target = $region61
  $region60: #{_lambda_.13} parent=0 // pred_region
    _
  $region61: #{_lambda_.13} parent=0 // pred_fallthru
    _
  // Predicated region
  $region62: #{_lambda_.13} parent=0 // pred_check
    _
  $region63: #{_lambda_.13} parent=0 // pred_check_branch
    %63 = sbr.rel (0) target = $region65
  $region64: #{_lambda_.13} parent=0 // pred_region
    _
  $region65: #{_lambda_.13} parent=0 // pred_fallthru
    _
  // Predicated region
  $region66: #{_lambda_.13} parent=0 // pred_check
    _
  $region67: #{_lambda_.13} parent=0 // pred_check_branch
    %65 = sbr.rel (0) target = $region69
  $region68: #{_lambda_.13} parent=0 // pred_region
    _
  $region69: #{_lambda_.13} parent=0 // pred_fallthru
    _
  // Predicated region
  $region70: #{_lambda_.13} parent=0 // pred_check
    _
  $region71: #{_lambda_.13} parent=0 // pred_check_branch
    %67 = sbr.rel (0) target = $region73
  $region72: #{_lambda_.13} parent=0 // pred_region
    _
  $region73: #{_lambda_.13} parent=0 // pred_fallthru
    _
  // Predicated region
  $region74: #{_lambda_.13} parent=0 // pred_check
    _
  $region75: #{_lambda_.13} parent=0 // pred_check_branch
    %69 = sbr.rel (0) target = $region77
  $region76: #{_lambda_.13} parent=0 // pred_region
    _
  $region77: #{_lambda_.13} parent=0 // pred_fallthru
    _
  // Predicated region
  $region78: #{_lambda_.13} parent=0 // pred_check
    _
  $region79: #{_lambda_.13} parent=0 // pred_check_branch
    %71 = sbr.rel (0) target = $region81
  $region80: #{_lambda_.13} parent=0 // pred_region
    _
  $region81: #{_lambda_.13} parent=0 // pred_fallthru
    _
  // Predicated region
  $region82: #{_lambda_.13} parent=0 // pred_check
    _
  $region83: #{_lambda_.13} parent=0 // pred_check_branch
    %73 = sbr.rel (0) target = $region85
  $region84: #{_lambda_.13} parent=0 // pred_region
    _
  $region85: #{_lambda_.13} parent=0 // pred_fallthru
    _
  // Predicated region
  $region86: #{_lambda_.13} parent=0 // pred_check
    _
  $region87: #{_lambda_.13} parent=0 // pred_check_branch
    %75 = sbr.rel (0) target = $region89
  $region88: #{_lambda_.13} parent=0 // pred_region
    _
  $region89: #{_lambda_.13} parent=0 // pred_fallthru
    _
  // Predicated region
  $region90: #{_lambda_.13} parent=0 // pred_check
    _
  $region91: #{_lambda_.13} parent=0 // pred_check_branch
    %77 = sbr.rel (0) target = $region93
  $region92: #{_lambda_.13} parent=0 // pred_region
    _
  $region93: #{_lambda_.13} parent=0 // pred_fallthru
    _
  // Predicated region
  $region94: #{_lambda_.13} parent=0 // pred_check
    _
  $region95: #{_lambda_.13} parent=0 // pred_check_branch
    %79 = sbr.rel (0) target = $region97
  $region96: #{_lambda_.13} parent=0 // pred_region
    _
  $region97: #{_lambda_.13} parent=0 // pred_fallthru
    _
  // Predicated region
  $region98: #{_lambda_.13} parent=0 // pred_check
    _
  $region99: #{_lambda_.13} parent=0 // pred_check_branch
    %81 = sbr.rel (0) target = $region101
  $region100: #{_lambda_.13} parent=0 // pred_region
    _
  $region101: #{_lambda_.13} parent=0 // pred_fallthru
    _
  // Predicated region
  $region102: #{_lambda_.13} parent=0 // pred_check
    _
  $region103: #{_lambda_.13} parent=0 // pred_check_branch
    %83 = sbr.rel (0) target = $region105
  $region104: #{_lambda_.13} parent=0 // pred_region
    _
  $region105: #{_lambda_.13} parent=0 // pred_fallthru
    _
  // Predicated region
  $region106: #{_lambda_.13} parent=0 // pred_check
    _
  $region107: #{_lambda_.13} parent=0 // pred_check_branch
    %85 = sbr.rel (0) target = $region109
  $region108: #{_lambda_.13} parent=0 // pred_region
    _
  $region109: #{_lambda_.13} parent=0 // pred_fallthru
    _
  %v87 = vld [vmem:[%s0] sm:$0xff]
  %v88 = vld [vmem:[%s1] sm:$0x3]
  %v89 = vld [vmem:[%s2] sm:$0xff]
  %v90 = vld [vmem:[%s5] sm:$0xf]
  %v91 = vld [vmem:[%s5 + $0x4] sm:$0xf]
  %v92 = vld [vmem:[%s5 + $0x8] sm:$0xf]
  %v93 = vld [vmem:[%s5 + $0xc] sm:$0xf]
  %v94 = vld [vmem:[%s6] sm:$0x1]
  %v95 = vpack.c.bf16 %v87, %v87
  %v97 = vlaneseq
  %v98 = vshrl.u32 %v97, 7
  %v99 = vsub.s32 0, %v98
  %v100 = vrot.slane %v94, %v99
  %v105 = vunpack.c.l.b16 %v90
  %v106 = vunpack.c.l.b16 %v91
  %v107 = vunpack.c.l.b16 %v92
  %v108 = vunpack.c.l.b16 %v93
  %v109 = vpack.c.b16 %v106, %v105
  %v110 = vpack.c.b16 %v108, %v107
  %111 = vrot.lane.b32.xlu0 %v109, 64
  %v112 = vpop.permute.xlu0 %111
  %113 = vrot.lane.b32.xlu0 %v110, 64
  %v114 = vpop.permute.xlu0 %113
  %117 = vrot.lane.b32.xlu0 %v100, 64
  %v118 = vpop.permute.xlu0 %117
  %vm120 = vcmask 261120
  %v122 = vsel %vm120, %v95, 0
  %124 = vmatprep.subr.bf16.mxu0 0
  %125 = vmatpush1.bf16.msra.mxu0 0
  %126 = vmatprep.subr.bf16.mxu0 0
  %127 = vmatpush1.bf16.msra.mxu0 0
  %128 = vmatprep.subr.bf16.mxu0 0
  %129 = vmatpush1.bf16.msra.mxu0 0
  %130 = vmatprep.subr.bf16.mxu0 0
  %131 = vmatpush1.bf16.msra.mxu0 0
  %132 = vmatprep.subr.bf16.mxu0 0
  %133 = vmatpush1.bf16.msra.mxu0 0
  %134 = vmatprep.subr.bf16.mxu0 0
  %135 = vmatpush1.bf16.msra.mxu0 0
  %136 = vmatprep.subr.bf16.mxu0 0
  %137 = vmatpush1.bf16.msra.mxu0 %v114
  %138 = vmatprep.subr.bf16.mxu0 0
  %139 = vmatpush1.bf16.msra.mxu0 %v112
  %140 = vmatprep.subr.bf16.mxu0 0
  %141 = vmatpush2.bf16.msra.mxu0 0
  %142 = vmatprep.subr.bf16.mxu0 0
  %143 = vmatpush2.bf16.msra.mxu0 0
  %144 = vmatprep.subr.bf16.mxu0 0
  %145 = vmatpush2.bf16.msra.mxu0 0
  %146 = vmatprep.subr.bf16.mxu0 0
  %147 = vmatpush2.bf16.msra.mxu0 0
  %148 = vmatprep.subr.bf16.mxu0 0
  %149 = vmatpush2.bf16.msra.mxu0 0
  %150 = vmatprep.subr.bf16.mxu0 0
  %151 = vmatpush2.bf16.msra.mxu0 0
  %152 = vmatprep.subr.bf16.mxu0 0
  %153 = vmatpush2.bf16.msra.mxu0 0
  %154 = vmatprep.subr.bf16.mxu0 0
  %155 = vmatpush2.bf16.msra.mxu0 0
  %156 = vmatprep.mubr.bf16.mxu0 0
  %157 = vmatmul.mubr.bf16.gmra.mxu0 %v122
  %v158 = vpop.f32.mrf.mxu0
  %v159 = vadd.f32 %v118, %v158
  %v160 = vpop.f32.mrf.mxu0
  %v161 = vpop.f32.mrf.mxu0
  %v162 = vpop.f32.mrf.mxu0
  %163 = vdwg.mxu0
  %vm164 = vcmp.ge.f32.partialorder %v89, -0.5
  %v165 = vsel %vm164, 1.0, 0.0
  %v166 = vpack.c.bf16 %v165, %v165
  %v167 = vpack.c.bf16 %v159, %v159
  %vm168 = vcmask 64512
  %v170 = vsel %vm168, %v166, 0
  %vm172 = vcmask 1043456
  %v174 = vsel %vm172, %v167, 0
  %176 = vmatprep.subr.bf16.mxu0 0
  %177 = vmatpush1.bf16.msra.mxu0 0
  %178 = vmatprep.subr.bf16.mxu0 0
  %179 = vmatpush1.bf16.msra.mxu0 0
  %180 = vmatprep.subr.bf16.mxu0 0
  %181 = vmatpush1.bf16.msra.mxu0 0
  %182 = vmatprep.subr.bf16.mxu0 0
  %183 = vmatpush1.bf16.msra.mxu0 0
  %184 = vmatprep.subr.bf16.mxu0 0
  %185 = vmatpush1.bf16.msra.mxu0 0
  %186 = vmatprep.subr.bf16.mxu0 0
  %187 = vmatpush1.bf16.msra.mxu0 0
  %188 = vmatprep.subr.bf16.mxu0 0
  %189 = vmatpush1.bf16.msra.mxu0 0
  %190 = vmatprep.subr.bf16.mxu0 0
  %191 = vmatpush1.bf16.msra.mxu0 %v174
  %192 = vmatprep.subr.bf16.mxu0 0
  %193 = vmatpush2.bf16.msra.mxu0 0
  %194 = vmatprep.subr.bf16.mxu0 0
  %195 = vmatpush2.bf16.msra.mxu0 0
  %196 = vmatprep.subr.bf16.mxu0 0
  %197 = vmatpush2.bf16.msra.mxu0 0
  %198 = vmatprep.subr.bf16.mxu0 0
  %199 = vmatpush2.bf16.msra.mxu0 0
  %200 = vmatprep.subr.bf16.mxu0 0
  %201 = vmatpush2.bf16.msra.mxu0 0
  %202 = vmatprep.subr.bf16.mxu0 0
  %203 = vmatpush2.bf16.msra.mxu0 0
  %204 = vmatprep.subr.bf16.mxu0 0
  %205 = vmatpush2.bf16.msra.mxu0 0
  %206 = vmatprep.subr.bf16.mxu0 0
  %207 = vmatpush2.bf16.msra.mxu0 0
  %208 = vmatprep.mubr.bf16.mxu0 0
  %209 = vmatmul.mubr.bf16.gmra.mxu0 %v170
  %v210 = vpop.f32.mrf.mxu0
  %v211 = vadd.f32 0.0, %v210
  %v212 = vpop.f32.mrf.mxu0
  %v213 = vpop.f32.mrf.mxu0
  %v214 = vpop.f32.mrf.mxu0
  %215 = vdwg.mxu0
  %v216 = vpack.c.bf16 %v211, %v211
  %217 = vrot.lane.b32.xlu0 %v109, 32
  %v218 = vpop.permute.xlu0 %217
  %219 = vrot.lane.b32.xlu0 %v110, 32
  %v220 = vpop.permute.xlu0 %219
  %223 = vrot.lane.b32.xlu0 %v100, 32
  %v224 = vpop.permute.xlu0 %223
  %v227 = vsel %vm120, %v216, 0
  %229 = vmatprep.subr.bf16.mxu0 0
  %230 = vmatpush1.bf16.msra.mxu0 0
  %231 = vmatprep.subr.bf16.mxu0 0
  %232 = vmatpush1.bf16.msra.mxu0 0
  %233 = vmatprep.subr.bf16.mxu0 0
  %234 = vmatpush1.bf16.msra.mxu0 0
  %235 = vmatprep.subr.bf16.mxu0 0
  %236 = vmatpush1.bf16.msra.mxu0 0
  %237 = vmatprep.subr.bf16.mxu0 0
  %238 = vmatpush1.bf16.msra.mxu0 0
  %239 = vmatprep.subr.bf16.mxu0 0
  %240 = vmatpush1.bf16.msra.mxu0 0
  %241 = vmatprep.subr.bf16.mxu0 0
  %242 = vmatpush1.bf16.msra.mxu0 %v220
  %243 = vmatprep.subr.bf16.mxu0 0
  %244 = vmatpush1.bf16.msra.mxu0 %v218
  %245 = vmatprep.subr.bf16.mxu0 0
  %246 = vmatpush2.bf16.msra.mxu0 0
  %247 = vmatprep.subr.bf16.mxu0 0
  %248 = vmatpush2.bf16.msra.mxu0 0
  %249 = vmatprep.subr.bf16.mxu0 0
  %250 = vmatpush2.bf16.msra.mxu0 0
  %251 = vmatprep.subr.bf16.mxu0 0
  %252 = vmatpush2.bf16.msra.mxu0 0
  %253 = vmatprep.subr.bf16.mxu0 0
  %254 = vmatpush2.bf16.msra.mxu0 0
  %255 = vmatprep.subr.bf16.mxu0 0
  %256 = vmatpush2.bf16.msra.mxu0 0
  %257 = vmatprep.subr.bf16.mxu0 0
  %258 = vmatpush2.bf16.msra.mxu0 0
  %259 = vmatprep.subr.bf16.mxu0 0
  %260 = vmatpush2.bf16.msra.mxu0 0
  %261 = vmatprep.mubr.bf16.mxu0 0
  %262 = vmatmul.mubr.bf16.gmra.mxu0 %v227
  %v263 = vpop.f32.mrf.mxu0
  %v264 = vadd.f32 %v224, %v263
  %v265 = vpop.f32.mrf.mxu0
  %v266 = vpop.f32.mrf.mxu0
  %v267 = vpop.f32.mrf.mxu0
  %268 = vdwg.mxu0
  %v269 = vadd.f32 %v87, %v264
  %v270 = vld [vmem:[%s7] sm:$0x1]
  %v271 = vld [vmem:[%s8] sm:$0x1]
  %v272 = vsel %vm120, %v269, 0.0
  %273 = vadd.xlane.f32.xlu0 %v272
  %v274 = vpop.xlane.xlu0 %273
  %v275 = vrcp.pop 32.0
  %v276 = vmul.f32 %v274, %v275
  %v277 = vsub.f32 %v269, %v276
  %v278 = vmul.f32 %v277, %v277
  %v279 = vsel %vm120, %v278, 0.0
  %280 = vadd.xlane.f32.xlu0 %v279
  %v281 = vpop.xlane.xlu0 %280
  %v282 = vmul.f32 %v281, %v275
  %v283 = vadd.f32 %v282, 1e-05
  %v284 = vrsqrt.pop %v283
  %v285 = vmul.f32 %v277, %v284
  %v287 = vlaneseq
  %v288 = vshrl.u32 %v287, 7
  %v289 = vsub.s32 0, %v288
  %v290 = vrot.slane %v270, %v289
  %v292 = vmul.f32 %v285, %v290
  %v294 = vlaneseq
  %v295 = vshrl.u32 %v294, 7
  %v296 = vsub.s32 0, %v295
  %v297 = vrot.slane %v271, %v296
  %v299 = vadd.f32 %v292, %v297
  %v300 = vld [vmem:[%s9] sm:$0xf]
  %v301 = vld [vmem:[%s9 + $0x4] sm:$0xf]
  %v302 = vld [vmem:[%s9 + $0x8] sm:$0xf]
  %v303 = vld [vmem:[%s9 + $0xc] sm:$0xf]
  %v304 = vld [vmem:[%s10] sm:$0x1]
  %v305 = vld [vmem:[%s11] sm:$0xf]
  %v306 = vld [vmem:[%s11 + $0x4] sm:$0xf]
  %v307 = vld [vmem:[%s11 + $0x8] sm:$0xf]
  %v308 = vld [vmem:[%s11 + $0xc] sm:$0xf]
  %v309 = vld [vmem:[%s11 + $0x10] sm:$0xf]
  %v310 = vld [vmem:[%s11 + $0x14] sm:$0xf]
  %v311 = vld [vmem:[%s11 + $0x18] sm:$0xf]
  %v312 = vld [vmem:[%s11 + $0x1c] sm:$0xf]
  %v313 = vld [vmem:[%s12] sm:$0x1]
  %v314 = vpack.c.bf16 %v299, %v299
  %v316 = vlaneseq
  %v317 = vshrl.u32 %v316, 7
  %v318 = vsub.s32 0, %v317
  %v319 = vrot.slane %v304, %v318
  %v325 = vunpack.c.l.b16 %v300
  %v326 = vunpack.c.l.b16 %v301
  %v327 = vunpack.c.l.b16 %v302
  %v328 = vunpack.c.l.b16 %v303
  %v329 = vpack.c.b16 %v326, %v325
  %v330 = vpack.c.b16 %v328, %v327
  %v334 = vsel %vm120, %v314, 0
  %336 = vmatprep.subr.bf16.mxu0 0
  %337 = vmatpush1.bf16.msra.mxu0 0
  %338 = vmatprep.subr.bf16.mxu0 0
  %339 = vmatpush1.bf16.msra.mxu0 0
  %340 = vmatprep.subr.bf16.mxu0 0
  %341 = vmatpush1.bf16.msra.mxu0 0
  %342 = vmatprep.subr.bf16.mxu0 0
  %343 = vmatpush1.bf16.msra.mxu0 0
  %344 = vmatprep.subr.bf16.mxu0 0
  %345 = vmatpush1.bf16.msra.mxu0 0
  %346 = vmatprep.subr.bf16.mxu0 0
  %347 = vmatpush1.bf16.msra.mxu0 0
  %348 = vmatprep.subr.bf16.mxu0 0
  %349 = vmatpush1.bf16.msra.mxu0 %v330
  %350 = vmatprep.subr.bf16.mxu0 0
  %351 = vmatpush1.bf16.msra.mxu0 %v329
  %352 = vmatprep.subr.bf16.mxu0 0
  %353 = vmatpush2.bf16.msra.mxu0 0
  %354 = vmatprep.subr.bf16.mxu0 0
  %355 = vmatpush2.bf16.msra.mxu0 0
  %356 = vmatprep.subr.bf16.mxu0 0
  %357 = vmatpush2.bf16.msra.mxu0 0
  %358 = vmatprep.subr.bf16.mxu0 0
  %359 = vmatpush2.bf16.msra.mxu0 0
  %360 = vmatprep.subr.bf16.mxu0 0
  %361 = vmatpush2.bf16.msra.mxu0 0
  %362 = vmatprep.subr.bf16.mxu0 0
  %363 = vmatpush2.bf16.msra.mxu0 0
  %364 = vmatprep.subr.bf16.mxu0 0
  %365 = vmatpush2.bf16.msra.mxu0 0
  %366 = vmatprep.subr.bf16.mxu0 0
  %367 = vmatpush2.bf16.msra.mxu0 0
  %368 = vmatprep.mubr.bf16.mxu0 0
  %369 = vmatmul.mubr.bf16.gmra.mxu0 %v334
  %v370 = vpop.f32.mrf.mxu0
  %v371 = vadd.f32 %v319, %v370
  %v372 = vpop.f32.mrf.mxu0
  %v373 = vpop.f32.mrf.mxu0
  %v374 = vpop.f32.mrf.mxu0
  %375 = vdwg.mxu0
  %v376 = vmul.f32 %v371, 0.5
  %v377 = vmul.f32 %v371, 0.70710677
  %vm378 = vcmp.ge.f32.partialorder %v377, 0.0
  %v379 = vsel %vm378, 1.0, -1.0
  %v380 = vand.u32 2147483647, %v377
  %v381 = vmul.f32 %v380, 0.3275911
  %v382 = vadd.f32 %v381, 1.0
  %v383 = vrcp.pop %v382
  %v384 = vmul.f32 1.0, %v383
  %v385 = vmul.f32 %v384, 1.0614054
  %v386 = vadd.f32 %v385, -1.4531521
  %v387 = vmul.f32 %v386, %v384
  %v388 = vadd.f32 %v387, 1.4214138
  %v389 = vmul.f32 %v388, %v384
  %v390 = vadd.f32 %v389, -0.28449672
  %v391 = vmul.f32 %v390, %v384
  %v392 = vadd.f32 %v391, 0.2548296
  %v393 = vmul.f32 %v392, %v384
  %v394 = vsub.f32 0.0, %v380
  %v395 = vmul.f32 %v394, %v380
  %v396 = vmul.f32 %v395, 1.442695
  %v397 = vpow.pop %v396
  %v398 = vmul.f32 %v393, %v397
  %v399 = vsub.f32 1.0, %v398
  %v400 = vmul.f32 %v379, %v399
  %v401 = vadd.f32 %v400, 1.0
  %v402 = vmul.f32 %v376, %v401
  %v403 = vpack.c.bf16 %v402, %v402
  %v405 = vlaneseq
  %v406 = vshrl.u32 %v405, 7
  %v407 = vsub.s32 0, %v406
  %v408 = vrot.slane %v313, %v407
  %v418 = vunpack.c.l.b16 %v305
  %v419 = vunpack.c.l.b16 %v306
  %v420 = vunpack.c.l.b16 %v307
  %v421 = vunpack.c.l.b16 %v308
  %v422 = vunpack.c.l.b16 %v309
  %v423 = vunpack.c.l.b16 %v310
  %v424 = vunpack.c.l.b16 %v311
  %v425 = vunpack.c.l.b16 %v312
  %v426 = vpack.c.b16 %v419, %v418
  %v427 = vpack.c.b16 %v421, %v420
  %v428 = vpack.c.b16 %v423, %v422
  %v429 = vpack.c.b16 %v425, %v424
  %vm434 = vcmask 523264
  %v436 = vsel %vm434, %v403, 0
  %438 = vmatprep.subr.bf16.mxu0 0
  %439 = vmatpush1.bf16.msra.mxu0 0
  %440 = vmatprep.subr.bf16.mxu0 0
  %441 = vmatpush1.bf16.msra.mxu0 0
  %442 = vmatprep.subr.bf16.mxu0 0
  %443 = vmatpush1.bf16.msra.mxu0 0
  %444 = vmatprep.subr.bf16.mxu0 0
  %445 = vmatpush1.bf16.msra.mxu0 0
  %446 = vmatprep.subr.bf16.mxu0 0
  %447 = vmatpush1.bf16.msra.mxu0 %v429
  %448 = vmatprep.subr.bf16.mxu0 0
  %449 = vmatpush1.bf16.msra.mxu0 %v428
  %450 = vmatprep.subr.bf16.mxu0 0
  %451 = vmatpush1.bf16.msra.mxu0 %v427
  %452 = vmatprep.subr.bf16.mxu0 0
  %453 = vmatpush1.bf16.msra.mxu0 %v426
  %454 = vmatprep.subr.bf16.mxu0 0
  %455 = vmatpush2.bf16.msra.mxu0 0
  %456 = vmatprep.subr.bf16.mxu0 0
  %457 = vmatpush2.bf16.msra.mxu0 0
  %458 = vmatprep.subr.bf16.mxu0 0
  %459 = vmatpush2.bf16.msra.mxu0 0
  %460 = vmatprep.subr.bf16.mxu0 0
  %461 = vmatpush2.bf16.msra.mxu0 0
  %462 = vmatprep.subr.bf16.mxu0 0
  %463 = vmatpush2.bf16.msra.mxu0 0
  %464 = vmatprep.subr.bf16.mxu0 0
  %465 = vmatpush2.bf16.msra.mxu0 0
  %466 = vmatprep.subr.bf16.mxu0 0
  %467 = vmatpush2.bf16.msra.mxu0 0
  %468 = vmatprep.subr.bf16.mxu0 0
  %469 = vmatpush2.bf16.msra.mxu0 0
  %470 = vmatprep.mubr.bf16.mxu0 0
  %471 = vmatmul.mubr.bf16.gmra.mxu0 %v436
  %v472 = vpop.f32.mrf.mxu0
  %v473 = vadd.f32 %v408, %v472
  %v474 = vpop.f32.mrf.mxu0
  %v475 = vpop.f32.mrf.mxu0
  %v476 = vpop.f32.mrf.mxu0
  %477 = vdwg.mxu0
  %v478 = vadd.f32 %v299, %v473
  %v479 = vld [vmem:[%s13] sm:$0x1]
  %v480 = vld [vmem:[%s14] sm:$0x1]
  %v481 = vsel %vm120, %v478, 0.0
  %482 = vadd.xlane.f32.xlu0 %v481
  %v483 = vpop.xlane.xlu0 %482
  %v484 = vmul.f32 %v483, %v275
  %v485 = vsub.f32 %v478, %v484
  %v486 = vmul.f32 %v485, %v485
  %v487 = vsel %vm120, %v486, 0.0
  %488 = vadd.xlane.f32.xlu0 %v487
  %v489 = vpop.xlane.xlu0 %488
  %v490 = vmul.f32 %v489, %v275
  %v491 = vadd.f32 %v490, 1e-05
  %v492 = vrsqrt.pop %v491
  %v493 = vmul.f32 %v485, %v492
  %v495 = vlaneseq
  %v496 = vshrl.u32 %v495, 7
  %v497 = vsub.s32 0, %v496
  %v498 = vrot.slane %v479, %v497
  %v500 = vmul.f32 %v493, %v498
  %v502 = vlaneseq
  %v503 = vshrl.u32 %v502, 7
  %v504 = vsub.s32 0, %v503
  %v505 = vrot.slane %v480, %v504
  %v507 = vadd.f32 %v500, %v505
  %v508 = vld [vmem:[%s3] sm:$0x3]
  %v509 = vld [vmem:[%s15] sm:$0xf]
  %v510 = vld [vmem:[%s15 + $0x4] sm:$0xf]
  %v511 = vld [vmem:[%s15 + $0x8] sm:$0xf]
  %v512 = vld [vmem:[%s15 + $0xc] sm:$0xf]
  %v513 = vld [vmem:[%s16] sm:$0x1]
  %v514 = vpack.c.bf16 %v88, %v88
  %v516 = vlaneseq
  %v517 = vshrl.u32 %v516, 7
  %v518 = vsub.s32 0, %v517
  %v519 = vrot.slane %v513, %v518
  %v525 = vunpack.c.l.b16 %v509
  %v526 = vunpack.c.l.b16 %v510
  %v527 = vunpack.c.l.b16 %v511
  %v528 = vunpack.c.l.b16 %v512
  %v529 = vpack.c.b16 %v526, %v525
  %v530 = vpack.c.b16 %v528, %v527
  %v534 = vsel %vm120, %v514, 0
  %536 = vmatprep.subr.bf16.mxu0 0
  %537 = vmatpush1.bf16.msra.mxu0 0
  %538 = vmatprep.subr.bf16.mxu0 0
  %539 = vmatpush1.bf16.msra.mxu0 0
  %540 = vmatprep.subr.bf16.mxu0 0
  %541 = vmatpush1.bf16.msra.mxu0 0
  %542 = vmatprep.subr.bf16.mxu0 0
  %543 = vmatpush1.bf16.msra.mxu0 0
  %544 = vmatprep.subr.bf16.mxu0 0
  %545 = vmatpush1.bf16.msra.mxu0 0
  %546 = vmatprep.subr.bf16.mxu0 0
  %547 = vmatpush1.bf16.msra.mxu0 0
  %548 = vmatprep.subr.bf16.mxu0 0
  %549 = vmatpush1.bf16.msra.mxu0 %v530
  %550 = vmatprep.subr.bf16.mxu0 0
  %551 = vmatpush1.bf16.msra.mxu0 %v529
  %552 = vmatprep.subr.bf16.mxu0 0
  %553 = vmatpush2.bf16.msra.mxu0 0
  %554 = vmatprep.subr.bf16.mxu0 0
  %555 = vmatpush2.bf16.msra.mxu0 0
  %556 = vmatprep.subr.bf16.mxu0 0
  %557 = vmatpush2.bf16.msra.mxu0 0
  %558 = vmatprep.subr.bf16.mxu0 0
  %559 = vmatpush2.bf16.msra.mxu0 0
  %560 = vmatprep.subr.bf16.mxu0 0
  %561 = vmatpush2.bf16.msra.mxu0 0
  %562 = vmatprep.subr.bf16.mxu0 0
  %563 = vmatpush2.bf16.msra.mxu0 0
  %564 = vmatprep.subr.bf16.mxu0 0
  %565 = vmatpush2.bf16.msra.mxu0 0
  %566 = vmatprep.subr.bf16.mxu0 0
  %567 = vmatpush2.bf16.msra.mxu0 0
  %568 = vmatprep.mubr.bf16.mxu0 0
  %569 = vmatmul.mubr.bf16.gmra.mxu0 %v534
  %v570 = vpop.f32.mrf.mxu0
  %v571 = vadd.f32 %v519, %v570
  %v572 = vpop.f32.mrf.mxu0
  %v573 = vpop.f32.mrf.mxu0
  %v574 = vpop.f32.mrf.mxu0
  %575 = vdwg.mxu0
  %v576 = vpack.c.bf16 %v507, %v507
  %577 = vrot.lane.b32.xlu0 %v529, 96
  %v578 = vpop.permute.xlu0 %577
  %579 = vrot.lane.b32.xlu0 %v530, 96
  %v580 = vpop.permute.xlu0 %579
  %583 = vrot.lane.b32.xlu0 %v519, 96
  %v584 = vpop.permute.xlu0 %583
  %v587 = vsel %vm120, %v576, 0
  %589 = vmatprep.subr.bf16.mxu0 0
  %590 = vmatpush1.bf16.msra.mxu0 0
  %591 = vmatprep.subr.bf16.mxu0 0
  %592 = vmatpush1.bf16.msra.mxu0 0
  %593 = vmatprep.subr.bf16.mxu0 0
  %594 = vmatpush1.bf16.msra.mxu0 0
  %595 = vmatprep.subr.bf16.mxu0 0
  %596 = vmatpush1.bf16.msra.mxu0 0
  %597 = vmatprep.subr.bf16.mxu0 0
  %598 = vmatpush1.bf16.msra.mxu0 0
  %599 = vmatprep.subr.bf16.mxu0 0
  %600 = vmatpush1.bf16.msra.mxu0 0
  %601 = vmatprep.subr.bf16.mxu0 0
  %602 = vmatpush1.bf16.msra.mxu0 %v580
  %603 = vmatprep.subr.bf16.mxu0 0
  %604 = vmatpush1.bf16.msra.mxu0 %v578
  %605 = vmatprep.subr.bf16.mxu0 0
  %606 = vmatpush2.bf16.msra.mxu0 0
  %607 = vmatprep.subr.bf16.mxu0 0
  %608 = vmatpush2.bf16.msra.mxu0 0
  %609 = vmatprep.subr.bf16.mxu0 0
  %610 = vmatpush2.bf16.msra.mxu0 0
  %611 = vmatprep.subr.bf16.mxu0 0
  %612 = vmatpush2.bf16.msra.mxu0 0
  %613 = vmatprep.subr.bf16.mxu0 0
  %614 = vmatpush2.bf16.msra.mxu0 0
  %615 = vmatprep.subr.bf16.mxu0 0
  %616 = vmatpush2.bf16.msra.mxu0 0
  %617 = vmatprep.subr.bf16.mxu0 0
  %618 = vmatpush2.bf16.msra.mxu0 0
  %619 = vmatprep.subr.bf16.mxu0 0
  %620 = vmatpush2.bf16.msra.mxu0 0
  %621 = vmatprep.mubr.bf16.mxu0 0
  %622 = vmatmul.mubr.bf16.gmra.mxu0 %v587
  %v623 = vpop.f32.mrf.mxu0
  %v624 = vadd.f32 %v584, %v623
  %v625 = vpop.f32.mrf.mxu0
  %v626 = vpop.f32.mrf.mxu0
  %v627 = vpop.f32.mrf.mxu0
  %628 = vdwg.mxu0
  %v629 = vpack.c.bf16 %v571, %v571
  %v630 = vpack.c.bf16 %v624, %v624
  %vm631 = vcmask 130048
  %v633 = vsel %vm631, %v629, 0
  %v636 = vsel %vm631, %v630, 0
  %638 = vmatprep.subr.bf16.mxu0 0
  %639 = vmatpush1.bf16.xpose.msra.mxu0 0
  %640 = vmatprep.subr.bf16.mxu0 0
  %641 = vmatpush1.bf16.xpose.msra.mxu0 0
  %642 = vmatprep.subr.bf16.mxu0 0
  %643 = vmatpush1.bf16.xpose.msra.mxu0 0
  %644 = vmatprep.subr.bf16.mxu0 0
  %645 = vmatpush1.bf16.xpose.msra.mxu0 0
  %646 = vmatprep.subr.bf16.mxu0 0
  %647 = vmatpush1.bf16.xpose.msra.mxu0 0
  %648 = vmatprep.subr.bf16.mxu0 0
  %649 = vmatpush1.bf16.xpose.msra.mxu0 0
  %650 = vmatprep.subr.bf16.mxu0 0
  %651 = vmatpush1.bf16.xpose.msra.mxu0 0
  %652 = vmatprep.subr.bf16.mxu0 0
  %653 = vmatpush1.bf16.xpose.msra.mxu0 %v636
  %654 = vmatprep.subr.bf16.mxu0 0
  %655 = vmatpush2.bf16.xpose.msra.mxu0 0
  %656 = vmatprep.subr.bf16.mxu0 0
  %657 = vmatpush2.bf16.xpose.msra.mxu0 0
  %658 = vmatprep.subr.bf16.mxu0 0
  %659 = vmatpush2.bf16.xpose.msra.mxu0 0
  %660 = vmatprep.subr.bf16.mxu0 0
  %661 = vmatpush2.bf16.xpose.msra.mxu0 0
  %662 = vmatprep.subr.bf16.mxu0 0
  %663 = vmatpush2.bf16.xpose.msra.mxu0 0
  %664 = vmatprep.subr.bf16.mxu0 0
  %665 = vmatpush2.bf16.xpose.msra.mxu0 0
  %666 = vmatprep.subr.bf16.mxu0 0
  %667 = vmatpush2.bf16.xpose.msra.mxu0 0
  %668 = vmatprep.subr.bf16.mxu0 0
  %669 = vmatpush2.bf16.xpose.msra.mxu0 0
  %670 = vmatprep.mubr.bf16.mxu0 0
  %671 = vmatmul.mubr.bf16.gmra.mxu0 %v633
  %v672 = vpop.f32.mrf.mxu0
  %v673 = vadd.f32 0.0, %v672
  %v674 = vpop.f32.mrf.mxu0
  %v675 = vpop.f32.mrf.mxu0
  %v676 = vpop.f32.mrf.mxu0
  %677 = vdwg.mxu0
  %v678 = vmul.f32 %v673, 0.25
  %v679 = vadd.f32 %v678, %v508
  %vm680 = vcmask 58368
  %v681 = vsel %vm680, %v679, -inf
  %682 = vmax.xlane.f32.xlu0 %v681
  %v683 = vpop.xlane.xlu0 %682
  %v684 = vsub.f32 %v679, %v683
  %v685 = vmul.f32 %v684, 1.442695
  %v686 = vpow.pop %v685
  %v687 = vsel %vm680, %v686, 0.0
  %688 = vadd.xlane.f32.xlu0 %v687
  %v689 = vpop.xlane.xlu0 %688
  %v690 = vrcp.pop %v689
  %v691 = vmul.f32 %v686, %v690
  %v692 = vpack.c.bf16 %v691, %v691
  %694 = vrot.lane.b32.xlu0 %v630, 96
  %v695 = vpop.permute.xlu0 %694
  %v697 = vsel %vm168, %v692, 0
  %v700 = vsel %vm172, %v695, 0
  %702 = vmatprep.subr.bf16.mxu0 0
  %703 = vmatpush1.bf16.msra.mxu0 0
  %704 = vmatprep.subr.bf16.mxu0 0
  %705 = vmatpush1.bf16.msra.mxu0 0
  %706 = vmatprep.subr.bf16.mxu0 0
  %707 = vmatpush1.bf16.msra.mxu0 0
  %708 = vmatprep.subr.bf16.mxu0 0
  %709 = vmatpush1.bf16.msra.mxu0 0
  %710 = vmatprep.subr.bf16.mxu0 0
  %711 = vmatpush1.bf16.msra.mxu0 0
  %712 = vmatprep.subr.bf16.mxu0 0
  %713 = vmatpush1.bf16.msra.mxu0 0
  %714 = vmatprep.subr.bf16.mxu0 0
  %715 = vmatpush1.bf16.msra.mxu0 0
  %716 = vmatprep.subr.bf16.mxu0 0
  %717 = vmatpush1.bf16.msra.mxu0 %v700
  %718 = vmatprep.subr.bf16.mxu0 0
  %719 = vmatpush2.bf16.msra.mxu0 0
  %720 = vmatprep.subr.bf16.mxu0 0
  %721 = vmatpush2.bf16.msra.mxu0 0
  %722 = vmatprep.subr.bf16.mxu0 0
  %723 = vmatpush2.bf16.msra.mxu0 0
  %724 = vmatprep.subr.bf16.mxu0 0
  %725 = vmatpush2.bf16.msra.mxu0 0
  %726 = vmatprep.subr.bf16.mxu0 0
  %727 = vmatpush2.bf16.msra.mxu0 0
  %728 = vmatprep.subr.bf16.mxu0 0
  %729 = vmatpush2.bf16.msra.mxu0 0
  %730 = vmatprep.subr.bf16.mxu0 0
  %731 = vmatpush2.bf16.msra.mxu0 0
  %732 = vmatprep.subr.bf16.mxu0 0
  %733 = vmatpush2.bf16.msra.mxu0 0
  %734 = vmatprep.mubr.bf16.mxu0 0
  %735 = vmatmul.mubr.bf16.gmra.mxu0 %v697
  %v736 = vpop.f32.mrf.mxu0
  %v737 = vadd.f32 0.0, %v736
  %v738 = vpop.f32.mrf.mxu0
  %v739 = vpop.f32.mrf.mxu0
  %v740 = vpop.f32.mrf.mxu0
  %741 = vdwg.mxu0
  %743 = vrot.lane.b32.xlu0 %v629, 112
  %v744 = vpop.permute.xlu0 %743
  %745 = vrot.lane.b32.xlu0 %v630, 112
  %v746 = vpop.permute.xlu0 %745
  %v748 = vsel %vm631, %v744, 0
  %v751 = vsel %vm631, %v746, 0
  %753 = vmatprep.subr.bf16.mxu0 0
  %754 = vmatpush1.bf16.xpose.msra.mxu0 0
  %755 = vmatprep.subr.bf16.mxu0 0
  %756 = vmatpush1.bf16.xpose.msra.mxu0 0
  %757 = vmatprep.subr.bf16.mxu0 0
  %758 = vmatpush1.bf16.xpose.msra.mxu0 0
  %759 = vmatprep.subr.bf16.mxu0 0
  %760 = vmatpush1.bf16.xpose.msra.mxu0 0
  %761 = vmatprep.subr.bf16.mxu0 0
  %762 = vmatpush1.bf16.xpose.msra.mxu0 0
  %763 = vmatprep.subr.bf16.mxu0 0
  %764 = vmatpush1.bf16.xpose.msra.mxu0 0
  %765 = vmatprep.subr.bf16.mxu0 0
  %766 = vmatpush1.bf16.xpose.msra.mxu0 0
  %767 = vmatprep.subr.bf16.mxu0 0
  %768 = vmatpush1.bf16.xpose.msra.mxu0 %v751
  %769 = vmatprep.subr.bf16.mxu0 0
  %770 = vmatpush2.bf16.xpose.msra.mxu0 0
  %771 = vmatprep.subr.bf16.mxu0 0
  %772 = vmatpush2.bf16.xpose.msra.mxu0 0
  %773 = vmatprep.subr.bf16.mxu0 0
  %774 = vmatpush2.bf16.xpose.msra.mxu0 0
  %775 = vmatprep.subr.bf16.mxu0 0
  %776 = vmatpush2.bf16.xpose.msra.mxu0 0
  %777 = vmatprep.subr.bf16.mxu0 0
  %778 = vmatpush2.bf16.xpose.msra.mxu0 0
  %779 = vmatprep.subr.bf16.mxu0 0
  %780 = vmatpush2.bf16.xpose.msra.mxu0 0
  %781 = vmatprep.subr.bf16.mxu0 0
  %782 = vmatpush2.bf16.xpose.msra.mxu0 0
  %783 = vmatprep.subr.bf16.mxu0 0
  %784 = vmatpush2.bf16.xpose.msra.mxu0 0
  %785 = vmatprep.mubr.bf16.mxu0 0
  %786 = vmatmul.mubr.bf16.gmra.mxu0 %v748
  %v787 = vpop.f32.mrf.mxu0
  %v788 = vadd.f32 0.0, %v787
  %v789 = vpop.f32.mrf.mxu0
  %v790 = vpop.f32.mrf.mxu0
  %v791 = vpop.f32.mrf.mxu0
  %792 = vdwg.mxu0
  %v793 = vmul.f32 %v788, 0.25
  %v794 = vadd.f32 %v793, %v508
  %v795 = vsel %vm680, %v794, -inf
  %796 = vmax.xlane.f32.xlu0 %v795
  %v797 = vpop.xlane.xlu0 %796
  %v798 = vsub.f32 %v794, %v797
  %v799 = vmul.f32 %v798, 1.442695
  %v800 = vpow.pop %v799
  %v801 = vsel %vm680, %v800, 0.0
  %802 = vadd.xlane.f32.xlu0 %v801
  %v803 = vpop.xlane.xlu0 %802
  %v804 = vrcp.pop %v803
  %v805 = vmul.f32 %v800, %v804
  %v806 = vpack.c.bf16 %v805, %v805
  %807 = vrot.lane.b32.xlu0 %v630, 80
  %v808 = vpop.permute.xlu0 %807
  %v810 = vsel %vm168, %v806, 0
  %v813 = vsel %vm172, %v808, 0
  %815 = vmatprep.subr.bf16.mxu0 0
  %816 = vmatpush1.bf16.msra.mxu0 0
  %817 = vmatprep.subr.bf16.mxu0 0
  %818 = vmatpush1.bf16.msra.mxu0 0
  %819 = vmatprep.subr.bf16.mxu0 0
  %820 = vmatpush1.bf16.msra.mxu0 0
  %821 = vmatprep.subr.bf16.mxu0 0
  %822 = vmatpush1.bf16.msra.mxu0 0
  %823 = vmatprep.subr.bf16.mxu0 0
  %824 = vmatpush1.bf16.msra.mxu0 0
  %825 = vmatprep.subr.bf16.mxu0 0
  %826 = vmatpush1.bf16.msra.mxu0 0
  %827 = vmatprep.subr.bf16.mxu0 0
  %828 = vmatpush1.bf16.msra.mxu0 0
  %829 = vmatprep.subr.bf16.mxu0 0
  %830 = vmatpush1.bf16.msra.mxu0 %v813
  %831 = vmatprep.subr.bf16.mxu0 0
  %832 = vmatpush2.bf16.msra.mxu0 0
  %833 = vmatprep.subr.bf16.mxu0 0
  %834 = vmatpush2.bf16.msra.mxu0 0
  %835 = vmatprep.subr.bf16.mxu0 0
  %836 = vmatpush2.bf16.msra.mxu0 0
  %837 = vmatprep.subr.bf16.mxu0 0
  %838 = vmatpush2.bf16.msra.mxu0 0
  %839 = vmatprep.subr.bf16.mxu0 0
  %840 = vmatpush2.bf16.msra.mxu0 0
  %841 = vmatprep.subr.bf16.mxu0 0
  %842 = vmatpush2.bf16.msra.mxu0 0
  %843 = vmatprep.subr.bf16.mxu0 0
  %844 = vmatpush2.bf16.msra.mxu0 0
  %845 = vmatprep.subr.bf16.mxu0 0
  %846 = vmatpush2.bf16.msra.mxu0 0
  %847 = vmatprep.mubr.bf16.mxu0 0
  %848 = vmatmul.mubr.bf16.gmra.mxu0 %v810
  %v849 = vpop.f32.mrf.mxu0
  %v850 = vadd.f32 0.0, %v849
  %v851 = vpop.f32.mrf.mxu0
  %v852 = vpop.f32.mrf.mxu0
  %v853 = vpop.f32.mrf.mxu0
  %854 = vdwg.mxu0
  %856 = vrot.lane.b32.xlu0 %v850, 16
  %v857 = vpop.permute.xlu0 %856
  %v859 = vsel %vm631, %v737, %v857
  %v860 = vpack.c.bf16 %v859, %v859
  %861 = vrot.lane.b32.xlu0 %v529, 32
  %v862 = vpop.permute.xlu0 %861
  %863 = vrot.lane.b32.xlu0 %v530, 32
  %v864 = vpop.permute.xlu0 %863
  %867 = vrot.lane.b32.xlu0 %v519, 32
  %v868 = vpop.permute.xlu0 %867
  %v871 = vsel %vm120, %v860, 0
  %873 = vmatprep.subr.bf16.mxu0 0
  %874 = vmatpush1.bf16.msra.mxu0 0
  %875 = vmatprep.subr.bf16.mxu0 0
  %876 = vmatpush1.bf16.msra.mxu0 0
  %877 = vmatprep.subr.bf16.mxu0 0
  %878 = vmatpush1.bf16.msra.mxu0 0
  %879 = vmatprep.subr.bf16.mxu0 0
  %880 = vmatpush1.bf16.msra.mxu0 0
  %881 = vmatprep.subr.bf16.mxu0 0
  %882 = vmatpush1.bf16.msra.mxu0 0
  %883 = vmatprep.subr.bf16.mxu0 0
  %884 = vmatpush1.bf16.msra.mxu0 0
  %885 = vmatprep.subr.bf16.mxu0 0
  %886 = vmatpush1.bf16.msra.mxu0 %v864
  %887 = vmatprep.subr.bf16.mxu0 0
  %888 = vmatpush1.bf16.msra.mxu0 %v862
  %889 = vmatprep.subr.bf16.mxu0 0
  %890 = vmatpush2.bf16.msra.mxu0 0
  %891 = vmatprep.subr.bf16.mxu0 0
  %892 = vmatpush2.bf16.msra.mxu0 0
  %893 = vmatprep.subr.bf16.mxu0 0
  %894 = vmatpush2.bf16.msra.mxu0 0
  %895 = vmatprep.subr.bf16.mxu0 0
  %896 = vmatpush2.bf16.msra.mxu0 0
  %897 = vmatprep.subr.bf16.mxu0 0
  %898 = vmatpush2.bf16.msra.mxu0 0
  %899 = vmatprep.subr.bf16.mxu0 0
  %900 = vmatpush2.bf16.msra.mxu0 0
  %901 = vmatprep.subr.bf16.mxu0 0
  %902 = vmatpush2.bf16.msra.mxu0 0
  %903 = vmatprep.subr.bf16.mxu0 0
  %904 = vmatpush2.bf16.msra.mxu0 0
  %905 = vmatprep.mubr.bf16.mxu0 0
  %906 = vmatmul.mubr.bf16.gmra.mxu0 %v871
  %v907 = vpop.f32.mrf.mxu0
  %v908 = vadd.f32 %v868, %v907
  %v909 = vpop.f32.mrf.mxu0
  %v910 = vpop.f32.mrf.mxu0
  %v911 = vpop.f32.mrf.mxu0
  %912 = vdwg.mxu0
  %v913 = vld [vmem:[%s4] sm:$0xff]
  %v914 = vld [vmem:[%s17] sm:$0xf]
  %v915 = vld [vmem:[%s17 + $0x4] sm:$0xf]
  %v916 = vld [vmem:[%s17 + $0x8] sm:$0xf]
  %v917 = vld [vmem:[%s17 + $0xc] sm:$0xf]
  %v918 = vld [vmem:[%s18] sm:$0x1]
  %v919 = vpack.c.bf16 %v908, %v908
  %v921 = vlaneseq
  %v922 = vshrl.u32 %v921, 7
  %v923 = vsub.s32 0, %v922
  %v924 = vrot.slane %v918, %v923
  %v929 = vunpack.c.l.b16 %v914
  %v930 = vunpack.c.l.b16 %v915
  %v931 = vunpack.c.l.b16 %v916
  %v932 = vunpack.c.l.b16 %v917
  %v933 = vpack.c.b16 %v930, %v929
  %v934 = vpack.c.b16 %v932, %v931
  %935 = vrot.lane.b32.xlu0 %v933, 64
  %v936 = vpop.permute.xlu0 %935
  %937 = vrot.lane.b32.xlu0 %v934, 64
  %v938 = vpop.permute.xlu0 %937
  %941 = vrot.lane.b32.xlu0 %v924, 64
  %v942 = vpop.permute.xlu0 %941
  %v945 = vsel %vm120, %v919, 0
  %947 = vmatprep.subr.bf16.mxu0 0
  %948 = vmatpush1.bf16.msra.mxu0 0
  %949 = vmatprep.subr.bf16.mxu0 0
  %950 = vmatpush1.bf16.msra.mxu0 0
  %951 = vmatprep.subr.bf16.mxu0 0
  %952 = vmatpush1.bf16.msra.mxu0 0
  %953 = vmatprep.subr.bf16.mxu0 0
  %954 = vmatpush1.bf16.msra.mxu0 0
  %955 = vmatprep.subr.bf16.mxu0 0
  %956 = vmatpush1.bf16.msra.mxu0 0
  %957 = vmatprep.subr.bf16.mxu0 0
  %958 = vmatpush1.bf16.msra.mxu0 0
  %959 = vmatprep.subr.bf16.mxu0 0
  %960 = vmatpush1.bf16.msra.mxu0 %v938
  %961 = vmatprep.subr.bf16.mxu0 0
  %962 = vmatpush1.bf16.msra.mxu0 %v936
  %963 = vmatprep.subr.bf16.mxu0 0
  %964 = vmatpush2.bf16.msra.mxu0 0
  %965 = vmatprep.subr.bf16.mxu0 0
  %966 = vmatpush2.bf16.msra.mxu0 0
  %967 = vmatprep.subr.bf16.mxu0 0
  %968 = vmatpush2.bf16.msra.mxu0 0
  %969 = vmatprep.subr.bf16.mxu0 0
  %970 = vmatpush2.bf16.msra.mxu0 0
  %971 = vmatprep.subr.bf16.mxu0 0
  %972 = vmatpush2.bf16.msra.mxu0 0
  %973 = vmatprep.subr.bf16.mxu0 0
  %974 = vmatpush2.bf16.msra.mxu0 0
  %975 = vmatprep.subr.bf16.mxu0 0
  %976 = vmatpush2.bf16.msra.mxu0 0
  %977 = vmatprep.subr.bf16.mxu0 0
  %978 = vmatpush2.bf16.msra.mxu0 0
  %979 = vmatprep.mubr.bf16.mxu0 0
  %980 = vmatmul.mubr.bf16.gmra.mxu0 %v945
  %v981 = vpop.f32.mrf.mxu0
  %v982 = vadd.f32 %v942, %v981
  %v983 = vpop.f32.mrf.mxu0
  %v984 = vpop.f32.mrf.mxu0
  %v985 = vpop.f32.mrf.mxu0
  %986 = vdwg.mxu0
  %vm987 = vcmp.ge.f32.partialorder %v913, -0.5
  %v988 = vsel %vm987, 1.0, 0.0
  %v989 = vpack.c.bf16 %v988, %v988
  %v990 = vpack.c.bf16 %v982, %v982
  %vm991 = vcmask 15360
  %v993 = vsel %vm991, %v989, 0
  %vm995 = vcmask 1040384
  %v997 = vsel %vm995, %v990, 0
  %999 = vmatprep.subr.bf16.mxu0 0
  %1000 = vmatpush1.bf16.msra.mxu0 0
  %1001 = vmatprep.subr.bf16.mxu0 0
  %1002 = vmatpush1.bf16.msra.mxu0 0
  %1003 = vmatprep.subr.bf16.mxu0 0
  %1004 = vmatpush1.bf16.msra.mxu0 0
  %1005 = vmatprep.subr.bf16.mxu0 0
  %1006 = vmatpush1.bf16.msra.mxu0 0
  %1007 = vmatprep.subr.bf16.mxu0 0
  %1008 = vmatpush1.bf16.msra.mxu0 0
  %1009 = vmatprep.subr.bf16.mxu0 0
  %1010 = vmatpush1.bf16.msra.mxu0 0
  %1011 = vmatprep.subr.bf16.mxu0 0
  %1012 = vmatpush1.bf16.msra.mxu0 0
  %1013 = vmatprep.subr.bf16.mxu0 0
  %1014 = vmatpush1.bf16.msra.mxu0 %v997
  %1015 = vmatprep.subr.bf16.mxu0 0
  %1016 = vmatpush2.bf16.msra.mxu0 0
  %1017 = vmatprep.subr.bf16.mxu0 0
  %1018 = vmatpush2.bf16.msra.mxu0 0
  %1019 = vmatprep.subr.bf16.mxu0 0
  %1020 = vmatpush2.bf16.msra.mxu0 0
  %1021 = vmatprep.subr.bf16.mxu0 0
  %1022 = vmatpush2.bf16.msra.mxu0 0
  %1023 = vmatprep.subr.bf16.mxu0 0
  %1024 = vmatpush2.bf16.msra.mxu0 0
  %1025 = vmatprep.subr.bf16.mxu0 0
  %1026 = vmatpush2.bf16.msra.mxu0 0
  %1027 = vmatprep.subr.bf16.mxu0 0
  %1028 = vmatpush2.bf16.msra.mxu0 0
  %1029 = vmatprep.subr.bf16.mxu0 0
  %1030 = vmatpush2.bf16.msra.mxu0 0
  %1031 = vmatprep.mubr.bf16.mxu0 0
  %1032 = vmatmul.mubr.bf16.gmra.mxu0 %v993
  %v1033 = vpop.f32.mrf.mxu0
  %v1034 = vadd.f32 0.0, %v1033
  %v1035 = vpop.f32.mrf.mxu0
  %v1036 = vpop.f32.mrf.mxu0
  %v1037 = vpop.f32.mrf.mxu0
  %1038 = vdwg.mxu0
  %v1039 = vpack.c.bf16 %v1034, %v1034
  %1040 = vrot.lane.b32.xlu0 %v933, 32
  %v1041 = vpop.permute.xlu0 %1040
  %1042 = vrot.lane.b32.xlu0 %v934, 32
  %v1043 = vpop.permute.xlu0 %1042
  %1046 = vrot.lane.b32.xlu0 %v924, 32
  %v1047 = vpop.permute.xlu0 %1046
  %v1050 = vsel %vm120, %v1039, 0
  %1052 = vmatprep.subr.bf16.mxu0 0
  %1053 = vmatpush1.bf16.msra.mxu0 0
  %1054 = vmatprep.subr.bf16.mxu0 0
  %1055 = vmatpush1.bf16.msra.mxu0 0
  %1056 = vmatprep.subr.bf16.mxu0 0
  %1057 = vmatpush1.bf16.msra.mxu0 0
  %1058 = vmatprep.subr.bf16.mxu0 0
  %1059 = vmatpush1.bf16.msra.mxu0 0
  %1060 = vmatprep.subr.bf16.mxu0 0
  %1061 = vmatpush1.bf16.msra.mxu0 0
  %1062 = vmatprep.subr.bf16.mxu0 0
  %1063 = vmatpush1.bf16.msra.mxu0 0
  %1064 = vmatprep.subr.bf16.mxu0 0
  %1065 = vmatpush1.bf16.msra.mxu0 %v1043
  %1066 = vmatprep.subr.bf16.mxu0 0
  %1067 = vmatpush1.bf16.msra.mxu0 %v1041
  %1068 = vmatprep.subr.bf16.mxu0 0
  %1069 = vmatpush2.bf16.msra.mxu0 0
  %1070 = vmatprep.subr.bf16.mxu0 0
  %1071 = vmatpush2.bf16.msra.mxu0 0
  %1072 = vmatprep.subr.bf16.mxu0 0
  %1073 = vmatpush2.bf16.msra.mxu0 0
  %1074 = vmatprep.subr.bf16.mxu0 0
  %1075 = vmatpush2.bf16.msra.mxu0 0
  %1076 = vmatprep.subr.bf16.mxu0 0
  %1077 = vmatpush2.bf16.msra.mxu0 0
  %1078 = vmatprep.subr.bf16.mxu0 0
  %1079 = vmatpush2.bf16.msra.mxu0 0
  %1080 = vmatprep.subr.bf16.mxu0 0
  %1081 = vmatpush2.bf16.msra.mxu0 0
  %1082 = vmatprep.subr.bf16.mxu0 0
  %1083 = vmatpush2.bf16.msra.mxu0 0
  %1084 = vmatprep.mubr.bf16.mxu0 0
  %1085 = vmatmul.mubr.bf16.gmra.mxu0 %v1050
  %v1086 = vpop.f32.mrf.mxu0
  %v1087 = vadd.f32 %v1047, %v1086
  %v1088 = vpop.f32.mrf.mxu0
  %v1089 = vpop.f32.mrf.mxu0
  %v1090 = vpop.f32.mrf.mxu0
  %1091 = vdwg.mxu0
  %v1092 = vadd.f32 %v507, %v1087
  %v1093 = vld [vmem:[%s19] sm:$0x1]
  %v1094 = vld [vmem:[%s20] sm:$0x1]
  %v1095 = vsel %vm120, %v1092, 0.0
  %1096 = vadd.xlane.f32.xlu0 %v1095
  %v1097 = vpop.xlane.xlu0 %1096
  %v1098 = vmul.f32 %v1097, %v275
  %v1099 = vsub.f32 %v1092, %v1098
  %v1100 = vmul.f32 %v1099, %v1099
  %v1101 = vsel %vm120, %v1100, 0.0
  %1102 = vadd.xlane.f32.xlu0 %v1101
  %v1103 = vpop.xlane.xlu0 %1102
  %v1104 = vmul.f32 %v1103, %v275
  %v1105 = vadd.f32 %v1104, 1e-05
  %v1106 = vrsqrt.pop %v1105
  %v1107 = vmul.f32 %v1099, %v1106
  %v1109 = vlaneseq
  %v1110 = vshrl.u32 %v1109, 7
  %v1111 = vsub.s32 0, %v1110
  %v1112 = vrot.slane %v1093, %v1111
  %v1114 = vmul.f32 %v1107, %v1112
  %v1116 = vlaneseq
  %v1117 = vshrl.u32 %v1116, 7
  %v1118 = vsub.s32 0, %v1117
  %v1119 = vrot.slane %v1094, %v1118
  %v1121 = vadd.f32 %v1114, %v1119
  %v1122 = vld [vmem:[%s21] sm:$0xf]
  %v1123 = vld [vmem:[%s21 + $0x4] sm:$0xf]
  %v1124 = vld [vmem:[%s21 + $0x8] sm:$0xf]
  %v1125 = vld [vmem:[%s21 + $0xc] sm:$0xf]
  %v1126 = vld [vmem:[%s22] sm:$0x1]
  %v1127 = vld [vmem:[%s23] sm:$0xf]
  %v1128 = vld [vmem:[%s23 + $0x4] sm:$0xf]
  %v1129 = vld [vmem:[%s23 + $0x8] sm:$0xf]
  %v1130 = vld [vmem:[%s23 + $0xc] sm:$0xf]
  %v1131 = vld [vmem:[%s23 + $0x10] sm:$0xf]
  %v1132 = vld [vmem:[%s23 + $0x14] sm:$0xf]
  %v1133 = vld [vmem:[%s23 + $0x18] sm:$0xf]
  %v1134 = vld [vmem:[%s23 + $0x1c] sm:$0xf]
  %v1135 = vld [vmem:[%s24] sm:$0x1]
  %v1136 = vpack.c.bf16 %v1121, %v1121
  %v1138 = vlaneseq
  %v1139 = vshrl.u32 %v1138, 7
  %v1140 = vsub.s32 0, %v1139
  %v1141 = vrot.slane %v1126, %v1140
  %v1147 = vunpack.c.l.b16 %v1122
  %v1148 = vunpack.c.l.b16 %v1123
  %v1149 = vunpack.c.l.b16 %v1124
  %v1150 = vunpack.c.l.b16 %v1125
  %v1151 = vpack.c.b16 %v1148, %v1147
  %v1152 = vpack.c.b16 %v1150, %v1149
  %v1156 = vsel %vm120, %v1136, 0
  %1158 = vmatprep.subr.bf16.mxu0 0
  %1159 = vmatpush1.bf16.msra.mxu0 0
  %1160 = vmatprep.subr.bf16.mxu0 0
  %1161 = vmatpush1.bf16.msra.mxu0 0
  %1162 = vmatprep.subr.bf16.mxu0 0
  %1163 = vmatpush1.bf16.msra.mxu0 0
  %1164 = vmatprep.subr.bf16.mxu0 0
  %1165 = vmatpush1.bf16.msra.mxu0 0
  %1166 = vmatprep.subr.bf16.mxu0 0
  %1167 = vmatpush1.bf16.msra.mxu0 0
  %1168 = vmatprep.subr.bf16.mxu0 0
  %1169 = vmatpush1.bf16.msra.mxu0 0
  %1170 = vmatprep.subr.bf16.mxu0 0
  %1171 = vmatpush1.bf16.msra.mxu0 %v1152
  %1172 = vmatprep.subr.bf16.mxu0 0
  %1173 = vmatpush1.bf16.msra.mxu0 %v1151
  %1174 = vmatprep.subr.bf16.mxu0 0
  %1175 = vmatpush2.bf16.msra.mxu0 0
  %1176 = vmatprep.subr.bf16.mxu0 0
  %1177 = vmatpush2.bf16.msra.mxu0 0
  %1178 = vmatprep.subr.bf16.mxu0 0
  %1179 = vmatpush2.bf16.msra.mxu0 0
  %1180 = vmatprep.subr.bf16.mxu0 0
  %1181 = vmatpush2.bf16.msra.mxu0 0
  %1182 = vmatprep.subr.bf16.mxu0 0
  %1183 = vmatpush2.bf16.msra.mxu0 0
  %1184 = vmatprep.subr.bf16.mxu0 0
  %1185 = vmatpush2.bf16.msra.mxu0 0
  %1186 = vmatprep.subr.bf16.mxu0 0
  %1187 = vmatpush2.bf16.msra.mxu0 0
  %1188 = vmatprep.subr.bf16.mxu0 0
  %1189 = vmatpush2.bf16.msra.mxu0 0
  %1190 = vmatprep.mubr.bf16.mxu0 0
  %1191 = vmatmul.mubr.bf16.gmra.mxu0 %v1156
  %v1192 = vpop.f32.mrf.mxu0
  %v1193 = vadd.f32 %v1141, %v1192
  %v1194 = vpop.f32.mrf.mxu0
  %v1195 = vpop.f32.mrf.mxu0
  %v1196 = vpop.f32.mrf.mxu0
  %1197 = vdwg.mxu0
  %v1198 = vmul.f32 %v1193, 0.5
  %v1199 = vmul.f32 %v1193, 0.70710677
  %vm1200 = vcmp.ge.f32.partialorder %v1199, 0.0
  %v1201 = vsel %vm1200, 1.0, -1.0
  %v1202 = vand.u32 2147483647, %v1199
  %v1203 = vmul.f32 %v1202, 0.3275911
  %v1204 = vadd.f32 %v1203, 1.0
  %v1205 = vrcp.pop %v1204
  %v1206 = vmul.f32 1.0, %v1205
  %v1207 = vmul.f32 %v1206, 1.0614054
  %v1208 = vadd.f32 %v1207, -1.4531521
  %v1209 = vmul.f32 %v1208, %v1206
  %v1210 = vadd.f32 %v1209, 1.4214138
  %v1211 = vmul.f32 %v1210, %v1206
  %v1212 = vadd.f32 %v1211, -0.28449672
  %v1213 = vmul.f32 %v1212, %v1206
  %v1214 = vadd.f32 %v1213, 0.2548296
  %v1215 = vmul.f32 %v1214, %v1206
  %v1216 = vsub.f32 0.0, %v1202
  %v1217 = vmul.f32 %v1216, %v1202
  %v1218 = vmul.f32 %v1217, 1.442695
  %v1219 = vpow.pop %v1218
  %v1220 = vmul.f32 %v1215, %v1219
  %v1221 = vsub.f32 1.0, %v1220
  %v1222 = vmul.f32 %v1201, %v1221
  %v1223 = vadd.f32 %v1222, 1.0
  %v1224 = vmul.f32 %v1198, %v1223
  %v1225 = vpack.c.bf16 %v1224, %v1224
  %v1227 = vlaneseq
  %v1228 = vshrl.u32 %v1227, 7
  %v1229 = vsub.s32 0, %v1228
  %v1230 = vrot.slane %v1135, %v1229
  %v1240 = vunpack.c.l.b16 %v1127
  %v1241 = vunpack.c.l.b16 %v1128
  %v1242 = vunpack.c.l.b16 %v1129
  %v1243 = vunpack.c.l.b16 %v1130
  %v1244 = vunpack.c.l.b16 %v1131
  %v1245 = vunpack.c.l.b16 %v1132
  %v1246 = vunpack.c.l.b16 %v1133
  %v1247 = vunpack.c.l.b16 %v1134
  %v1248 = vpack.c.b16 %v1241, %v1240
  %v1249 = vpack.c.b16 %v1243, %v1242
  %v1250 = vpack.c.b16 %v1245, %v1244
  %v1251 = vpack.c.b16 %v1247, %v1246
  %v1257 = vsel %vm434, %v1225, 0
  %1259 = vmatprep.subr.bf16.mxu0 0
  %1260 = vmatpush1.bf16.msra.mxu0 0
  %1261 = vmatprep.subr.bf16.mxu0 0
  %1262 = vmatpush1.bf16.msra.mxu0 0
  %1263 = vmatprep.subr.bf16.mxu0 0
  %1264 = vmatpush1.bf16.msra.mxu0 0
  %1265 = vmatprep.subr.bf16.mxu0 0
  %1266 = vmatpush1.bf16.msra.mxu0 0
  %1267 = vmatprep.subr.bf16.mxu0 0
  %1268 = vmatpush1.bf16.msra.mxu0 %v1251
  %1269 = vmatprep.subr.bf16.mxu0 0
  %1270 = vmatpush1.bf16.msra.mxu0 %v1250
  %1271 = vmatprep.subr.bf16.mxu0 0
  %1272 = vmatpush1.bf16.msra.mxu0 %v1249
  %1273 = vmatprep.subr.bf16.mxu0 0
  %1274 = vmatpush1.bf16.msra.mxu0 %v1248
  %1275 = vmatprep.subr.bf16.mxu0 0
  %1276 = vmatpush2.bf16.msra.mxu0 0
  %1277 = vmatprep.subr.bf16.mxu0 0
  %1278 = vmatpush2.bf16.msra.mxu0 0
  %1279 = vmatprep.subr.bf16.mxu0 0
  %1280 = vmatpush2.bf16.msra.mxu0 0
  %1281 = vmatprep.subr.bf16.mxu0 0
  %1282 = vmatpush2.bf16.msra.mxu0 0
  %1283 = vmatprep.subr.bf16.mxu0 0
  %1284 = vmatpush2.bf16.msra.mxu0 0
  %1285 = vmatprep.subr.bf16.mxu0 0
  %1286 = vmatpush2.bf16.msra.mxu0 0
  %1287 = vmatprep.subr.bf16.mxu0 0
  %1288 = vmatpush2.bf16.msra.mxu0 0
  %1289 = vmatprep.subr.bf16.mxu0 0
  %1290 = vmatpush2.bf16.msra.mxu0 0
  %1291 = vmatprep.mubr.bf16.mxu0 0
  %1292 = vmatmul.mubr.bf16.gmra.mxu0 %v1257
  %v1293 = vpop.f32.mrf.mxu0
  %v1294 = vadd.f32 %v1230, %v1293
  %v1295 = vpop.f32.mrf.mxu0
  %v1296 = vpop.f32.mrf.mxu0
  %v1297 = vpop.f32.mrf.mxu0
  %1298 = vdwg.mxu0
  %v1299 = vadd.f32 %v1121, %v1294
  %v1300 = vld [vmem:[%s25] sm:$0x1]
  %v1301 = vld [vmem:[%s26] sm:$0x1]
  %v1302 = vsel %vm120, %v1299, 0.0
  %1303 = vadd.xlane.f32.xlu0 %v1302
  %v1304 = vpop.xlane.xlu0 %1303
  %v1305 = vmul.f32 %v1304, %v275
  %v1306 = vsub.f32 %v1299, %v1305
  %v1307 = vmul.f32 %v1306, %v1306
  %v1308 = vsel %vm120, %v1307, 0.0
  %1309 = vadd.xlane.f32.xlu0 %v1308
  %v1310 = vpop.xlane.xlu0 %1309
  %v1311 = vmul.f32 %v1310, %v275
  %v1312 = vadd.f32 %v1311, 1e-05
  %v1313 = vrsqrt.pop %v1312
  %v1314 = vmul.f32 %v1306, %v1313
  %v1316 = vlaneseq
  %v1317 = vshrl.u32 %v1316, 7
  %v1318 = vsub.s32 0, %v1317
  %v1319 = vrot.slane %v1300, %v1318
  %v1321 = vmul.f32 %v1314, %v1319
  %v1323 = vlaneseq
  %v1324 = vshrl.u32 %v1323, 7
  %v1325 = vsub.s32 0, %v1324
  %v1326 = vrot.slane %v1301, %v1325
  %v1328 = vadd.f32 %v1321, %v1326
  %1329 = vst.msk [vmem:[%s27] sm:$0xff] %vm120, %v1328
  // Predicated region
  $region110: #{_lambda_.13} parent=0 // pred_check
    _
  $region111: #{_lambda_.13} parent=0 // pred_check_branch
    %1331 = sbr.rel (0) target = $region113
  $region112: #{_lambda_.13} parent=0 // pred_region
    _
  $region113: #{_lambda_.13} parent=0 // pred_fallthru
    _
  // Predicated region
  $region114: #{_lambda_.13} parent=0 // pred_check
    _
  $region115: #{_lambda_.13} parent=0 // pred_check_branch
    %1333 = sbr.rel (0) target = $region117
  $region116: #{_lambda_.13} parent=0 // pred_region
    _
  $region117: #{_lambda_.13} parent=0 // pred_fallthru
    _

// kernel: _lambda_.15
$region0: #{_lambda_.15}
  #allocation0 [shape = 'u32[]', space=smem, size = 0x4, offset = 0x4, fixed_abs, tag = 'smem constant byte address 0x4 - core index']
  #allocation1 [shape = 'u32[144,128]{1,0:T(1,128)}', space=vmem, size = 0x12000, scoped, tag = 'internal scratch']
  %s0 = inlined_call_operand.vmem [shape: f32[16,32], index: 0, kind: input, shape index: {}]
  %s1 = inlined_call_operand.vmem [shape: f32[16,32], index: 1, kind: input, shape index: {}]
  %s2 = inlined_call_operand.vmem [shape: f32[16,16], index: 2, kind: input, shape index: {}]
  %s3 = inlined_call_operand.vmem [shape: bf16[32,128], index: 3, kind: input, shape index: {}]
  %s4 = inlined_call_operand.vmem [shape: f32[1,128], index: 4, kind: input, shape index: {}]
  %s5 = inlined_call_operand.vmem [shape: f32[1,32], index: 5, kind: input, shape index: {}]
  %s6 = inlined_call_operand.vmem [shape: f32[1,32], index: 6, kind: input, shape index: {}]
  %s7 = inlined_call_operand.vmem [shape: bf16[32,32], index: 7, kind: input, shape index: {}]
  %s8 = inlined_call_operand.vmem [shape: f32[1,32], index: 8, kind: input, shape index: {}]
  %s9 = inlined_call_operand.vmem [shape: bf16[32,32], index: 9, kind: input, shape index: {}]
  %s10 = inlined_call_operand.vmem [shape: f32[1,32], index: 10, kind: input, shape index: {}]
  %s11 = inlined_call_operand.vmem [shape: f32[1,32], index: 11, kind: input, shape index: {}]
  %s12 = inlined_call_operand.vmem [shape: f32[1,32], index: 12, kind: input, shape index: {}]
  %s13 = inlined_call_operand.vmem [shape: bf16[32,12], index: 13, kind: input, shape index: {}]
  %s14 = inlined_call_operand.vmem [shape: f32[1,12], index: 14, kind: input, shape index: {}]
  %s15 = inlined_call_operand.vmem [shape: f32[16,32], index: 15, kind: output, shape index: {0}]
  %s16 = inlined_call_operand.vmem [shape: f32[16,12], index: 16, kind: output, shape index: {1}]
  %17 = xla_tuple %s15, %s16
  %s18 = sld [smem:[#allocation0]]
  $region78: #{_lambda_.15} parent=0
    _
  %s20 = ssub.s32 1, %s18
  %s21 = scalar_select 0, %s20, %s18
  // Predicated region
  $region2: #{_lambda_.15} parent=0 // pred_check
    _
  $region3: #{_lambda_.15} parent=0 // pred_check_branch
    %23 = sbr.rel (0) target = $region5
  $region4: #{_lambda_.15} parent=0 // pred_region
    _
  $region5: #{_lambda_.15} parent=0 // pred_fallthru
    _
  // Predicated region
  $region6: #{_lambda_.15} parent=0 // pred_check
    _
  $region7: #{_lambda_.15} parent=0 // pred_check_branch
    %25 = sbr.rel (0) target = $region9
  $region8: #{_lambda_.15} parent=0 // pred_region
    _
  $region9: #{_lambda_.15} parent=0 // pred_fallthru
    _
  // Predicated region
  $region10: #{_lambda_.15} parent=0 // pred_check
    _
  $region11: #{_lambda_.15} parent=0 // pred_check_branch
    %27 = sbr.rel (0) target = $region13
  $region12: #{_lambda_.15} parent=0 // pred_region
    _
  $region13: #{_lambda_.15} parent=0 // pred_fallthru
    _
  // Predicated region
  $region14: #{_lambda_.15} parent=0 // pred_check
    _
  $region15: #{_lambda_.15} parent=0 // pred_check_branch
    %29 = sbr.rel (0) target = $region17
  $region16: #{_lambda_.15} parent=0 // pred_region
    _
  $region17: #{_lambda_.15} parent=0 // pred_fallthru
    _
  // Predicated region
  $region18: #{_lambda_.15} parent=0 // pred_check
    _
  $region19: #{_lambda_.15} parent=0 // pred_check_branch
    %31 = sbr.rel (0) target = $region21
  $region20: #{_lambda_.15} parent=0 // pred_region
    _
  $region21: #{_lambda_.15} parent=0 // pred_fallthru
    _
  // Predicated region
  $region22: #{_lambda_.15} parent=0 // pred_check
    _
  $region23: #{_lambda_.15} parent=0 // pred_check_branch
    %33 = sbr.rel (0) target = $region25
  $region24: #{_lambda_.15} parent=0 // pred_region
    _
  $region25: #{_lambda_.15} parent=0 // pred_fallthru
    _
  // Predicated region
  $region26: #{_lambda_.15} parent=0 // pred_check
    _
  $region27: #{_lambda_.15} parent=0 // pred_check_branch
    %35 = sbr.rel (0) target = $region29
  $region28: #{_lambda_.15} parent=0 // pred_region
    _
  $region29: #{_lambda_.15} parent=0 // pred_fallthru
    _
  // Predicated region
  $region30: #{_lambda_.15} parent=0 // pred_check
    _
  $region31: #{_lambda_.15} parent=0 // pred_check_branch
    %37 = sbr.rel (0) target = $region33
  $region32: #{_lambda_.15} parent=0 // pred_region
    _
  $region33: #{_lambda_.15} parent=0 // pred_fallthru
    _
  // Predicated region
  $region34: #{_lambda_.15} parent=0 // pred_check
    _
  $region35: #{_lambda_.15} parent=0 // pred_check_branch
    %39 = sbr.rel (0) target = $region37
  $region36: #{_lambda_.15} parent=0 // pred_region
    _
  $region37: #{_lambda_.15} parent=0 // pred_fallthru
    _
  // Predicated region
  $region38: #{_lambda_.15} parent=0 // pred_check
    _
  $region39: #{_lambda_.15} parent=0 // pred_check_branch
    %41 = sbr.rel (0) target = $region41
  $region40: #{_lambda_.15} parent=0 // pred_region
    _
  $region41: #{_lambda_.15} parent=0 // pred_fallthru
    _
  // Predicated region
  $region42: #{_lambda_.15} parent=0 // pred_check
    _
  $region43: #{_lambda_.15} parent=0 // pred_check_branch
    %43 = sbr.rel (0) target = $region45
  $region44: #{_lambda_.15} parent=0 // pred_region
    _
  $region45: #{_lambda_.15} parent=0 // pred_fallthru
    _
  // Predicated region
  $region46: #{_lambda_.15} parent=0 // pred_check
    _
  $region47: #{_lambda_.15} parent=0 // pred_check_branch
    %45 = sbr.rel (0) target = $region49
  $region48: #{_lambda_.15} parent=0 // pred_region
    _
  $region49: #{_lambda_.15} parent=0 // pred_fallthru
    _
  // Predicated region
  $region50: #{_lambda_.15} parent=0 // pred_check
    _
  $region51: #{_lambda_.15} parent=0 // pred_check_branch
    %47 = sbr.rel (0) target = $region53
  $region52: #{_lambda_.15} parent=0 // pred_region
    _
  $region53: #{_lambda_.15} parent=0 // pred_fallthru
    _
  // Predicated region
  $region54: #{_lambda_.15} parent=0 // pred_check
    _
  $region55: #{_lambda_.15} parent=0 // pred_check_branch
    %49 = sbr.rel (0) target = $region57
  $region56: #{_lambda_.15} parent=0 // pred_region
    _
  $region57: #{_lambda_.15} parent=0 // pred_fallthru
    _
  // Predicated region
  $region58: #{_lambda_.15} parent=0 // pred_check
    _
  $region59: #{_lambda_.15} parent=0 // pred_check_branch
    %51 = sbr.rel (0) target = $region61
  $region60: #{_lambda_.15} parent=0 // pred_region
    _
  $region61: #{_lambda_.15} parent=0 // pred_fallthru
    _
  %v53 = vld [vmem:[%s0] sm:$0xff]
  %v54 = vld [vmem:[%s0 + $0x8] sm:$0xff]
  %v55 = vld [vmem:[%s1] sm:$0xff]
  %v56 = vld [vmem:[%s1 + $0x8] sm:$0xff]
  %v57 = vld [vmem:[%s2] sm:$0xff]
  %v58 = vld [vmem:[%s2 + $0x8] sm:$0xff]
  %v59 = vld [vmem:[%s3] sm:$0xf]
  %v60 = vld [vmem:[%s3 + $0x4] sm:$0xf]
  %v61 = vld [vmem:[%s3 + $0x8] sm:$0xf]
  %v62 = vld [vmem:[%s3 + $0xc] sm:$0xf]
  %v63 = vld [vmem:[%s4] sm:$0x1]
  %v64 = vpack.c.bf16 %v54, %v53
  %v66 = vlaneseq
  %v67 = vshrl.u32 %v66, 7
  %v68 = vsub.s32 0, %v67
  %v69 = vrot.slane %v63, %v68
  %v75 = vunpack.c.l.b16 %v59
  %v76 = vunpack.c.l.b16 %v60
  %v77 = vunpack.c.l.b16 %v61
  %v78 = vunpack.c.l.b16 %v62
  %v79 = vpack.c.b16 %v76, %v75
  %v80 = vpack.c.b16 %v78, %v77
  %vm83 = vcmask 261120
  %v85 = vsel %vm83, %v64, 0
  %87 = vmatprep.subr.bf16.mxu0 0
  %88 = vmatpush1.bf16.msra.mxu0 0
  %89 = vmatprep.subr.bf16.mxu0 0
  %90 = vmatpush1.bf16.msra.mxu0 0
  %91 = vmatprep.subr.bf16.mxu0 0
  %92 = vmatpush1.bf16.msra.mxu0 0
  %93 = vmatprep.subr.bf16.mxu0 0
  %94 = vmatpush1.bf16.msra.mxu0 0
  %95 = vmatprep.subr.bf16.mxu0 0
  %96 = vmatpush1.bf16.msra.mxu0 0
  %97 = vmatprep.subr.bf16.mxu0 0
  %98 = vmatpush1.bf16.msra.mxu0 0
  %99 = vmatprep.subr.bf16.mxu0 0
  %100 = vmatpush1.bf16.msra.mxu0 %v80
  %101 = vmatprep.subr.bf16.mxu0 0
  %102 = vmatpush1.bf16.msra.mxu0 %v79
  %103 = vmatprep.subr.bf16.mxu0 0
  %104 = vmatpush2.bf16.msra.mxu0 0
  %105 = vmatprep.subr.bf16.mxu0 0
  %106 = vmatpush2.bf16.msra.mxu0 0
  %107 = vmatprep.subr.bf16.mxu0 0
  %108 = vmatpush2.bf16.msra.mxu0 0
  %109 = vmatprep.subr.bf16.mxu0 0
  %110 = vmatpush2.bf16.msra.mxu0 0
  %111 = vmatprep.subr.bf16.mxu0 0
  %112 = vmatpush2.bf16.msra.mxu0 0
  %113 = vmatprep.subr.bf16.mxu0 0
  %114 = vmatpush2.bf16.msra.mxu0 0
  %115 = vmatprep.subr.bf16.mxu0 0
  %116 = vmatpush2.bf16.msra.mxu0 0
  %117 = vmatprep.subr.bf16.mxu0 0
  %118 = vmatpush2.bf16.msra.mxu0 0
  %119 = vmatprep.mubr.bf16.mxu0 0
  %120 = vmatmul.mubr.bf16.gmra.mxu0 %v85
  %v121 = vpop.f32.mrf.mxu0
  %v122 = vadd.f32 %v69, %v121
  %v123 = vpop.f32.mrf.mxu0
  %v124 = vpop.f32.mrf.mxu0
  %v125 = vadd.f32 %v69, %v124
  %v126 = vpop.f32.mrf.mxu0
  %127 = vdwg.mxu0
  %v128 = vpack.c.bf16 %v56, %v55
  %129 = vrot.lane.b32.xlu0 %v79, 96
  %v130 = vpop.permute.xlu0 %129
  %131 = vrot.lane.b32.xlu0 %v80, 96
  %v132 = vpop.permute.xlu0 %131
  %135 = vrot.lane.b32.xlu0 %v69, 96
  %v136 = vpop.permute.xlu0 %135
  %v139 = vsel %vm83, %v128, 0
  %141 = vmatprep.subr.bf16.mxu0 0
  %142 = vmatpush1.bf16.msra.mxu0 0
  %143 = vmatprep.subr.bf16.mxu0 0
  %144 = vmatpush1.bf16.msra.mxu0 0
  %145 = vmatprep.subr.bf16.mxu0 0
  %146 = vmatpush1.bf16.msra.mxu0 0
  %147 = vmatprep.subr.bf16.mxu0 0
  %148 = vmatpush1.bf16.msra.mxu0 0
  %149 = vmatprep.subr.bf16.mxu0 0
  %150 = vmatpush1.bf16.msra.mxu0 0
  %151 = vmatprep.subr.bf16.mxu0 0
  %152 = vmatpush1.bf16.msra.mxu0 0
  %153 = vmatprep.subr.bf16.mxu0 0
  %154 = vmatpush1.bf16.msra.mxu0 %v132
  %155 = vmatprep.subr.bf16.mxu0 0
  %156 = vmatpush1.bf16.msra.mxu0 %v130
  %157 = vmatprep.subr.bf16.mxu0 0
  %158 = vmatpush2.bf16.msra.mxu0 0
  %159 = vmatprep.subr.bf16.mxu0 0
  %160 = vmatpush2.bf16.msra.mxu0 0
  %161 = vmatprep.subr.bf16.mxu0 0
  %162 = vmatpush2.bf16.msra.mxu0 0
  %163 = vmatprep.subr.bf16.mxu0 0
  %164 = vmatpush2.bf16.msra.mxu0 0
  %165 = vmatprep.subr.bf16.mxu0 0
  %166 = vmatpush2.bf16.msra.mxu0 0
  %167 = vmatprep.subr.bf16.mxu0 0
  %168 = vmatpush2.bf16.msra.mxu0 0
  %169 = vmatprep.subr.bf16.mxu0 0
  %170 = vmatpush2.bf16.msra.mxu0 0
  %171 = vmatprep.subr.bf16.mxu0 0
  %172 = vmatpush2.bf16.msra.mxu0 0
  %173 = vmatprep.mubr.bf16.mxu0 0
  %174 = vmatmul.mubr.bf16.gmra.mxu0 %v139
  %v175 = vpop.f32.mrf.mxu0
  %v176 = vadd.f32 %v136, %v175
  %v177 = vpop.f32.mrf.mxu0
  %v178 = vpop.f32.mrf.mxu0
  %v179 = vadd.f32 %v136, %v178
  %v180 = vpop.f32.mrf.mxu0
  %181 = vdwg.mxu0
  %v182 = vpack.c.bf16 %v125, %v122
  %v183 = vpack.c.bf16 %v179, %v176
  %vm184 = vcmask 130048
  %v186 = vsel %vm184, %v182, 0
  %v189 = vsel %vm184, %v183, 0
  %191 = vmatprep.subr.bf16.mxu0 0
  %192 = vmatpush1.bf16.xpose.msra.mxu0 0
  %193 = vmatprep.subr.bf16.mxu0 0
  %194 = vmatpush1.bf16.xpose.msra.mxu0 0
  %195 = vmatprep.subr.bf16.mxu0 0
  %196 = vmatpush1.bf16.xpose.msra.mxu0 0
  %197 = vmatprep.subr.bf16.mxu0 0
  %198 = vmatpush1.bf16.xpose.msra.mxu0 0
  %199 = vmatprep.subr.bf16.mxu0 0
  %200 = vmatpush1.bf16.xpose.msra.mxu0 0
  %201 = vmatprep.subr.bf16.mxu0 0
  %202 = vmatpush1.bf16.xpose.msra.mxu0 0
  %203 = vmatprep.subr.bf16.mxu0 0
  %204 = vmatpush1.bf16.xpose.msra.mxu0 0
  %205 = vmatprep.subr.bf16.mxu0 0
  %206 = vmatpush1.bf16.xpose.msra.mxu0 %v189
  %207 = vmatprep.subr.bf16.mxu0 0
  %208 = vmatpush2.bf16.xpose.msra.mxu0 0
  %209 = vmatprep.subr.bf16.mxu0 0
  %210 = vmatpush2.bf16.xpose.msra.mxu0 0
  %211 = vmatprep.subr.bf16.mxu0 0
  %212 = vmatpush2.bf16.xpose.msra.mxu0 0
  %213 = vmatprep.subr.bf16.mxu0 0
  %214 = vmatpush2.bf16.xpose.msra.mxu0 0
  %215 = vmatprep.subr.bf16.mxu0 0
  %216 = vmatpush2.bf16.xpose.msra.mxu0 0
  %217 = vmatprep.subr.bf16.mxu0 0
  %218 = vmatpush2.bf16.xpose.msra.mxu0 0
  %219 = vmatprep.subr.bf16.mxu0 0
  %220 = vmatpush2.bf16.xpose.msra.mxu0 0
  %221 = vmatprep.subr.bf16.mxu0 0
  %222 = vmatpush2.bf16.xpose.msra.mxu0 0
  %223 = vmatprep.mubr.bf16.mxu0 0
  %224 = vmatmul.mubr.bf16.gmra.mxu0 %v186
  %v225 = vpop.f32.mrf.mxu0
  %v226 = vadd.f32 0.0, %v225
  %v227 = vpop.f32.mrf.mxu0
  %v228 = vpop.f32.mrf.mxu0
  %v229 = vadd.f32 0.0, %v228
  %v230 = vpop.f32.mrf.mxu0
  %231 = vdwg.mxu0
  %v232 = vmul.f32 %v226, 0.25
  %v233 = vmul.f32 %v229, 0.25
  %v234 = vadd.f32 %v232, %v57
  %v235 = vadd.f32 %v233, %v58
  %v236 = vsel %vm184, %v234, -inf
  %237 = vmax.xlane.f32.xlu0 %v236
  %v238 = vpop.xlane.xlu0 %237
  %v239 = vsel %vm184, %v235, -inf
  %240 = vmax.xlane.f32.xlu0 %v239
  %v241 = vpop.xlane.xlu0 %240
  %v242 = vsub.f32 %v234, %v238
  %v243 = vsub.f32 %v235, %v241
  %v244 = vmul.f32 %v242, 1.442695
  %v245 = vpow.pop %v244
  %v246 = vmul.f32 %v243, 1.442695
  %v247 = vpow.pop %v246
  %v248 = vsel %vm184, %v245, 0.0
  %249 = vadd.xlane.f32.xlu0 %v248
  %v250 = vpop.xlane.xlu0 %249
  %v251 = vsel %vm184, %v247, 0.0
  %252 = vadd.xlane.f32.xlu0 %v251
  %v253 = vpop.xlane.xlu0 %252
  %v254 = vrcp.pop %v250
  %v255 = vrcp.pop %v253
  %v256 = vmul.f32 %v245, %v254
  %v257 = vmul.f32 %v247, %v255
  %v258 = vpack.c.bf16 %v257, %v256
  %260 = vrot.lane.b32.xlu0 %v183, 96
  %v261 = vpop.permute.xlu0 %260
  %v264 = vsel %vm184, %v258, 0
  %266 = vmatprep.subr.bf16.mxu0 0
  %267 = vmatpush1.bf16.msra.mxu0 0
  %268 = vmatprep.subr.bf16.mxu0 0
  %269 = vmatpush1.bf16.msra.mxu0 0
  %270 = vmatprep.subr.bf16.mxu0 0
  %271 = vmatpush1.bf16.msra.mxu0 0
  %272 = vmatprep.subr.bf16.mxu0 0
  %273 = vmatpush1.bf16.msra.mxu0 0
  %274 = vmatprep.subr.bf16.mxu0 0
  %275 = vmatpush1.bf16.msra.mxu0 0
  %276 = vmatprep.subr.bf16.mxu0 0
  %277 = vmatpush1.bf16.msra.mxu0 0
  %278 = vmatprep.subr.bf16.mxu0 0
  %279 = vmatpush1.bf16.msra.mxu0 0
  %280 = vmatprep.subr.bf16.mxu0 0
  %281 = vmatpush1.bf16.msra.mxu0 %v261
  %282 = vmatprep.subr.bf16.mxu0 0
  %283 = vmatpush2.bf16.msra.mxu0 0
  %284 = vmatprep.subr.bf16.mxu0 0
  %285 = vmatpush2.bf16.msra.mxu0 0
  %286 = vmatprep.subr.bf16.mxu0 0
  %287 = vmatpush2.bf16.msra.mxu0 0
  %288 = vmatprep.subr.bf16.mxu0 0
  %289 = vmatpush2.bf16.msra.mxu0 0
  %290 = vmatprep.subr.bf16.mxu0 0
  %291 = vmatpush2.bf16.msra.mxu0 0
  %292 = vmatprep.subr.bf16.mxu0 0
  %293 = vmatpush2.bf16.msra.mxu0 0
  %294 = vmatprep.subr.bf16.mxu0 0
  %295 = vmatpush2.bf16.msra.mxu0 0
  %296 = vmatprep.subr.bf16.mxu0 0
  %297 = vmatpush2.bf16.msra.mxu0 0
  %298 = vmatprep.mubr.bf16.mxu0 0
  %299 = vmatmul.mubr.bf16.gmra.mxu0 %v264
  %v300 = vpop.f32.mrf.mxu0
  %v301 = vadd.f32 0.0, %v300
  %v302 = vpop.f32.mrf.mxu0
  %v303 = vpop.f32.mrf.mxu0
  %v304 = vadd.f32 0.0, %v303
  %v305 = vpop.f32.mrf.mxu0
  %306 = vdwg.mxu0
  %308 = vrot.lane.b32.xlu0 %v182, 112
  %v309 = vpop.permute.xlu0 %308
  %310 = vrot.lane.b32.xlu0 %v183, 112
  %v311 = vpop.permute.xlu0 %310
  %v313 = vsel %vm184, %v309, 0
  %v316 = vsel %vm184, %v311, 0
  %318 = vmatprep.subr.bf16.mxu0 0
  %319 = vmatpush1.bf16.xpose.msra.mxu0 0
  %320 = vmatprep.subr.bf16.mxu0 0
  %321 = vmatpush1.bf16.xpose.msra.mxu0 0
  %322 = vmatprep.subr.bf16.mxu0 0
  %323 = vmatpush1.bf16.xpose.msra.mxu0 0
  %324 = vmatprep.subr.bf16.mxu0 0
  %325 = vmatpush1.bf16.xpose.msra.mxu0 0
  %326 = vmatprep.subr.bf16.mxu0 0
  %327 = vmatpush1.bf16.xpose.msra.mxu0 0
  %328 = vmatprep.subr.bf16.mxu0 0
  %329 = vmatpush1.bf16.xpose.msra.mxu0 0
  %330 = vmatprep.subr.bf16.mxu0 0
  %331 = vmatpush1.bf16.xpose.msra.mxu0 0
  %332 = vmatprep.subr.bf16.mxu0 0
  %333 = vmatpush1.bf16.xpose.msra.mxu0 %v316
  %334 = vmatprep.subr.bf16.mxu0 0
  %335 = vmatpush2.bf16.xpose.msra.mxu0 0
  %336 = vmatprep.subr.bf16.mxu0 0
  %337 = vmatpush2.bf16.xpose.msra.mxu0 0
  %338 = vmatprep.subr.bf16.mxu0 0
  %339 = vmatpush2.bf16.xpose.msra.mxu0 0
  %340 = vmatprep.subr.bf16.mxu0 0
  %341 = vmatpush2.bf16.xpose.msra.mxu0 0
  %342 = vmatprep.subr.bf16.mxu0 0
  %343 = vmatpush2.bf16.xpose.msra.mxu0 0
  %344 = vmatprep.subr.bf16.mxu0 0
  %345 = vmatpush2.bf16.xpose.msra.mxu0 0
  %346 = vmatprep.subr.bf16.mxu0 0
  %347 = vmatpush2.bf16.xpose.msra.mxu0 0
  %348 = vmatprep.subr.bf16.mxu0 0
  %349 = vmatpush2.bf16.xpose.msra.mxu0 0
  %350 = vmatprep.mubr.bf16.mxu0 0
  %351 = vmatmul.mubr.bf16.gmra.mxu0 %v313
  %v352 = vpop.f32.mrf.mxu0
  %v353 = vadd.f32 0.0, %v352
  %v354 = vpop.f32.mrf.mxu0
  %v355 = vpop.f32.mrf.mxu0
  %v356 = vadd.f32 0.0, %v355
  %v357 = vpop.f32.mrf.mxu0
  %358 = vdwg.mxu0
  %v359 = vmul.f32 %v353, 0.25
  %v360 = vmul.f32 %v356, 0.25
  %v361 = vadd.f32 %v359, %v57
  %v362 = vadd.f32 %v360, %v58
  %v363 = vsel %vm184, %v361, -inf
  %364 = vmax.xlane.f32.xlu0 %v363
  %v365 = vpop.xlane.xlu0 %364
  %v366 = vsel %vm184, %v362, -inf
  %367 = vmax.xlane.f32.xlu0 %v366
  %v368 = vpop.xlane.xlu0 %367
  %v369 = vsub.f32 %v361, %v365
  %v370 = vsub.f32 %v362, %v368
  %v371 = vmul.f32 %v369, 1.442695
  %v372 = vpow.pop %v371
  %v373 = vmul.f32 %v370, 1.442695
  %v374 = vpow.pop %v373
  %v375 = vsel %vm184, %v372, 0.0
  %376 = vadd.xlane.f32.xlu0 %v375
  %v377 = vpop.xlane.xlu0 %376
  %v378 = vsel %vm184, %v374, 0.0
  %379 = vadd.xlane.f32.xlu0 %v378
  %v380 = vpop.xlane.xlu0 %379
  %v381 = vrcp.pop %v377
  %v382 = vrcp.pop %v380
  %v383 = vmul.f32 %v372, %v381
  %v384 = vmul.f32 %v374, %v382
  %v385 = vpack.c.bf16 %v384, %v383
  %386 = vrot.lane.b32.xlu0 %v183, 80
  %v387 = vpop.permute.xlu0 %386
  %v390 = vsel %vm184, %v385, 0
  %392 = vmatprep.subr.bf16.mxu0 0
  %393 = vmatpush1.bf16.msra.mxu0 0
  %394 = vmatprep.subr.bf16.mxu0 0
  %395 = vmatpush1.bf16.msra.mxu0 0
  %396 = vmatprep.subr.bf16.mxu0 0
  %397 = vmatpush1.bf16.msra.mxu0 0
  %398 = vmatprep.subr.bf16.mxu0 0
  %399 = vmatpush1.bf16.msra.mxu0 0
  %400 = vmatprep.subr.bf16.mxu0 0
  %401 = vmatpush1.bf16.msra.mxu0 0
  %402 = vmatprep.subr.bf16.mxu0 0
  %403 = vmatpush1.bf16.msra.mxu0 0
  %404 = vmatprep.subr.bf16.mxu0 0
  %405 = vmatpush1.bf16.msra.mxu0 0
  %406 = vmatprep.subr.bf16.mxu0 0
  %407 = vmatpush1.bf16.msra.mxu0 %v387
  %408 = vmatprep.subr.bf16.mxu0 0
  %409 = vmatpush2.bf16.msra.mxu0 0
  %410 = vmatprep.subr.bf16.mxu0 0
  %411 = vmatpush2.bf16.msra.mxu0 0
  %412 = vmatprep.subr.bf16.mxu0 0
  %413 = vmatpush2.bf16.msra.mxu0 0
  %414 = vmatprep.subr.bf16.mxu0 0
  %415 = vmatpush2.bf16.msra.mxu0 0
  %416 = vmatprep.subr.bf16.mxu0 0
  %417 = vmatpush2.bf16.msra.mxu0 0
  %418 = vmatprep.subr.bf16.mxu0 0
  %419 = vmatpush2.bf16.msra.mxu0 0
  %420 = vmatprep.subr.bf16.mxu0 0
  %421 = vmatpush2.bf16.msra.mxu0 0
  %422 = vmatprep.subr.bf16.mxu0 0
  %423 = vmatpush2.bf16.msra.mxu0 0
  %424 = vmatprep.mubr.bf16.mxu0 0
  %425 = vmatmul.mubr.bf16.gmra.mxu0 %v390
  %v426 = vpop.f32.mrf.mxu0
  %v427 = vadd.f32 0.0, %v426
  %v428 = vpop.f32.mrf.mxu0
  %v429 = vpop.f32.mrf.mxu0
  %v430 = vadd.f32 0.0, %v429
  %v431 = vpop.f32.mrf.mxu0
  %432 = vdwg.mxu0
  %435 = vrot.lane.b32.xlu0 %v427, 16
  %v436 = vpop.permute.xlu0 %435
  %437 = vrot.lane.b32.xlu0 %v430, 16
  %v438 = vpop.permute.xlu0 %437
  %v441 = vsel %vm184, %v301, %v436
  %v442 = vsel %vm184, %v304, %v438
  %v443 = vpack.c.bf16 %v442, %v441
  %444 = vrot.lane.b32.xlu0 %v79, 32
  %v445 = vpop.permute.xlu0 %444
  %446 = vrot.lane.b32.xlu0 %v80, 32
  %v447 = vpop.permute.xlu0 %446
  %450 = vrot.lane.b32.xlu0 %v69, 32
  %v451 = vpop.permute.xlu0 %450
  %v454 = vsel %vm83, %v443, 0
  %456 = vmatprep.subr.bf16.mxu0 0
  %457 = vmatpush1.bf16.msra.mxu0 0
  %458 = vmatprep.subr.bf16.mxu0 0
  %459 = vmatpush1.bf16.msra.mxu0 0
  %460 = vmatprep.subr.bf16.mxu0 0
  %461 = vmatpush1.bf16.msra.mxu0 0
  %462 = vmatprep.subr.bf16.mxu0 0
  %463 = vmatpush1.bf16.msra.mxu0 0
  %464 = vmatprep.subr.bf16.mxu0 0
  %465 = vmatpush1.bf16.msra.mxu0 0
  %466 = vmatprep.subr.bf16.mxu0 0
  %467 = vmatpush1.bf16.msra.mxu0 0
  %468 = vmatprep.subr.bf16.mxu0 0
  %469 = vmatpush1.bf16.msra.mxu0 %v447
  %470 = vmatprep.subr.bf16.mxu0 0
  %471 = vmatpush1.bf16.msra.mxu0 %v445
  %472 = vmatprep.subr.bf16.mxu0 0
  %473 = vmatpush2.bf16.msra.mxu0 0
  %474 = vmatprep.subr.bf16.mxu0 0
  %475 = vmatpush2.bf16.msra.mxu0 0
  %476 = vmatprep.subr.bf16.mxu0 0
  %477 = vmatpush2.bf16.msra.mxu0 0
  %478 = vmatprep.subr.bf16.mxu0 0
  %479 = vmatpush2.bf16.msra.mxu0 0
  %480 = vmatprep.subr.bf16.mxu0 0
  %481 = vmatpush2.bf16.msra.mxu0 0
  %482 = vmatprep.subr.bf16.mxu0 0
  %483 = vmatpush2.bf16.msra.mxu0 0
  %484 = vmatprep.subr.bf16.mxu0 0
  %485 = vmatpush2.bf16.msra.mxu0 0
  %486 = vmatprep.subr.bf16.mxu0 0
  %487 = vmatpush2.bf16.msra.mxu0 0
  %488 = vmatprep.mubr.bf16.mxu0 0
  %489 = vmatmul.mubr.bf16.gmra.mxu0 %v454
  %v490 = vpop.f32.mrf.mxu0
  %v491 = vadd.f32 %v451, %v490
  %v492 = vpop.f32.mrf.mxu0
  %v493 = vpop.f32.mrf.mxu0
  %v494 = vadd.f32 %v451, %v493
  %v495 = vpop.f32.mrf.mxu0
  %496 = vdwg.mxu0
  %v497 = vadd.f32 %v53, %v491
  %v498 = vadd.f32 %v54, %v494
  %v499 = vld [vmem:[%s5] sm:$0x1]
  %v500 = vld [vmem:[%s6] sm:$0x1]
  %v501 = vsel %vm83, %v497, 0.0
  %502 = vadd.xlane.f32.xlu0 %v501
  %v503 = vpop.xlane.xlu0 %502
  %v504 = vsel %vm83, %v498, 0.0
  %505 = vadd.xlane.f32.xlu0 %v504
  %v506 = vpop.xlane.xlu0 %505
  %v507 = vrcp.pop 32.0
  %v508 = vmul.f32 %v503, %v507
  %v509 = vmul.f32 %v506, %v507
  %v510 = vsub.f32 %v497, %v508
  %v511 = vsub.f32 %v498, %v509
  %v512 = vmul.f32 %v510, %v510
  %v513 = vmul.f32 %v511, %v511
  %v514 = vsel %vm83, %v512, 0.0
  %515 = vadd.xlane.f32.xlu0 %v514
  %v516 = vpop.xlane.xlu0 %515
  %v517 = vsel %vm83, %v513, 0.0
  %518 = vadd.xlane.f32.xlu0 %v517
  %v519 = vpop.xlane.xlu0 %518
  %v520 = vmul.f32 %v516, %v507
  %v521 = vmul.f32 %v519, %v507
  %v522 = vadd.f32 %v520, 1e-05
  %v523 = vadd.f32 %v521, 1e-05
  %v524 = vrsqrt.pop %v522
  %v525 = vrsqrt.pop %v523
  %v526 = vmul.f32 %v510, %v524
  %v527 = vmul.f32 %v511, %v525
  %v529 = vlaneseq
  %v530 = vshrl.u32 %v529, 7
  %v531 = vsub.s32 0, %v530
  %v532 = vrot.slane %v499, %v531
  %v534 = vmul.f32 %v526, %v532
  %v535 = vmul.f32 %v527, %v532
  %v537 = vlaneseq
  %v538 = vshrl.u32 %v537, 7
  %v539 = vsub.s32 0, %v538
  %v540 = vrot.slane %v500, %v539
  %v542 = vadd.f32 %v534, %v540
  %v543 = vadd.f32 %v535, %v540
  %v544 = vld [vmem:[%s7] sm:$0xf]
  %v545 = vld [vmem:[%s7 + $0x4] sm:$0xf]
  %v546 = vld [vmem:[%s7 + $0x8] sm:$0xf]
  %v547 = vld [vmem:[%s7 + $0xc] sm:$0xf]
  %v548 = vld [vmem:[%s8] sm:$0x1]
  %v549 = vld [vmem:[%s9] sm:$0xf]
  %v550 = vld [vmem:[%s9 + $0x4] sm:$0xf]
  %v551 = vld [vmem:[%s9 + $0x8] sm:$0xf]
  %v552 = vld [vmem:[%s9 + $0xc] sm:$0xf]
  %v553 = vld [vmem:[%s10] sm:$0x1]
  %v554 = vpack.c.bf16 %v543, %v542
  %v556 = vlaneseq
  %v557 = vshrl.u32 %v556, 7
  %v558 = vsub.s32 0, %v557
  %v559 = vrot.slane %v548, %v558
  %v565 = vunpack.c.l.b16 %v544
  %v566 = vunpack.c.l.b16 %v545
  %v567 = vunpack.c.l.b16 %v546
  %v568 = vunpack.c.l.b16 %v547
  %v569 = vpack.c.b16 %v566, %v565
  %v570 = vpack.c.b16 %v568, %v567
  %v574 = vsel %vm83, %v554, 0
  %576 = vmatprep.subr.bf16.mxu0 0
  %577 = vmatpush1.bf16.msra.mxu0 0
  %578 = vmatprep.subr.bf16.mxu0 0
  %579 = vmatpush1.bf16.msra.mxu0 0
  %580 = vmatprep.subr.bf16.mxu0 0
  %581 = vmatpush1.bf16.msra.mxu0 0
  %582 = vmatprep.subr.bf16.mxu0 0
  %583 = vmatpush1.bf16.msra.mxu0 0
  %584 = vmatprep.subr.bf16.mxu0 0
  %585 = vmatpush1.bf16.msra.mxu0 0
  %586 = vmatprep.subr.bf16.mxu0 0
  %587 = vmatpush1.bf16.msra.mxu0 0
  %588 = vmatprep.subr.bf16.mxu0 0
  %589 = vmatpush1.bf16.msra.mxu0 %v570
  %590 = vmatprep.subr.bf16.mxu0 0
  %591 = vmatpush1.bf16.msra.mxu0 %v569
  %592 = vmatprep.subr.bf16.mxu0 0
  %593 = vmatpush2.bf16.msra.mxu0 0
  %594 = vmatprep.subr.bf16.mxu0 0
  %595 = vmatpush2.bf16.msra.mxu0 0
  %596 = vmatprep.subr.bf16.mxu0 0
  %597 = vmatpush2.bf16.msra.mxu0 0
  %598 = vmatprep.subr.bf16.mxu0 0
  %599 = vmatpush2.bf16.msra.mxu0 0
  %600 = vmatprep.subr.bf16.mxu0 0
  %601 = vmatpush2.bf16.msra.mxu0 0
  %602 = vmatprep.subr.bf16.mxu0 0
  %603 = vmatpush2.bf16.msra.mxu0 0
  %604 = vmatprep.subr.bf16.mxu0 0
  %605 = vmatpush2.bf16.msra.mxu0 0
  %606 = vmatprep.subr.bf16.mxu0 0
  %607 = vmatpush2.bf16.msra.mxu0 0
  %608 = vmatprep.mubr.bf16.mxu0 0
  %609 = vmatmul.mubr.bf16.gmra.mxu0 %v574
  %v610 = vpop.f32.mrf.mxu0
  %v611 = vadd.f32 %v559, %v610
  %v612 = vpop.f32.mrf.mxu0
  %v613 = vpop.f32.mrf.mxu0
  %v614 = vadd.f32 %v559, %v613
  %v615 = vpop.f32.mrf.mxu0
  %616 = vdwg.mxu0
  %v617 = vmul.f32 %v611, 0.5
  %v618 = vmul.f32 %v614, 0.5
  %v619 = vmul.f32 %v611, 0.70710677
  %v620 = vmul.f32 %v614, 0.70710677
  %vm621 = vcmp.ge.f32.partialorder %v619, 0.0
  %vm622 = vcmp.ge.f32.partialorder %v620, 0.0
  %v623 = vsel %vm621, 1.0, -1.0
  %v624 = vsel %vm622, 1.0, -1.0
  %v625 = vand.u32 2147483647, %v619
  %v626 = vand.u32 2147483647, %v620
  %v627 = vmul.f32 %v625, 0.3275911
  %v628 = vmul.f32 %v626, 0.3275911
  %v629 = vadd.f32 %v627, 1.0
  %v630 = vadd.f32 %v628, 1.0
  %v631 = vrcp.pop %v629
  %v632 = vmul.f32 1.0, %v631
  %v633 = vrcp.pop %v630
  %v634 = vmul.f32 1.0, %v633
  %v635 = vmul.f32 %v632, 1.0614054
  %v636 = vmul.f32 %v634, 1.0614054
  %v637 = vadd.f32 %v635, -1.4531521
  %v638 = vadd.f32 %v636, -1.4531521
  %v639 = vmul.f32 %v637, %v632
  %v640 = vmul.f32 %v638, %v634
  %v641 = vadd.f32 %v639, 1.4214138
  %v642 = vadd.f32 %v640, 1.4214138
  %v643 = vmul.f32 %v641, %v632
  %v644 = vmul.f32 %v642, %v634
  %v645 = vadd.f32 %v643, -0.28449672
  %v646 = vadd.f32 %v644, -0.28449672
  %v647 = vmul.f32 %v645, %v632
  %v648 = vmul.f32 %v646, %v634
  %v649 = vadd.f32 %v647, 0.2548296
  %v650 = vadd.f32 %v648, 0.2548296
  %v651 = vmul.f32 %v649, %v632
  %v652 = vmul.f32 %v650, %v634
  %v653 = vsub.f32 0.0, %v625
  %v654 = vsub.f32 0.0, %v626
  %v655 = vmul.f32 %v653, %v625
  %v656 = vmul.f32 %v654, %v626
  %v657 = vmul.f32 %v655, 1.442695
  %v658 = vpow.pop %v657
  %v659 = vmul.f32 %v656, 1.442695
  %v660 = vpow.pop %v659
  %v661 = vmul.f32 %v651, %v658
  %v662 = vmul.f32 %v652, %v660
  %v663 = vsub.f32 1.0, %v661
  %v664 = vsub.f32 1.0, %v662
  %v665 = vmul.f32 %v623, %v663
  %v666 = vmul.f32 %v624, %v664
  %v667 = vadd.f32 %v665, 1.0
  %v668 = vadd.f32 %v666, 1.0
  %v669 = vmul.f32 %v617, %v667
  %v670 = vmul.f32 %v618, %v668
  %v671 = vpack.c.bf16 %v670, %v669
  %v673 = vlaneseq
  %v674 = vshrl.u32 %v673, 7
  %v675 = vsub.s32 0, %v674
  %v676 = vrot.slane %v553, %v675
  %v682 = vunpack.c.l.b16 %v549
  %v683 = vunpack.c.l.b16 %v550
  %v684 = vunpack.c.l.b16 %v551
  %v685 = vunpack.c.l.b16 %v552
  %v686 = vpack.c.b16 %v683, %v682
  %v687 = vpack.c.b16 %v685, %v684
  %v691 = vsel %vm83, %v671, 0
  %693 = vmatprep.subr.bf16.mxu0 0
  %694 = vmatpush1.bf16.msra.mxu0 0
  %695 = vmatprep.subr.bf16.mxu0 0
  %696 = vmatpush1.bf16.msra.mxu0 0
  %697 = vmatprep.subr.bf16.mxu0 0
  %698 = vmatpush1.bf16.msra.mxu0 0
  %699 = vmatprep.subr.bf16.mxu0 0
  %700 = vmatpush1.bf16.msra.mxu0 0
  %701 = vmatprep.subr.bf16.mxu0 0
  %702 = vmatpush1.bf16.msra.mxu0 0
  %703 = vmatprep.subr.bf16.mxu0 0
  %704 = vmatpush1.bf16.msra.mxu0 0
  %705 = vmatprep.subr.bf16.mxu0 0
  %706 = vmatpush1.bf16.msra.mxu0 %v687
  %707 = vmatprep.subr.bf16.mxu0 0
  %708 = vmatpush1.bf16.msra.mxu0 %v686
  %709 = vmatprep.subr.bf16.mxu0 0
  %710 = vmatpush2.bf16.msra.mxu0 0
  %711 = vmatprep.subr.bf16.mxu0 0
  %712 = vmatpush2.bf16.msra.mxu0 0
  %713 = vmatprep.subr.bf16.mxu0 0
  %714 = vmatpush2.bf16.msra.mxu0 0
  %715 = vmatprep.subr.bf16.mxu0 0
  %716 = vmatpush2.bf16.msra.mxu0 0
  %717 = vmatprep.subr.bf16.mxu0 0
  %718 = vmatpush2.bf16.msra.mxu0 0
  %719 = vmatprep.subr.bf16.mxu0 0
  %720 = vmatpush2.bf16.msra.mxu0 0
  %721 = vmatprep.subr.bf16.mxu0 0
  %722 = vmatpush2.bf16.msra.mxu0 0
  %723 = vmatprep.subr.bf16.mxu0 0
  %724 = vmatpush2.bf16.msra.mxu0 0
  %725 = vmatprep.mubr.bf16.mxu0 0
  %726 = vmatmul.mubr.bf16.gmra.mxu0 %v691
  %v727 = vpop.f32.mrf.mxu0
  %v728 = vadd.f32 %v676, %v727
  %v729 = vpop.f32.mrf.mxu0
  %v730 = vpop.f32.mrf.mxu0
  %v731 = vadd.f32 %v676, %v730
  %v732 = vpop.f32.mrf.mxu0
  %733 = vdwg.mxu0
  %v734 = vadd.f32 %v542, %v728
  %v735 = vadd.f32 %v543, %v731
  %v736 = vld [vmem:[%s11] sm:$0x1]
  %v737 = vld [vmem:[%s12] sm:$0x1]
  %v738 = vsel %vm83, %v734, 0.0
  %739 = vadd.xlane.f32.xlu0 %v738
  %v740 = vpop.xlane.xlu0 %739
  %v741 = vsel %vm83, %v735, 0.0
  %742 = vadd.xlane.f32.xlu0 %v741
  %v743 = vpop.xlane.xlu0 %742
  %v744 = vmul.f32 %v740, %v507
  %v745 = vmul.f32 %v743, %v507
  %v746 = vsub.f32 %v734, %v744
  %v747 = vsub.f32 %v735, %v745
  %v748 = vmul.f32 %v746, %v746
  %v749 = vmul.f32 %v747, %v747
  %v750 = vsel %vm83, %v748, 0.0
  %751 = vadd.xlane.f32.xlu0 %v750
  %v752 = vpop.xlane.xlu0 %751
  %v753 = vsel %vm83, %v749, 0.0
  %754 = vadd.xlane.f32.xlu0 %v753
  %v755 = vpop.xlane.xlu0 %754
  %v756 = vmul.f32 %v752, %v507
  %v757 = vmul.f32 %v755, %v507
  %v758 = vadd.f32 %v756, 1e-05
  %v759 = vadd.f32 %v757, 1e-05
  %v760 = vrsqrt.pop %v758
  %v761 = vrsqrt.pop %v759
  %v762 = vmul.f32 %v746, %v760
  %v763 = vmul.f32 %v747, %v761
  %v765 = vlaneseq
  %v766 = vshrl.u32 %v765, 7
  %v767 = vsub.s32 0, %v766
  %v768 = vrot.slane %v736, %v767
  %v770 = vmul.f32 %v762, %v768
  %v771 = vmul.f32 %v763, %v768
  %v773 = vlaneseq
  %v774 = vshrl.u32 %v773, 7
  %v775 = vsub.s32 0, %v774
  %v776 = vrot.slane %v737, %v775
  %v778 = vadd.f32 %v770, %v776
  %v779 = vadd.f32 %v771, %v776
  %780 = vst.msk [vmem:[%s15] sm:$0xff] %vm83, %v778
  %781 = vst.msk [vmem:[%s15 + $0x8] sm:$0xff] %vm83, %v779
  %v782 = vld [vmem:[%s13] sm:$0xf]
  %v783 = vld [vmem:[%s13 + $0x4] sm:$0xf]
  %v784 = vld [vmem:[%s13 + $0x8] sm:$0xf]
  %v785 = vld [vmem:[%s13 + $0xc] sm:$0xf]
  %v786 = vld [vmem:[%s14] sm:$0x1]
  %v787 = vpack.c.bf16 %v779, %v778
  %v789 = vlaneseq
  %v790 = vshrl.u32 %v789, 7
  %v791 = vsub.s32 0, %v790
  %v792 = vrot.slane %v786, %v791
  %v798 = vunpack.c.l.b16 %v782
  %v799 = vunpack.c.l.b16 %v783
  %v800 = vunpack.c.l.b16 %v784
  %v801 = vunpack.c.l.b16 %v785
  %v802 = vpack.c.b16 %v799, %v798
  %v803 = vpack.c.b16 %v801, %v800
  %v807 = vsel %vm83, %v787, 0
  %809 = vmatprep.subr.bf16.mxu0 0
  %810 = vmatpush1.bf16.msra.mxu0 0
  %811 = vmatprep.subr.bf16.mxu0 0
  %812 = vmatpush1.bf16.msra.mxu0 0
  %813 = vmatprep.subr.bf16.mxu0 0
  %814 = vmatpush1.bf16.msra.mxu0 0
  %815 = vmatprep.subr.bf16.mxu0 0
  %816 = vmatpush1.bf16.msra.mxu0 0
  %817 = vmatprep.subr.bf16.mxu0 0
  %818 = vmatpush1.bf16.msra.mxu0 0
  %819 = vmatprep.subr.bf16.mxu0 0
  %820 = vmatpush1.bf16.msra.mxu0 0
  %821 = vmatprep.subr.bf16.mxu0 0
  %822 = vmatpush1.bf16.msra.mxu0 %v803
  %823 = vmatprep.subr.bf16.mxu0 0
  %824 = vmatpush1.bf16.msra.mxu0 %v802
  %825 = vmatprep.subr.bf16.mxu0 0
  %826 = vmatpush2.bf16.msra.mxu0 0
  %827 = vmatprep.subr.bf16.mxu0 0
  %828 = vmatpush2.bf16.msra.mxu0 0
  %829 = vmatprep.subr.bf16.mxu0 0
  %830 = vmatpush2.bf16.msra.mxu0 0
  %831 = vmatprep.subr.bf16.mxu0 0
  %832 = vmatpush2.bf16.msra.mxu0 0
  %833 = vmatprep.subr.bf16.mxu0 0
  %834 = vmatpush2.bf16.msra.mxu0 0
  %835 = vmatprep.subr.bf16.mxu0 0
  %836 = vmatpush2.bf16.msra.mxu0 0
  %837 = vmatprep.subr.bf16.mxu0 0
  %838 = vmatpush2.bf16.msra.mxu0 0
  %839 = vmatprep.subr.bf16.mxu0 0
  %840 = vmatpush2.bf16.msra.mxu0 0
  %841 = vmatprep.mubr.bf16.mxu0 0
  %842 = vmatmul.mubr.bf16.gmra.mxu0 %v807
  %v843 = vpop.f32.mrf.mxu0
  %v844 = vadd.f32 %v792, %v843
  %v845 = vpop.f32.mrf.mxu0
  %v846 = vpop.f32.mrf.mxu0
  %v847 = vadd.f32 %v792, %v846
  %v848 = vpop.f32.mrf.mxu0
  %849 = vdwg.mxu0
  %vm850 = vcmask 97280
  %851 = vst.msk [vmem:[%s16] sm:$0xff] %vm850, %v844
  %852 = vst.msk [vmem:[%s16 + $0x8] sm:$0xff] %vm850, %v847
  // Predicated region
  $region62: #{_lambda_.15} parent=0 // pred_check
    _
  $region63: #{_lambda_.15} parent=0 // pred_check_branch
    %854 = sbr.rel (0) target = $region65
  $region64: #{_lambda_.15} parent=0 // pred_region
    _
  $region65: #{_lambda_.15} parent=0 // pred_fallthru
    _
  // Predicated region
  $region66: #{_lambda_.15} parent=0 // pred_check
    _
  $region67: #{_lambda_.15} parent=0 // pred_check_branch
    %856 = sbr.rel (0) target = $region69
  $region68: #{_lambda_.15} parent=0 // pred_region
    _
  $region69: #{_lambda_.15} parent=0 // pred_fallthru
    _
  // Predicated region
  $region70: #{_lambda_.15} parent=0 // pred_check
    _
  $region71: #{_lambda_.15} parent=0 // pred_check_branch
    %858 = sbr.rel (0) target = $region73
  $region72: #{_lambda_.15} parent=0 // pred_region
    _
  $region73: #{_lambda_.15} parent=0 // pred_fallthru
    _
  // Predicated region
  $region74: #{_lambda_.15} parent=0 // pred_check
    _
  $region75: #{_lambda_.15} parent=0 // pred_check_branch
    %860 = sbr.rel (0) target = $region77
  $region76: #{_lambda_.15} parent=0 // pred_region
    _
  $region77: #{_lambda_.15} parent=0 // pred_fallthru
    _

</llo_original>
